<compile_context>
chip_gen: v7x
topology: tpu7x:2x2x1
jax: 0.10.0
libtpu: 0.0.40
codegen_flags: <defaults>
</compile_context>

<pallas_src>
import functools
import math

import numpy as np
import jax
import jax.numpy as jnp
from jax.experimental import pallas as pl
from jax.experimental.pallas import tpu as pltpu  # noqa: F401  (kept for CompilerParams at prod sizes)

# Large finite negative for masking: exp(NEG_BIG - max) underflows to exactly 0 like -inf,
# but a fully-masked row gives uniform weights instead of NaN.
NEG_BIG = -1e30
LN_EPS = 1e-5

# f32 MXU operands: these validation shapes are launch-bound, and we compare against an f32
# reference at tight tolerance.  Flip to jnp.bfloat16 for production sizes (2x MXU throughput
# on v6e/v7x, half the weight DMA/VMEM) and loosen the test tolerance accordingly.
MATMUL_DTYPE = jnp.float32


# ------------------------------------------------------------------
# Kernel helpers
# ------------------------------------------------------------------
def _layernorm(y, g, b):
    mu = jnp.mean(y, axis=-1, keepdims=True)
    var = jnp.mean(jnp.square(y - mu), axis=-1, keepdims=True)
    return (y - mu) * jax.lax.rsqrt(var + LN_EPS) * g + b


def _mha_core(xq, xkv, wq_t, bq, wkv_t, bkv, wo_t, bo, gamma, beta, am, kpm, o_ref,
              *, nhead, batch, lq, lk, residual):
    """Shared fused-MHA body.

    xq: [B*Lq, D] query activations, xkv: [B*Lk, D] key/value activations.
    Projections run batched over the full slab (batch folded into MXU M); the static
    per-batch loop only covers the masked softmax + output projection + LN epilogue.
    """
    d = xq.shape[-1]
    hd = d // nhead

    # Batched projections over the whole [B*L, D] slab (one MXU pass each).
    q = jnp.dot(xq.astype(MATMUL_DTYPE), wq_t.astype(MATMUL_DTYPE),
                preferred_element_type=jnp.float32) + bq              # [B*Lq, D] (scale folded)
    kv = jnp.dot(xkv.astype(MATMUL_DTYPE), wkv_t.astype(MATMUL_DTYPE),
                 preferred_element_type=jnp.float32) + bkv            # [B*Lk, 2D]
    k = kv[:, :d]
    v = kv[:, d:]

    for b in range(batch):                       # static loop: masked softmax only
        qb = q[b * lq:(b + 1) * lq, :]           # [Lq, D]  (sublane-aligned row slices)
        kb = k[b * lk:(b + 1) * lk, :]           # [Lk, D]
        vb = v[b * lk:(b + 1) * lk, :]
        bias = am + kpm[b:b + 1, :]              # [Lq, Lk] additive mask for this batch

        ob = None
        # TODO(synk): per-head unroll with hd=8-wide lane slices; see header TODO for the
        #             production-scale head-packed / head-grid-axis layout.
        for h in range(nhead):
            sl = slice(h * hd, (h + 1) * hd)
            s = jax.lax.dot_general(qb[:, sl], kb[:, sl], (((1,), (1,)), ((), ())),
                                    preferred_element_type=jnp.float32) + bias
            s = s - jnp.max(s, axis=-1, keepdims=True)
            p = jnp.exp(s)
            denom = jnp.sum(p, axis=-1, keepdims=True)
            oh = jnp.dot(p.astype(MATMUL_DTYPE), vb[:, sl].astype(MATMUL_DTYPE),
                         preferred_element_type=jnp.float32)          # [Lq, hd]
            oh = oh / denom                      # exact normalization AFTER P@V (flash epilogue)
            # concat-of-heads + out-projection == sum of per-head partial products
            contrib = jnp.dot(oh.astype(MATMUL_DTYPE), wo_t[sl, :].astype(MATMUL_DTYPE),
                              preferred_element_type=jnp.float32)     # [Lq, D]
            ob = contrib if ob is None else ob + contrib
        ob = ob + bo

        xb = xq[b * lq:(b + 1) * lq, :]
        yb = (xb + ob) if residual else ob
        o_ref[b * lq:(b + 1) * lq, :] = _layernorm(yb, gamma, beta)


def _mha_self_kernel(x_ref, wq_ref, bq_ref, wkv_ref, bkv_ref, wo_ref, bo_ref,
                     g_ref, beta_ref, am_ref, kpm_ref, o_ref,
                     *, nhead, batch, seq, residual):
    x = x_ref[...]                               # single slab: q == k == v input
    _mha_core(x, x, wq_ref[...], bq_ref[...], wkv_ref[...], bkv_ref[...],
              wo_ref[...], bo_ref[...], g_ref[...], beta_ref[...],
              am_ref[...], kpm_ref[...], o_ref,
              nhead=nhead, batch=batch, lq=seq, lk=seq, residual=residual)


def _mha_cross_kernel(xq_ref, xkv_ref, wq_ref, bq_ref, wkv_ref, bkv_ref, wo_ref, bo_ref,
                      g_ref, beta_ref, am_ref, kpm_ref, o_ref,
                      *, nhead, batch, lq, lk, residual):
    _mha_core(xq_ref[...], xkv_ref[...], wq_ref[...], bq_ref[...], wkv_ref[...], bkv_ref[...],
              wo_ref[...], bo_ref[...], g_ref[...], beta_ref[...],
              am_ref[...], kpm_ref[...], o_ref,
              nhead=nhead, batch=batch, lq=lq, lk=lk, residual=residual)


def _ffn_core(x, w1_t, b1, w2_t, b2, gamma, beta):
    h = jnp.dot(x.astype(MATMUL_DTYPE), w1_t.astype(MATMUL_DTYPE),
                preferred_element_type=jnp.float32) + b1
    h = jnp.maximum(h, 0.0)
    y = x + jnp.dot(h.astype(MATMUL_DTYPE), w2_t.astype(MATMUL_DTYPE),
                    preferred_element_type=jnp.float32) + b2
    return _layernorm(y, gamma, beta)


def _ffn_ln_kernel(x_ref, w1_ref, b1_ref, w2_ref, b2_ref, g_ref, beta_ref, o_ref):
    o_ref[...] = _ffn_core(x_ref[...], w1_ref[...], b1_ref[...], w2_ref[...], b2_ref[...],
                           g_ref[...], beta_ref[...])


def _ffn_ln_final_kernel(x_ref, w1_ref, b1_ref, w2_ref, b2_ref, g_ref, beta_ref,
                         g2_ref, beta2_ref, o_ref):
    # Last layer of the stack: fuse the encoder/decoder final LayerNorm into the epilogue.
    y = _ffn_core(x_ref[...], w1_ref[...], b1_ref[...], w2_ref[...], b2_ref[...],
                  g_ref[...], beta_ref[...])
    o_ref[...] = _layernorm(y, g2_ref[...], beta2_ref[...])


# ------------------------------------------------------------------
# pallas_call wrappers (single grid step; whole-operand blocks at these tiny shapes)
# ------------------------------------------------------------------
def _spec(shape):
    return pl.BlockSpec(shape, lambda i: (0, 0))


def fused_self_attn_pallas(pp, ln, x2d, batch, seq, attn_add, kpm_add, nhead, residual=True):
    n, d = x2d.shape
    kern = functools.partial(_mha_self_kernel, nhead=nhead, batch=batch, seq=seq,
                             residual=residual)
    return pl.pallas_call(
        kern,
        out_shape=jax.ShapeDtypeStruct((n, d), jnp.float32),
        grid=(1,),
        in_specs=[
            _spec((n, d)),            # x (query == key == value activations)
            _spec((d, d)),            # W_q^T (1/sqrt(hd) folded in)
            _spec((1, d)),            # b_q (scaled)
            _spec((d, 2 * d)),        # [W_k^T | W_v^T]
            _spec((1, 2 * d)),        # [b_k | b_v]
            _spec((d, d)),            # W_o^T
            _spec((1, d)),            # b_o
            _spec((1, d)),            # LN gamma
            _spec((1, d)),            # LN beta
            _spec((seq, seq)),        # shared additive attn mask [Lq, Lk]
            _spec((batch, seq)),      # additive key-padding rows [B, Lk]
        ],
        out_specs=_spec((n, d)),
    )(x2d, pp["wq_t"], pp["bq"], pp["wkv_t"], pp["bkv"], pp["wo_t"], pp["bo"],
      ln["g"], ln["b"], attn_add, kpm_add)


def fused_cross_attn_pallas(pp, ln, xq2d, xkv2d, batch, lq, lk, attn_add, kpm_add, nhead,
                            residual=True):
    nq, d = xq2d.shape
    nk = xkv2d.shape[0]
    kern = functools.partial(_mha_cross_kernel, nhead=nhead, batch=batch, lq=lq, lk=lk,
                             residual=residual)
    return pl.pallas_call(
        kern,
        out_shape=jax.ShapeDtypeStruct((nq, d), jnp.float32),
        grid=(1,),
        in_specs=[
            _spec((nq, d)),           # query activations
            _spec((nk, d)),           # key/value activations (memory)
            _spec((d, d)),
            _spec((1, d)),
            _spec((d, 2 * d)),
            _spec((1, 2 * d)),
            _spec((d, d)),
            _spec((1, d)),
            _spec((1, d)),
            _spec((1, d)),
            _spec((lq, lk)),
            _spec((batch, lk)),
        ],
        out_specs=_spec((nq, d)),
    )(xq2d, xkv2d, pp["wq_t"], pp["bq"], pp["wkv_t"], pp["bkv"], pp["wo_t"], pp["bo"],
      ln["g"], ln["b"], attn_add, kpm_add)


def fused_ffn_pallas(pp, ln, x2d, final_ln=None):
    n, d = x2d.shape
    dff = pp["w1_t"].shape[1]
    base_specs = [_spec((n, d)), _spec((d, dff)), _spec((1, dff)), _spec((dff, d)),
                  _spec((1, d)), _spec((1, d)), _spec((1, d))]
    base_args = (x2d, pp["w1_t"], pp["b1"], pp["w2_t"], pp["b2"], ln["g"], ln["b"])
    if final_ln is None:
        kern, specs, args = _ffn_ln_kernel, base_specs, base_args
    else:
        kern = _ffn_ln_final_kernel
        specs = base_specs + [_spec((1, d)), _spec((1, d))]
        args = base_args + (final_ln["g"], final_ln["b"])
    return pl.pallas_call(
        kern,
        out_shape=jax.ShapeDtypeStruct((n, d), jnp.float32),
        grid=(1,),
        in_specs=specs,
        out_specs=_spec((n, d)),
    )(*args)


# ------------------------------------------------------------------
# One-time parameter preprocessing (pre-transposed / fused weight layouts)
# ------------------------------------------------------------------
def prepare_pallas_params(params, nhead):
    def prep_mha(p):
        d = p["q"]["w"].shape[0]
        scale = float(d // nhead) ** -0.5
        return {
            "wq_t": (p["q"]["w"] * scale).T,                                    # fold 1/sqrt(hd)
            "bq": (p["q"]["b"] * scale).reshape(1, d),
            "wkv_t": jnp.concatenate([p["k"]["w"].T, p["v"]["w"].T], axis=1),   # [D, 2D]
            "bkv": jnp.concatenate([p["k"]["b"], p["v"]["b"]]).reshape(1, 2 * d),
            "wo_t": p["out"]["w"].T,
            "bo": p["out"]["b"].reshape(1, d),
        }

    def prep_ffn(l1, l2):
        dff, d = l1["w"].shape
        return {"w1_t": l1["w"].T, "b1": l1["b"].reshape(1, dff),
                "w2_t": l2["w"].T, "b2": l2["b"].reshape(1, d)}

    def prep_ln(p):
        d = p["g"].shape[0]
        return {"g": p["g"].reshape(1, d), "b": p["b"].reshape(1, d)}

    enc_layers = [{"self_attn": prep_mha(lp["self_attn"]),
                   "ffn": prep_ffn(lp["linear1"], lp["linear2"]),
                   "norm1": prep_ln(lp["norm1"]), "norm2": prep_ln(lp["norm2"])}
                  for lp in params["encoder"]["layers"]]
    dec_layers = [{"self_attn": prep_mha(lp["self_attn"]),
                   "multi_attn": prep_mha(lp["multi_attn"]),
                   "ffn": prep_ffn(lp["linear1"], lp["linear2"]),
                   "norm1": prep_ln(lp["norm1"]), "norm2": prep_ln(lp["norm2"]),
                   "norm3": prep_ln(lp["norm3"])}
                  for lp in params["decoder"]["layers"]]
    return {"encoder": {"layers": enc_layers, "norm": prep_ln(params["encoder"]["norm"])},
            "decoder": {"layers": dec_layers, "norm": prep_ln(params["decoder"]["norm"])}}


# Compact additive masks (no [B, Lq, Lk] materialization / DMA).
def _attn_add(attn_mask, lq, lk):
    if attn_mask is None:
        return jnp.zeros((lq, lk), jnp.float32)
    return jnp.maximum(attn_mask.astype(jnp.float32), NEG_BIG)     # clamp -inf -> NEG_BIG


def _kpm_add(kpm, batch, lk):
    if kpm is None:
        return jnp.zeros((batch, lk), jnp.float32)
    return jnp.where(kpm, jnp.float32(NEG_BIG), jnp.float32(0.0))


# ------------------------------------------------------------------
# Pallas forward pass (works on [B*L, D] batch-major slabs)
# ------------------------------------------------------------------
def transformer_forward_pallas(pparams, src, tgt, nhead, src_mask=None, tgt_mask=None,
                               memory_mask=None, src_kpm=None, tgt_kpm=None, mem_kpm=None):
    ls, b, d = src.shape
    lt = tgt.shape[0]
    x = src.transpose(1, 0, 2).reshape(b * ls, d)
    y = tgt.transpose(1, 0, 2).reshape(b * lt, d)

    src_am = _attn_add(src_mask, ls, ls)
    tgt_am = _attn_add(tgt_mask, lt, lt)
    mem_am = _attn_add(memory_mask, lt, ls)
    src_kb = _kpm_add(src_kpm, b, ls)
    tgt_kb = _kpm_add(tgt_kpm, b, lt)
    mem_kb = _kpm_add(mem_kpm, b, ls)

    enc_layers = pparams["encoder"]["layers"]
    for idx, lp in enumerate(enc_layers):
        x = fused_self_attn_pallas(lp["self_attn"], lp["norm1"], x, b, ls,
                                   src_am, src_kb, nhead, residual=True)
        fin = pparams["encoder"]["norm"] if idx == len(enc_layers) - 1 else None
        x = fused_ffn_pallas(lp["ffn"], lp["norm2"], x, final_ln=fin)
    memory = x

    dec_layers = pparams["decoder"]["layers"]
    for idx, lp in enumerate(dec_layers):
        y = fused_self_attn_pallas(lp["self_attn"], lp["norm1"], y, b, lt,
                                   tgt_am, tgt_kb, nhead, residual=True)
        # NOTE: replicates the reference quirk `tgt = self.norm2(tgt2)`: norm2 is applied to
        # the cross-attention output only (the residual sum is computed then discarded in the
        # PyTorch code), hence residual=False.  Do not "fix" during optimization.
        y = fused_cross_attn_pallas(lp["multi_attn"], lp["norm2"], y, memory, b, lt, ls,
                                    mem_am, mem_kb, nhead, residual=False)
        fin = pparams["decoder"]["norm"] if idx == len(dec_layers) - 1 else None
        y = fused_ffn_pallas(lp["ffn"], lp["norm3"], y, final_ln=fin)

    return y.reshape(b, lt, d).transpose(1, 0, 2)


# ------------------------------------------------------------------
# Pure-JAX reference (mirrors the PyTorch module exactly; independent of the kernels)
# ------------------------------------------------------------------
_HI = jax.lax.Precision.HIGHEST


def _linear_ref(x2d, w, b):
    return jnp.dot(x2d, w.T, precision=_HI) + b[None, :]


def _layernorm_ref(x2d, g, b):
    mu = jnp.mean(x2d, -1, keepdims=True)
    var = jnp.mean(jnp.square(x2d - mu), -1, keepdims=True)
    return (x2d - mu) * jax.lax.rsqrt(var + LN_EPS) * g[None, :] + b[None, :]


def _mha_ref(p, query, key, value, nhead, attn_mask=None, key_padding_mask=None):
    lq, b, d = query.shape
    lk = key.shape[0]
    hd = d // nhead
    scale = float(hd) ** -0.5
    q = _linear_ref(query.reshape(lq * b, d), p["q"]["w"], p["q"]["b"]).reshape(lq, b, d)
    k = _linear_ref(key.reshape(lk * b, d), p["k"]["w"], p["k"]["b"]).reshape(lk, b, d)
    v = _linear_ref(value.reshape(lk * b, d), p["v"]["w"], p["v"]["b"]).reshape(lk, b, d)
    q = (q * scale).reshape(lq, b * nhead, hd).transpose(1, 0, 2)
    k = k.reshape(lk, b * nhead, hd).transpose(1, 0, 2)
    v = v.reshape(lk, b * nhead, hd).transpose(1, 0, 2)
    s = jnp.einsum("bqd,bkd->bqk", q, k, precision=_HI)
    if attn_mask is not None:
        s = s + attn_mask[None, :, :].astype(jnp.float32)
    if key_padding_mask is not None:
        s = s.reshape(b, nhead, lq, lk)
        s = jnp.where(key_padding_mask[:, None, None, :], -jnp.inf, s)
        s = s.reshape(b * nhead, lq, lk)
    s = s - jnp.max(s, -1, keepdims=True)
    pw = jnp.exp(s)
    pw = pw / jnp.sum(pw, -1, keepdims=True)
    o = jnp.einsum("bqk,bkd->bqd", pw, v, precision=_HI)
    o = o.transpose(1, 0, 2).reshape(lq, b, d)
    return _linear_ref(o.reshape(lq * b, d), p["out"]["w"], p["out"]["b"]).reshape(lq, b, d)


def _encoder_layer_ref(p, src, nhead, src_mask=None, src_kpm=None):
    l, b, d = src.shape
    src2 = _mha_ref(p["self_attn"], src, src, src, nhead, src_mask, src_kpm)
    src = src + src2
    src = _layernorm_ref(src.reshape(l * b, d), p["norm1"]["g"], p["norm1"]["b"]).reshape(l, b, d)
    h = jnp.maximum(_linear_ref(src.reshape(l * b, d), p["linear1"]["w"], p["linear1"]["b"]), 0.0)
    src2 = _linear_ref(h, p["linear2"]["w"], p["linear2"]["b"]).reshape(l, b, d)
    src = src + src2
    return _layernorm_ref(src.reshape(l * b, d), p["norm2"]["g"], p["norm2"]["b"]).reshape(l, b, d)


def _decoder_layer_ref(p, tgt, memory, nhead, tgt_mask=None, memory_mask=None,
                       tgt_kpm=None, mem_kpm=None):
    lt, b, d = tgt.shape
    tgt2 = _mha_ref(p["self_attn"], tgt, tgt, tgt, nhead, tgt_mask, tgt_kpm)
    tgt = tgt + tgt2
    tgt = _layernorm_ref(tgt.reshape(lt * b, d), p["norm1"]["g"], p["norm1"]["b"]).reshape(lt, b, d)
    tgt2 = _mha_ref(p["multi_attn"], tgt, memory, memory, nhead, memory_mask, mem_kpm)
    # reference quirk: norm2(tgt2), not norm2(tgt + tgt2)
    tgt = _layernorm_ref(tgt2.reshape(lt * b, d), p["norm2"]["g"], p["norm2"]["b"]).reshape(lt, b, d)
    h = jnp.maximum(_linear_ref(tgt.reshape(lt * b, d), p["linear1"]["w"], p["linear1"]["b"]), 0.0)
    tgt2 = _linear_ref(h, p["linear2"]["w"], p["linear2"]["b"]).reshape(lt, b, d)
    tgt = tgt + tgt2
    return _layernorm_ref(tgt.reshape(lt * b, d), p["norm3"]["g"], p["norm3"]["b"]).reshape(lt, b, d)


def transformer_forward_ref(params, src, tgt, nhead, src_mask=None, tgt_mask=None,
                            memory_mask=None, src_kpm=None, tgt_kpm=None, mem_kpm=None):
    memory = src
    for lp in params["encoder"]["layers"]:
        memory = _encoder_layer_ref(lp, memory, nhead, src_mask, src_kpm)
    ls, b, d = memory.shape
    memory = _layernorm_ref(memory.reshape(ls * b, d), params["encoder"]["norm"]["g"],
                            params["encoder"]["norm"]["b"]).reshape(ls, b, d)
    output = tgt
    for lp in params["decoder"]["layers"]:
        output = _decoder_layer_ref(lp, output, memory, nhead, tgt_mask, memory_mask,
                                    tgt_kpm, mem_kpm)
    lt, b, d = output.shape
    output = _layernorm_ref(output.reshape(lt * b, d), params["decoder"]["norm"]["g"],
                            params["decoder"]["norm"]["b"]).reshape(lt, b, d)
    return output


# ------------------------------------------------------------------
# Deterministic parameter init (xavier-uniform like reset_parameters)
# ------------------------------------------------------------------
def _xavier(key, dout, din):
    limit = math.sqrt(6.0 / (din + dout))
    return jax.random.uniform(key, (dout, din), jnp.float32, -limit, limit)


def init_linear(key, dout, din):
    kw, kb = jax.random.split(key)
    return {"w": _xavier(kw, dout, din),
            "b": 0.01 * jax.random.normal(kb, (dout,), jnp.float32)}


def init_ln(d):
    return {"g": jnp.ones((d,), jnp.float32), "b": jnp.zeros((d,), jnp.float32)}


def init_mha(key, d):
    ks = jax.random.split(key, 4)
    return {"q": init_linear(ks[0], d, d), "k": init_linear(ks[1], d, d),
            "v": init_linear(ks[2], d, d), "out": init_linear(ks[3], d, d)}


def init_enc_layer(key, d, dff):
    ks = jax.random.split(key, 3)
    return {"self_attn": init_mha(ks[0], d),
            "linear1": init_linear(ks[1], dff, d), "linear2": init_linear(ks[2], d, dff),
            "norm1": init_ln(d), "norm2": init_ln(d)}


def init_dec_layer(key, d, dff):
    ks = jax.random.split(key, 4)
    return {"self_attn": init_mha(ks[0], d), "multi_attn": init_mha(ks[1], d),
            "linear1": init_linear(ks[2], dff, d), "linear2": init_linear(ks[3], d, dff),
            "norm1": init_ln(d), "norm2": init_ln(d), "norm3": init_ln(d)}


def init_params(key, d, dff, n_enc, n_dec):
    keys = jax.random.split(key, n_enc + n_dec)
    enc_layers = [init_enc_layer(keys[i], d, dff) for i in range(n_enc)]
    dec_layers = [init_dec_layer(keys[n_enc + i], d, dff) for i in range(n_dec)]
    return {"encoder": {"layers": enc_layers, "norm": init_ln(d)},
            "decoder": {"layers": dec_layers, "norm": init_ln(d)}}


def generate_square_subsequent_mask(sz):
    i = jnp.arange(sz)
    return jnp.where(i[None, :] > i[:, None], float("-inf"), 0.0).astype(jnp.float32)


# ------------------------------------------------------------------
if __name__ == "__main__":
    d_model, nhead, dim_feedforward = 32, 4, 64
    num_encoder_layers, num_decoder_layers = 2, 2
    src_len, tgt_len, batch = 8, 8, 2

    root = jax.random.PRNGKey(0)
    kp, ks, kt = jax.random.split(root, 3)
    params = init_params(kp, d_model, dim_feedforward, num_encoder_layers, num_decoder_layers)
    pparams = prepare_pallas_params(params, nhead)   # one-time weight layout preprocessing

    src = jax.random.normal(ks, (src_len, batch, d_model), jnp.float32)
    tgt = jax.random.normal(kt, (tgt_len, batch, d_model), jnp.float32)
    tgt_mask = generate_square_subsequent_mask(tgt_len)
    src_kpm = jnp.zeros((batch, src_len), dtype=bool).at[1, -1].set(True)
    mem_kpm = src_kpm

    fwd = jax.jit(functools.partial(transformer_forward_pallas, nhead=nhead))
    out = fwd(pparams, src, tgt, src_mask=None, tgt_mask=tgt_mask, memory_mask=None,
              src_kpm=src_kpm, tgt_kpm=None, mem_kpm=mem_kpm)
    out = jax.block_until_ready(out)
    assert out.shape == (tgt_len, batch, d_model)
    assert bool(jnp.all(jnp.isfinite(out)))

    ref = transformer_forward_ref(params, src, tgt, nhead, src_mask=None, tgt_mask=tgt_mask,
                                  memory_mask=None, src_kpm=src_kpm, tgt_kpm=None,
                                  mem_kpm=mem_kpm)
    # All-f32 matmuls and an exact softmax divide: the kernel tracks the f32 reference to
    # ~1e-5; 2e-3 leaves margin for f32 reassociation amplified through the LayerNorm stack.
    np.testing.assert_allclose(np.asarray(out), np.asarray(ref), rtol=2e-3, atol=2e-3)

    print("KERNEL_OK")
</pallas_src>

<mosaic_0001>
module attributes {stable_mosaic.version = 11 : i64} {
  func.func @_mha_self_kernel(%arg0: i32, %arg1: memref<16x32xf32, #tpu.memory_space<vmem>>, %arg2: memref<32x32xf32, #tpu.memory_space<vmem>>, %arg3: memref<1x32xf32, #tpu.memory_space<vmem>>, %arg4: memref<32x64xf32, #tpu.memory_space<vmem>>, %arg5: memref<1x64xf32, #tpu.memory_space<vmem>>, %arg6: memref<32x32xf32, #tpu.memory_space<vmem>>, %arg7: memref<1x32xf32, #tpu.memory_space<vmem>>, %arg8: memref<1x32xf32, #tpu.memory_space<vmem>>, %arg9: memref<1x32xf32, #tpu.memory_space<vmem>>, %arg10: memref<8x8xf32, #tpu.memory_space<vmem>>, %arg11: memref<2x8xf32, #tpu.memory_space<vmem>>, %arg12: memref<16x32xf32, #tpu.memory_space<vmem>>) attributes {dimension_semantics = [#tpu.dimension_semantics<arbitrary>], iteration_bounds = array<i64: 1>, scalar_prefetch = 0 : i64, scratch_operands = 0 : i64, tpu.core_type = #tpu.core_type<tc>, window_params = [{pipeline_mode = #tpu.pipeline_mode<synchronous>, transform_indices = @transform_0, window_bounds = array<i64: 16, 32>}, {pipeline_mode = #tpu.pipeline_mode<synchronous>, transform_indices = @transform_1, window_bounds = array<i64: 32, 32>}, {pipeline_mode = #tpu.pipeline_mode<synchronous>, transform_indices = @transform_2, window_bounds = array<i64: 1, 32>}, {pipeline_mode = #tpu.pipeline_mode<synchronous>, transform_indices = @transform_3, window_bounds = array<i64: 32, 64>}, {pipeline_mode = #tpu.pipeline_mode<synchronous>, transform_indices = @transform_4, window_bounds = array<i64: 1, 64>}, {pipeline_mode = #tpu.pipeline_mode<synchronous>, transform_indices = @transform_5, window_bounds = array<i64: 32, 32>}, {pipeline_mode = #tpu.pipeline_mode<synchronous>, transform_indices = @transform_6, window_bounds = array<i64: 1, 32>}, {pipeline_mode = #tpu.pipeline_mode<synchronous>, transform_indices = @transform_7, window_bounds = array<i64: 1, 32>}, {pipeline_mode = #tpu.pipeline_mode<synchronous>, transform_indices = @transform_8, window_bounds = array<i64: 1, 32>}, {pipeline_mode = #tpu.pipeline_mode<synchronous>, transform_indices = @transform_9, window_bounds = array<i64: 8, 8>}, {pipeline_mode = #tpu.pipeline_mode<synchronous>, transform_indices = @transform_10, window_bounds = array<i64: 2, 8>}, {pipeline_mode = #tpu.pipeline_mode<synchronous>, transform_indices = @transform_11, window_bounds = array<i64: 16, 32>}]} {
    %c0 = arith.constant 0 : index
    %c0_0 = arith.constant 0 : index
    %0 = vector.load %arg1[%c0, %c0_0] : memref<16x32xf32, #tpu.memory_space<vmem>>, vector<16x32xf32>
    %c0_1 = arith.constant 0 : index
    %c0_2 = arith.constant 0 : index
    %1 = vector.load %arg2[%c0_1, %c0_2] : memref<32x32xf32, #tpu.memory_space<vmem>>, vector<32x32xf32>
    %c0_3 = arith.constant 0 : index
    %c0_4 = arith.constant 0 : index
    %2 = vector.load %arg3[%c0_3, %c0_4] : memref<1x32xf32, #tpu.memory_space<vmem>>, vector<1x32xf32>
    %c0_5 = arith.constant 0 : index
    %c0_6 = arith.constant 0 : index
    %3 = vector.load %arg4[%c0_5, %c0_6] : memref<32x64xf32, #tpu.memory_space<vmem>>, vector<32x64xf32>
    %c0_7 = arith.constant 0 : index
    %c0_8 = arith.constant 0 : index
    %4 = vector.load %arg5[%c0_7, %c0_8] : memref<1x64xf32, #tpu.memory_space<vmem>>, vector<1x64xf32>
    %c0_9 = arith.constant 0 : index
    %c0_10 = arith.constant 0 : index
    %5 = vector.load %arg6[%c0_9, %c0_10] : memref<32x32xf32, #tpu.memory_space<vmem>>, vector<32x32xf32>
    %c0_11 = arith.constant 0 : index
    %c0_12 = arith.constant 0 : index
    %6 = vector.load %arg7[%c0_11, %c0_12] : memref<1x32xf32, #tpu.memory_space<vmem>>, vector<1x32xf32>
    %c0_13 = arith.constant 0 : index
    %c0_14 = arith.constant 0 : index
    %7 = vector.load %arg8[%c0_13, %c0_14] : memref<1x32xf32, #tpu.memory_space<vmem>>, vector<1x32xf32>
    %c0_15 = arith.constant 0 : index
    %c0_16 = arith.constant 0 : index
    %8 = vector.load %arg9[%c0_15, %c0_16] : memref<1x32xf32, #tpu.memory_space<vmem>>, vector<1x32xf32>
    %c0_17 = arith.constant 0 : index
    %c0_18 = arith.constant 0 : index
    %9 = vector.load %arg10[%c0_17, %c0_18] : memref<8x8xf32, #tpu.memory_space<vmem>>, vector<8x8xf32>
    %c0_19 = arith.constant 0 : index
    %c0_20 = arith.constant 0 : index
    %10 = vector.load %arg11[%c0_19, %c0_20] : memref<2x8xf32, #tpu.memory_space<vmem>>, vector<2x8xf32>
    %cst = arith.constant dense<0.000000e+00> : vector<16x32xf32>
    %11 = tpu.matmul %0, %1, %cst {dimension_numbers = #tpu.dot_dimension_numbers<[1], [0], [0], [1], [0, 0, 1, 1], [], []>} : vector<16x32xf32>, vector<32x32xf32>, vector<16x32xf32> -> vector<16x32xf32>
    %12 = vector.broadcast %2 : vector<1x32xf32> to vector<16x32xf32>
    %13 = arith.addf %11, %12 : vector<16x32xf32>
    %cst_21 = arith.constant dense<0.000000e+00> : vector<16x64xf32>
    %14 = tpu.matmul %0, %3, %cst_21 {dimension_numbers = #tpu.dot_dimension_numbers<[1], [0], [0], [1], [0, 0, 1, 1], [], []>} : vector<16x32xf32>, vector<32x64xf32>, vector<16x64xf32> -> vector<16x64xf32>
    %15 = vector.broadcast %4 : vector<1x64xf32> to vector<16x64xf32>
    %16 = arith.addf %14, %15 : vector<16x64xf32>
    %17 = vector.extract_strided_slice %16 {offsets = [0, 0], sizes = [16, 32], strides = [1, 1]} : vector<16x64xf32> to vector<16x32xf32>
    %18 = vector.extract_strided_slice %16 {offsets = [0, 32], sizes = [16, 32], strides = [1, 1]} : vector<16x64xf32> to vector<16x32xf32>
    %19 = vector.extract_strided_slice %13 {offsets = [0, 0], sizes = [8, 32], strides = [1, 1]} : vector<16x32xf32> to vector<8x32xf32>
    %20 = vector.extract_strided_slice %17 {offsets = [0, 0], sizes = [8, 32], strides = [1, 1]} : vector<16x32xf32> to vector<8x32xf32>
    %21 = vector.extract_strided_slice %18 {offsets = [0, 0], sizes = [8, 32], strides = [1, 1]} : vector<16x32xf32> to vector<8x32xf32>
    %22 = vector.extract_strided_slice %10 {offsets = [0, 0], sizes = [1, 8], strides = [1, 1]} : vector<2x8xf32> to vector<1x8xf32>
    %23 = vector.broadcast %22 : vector<1x8xf32> to vector<8x8xf32>
    %24 = arith.addf %9, %23 : vector<8x8xf32>
    %25 = vector.extract_strided_slice %19 {offsets = [0, 0], sizes = [8, 8], strides = [1, 1]} : vector<8x32xf32> to vector<8x8xf32>
    %26 = vector.extract_strided_slice %20 {offsets = [0, 0], sizes = [8, 8], strides = [1, 1]} : vector<8x32xf32> to vector<8x8xf32>
    %cst_22 = arith.constant dense<0.000000e+00> : vector<8x8xf32>
    %27 = tpu.matmul %25, %26, %cst_22 {dimension_numbers = #tpu.dot_dimension_numbers<[1], [1], [0], [0], [0, 0, 1, 0], [], []>} : vector<8x8xf32>, vector<8x8xf32>, vector<8x8xf32> -> vector<8x8xf32>
    %28 = arith.addf %27, %24 : vector<8x8xf32>
    %cst_23 = arith.constant dense<0xFF800000> : vector<8xf32>
    %29 = vector.multi_reduction <maximumf>, %28, %cst_23 [1] : vector<8x8xf32> to vector<8xf32>
    %30 = vector.shape_cast %29 : vector<8xf32> to vector<8x1xf32>
    %31 = vector.broadcast %30 : vector<8x1xf32> to vector<8x8xf32>
    %32 = arith.subf %28, %31 : vector<8x8xf32>
    %33 = math.exp %32 : vector<8x8xf32>
    %cst_24 = arith.constant dense<0.000000e+00> : vector<8xf32>
    %34 = vector.multi_reduction <add>, %33, %cst_24 [1] : vector<8x8xf32> to vector<8xf32>
    %35 = vector.shape_cast %34 : vector<8xf32> to vector<8x1xf32>
    %36 = vector.extract_strided_slice %21 {offsets = [0, 0], sizes = [8, 8], strides = [1, 1]} : vector<8x32xf32> to vector<8x8xf32>
    %cst_25 = arith.constant dense<0.000000e+00> : vector<8x8xf32>
    %37 = tpu.matmul %33, %36, %cst_25 {dimension_numbers = #tpu.dot_dimension_numbers<[1], [0], [0], [1], [0, 0, 1, 1], [], []>} : vector<8x8xf32>, vector<8x8xf32>, vector<8x8xf32> -> vector<8x8xf32>
    %38 = vector.broadcast %35 : vector<8x1xf32> to vector<8x8xf32>
    %39 = arith.divf %37, %38 : vector<8x8xf32>
    %40 = vector.extract_strided_slice %5 {offsets = [0, 0], sizes = [8, 32], strides = [1, 1]} : vector<32x32xf32> to vector<8x32xf32>
    %cst_26 = arith.constant dense<0.000000e+00> : vector<8x32xf32>
    %41 = tpu.matmul %39, %40, %cst_26 {dimension_numbers = #tpu.dot_dimension_numbers<[1], [0], [0], [1], [0, 0, 1, 1], [], []>} : vector<8x8xf32>, vector<8x32xf32>, vector<8x32xf32> -> vector<8x32xf32>
    %42 = vector.extract_strided_slice %19 {offsets = [0, 8], sizes = [8, 8], strides = [1, 1]} : vector<8x32xf32> to vector<8x8xf32>
    %43 = vector.extract_strided_slice %20 {offsets = [0, 8], sizes = [8, 8], strides = [1, 1]} : vector<8x32xf32> to vector<8x8xf32>
    %cst_27 = arith.constant dense<0.000000e+00> : vector<8x8xf32>
    %44 = tpu.matmul %42, %43, %cst_27 {dimension_numbers = #tpu.dot_dimension_numbers<[1], [1], [0], [0], [0, 0, 1, 0], [], []>} : vector<8x8xf32>, vector<8x8xf32>, vector<8x8xf32> -> vector<8x8xf32>
    %45 = arith.addf %44, %24 : vector<8x8xf32>
    %cst_28 = arith.constant dense<0xFF800000> : vector<8xf32>
    %46 = vector.multi_reduction <maximumf>, %45, %cst_28 [1] : vector<8x8xf32> to vector<8xf32>
    %47 = vector.shape_cast %46 : vector<8xf32> to vector<8x1xf32>
    %48 = vector.broadcast %47 : vector<8x1xf32> to vector<8x8xf32>
    %49 = arith.subf %45, %48 : vector<8x8xf32>
    %50 = math.exp %49 : vector<8x8xf32>
    %cst_29 = arith.constant dense<0.000000e+00> : vector<8xf32>
    %51 = vector.multi_reduction <add>, %50, %cst_29 [1] : vector<8x8xf32> to vector<8xf32>
    %52 = vector.shape_cast %51 : vector<8xf32> to vector<8x1xf32>
    %53 = vector.extract_strided_slice %21 {offsets = [0, 8], sizes = [8, 8], strides = [1, 1]} : vector<8x32xf32> to vector<8x8xf32>
    %cst_30 = arith.constant dense<0.000000e+00> : vector<8x8xf32>
    %54 = tpu.matmul %50, %53, %cst_30 {dimension_numbers = #tpu.dot_dimension_numbers<[1], [0], [0], [1], [0, 0, 1, 1], [], []>} : vector<8x8xf32>, vector<8x8xf32>, vector<8x8xf32> -> vector<8x8xf32>
    %55 = vector.broadcast %52 : vector<8x1xf32> to vector<8x8xf32>
    %56 = arith.divf %54, %55 : vector<8x8xf32>
    %57 = vector.extract_strided_slice %5 {offsets = [8, 0], sizes = [8, 32], strides = [1, 1]} : vector<32x32xf32> to vector<8x32xf32>
    %cst_31 = arith.constant dense<0.000000e+00> : vector<8x32xf32>
    %58 = tpu.matmul %56, %57, %cst_31 {dimension_numbers = #tpu.dot_dimension_numbers<[1], [0], [0], [1], [0, 0, 1, 1], [], []>} : vector<8x8xf32>, vector<8x32xf32>, vector<8x32xf32> -> vector<8x32xf32>
    %59 = arith.addf %41, %58 : vector<8x32xf32>
    %60 = vector.extract_strided_slice %19 {offsets = [0, 16], sizes = [8, 8], strides = [1, 1]} : vector<8x32xf32> to vector<8x8xf32>
    %61 = vector.extract_strided_slice %20 {offsets = [0, 16], sizes = [8, 8], strides = [1, 1]} : vector<8x32xf32> to vector<8x8xf32>
    %cst_32 = arith.constant dense<0.000000e+00> : vector<8x8xf32>
    %62 = tpu.matmul %60, %61, %cst_32 {dimension_numbers = #tpu.dot_dimension_numbers<[1], [1], [0], [0], [0, 0, 1, 0], [], []>} : vector<8x8xf32>, vector<8x8xf32>, vector<8x8xf32> -> vector<8x8xf32>
    %63 = arith.addf %62, %24 : vector<8x8xf32>
    %cst_33 = arith.constant dense<0xFF800000> : vector<8xf32>
    %64 = vector.multi_reduction <maximumf>, %63, %cst_33 [1] : vector<8x8xf32> to vector<8xf32>
    %65 = vector.shape_cast %64 : vector<8xf32> to vector<8x1xf32>
    %66 = vector.broadcast %65 : vector<8x1xf32> to vector<8x8xf32>
    %67 = arith.subf %63, %66 : vector<8x8xf32>
    %68 = math.exp %67 : vector<8x8xf32>
    %cst_34 = arith.constant dense<0.000000e+00> : vector<8xf32>
    %69 = vector.multi_reduction <add>, %68, %cst_34 [1] : vector<8x8xf32> to vector<8xf32>
    %70 = vector.shape_cast %69 : vector<8xf32> to vector<8x1xf32>
    %71 = vector.extract_strided_slice %21 {offsets = [0, 16], sizes = [8, 8], strides = [1, 1]} : vector<8x32xf32> to vector<8x8xf32>
    %cst_35 = arith.constant dense<0.000000e+00> : vector<8x8xf32>
    %72 = tpu.matmul %68, %71, %cst_35 {dimension_numbers = #tpu.dot_dimension_numbers<[1], [0], [0], [1], [0, 0, 1, 1], [], []>} : vector<8x8xf32>, vector<8x8xf32>, vector<8x8xf32> -> vector<8x8xf32>
    %73 = vector.broadcast %70 : vector<8x1xf32> to vector<8x8xf32>
    %74 = arith.divf %72, %73 : vector<8x8xf32>
    %75 = vector.extract_strided_slice %5 {offsets = [16, 0], sizes = [8, 32], strides = [1, 1]} : vector<32x32xf32> to vector<8x32xf32>
    %cst_36 = arith.constant dense<0.000000e+00> : vector<8x32xf32>
    %76 = tpu.matmul %74, %75, %cst_36 {dimension_numbers = #tpu.dot_dimension_numbers<[1], [0], [0], [1], [0, 0, 1, 1], [], []>} : vector<8x8xf32>, vector<8x32xf32>, vector<8x32xf32> -> vector<8x32xf32>
    %77 = arith.addf %59, %76 : vector<8x32xf32>
    %78 = vector.extract_strided_slice %19 {offsets = [0, 24], sizes = [8, 8], strides = [1, 1]} : vector<8x32xf32> to vector<8x8xf32>
    %79 = vector.extract_strided_slice %20 {offsets = [0, 24], sizes = [8, 8], strides = [1, 1]} : vector<8x32xf32> to vector<8x8xf32>
    %cst_37 = arith.constant dense<0.000000e+00> : vector<8x8xf32>
    %80 = tpu.matmul %78, %79, %cst_37 {dimension_numbers = #tpu.dot_dimension_numbers<[1], [1], [0], [0], [0, 0, 1, 0], [], []>} : vector<8x8xf32>, vector<8x8xf32>, vector<8x8xf32> -> vector<8x8xf32>
    %81 = arith.addf %80, %24 : vector<8x8xf32>
    %cst_38 = arith.constant dense<0xFF800000> : vector<8xf32>
    %82 = vector.multi_reduction <maximumf>, %81, %cst_38 [1] : vector<8x8xf32> to vector<8xf32>
    %83 = vector.shape_cast %82 : vector<8xf32> to vector<8x1xf32>
    %84 = vector.broadcast %83 : vector<8x1xf32> to vector<8x8xf32>
    %85 = arith.subf %81, %84 : vector<8x8xf32>
    %86 = math.exp %85 : vector<8x8xf32>
    %cst_39 = arith.constant dense<0.000000e+00> : vector<8xf32>
    %87 = vector.multi_reduction <add>, %86, %cst_39 [1] : vector<8x8xf32> to vector<8xf32>
    %88 = vector.shape_cast %87 : vector<8xf32> to vector<8x1xf32>
    %89 = vector.extract_strided_slice %21 {offsets = [0, 24], sizes = [8, 8], strides = [1, 1]} : vector<8x32xf32> to vector<8x8xf32>
    %cst_40 = arith.constant dense<0.000000e+00> : vector<8x8xf32>
    %90 = tpu.matmul %86, %89, %cst_40 {dimension_numbers = #tpu.dot_dimension_numbers<[1], [0], [0], [1], [0, 0, 1, 1], [], []>} : vector<8x8xf32>, vector<8x8xf32>, vector<8x8xf32> -> vector<8x8xf32>
    %91 = vector.broadcast %88 : vector<8x1xf32> to vector<8x8xf32>
    %92 = arith.divf %90, %91 : vector<8x8xf32>
    %93 = vector.extract_strided_slice %5 {offsets = [24, 0], sizes = [8, 32], strides = [1, 1]} : vector<32x32xf32> to vector<8x32xf32>
    %cst_41 = arith.constant dense<0.000000e+00> : vector<8x32xf32>
    %94 = tpu.matmul %92, %93, %cst_41 {dimension_numbers = #tpu.dot_dimension_numbers<[1], [0], [0], [1], [0, 0, 1, 1], [], []>} : vector<8x8xf32>, vector<8x32xf32>, vector<8x32xf32> -> vector<8x32xf32>
    %95 = arith.addf %77, %94 : vector<8x32xf32>
    %96 = vector.broadcast %6 : vector<1x32xf32> to vector<8x32xf32>
    %97 = arith.addf %95, %96 : vector<8x32xf32>
    %98 = vector.extract_strided_slice %0 {offsets = [0, 0], sizes = [8, 32], strides = [1, 1]} : vector<16x32xf32> to vector<8x32xf32>
    %99 = arith.addf %98, %97 : vector<8x32xf32>
    %cst_42 = arith.constant dense<0.000000e+00> : vector<8xf32>
    %100 = vector.multi_reduction <add>, %99, %cst_42 [1] : vector<8x32xf32> to vector<8xf32>
    %101 = vector.shape_cast %100 : vector<8xf32> to vector<8x1xf32>
    %cst_43 = arith.constant 3.200000e+01 : f32
    %102 = vector.broadcast %cst_43 : f32 to vector<8x1xf32>
    %103 = arith.divf %101, %102 : vector<8x1xf32>
    %104 = vector.broadcast %103 : vector<8x1xf32> to vector<8x32xf32>
    %105 = arith.subf %99, %104 : vector<8x32xf32>
    %106 = arith.mulf %105, %105 : vector<8x32xf32>
    %cst_44 = arith.constant dense<0.000000e+00> : vector<8xf32>
    %107 = vector.multi_reduction <add>, %106, %cst_44 [1] : vector<8x32xf32> to vector<8xf32>
    %108 = vector.shape_cast %107 : vector<8xf32> to vector<8x1xf32>
    %cst_45 = arith.constant 3.200000e+01 : f32
    %109 = vector.broadcast %cst_45 : f32 to vector<8x1xf32>
    %110 = arith.divf %108, %109 : vector<8x1xf32>
    %111 = vector.broadcast %103 : vector<8x1xf32> to vector<8x32xf32>
    %112 = arith.subf %99, %111 : vector<8x32xf32>
    %cst_46 = arith.constant 9.99999974E-6 : f32
    %113 = vector.broadcast %cst_46 : f32 to vector<8x1xf32>
    %114 = arith.addf %110, %113 : vector<8x1xf32>
    %115 = math.rsqrt %114 : vector<8x1xf32>
    %116 = vector.broadcast %115 : vector<8x1xf32> to vector<8x32xf32>
    %117 = arith.mulf %112, %116 : vector<8x32xf32>
    %118 = vector.broadcast %7 : vector<1x32xf32> to vector<8x32xf32>
    %119 = arith.mulf %117, %118 : vector<8x32xf32>
    %120 = vector.broadcast %8 : vector<1x32xf32> to vector<8x32xf32>
    %121 = arith.addf %119, %120 : vector<8x32xf32>
    %c0_47 = arith.constant 0 : index
    %c0_48 = arith.constant 0 : index
    %122 = vector.load %arg12[%c0_47, %c0_48] : memref<16x32xf32, #tpu.memory_space<vmem>>, vector<8x32xf32>
    tpu.vector_store %arg12[%c0_47, %c0_48], %121 {strides = array<i32>} : memref<16x32xf32, #tpu.memory_space<vmem>>, vector<8x32xf32>,
    %123 = vector.extract_strided_slice %13 {offsets = [8, 0], sizes = [8, 32], strides = [1, 1]} : vector<16x32xf32> to vector<8x32xf32>
    %124 = vector.extract_strided_slice %17 {offsets = [8, 0], sizes = [8, 32], strides = [1, 1]} : vector<16x32xf32> to vector<8x32xf32>
    %125 = vector.extract_strided_slice %18 {offsets = [8, 0], sizes = [8, 32], strides = [1, 1]} : vector<16x32xf32> to vector<8x32xf32>
    %126 = vector.extract_strided_slice %10 {offsets = [1, 0], sizes = [1, 8], strides = [1, 1]} : vector<2x8xf32> to vector<1x8xf32>
    %127 = vector.broadcast %126 : vector<1x8xf32> to vector<8x8xf32>
    %128 = arith.addf %9, %127 : vector<8x8xf32>
    %129 = vector.extract_strided_slice %123 {offsets = [0, 0], sizes = [8, 8], strides = [1, 1]} : vector<8x32xf32> to vector<8x8xf32>
    %130 = vector.extract_strided_slice %124 {offsets = [0, 0], sizes = [8, 8], strides = [1, 1]} : vector<8x32xf32> to vector<8x8xf32>
    %cst_49 = arith.constant dense<0.000000e+00> : vector<8x8xf32>
    %131 = tpu.matmul %129, %130, %cst_49 {dimension_numbers = #tpu.dot_dimension_numbers<[1], [1], [0], [0], [0, 0, 1, 0], [], []>} : vector<8x8xf32>, vector<8x8xf32>, vector<8x8xf32> -> vector<8x8xf32>
    %132 = arith.addf %131, %128 : vector<8x8xf32>
    %cst_50 = arith.constant dense<0xFF800000> : vector<8xf32>
    %133 = vector.multi_reduction <maximumf>, %132, %cst_50 [1] : vector<8x8xf32> to vector<8xf32>
    %134 = vector.shape_cast %133 : vector<8xf32> to vector<8x1xf32>
    %135 = vector.broadcast %134 : vector<8x1xf32> to vector<8x8xf32>
    %136 = arith.subf %132, %135 : vector<8x8xf32>
    %137 = math.exp %136 : vector<8x8xf32>
    %cst_51 = arith.constant dense<0.000000e+00> : vector<8xf32>
    %138 = vector.multi_reduction <add>, %137, %cst_51 [1] : vector<8x8xf32> to vector<8xf32>
    %139 = vector.shape_cast %138 : vector<8xf32> to vector<8x1xf32>
    %140 = vector.extract_strided_slice %125 {offsets = [0, 0], sizes = [8, 8], strides = [1, 1]} : vector<8x32xf32> to vector<8x8xf32>
    %cst_52 = arith.constant dense<0.000000e+00> : vector<8x8xf32>
    %141 = tpu.matmul %137, %140, %cst_52 {dimension_numbers = #tpu.dot_dimension_numbers<[1], [0], [0], [1], [0, 0, 1, 1], [], []>} : vector<8x8xf32>, vector<8x8xf32>, vector<8x8xf32> -> vector<8x8xf32>
    %142 = vector.broadcast %139 : vector<8x1xf32> to vector<8x8xf32>
    %143 = arith.divf %141, %142 : vector<8x8xf32>
    %144 = vector.extract_strided_slice %5 {offsets = [0, 0], sizes = [8, 32], strides = [1, 1]} : vector<32x32xf32> to vector<8x32xf32>
    %cst_53 = arith.constant dense<0.000000e+00> : vector<8x32xf32>
    %145 = tpu.matmul %143, %144, %cst_53 {dimension_numbers = #tpu.dot_dimension_numbers<[1], [0], [0], [1], [0, 0, 1, 1], [], []>} : vector<8x8xf32>, vector<8x32xf32>, vector<8x32xf32> -> vector<8x32xf32>
    %146 = vector.extract_strided_slice %123 {offsets = [0, 8], sizes = [8, 8], strides = [1, 1]} : vector<8x32xf32> to vector<8x8xf32>
    %147 = vector.extract_strided_slice %124 {offsets = [0, 8], sizes = [8, 8], strides = [1, 1]} : vector<8x32xf32> to vector<8x8xf32>
    %cst_54 = arith.constant dense<0.000000e+00> : vector<8x8xf32>
    %148 = tpu.matmul %146, %147, %cst_54 {dimension_numbers = #tpu.dot_dimension_numbers<[1], [1], [0], [0], [0, 0, 1, 0], [], []>} : vector<8x8xf32>, vector<8x8xf32>, vector<8x8xf32> -> vector<8x8xf32>
    %149 = arith.addf %148, %128 : vector<8x8xf32>
    %cst_55 = arith.constant dense<0xFF800000> : vector<8xf32>
    %150 = vector.multi_reduction <maximumf>, %149, %cst_55 [1] : vector<8x8xf32> to vector<8xf32>
    %151 = vector.shape_cast %150 : vector<8xf32> to vector<8x1xf32>
    %152 = vector.broadcast %151 : vector<8x1xf32> to vector<8x8xf32>
    %153 = arith.subf %149, %152 : vector<8x8xf32>
    %154 = math.exp %153 : vector<8x8xf32>
    %cst_56 = arith.constant dense<0.000000e+00> : vector<8xf32>
    %155 = vector.multi_reduction <add>, %154, %cst_56 [1] : vector<8x8xf32> to vector<8xf32>
    %156 = vector.shape_cast %155 : vector<8xf32> to vector<8x1xf32>
    %157 = vector.extract_strided_slice %125 {offsets = [0, 8], sizes = [8, 8], strides = [1, 1]} : vector<8x32xf32> to vector<8x8xf32>
    %cst_57 = arith.constant dense<0.000000e+00> : vector<8x8xf32>
    %158 = tpu.matmul %154, %157, %cst_57 {dimension_numbers = #tpu.dot_dimension_numbers<[1], [0], [0], [1], [0, 0, 1, 1], [], []>} : vector<8x8xf32>, vector<8x8xf32>, vector<8x8xf32> -> vector<8x8xf32>
    %159 = vector.broadcast %156 : vector<8x1xf32> to vector<8x8xf32>
    %160 = arith.divf %158, %159 : vector<8x8xf32>
    %161 = vector.extract_strided_slice %5 {offsets = [8, 0], sizes = [8, 32], strides = [1, 1]} : vector<32x32xf32> to vector<8x32xf32>
    %cst_58 = arith.constant dense<0.000000e+00> : vector<8x32xf32>
    %162 = tpu.matmul %160, %161, %cst_58 {dimension_numbers = #tpu.dot_dimension_numbers<[1], [0], [0], [1], [0, 0, 1, 1], [], []>} : vector<8x8xf32>, vector<8x32xf32>, vector<8x32xf32> -> vector<8x32xf32>
    %163 = arith.addf %145, %162 : vector<8x32xf32>
    %164 = vector.extract_strided_slice %123 {offsets = [0, 16], sizes = [8, 8], strides = [1, 1]} : vector<8x32xf32> to vector<8x8xf32>
    %165 = vector.extract_strided_slice %124 {offsets = [0, 16], sizes = [8, 8], strides = [1, 1]} : vector<8x32xf32> to vector<8x8xf32>
    %cst_59 = arith.constant dense<0.000000e+00> : vector<8x8xf32>
    %166 = tpu.matmul %164, %165, %cst_59 {dimension_numbers = #tpu.dot_dimension_numbers<[1], [1], [0], [0], [0, 0, 1, 0], [], []>} : vector<8x8xf32>, vector<8x8xf32>, vector<8x8xf32> -> vector<8x8xf32>
    %167 = arith.addf %166, %128 : vector<8x8xf32>
    %cst_60 = arith.constant dense<0xFF800000> : vector<8xf32>
    %168 = vector.multi_reduction <maximumf>, %167, %cst_60 [1] : vector<8x8xf32> to vector<8xf32>
    %169 = vector.shape_cast %168 : vector<8xf32> to vector<8x1xf32>
    %170 = vector.broadcast %169 : vector<8x1xf32> to vector<8x8xf32>
    %171 = arith.subf %167, %170 : vector<8x8xf32>
    %172 = math.exp %171 : vector<8x8xf32>
    %cst_61 = arith.constant dense<0.000000e+00> : vector<8xf32>
    %173 = vector.multi_reduction <add>, %172, %cst_61 [1] : vector<8x8xf32> to vector<8xf32>
    %174 = vector.shape_cast %173 : vector<8xf32> to vector<8x1xf32>
    %175 = vector.extract_strided_slice %125 {offsets = [0, 16], sizes = [8, 8], strides = [1, 1]} : vector<8x32xf32> to vector<8x8xf32>
    %cst_62 = arith.constant dense<0.000000e+00> : vector<8x8xf32>
    %176 = tpu.matmul %172, %175, %cst_62 {dimension_numbers = #tpu.dot_dimension_numbers<[1], [0], [0], [1], [0, 0, 1, 1], [], []>} : vector<8x8xf32>, vector<8x8xf32>, vector<8x8xf32> -> vector<8x8xf32>
    %177 = vector.broadcast %174 : vector<8x1xf32> to vector<8x8xf32>
    %178 = arith.divf %176, %177 : vector<8x8xf32>
    %179 = vector.extract_strided_slice %5 {offsets = [16, 0], sizes = [8, 32], strides = [1, 1]} : vector<32x32xf32> to vector<8x32xf32>
    %cst_63 = arith.constant dense<0.000000e+00> : vector<8x32xf32>
    %180 = tpu.matmul %178, %179, %cst_63 {dimension_numbers = #tpu.dot_dimension_numbers<[1], [0], [0], [1], [0, 0, 1, 1], [], []>} : vector<8x8xf32>, vector<8x32xf32>, vector<8x32xf32> -> vector<8x32xf32>
    %181 = arith.addf %163, %180 : vector<8x32xf32>
    %182 = vector.extract_strided_slice %123 {offsets = [0, 24], sizes = [8, 8], strides = [1, 1]} : vector<8x32xf32> to vector<8x8xf32>
    %183 = vector.extract_strided_slice %124 {offsets = [0, 24], sizes = [8, 8], strides = [1, 1]} : vector<8x32xf32> to vector<8x8xf32>
    %cst_64 = arith.constant dense<0.000000e+00> : vector<8x8xf32>
    %184 = tpu.matmul %182, %183, %cst_64 {dimension_numbers = #tpu.dot_dimension_numbers<[1], [1], [0], [0], [0, 0, 1, 0], [], []>} : vector<8x8xf32>, vector<8x8xf32>, vector<8x8xf32> -> vector<8x8xf32>
    %185 = arith.addf %184, %128 : vector<8x8xf32>
    %cst_65 = arith.constant dense<0xFF800000> : vector<8xf32>
    %186 = vector.multi_reduction <maximumf>, %185, %cst_65 [1] : vector<8x8xf32> to vector<8xf32>
    %187 = vector.shape_cast %186 : vector<8xf32> to vector<8x1xf32>
    %188 = vector.broadcast %187 : vector<8x1xf32> to vector<8x8xf32>
    %189 = arith.subf %185, %188 : vector<8x8xf32>
    %190 = math.exp %189 : vector<8x8xf32>
    %cst_66 = arith.constant dense<0.000000e+00> : vector<8xf32>
    %191 = vector.multi_reduction <add>, %190, %cst_66 [1] : vector<8x8xf32> to vector<8xf32>
    %192 = vector.shape_cast %191 : vector<8xf32> to vector<8x1xf32>
    %193 = vector.extract_strided_slice %125 {offsets = [0, 24], sizes = [8, 8], strides = [1, 1]} : vector<8x32xf32> to vector<8x8xf32>
    %cst_67 = arith.constant dense<0.000000e+00> : vector<8x8xf32>
    %194 = tpu.matmul %190, %193, %cst_67 {dimension_numbers = #tpu.dot_dimension_numbers<[1], [0], [0], [1], [0, 0, 1, 1], [], []>} : vector<8x8xf32>, vector<8x8xf32>, vector<8x8xf32> -> vector<8x8xf32>
    %195 = vector.broadcast %192 : vector<8x1xf32> to vector<8x8xf32>
    %196 = arith.divf %194, %195 : vector<8x8xf32>
    %197 = vector.extract_strided_slice %5 {offsets = [24, 0], sizes = [8, 32], strides = [1, 1]} : vector<32x32xf32> to vector<8x32xf32>
    %cst_68 = arith.constant dense<0.000000e+00> : vector<8x32xf32>
    %198 = tpu.matmul %196, %197, %cst_68 {dimension_numbers = #tpu.dot_dimension_numbers<[1], [0], [0], [1], [0, 0, 1, 1], [], []>} : vector<8x8xf32>, vector<8x32xf32>, vector<8x32xf32> -> vector<8x32xf32>
    %199 = arith.addf %181, %198 : vector<8x32xf32>
    %200 = vector.broadcast %6 : vector<1x32xf32> to vector<8x32xf32>
    %201 = arith.addf %199, %200 : vector<8x32xf32>
    %202 = vector.extract_strided_slice %0 {offsets = [8, 0], sizes = [8, 32], strides = [1, 1]} : vector<16x32xf32> to vector<8x32xf32>
    %203 = arith.addf %202, %201 : vector<8x32xf32>
    %cst_69 = arith.constant dense<0.000000e+00> : vector<8xf32>
    %204 = vector.multi_reduction <add>, %203, %cst_69 [1] : vector<8x32xf32> to vector<8xf32>
    %205 = vector.shape_cast %204 : vector<8xf32> to vector<8x1xf32>
    %cst_70 = arith.constant 3.200000e+01 : f32
    %206 = vector.broadcast %cst_70 : f32 to vector<8x1xf32>
    %207 = arith.divf %205, %206 : vector<8x1xf32>
    %208 = vector.broadcast %207 : vector<8x1xf32> to vector<8x32xf32>
    %209 = arith.subf %203, %208 : vector<8x32xf32>
    %210 = arith.mulf %209, %209 : vector<8x32xf32>
    %cst_71 = arith.constant dense<0.000000e+00> : vector<8xf32>
    %211 = vector.multi_reduction <add>, %210, %cst_71 [1] : vector<8x32xf32> to vector<8xf32>
    %212 = vector.shape_cast %211 : vector<8xf32> to vector<8x1xf32>
    %cst_72 = arith.constant 3.200000e+01 : f32
    %213 = vector.broadcast %cst_72 : f32 to vector<8x1xf32>
    %214 = arith.divf %212, %213 : vector<8x1xf32>
    %215 = vector.broadcast %207 : vector<8x1xf32> to vector<8x32xf32>
    %216 = arith.subf %203, %215 : vector<8x32xf32>
    %cst_73 = arith.constant 9.99999974E-6 : f32
    %217 = vector.broadcast %cst_73 : f32 to vector<8x1xf32>
    %218 = arith.addf %214, %217 : vector<8x1xf32>
    %219 = math.rsqrt %218 : vector<8x1xf32>
    %220 = vector.broadcast %219 : vector<8x1xf32> to vector<8x32xf32>
    %221 = arith.mulf %216, %220 : vector<8x32xf32>
    %222 = vector.broadcast %7 : vector<1x32xf32> to vector<8x32xf32>
    %223 = arith.mulf %221, %222 : vector<8x32xf32>
    %224 = vector.broadcast %8 : vector<1x32xf32> to vector<8x32xf32>
    %225 = arith.addf %223, %224 : vector<8x32xf32>
    %c8 = arith.constant 8 : index
    %c0_74 = arith.constant 0 : index
    %226 = vector.load %arg12[%c8, %c0_74] : memref<16x32xf32, #tpu.memory_space<vmem>>, vector<8x32xf32>
    tpu.vector_store %arg12[%c8, %c0_74], %225 {strides = array<i32>} : memref<16x32xf32, #tpu.memory_space<vmem>>, vector<8x32xf32>,
    return
  }
  func.func @transform_0(%arg0: i32) -> (i32, i32) {
    %c0_i32 = arith.constant 0 : i32
    %c0_i32_0 = arith.constant 0 : i32
    %c0_i32_1 = arith.constant 0 : i32
    return %c0_i32, %c0_i32_0 : i32, i32
  }
  func.func @transform_1(%arg0: i32) -> (i32, i32) {
    %c0_i32 = arith.constant 0 : i32
    %c0_i32_0 = arith.constant 0 : i32
    %c0_i32_1 = arith.constant 0 : i32
    return %c0_i32, %c0_i32_0 : i32, i32
  }
  func.func @transform_2(%arg0: i32) -> (i32, i32) {
    %c0_i32 = arith.constant 0 : i32
    %c0_i32_0 = arith.constant 0 : i32
    %c0_i32_1 = arith.constant 0 : i32
    return %c0_i32, %c0_i32_0 : i32, i32
  }
  func.func @transform_3(%arg0: i32) -> (i32, i32) {
    %c0_i32 = arith.constant 0 : i32
    %c0_i32_0 = arith.constant 0 : i32
    %c0_i32_1 = arith.constant 0 : i32
    return %c0_i32, %c0_i32_0 : i32, i32
  }
  func.func @transform_4(%arg0: i32) -> (i32, i32) {
    %c0_i32 = arith.constant 0 : i32
    %c0_i32_0 = arith.constant 0 : i32
    %c0_i32_1 = arith.constant 0 : i32
    return %c0_i32, %c0_i32_0 : i32, i32
  }
  func.func @transform_5(%arg0: i32) -> (i32, i32) {
    %c0_i32 = arith.constant 0 : i32
    %c0_i32_0 = arith.constant 0 : i32
    %c0_i32_1 = arith.constant 0 : i32
    return %c0_i32, %c0_i32_0 : i32, i32
  }
  func.func @transform_6(%arg0: i32) -> (i32, i32) {
    %c0_i32 = arith.constant 0 : i32
    %c0_i32_0 = arith.constant 0 : i32
    %c0_i32_1 = arith.constant 0 : i32
    return %c0_i32, %c0_i32_0 : i32, i32
  }
  func.func @transform_7(%arg0: i32) -> (i32, i32) {
    %c0_i32 = arith.constant 0 : i32
    %c0_i32_0 = arith.constant 0 : i32
    %c0_i32_1 = arith.constant 0 : i32
    return %c0_i32, %c0_i32_0 : i32, i32
  }
  func.func @transform_8(%arg0: i32) -> (i32, i32) {
    %c0_i32 = arith.constant 0 : i32
    %c0_i32_0 = arith.constant 0 : i32
    %c0_i32_1 = arith.constant 0 : i32
    return %c0_i32, %c0_i32_0 : i32, i32
  }
  func.func @transform_9(%arg0: i32) -> (i32, i32) {
    %c0_i32 = arith.constant 0 : i32
    %c0_i32_0 = arith.constant 0 : i32
    %c0_i32_1 = arith.constant 0 : i32
    return %c0_i32, %c0_i32_0 : i32, i32
  }
  func.func @transform_10(%arg0: i32) -> (i32, i32) {
    %c0_i32 = arith.constant 0 : i32
    %c0_i32_0 = arith.constant 0 : i32
    %c0_i32_1 = arith.constant 0 : i32
    return %c0_i32, %c0_i32_0 : i32, i32
  }
  func.func @transform_11(%arg0: i32) -> (i32, i32) {
    %c0_i32 = arith.constant 0 : i32
    %c0_i32_0 = arith.constant 0 : i32
    %c0_i32_1 = arith.constant 0 : i32
    return %c0_i32, %c0_i32_0 : i32, i32
  }
}

module attributes {stable_mosaic.version = 11 : i64} {
  func.func @_ffn_ln_kernel(%arg0: i32, %arg1: memref<16x32xf32, #tpu.memory_space<vmem>>, %arg2: memref<32x64xf32, #tpu.memory_space<vmem>>, %arg3: memref<1x64xf32, #tpu.memory_space<vmem>>, %arg4: memref<64x32xf32, #tpu.memory_space<vmem>>, %arg5: memref<1x32xf32, #tpu.memory_space<vmem>>, %arg6: memref<1x32xf32, #tpu.memory_space<vmem>>, %arg7: memref<1x32xf32, #tpu.memory_space<vmem>>, %arg8: memref<16x32xf32, #tpu.memory_space<vmem>>) attributes {dimension_semantics = [#tpu.dimension_semantics<arbitrary>], iteration_bounds = array<i64: 1>, scalar_prefetch = 0 : i64, scratch_operands = 0 : i64, tpu.core_type = #tpu.core_type<tc>, window_params = [{pipeline_mode = #tpu.pipeline_mode<synchronous>, transform_indices = @transform_0, window_bounds = array<i64: 16, 32>}, {pipeline_mode = #tpu.pipeline_mode<synchronous>, transform_indices = @transform_1, window_bounds = array<i64: 32, 64>}, {pipeline_mode = #tpu.pipeline_mode<synchronous>, transform_indices = @transform_2, window_bounds = array<i64: 1, 64>}, {pipeline_mode = #tpu.pipeline_mode<synchronous>, transform_indices = @transform_3, window_bounds = array<i64: 64, 32>}, {pipeline_mode = #tpu.pipeline_mode<synchronous>, transform_indices = @transform_4, window_bounds = array<i64: 1, 32>}, {pipeline_mode = #tpu.pipeline_mode<synchronous>, transform_indices = @transform_5, window_bounds = array<i64: 1, 32>}, {pipeline_mode = #tpu.pipeline_mode<synchronous>, transform_indices = @transform_6, window_bounds = array<i64: 1, 32>}, {pipeline_mode = #tpu.pipeline_mode<synchronous>, transform_indices = @transform_7, window_bounds = array<i64: 16, 32>}]} {
    %c0 = arith.constant 0 : index
    %c0_0 = arith.constant 0 : index
    %0 = vector.load %arg1[%c0, %c0_0] : memref<16x32xf32, #tpu.memory_space<vmem>>, vector<16x32xf32>
    %c0_1 = arith.constant 0 : index
    %c0_2 = arith.constant 0 : index
    %1 = vector.load %arg2[%c0_1, %c0_2] : memref<32x64xf32, #tpu.memory_space<vmem>>, vector<32x64xf32>
    %c0_3 = arith.constant 0 : index
    %c0_4 = arith.constant 0 : index
    %2 = vector.load %arg3[%c0_3, %c0_4] : memref<1x64xf32, #tpu.memory_space<vmem>>, vector<1x64xf32>
    %c0_5 = arith.constant 0 : index
    %c0_6 = arith.constant 0 : index
    %3 = vector.load %arg4[%c0_5, %c0_6] : memref<64x32xf32, #tpu.memory_space<vmem>>, vector<64x32xf32>
    %c0_7 = arith.constant 0 : index
    %c0_8 = arith.constant 0 : index
    %4 = vector.load %arg5[%c0_7, %c0_8] : memref<1x32xf32, #tpu.memory_space<vmem>>, vector<1x32xf32>
    %c0_9 = arith.constant 0 : index
    %c0_10 = arith.constant 0 : index
    %5 = vector.load %arg6[%c0_9, %c0_10] : memref<1x32xf32, #tpu.memory_space<vmem>>, vector<1x32xf32>
    %c0_11 = arith.constant 0 : index
    %c0_12 = arith.constant 0 : index
    %6 = vector.load %arg7[%c0_11, %c0_12] : memref<1x32xf32, #tpu.memory_space<vmem>>, vector<1x32xf32>
    %cst = arith.constant dense<0.000000e+00> : vector<16x64xf32>
    %7 = tpu.matmul %0, %1, %cst {dimension_numbers = #tpu.dot_dimension_numbers<[1], [0], [0], [1], [0, 0, 1, 1], [], []>} : vector<16x32xf32>, vector<32x64xf32>, vector<16x64xf32> -> vector<16x64xf32>
    %8 = vector.broadcast %2 : vector<1x64xf32> to vector<16x64xf32>
    %9 = arith.addf %7, %8 : vector<16x64xf32>
    %cst_13 = arith.constant 0.000000e+00 : f32
    %10 = vector.broadcast %cst_13 : f32 to vector<16x64xf32>
    %11 = arith.maximumf %9, %10 : vector<16x64xf32>
    %cst_14 = arith.constant dense<0.000000e+00> : vector<16x32xf32>
    %12 = tpu.matmul %11, %3, %cst_14 {dimension_numbers = #tpu.dot_dimension_numbers<[1], [0], [0], [1], [0, 0, 1, 1], [], []>} : vector<16x64xf32>, vector<64x32xf32>, vector<16x32xf32> -> vector<16x32xf32>
    %13 = arith.addf %0, %12 : vector<16x32xf32>
    %14 = vector.broadcast %4 : vector<1x32xf32> to vector<16x32xf32>
    %15 = arith.addf %13, %14 : vector<16x32xf32>
    %cst_15 = arith.constant dense<0.000000e+00> : vector<16xf32>
    %16 = vector.multi_reduction <add>, %15, %cst_15 [1] : vector<16x32xf32> to vector<16xf32>
    %17 = vector.shape_cast %16 : vector<16xf32> to vector<16x1xf32>
    %cst_16 = arith.constant 3.200000e+01 : f32
    %18 = vector.broadcast %cst_16 : f32 to vector<16x1xf32>
    %19 = arith.divf %17, %18 : vector<16x1xf32>
    %20 = vector.broadcast %19 : vector<16x1xf32> to vector<16x32xf32>
    %21 = arith.subf %15, %20 : vector<16x32xf32>
    %22 = arith.mulf %21, %21 : vector<16x32xf32>
    %cst_17 = arith.constant dense<0.000000e+00> : vector<16xf32>
    %23 = vector.multi_reduction <add>, %22, %cst_17 [1] : vector<16x32xf32> to vector<16xf32>
    %24 = vector.shape_cast %23 : vector<16xf32> to vector<16x1xf32>
    %cst_18 = arith.constant 3.200000e+01 : f32
    %25 = vector.broadcast %cst_18 : f32 to vector<16x1xf32>
    %26 = arith.divf %24, %25 : vector<16x1xf32>
    %27 = vector.broadcast %19 : vector<16x1xf32> to vector<16x32xf32>
    %28 = arith.subf %15, %27 : vector<16x32xf32>
    %cst_19 = arith.constant 9.99999974E-6 : f32
    %29 = vector.broadcast %cst_19 : f32 to vector<16x1xf32>
    %30 = arith.addf %26, %29 : vector<16x1xf32>
    %31 = math.rsqrt %30 : vector<16x1xf32>
    %32 = vector.broadcast %31 : vector<16x1xf32> to vector<16x32xf32>
    %33 = arith.mulf %28, %32 : vector<16x32xf32>
    %34 = vector.broadcast %5 : vector<1x32xf32> to vector<16x32xf32>
    %35 = arith.mulf %33, %34 : vector<16x32xf32>
    %36 = vector.broadcast %6 : vector<1x32xf32> to vector<16x32xf32>
    %37 = arith.addf %35, %36 : vector<16x32xf32>
    %c0_20 = arith.constant 0 : index
    %c0_21 = arith.constant 0 : index
    %38 = vector.load %arg8[%c0_20, %c0_21] : memref<16x32xf32, #tpu.memory_space<vmem>>, vector<16x32xf32>
    tpu.vector_store %arg8[%c0_20, %c0_21], %37 {strides = array<i32>} : memref<16x32xf32, #tpu.memory_space<vmem>>, vector<16x32xf32>,
    return
  }
  func.func @transform_0(%arg0: i32) -> (i32, i32) {
    %c0_i32 = arith.constant 0 : i32
    %c0_i32_0 = arith.constant 0 : i32
    %c0_i32_1 = arith.constant 0 : i32
    return %c0_i32, %c0_i32_0 : i32, i32
  }
  func.func @transform_1(%arg0: i32) -> (i32, i32) {
    %c0_i32 = arith.constant 0 : i32
    %c0_i32_0 = arith.constant 0 : i32
    %c0_i32_1 = arith.constant 0 : i32
    return %c0_i32, %c0_i32_0 : i32, i32
  }
  func.func @transform_2(%arg0: i32) -> (i32, i32) {
    %c0_i32 = arith.constant 0 : i32
    %c0_i32_0 = arith.constant 0 : i32
    %c0_i32_1 = arith.constant 0 : i32
    return %c0_i32, %c0_i32_0 : i32, i32
  }
  func.func @transform_3(%arg0: i32) -> (i32, i32) {
    %c0_i32 = arith.constant 0 : i32
    %c0_i32_0 = arith.constant 0 : i32
    %c0_i32_1 = arith.constant 0 : i32
    return %c0_i32, %c0_i32_0 : i32, i32
  }
  func.func @transform_4(%arg0: i32) -> (i32, i32) {
    %c0_i32 = arith.constant 0 : i32
    %c0_i32_0 = arith.constant 0 : i32
    %c0_i32_1 = arith.constant 0 : i32
    return %c0_i32, %c0_i32_0 : i32, i32
  }
  func.func @transform_5(%arg0: i32) -> (i32, i32) {
    %c0_i32 = arith.constant 0 : i32
    %c0_i32_0 = arith.constant 0 : i32
    %c0_i32_1 = arith.constant 0 : i32
    return %c0_i32, %c0_i32_0 : i32, i32
  }
  func.func @transform_6(%arg0: i32) -> (i32, i32) {
    %c0_i32 = arith.constant 0 : i32
    %c0_i32_0 = arith.constant 0 : i32
    %c0_i32_1 = arith.constant 0 : i32
    return %c0_i32, %c0_i32_0 : i32, i32
  }
  func.func @transform_7(%arg0: i32) -> (i32, i32) {
    %c0_i32 = arith.constant 0 : i32
    %c0_i32_0 = arith.constant 0 : i32
    %c0_i32_1 = arith.constant 0 : i32
    return %c0_i32, %c0_i32_0 : i32, i32
  }
}

module attributes {stable_mosaic.version = 11 : i64} {
  func.func @_ffn_ln_final_kernel(%arg0: i32, %arg1: memref<16x32xf32, #tpu.memory_space<vmem>>, %arg2: memref<32x64xf32, #tpu.memory_space<vmem>>, %arg3: memref<1x64xf32, #tpu.memory_space<vmem>>, %arg4: memref<64x32xf32, #tpu.memory_space<vmem>>, %arg5: memref<1x32xf32, #tpu.memory_space<vmem>>, %arg6: memref<1x32xf32, #tpu.memory_space<vmem>>, %arg7: memref<1x32xf32, #tpu.memory_space<vmem>>, %arg8: memref<1x32xf32, #tpu.memory_space<vmem>>, %arg9: memref<1x32xf32, #tpu.memory_space<vmem>>, %arg10: memref<16x32xf32, #tpu.memory_space<vmem>>) attributes {dimension_semantics = [#tpu.dimension_semantics<arbitrary>], iteration_bounds = array<i64: 1>, scalar_prefetch = 0 : i64, scratch_operands = 0 : i64, tpu.core_type = #tpu.core_type<tc>, window_params = [{pipeline_mode = #tpu.pipeline_mode<synchronous>, transform_indices = @transform_0, window_bounds = array<i64: 16, 32>}, {pipeline_mode = #tpu.pipeline_mode<synchronous>, transform_indices = @transform_1, window_bounds = array<i64: 32, 64>}, {pipeline_mode = #tpu.pipeline_mode<synchronous>, transform_indices = @transform_2, window_bounds = array<i64: 1, 64>}, {pipeline_mode = #tpu.pipeline_mode<synchronous>, transform_indices = @transform_3, window_bounds = array<i64: 64, 32>}, {pipeline_mode = #tpu.pipeline_mode<synchronous>, transform_indices = @transform_4, window_bounds = array<i64: 1, 32>}, {pipeline_mode = #tpu.pipeline_mode<synchronous>, transform_indices = @transform_5, window_bounds = array<i64: 1, 32>}, {pipeline_mode = #tpu.pipeline_mode<synchronous>, transform_indices = @transform_6, window_bounds = array<i64: 1, 32>}, {pipeline_mode = #tpu.pipeline_mode<synchronous>, transform_indices = @transform_7, window_bounds = array<i64: 1, 32>}, {pipeline_mode = #tpu.pipeline_mode<synchronous>, transform_indices = @transform_8, window_bounds = array<i64: 1, 32>}, {pipeline_mode = #tpu.pipeline_mode<synchronous>, transform_indices = @transform_9, window_bounds = array<i64: 16, 32>}]} {
    %c0 = arith.constant 0 : index
    %c0_0 = arith.constant 0 : index
    %0 = vector.load %arg1[%c0, %c0_0] : memref<16x32xf32, #tpu.memory_space<vmem>>, vector<16x32xf32>
    %c0_1 = arith.constant 0 : index
    %c0_2 = arith.constant 0 : index
    %1 = vector.load %arg2[%c0_1, %c0_2] : memref<32x64xf32, #tpu.memory_space<vmem>>, vector<32x64xf32>
    %c0_3 = arith.constant 0 : index
    %c0_4 = arith.constant 0 : index
    %2 = vector.load %arg3[%c0_3, %c0_4] : memref<1x64xf32, #tpu.memory_space<vmem>>, vector<1x64xf32>
    %c0_5 = arith.constant 0 : index
    %c0_6 = arith.constant 0 : index
    %3 = vector.load %arg4[%c0_5, %c0_6] : memref<64x32xf32, #tpu.memory_space<vmem>>, vector<64x32xf32>
    %c0_7 = arith.constant 0 : index
    %c0_8 = arith.constant 0 : index
    %4 = vector.load %arg5[%c0_7, %c0_8] : memref<1x32xf32, #tpu.memory_space<vmem>>, vector<1x32xf32>
    %c0_9 = arith.constant 0 : index
    %c0_10 = arith.constant 0 : index
    %5 = vector.load %arg6[%c0_9, %c0_10] : memref<1x32xf32, #tpu.memory_space<vmem>>, vector<1x32xf32>
    %c0_11 = arith.constant 0 : index
    %c0_12 = arith.constant 0 : index
    %6 = vector.load %arg7[%c0_11, %c0_12] : memref<1x32xf32, #tpu.memory_space<vmem>>, vector<1x32xf32>
    %cst = arith.constant dense<0.000000e+00> : vector<16x64xf32>
    %7 = tpu.matmul %0, %1, %cst {dimension_numbers = #tpu.dot_dimension_numbers<[1], [0], [0], [1], [0, 0, 1, 1], [], []>} : vector<16x32xf32>, vector<32x64xf32>, vector<16x64xf32> -> vector<16x64xf32>
    %8 = vector.broadcast %2 : vector<1x64xf32> to vector<16x64xf32>
    %9 = arith.addf %7, %8 : vector<16x64xf32>
    %cst_13 = arith.constant 0.000000e+00 : f32
    %10 = vector.broadcast %cst_13 : f32 to vector<16x64xf32>
    %11 = arith.maximumf %9, %10 : vector<16x64xf32>
    %cst_14 = arith.constant dense<0.000000e+00> : vector<16x32xf32>
    %12 = tpu.matmul %11, %3, %cst_14 {dimension_numbers = #tpu.dot_dimension_numbers<[1], [0], [0], [1], [0, 0, 1, 1], [], []>} : vector<16x64xf32>, vector<64x32xf32>, vector<16x32xf32> -> vector<16x32xf32>
    %13 = arith.addf %0, %12 : vector<16x32xf32>
    %14 = vector.broadcast %4 : vector<1x32xf32> to vector<16x32xf32>
    %15 = arith.addf %13, %14 : vector<16x32xf32>
    %cst_15 = arith.constant dense<0.000000e+00> : vector<16xf32>
    %16 = vector.multi_reduction <add>, %15, %cst_15 [1] : vector<16x32xf32> to vector<16xf32>
    %17 = vector.shape_cast %16 : vector<16xf32> to vector<16x1xf32>
    %cst_16 = arith.constant 3.200000e+01 : f32
    %18 = vector.broadcast %cst_16 : f32 to vector<16x1xf32>
    %19 = arith.divf %17, %18 : vector<16x1xf32>
    %20 = vector.broadcast %19 : vector<16x1xf32> to vector<16x32xf32>
    %21 = arith.subf %15, %20 : vector<16x32xf32>
    %22 = arith.mulf %21, %21 : vector<16x32xf32>
    %cst_17 = arith.constant dense<0.000000e+00> : vector<16xf32>
    %23 = vector.multi_reduction <add>, %22, %cst_17 [1] : vector<16x32xf32> to vector<16xf32>
    %24 = vector.shape_cast %23 : vector<16xf32> to vector<16x1xf32>
    %cst_18 = arith.constant 3.200000e+01 : f32
    %25 = vector.broadcast %cst_18 : f32 to vector<16x1xf32>
    %26 = arith.divf %24, %25 : vector<16x1xf32>
    %27 = vector.broadcast %19 : vector<16x1xf32> to vector<16x32xf32>
    %28 = arith.subf %15, %27 : vector<16x32xf32>
    %cst_19 = arith.constant 9.99999974E-6 : f32
    %29 = vector.broadcast %cst_19 : f32 to vector<16x1xf32>
    %30 = arith.addf %26, %29 : vector<16x1xf32>
    %31 = math.rsqrt %30 : vector<16x1xf32>
    %32 = vector.broadcast %31 : vector<16x1xf32> to vector<16x32xf32>
    %33 = arith.mulf %28, %32 : vector<16x32xf32>
    %34 = vector.broadcast %5 : vector<1x32xf32> to vector<16x32xf32>
    %35 = arith.mulf %33, %34 : vector<16x32xf32>
    %36 = vector.broadcast %6 : vector<1x32xf32> to vector<16x32xf32>
    %37 = arith.addf %35, %36 : vector<16x32xf32>
    %c0_20 = arith.constant 0 : index
    %c0_21 = arith.constant 0 : index
    %38 = vector.load %arg8[%c0_20, %c0_21] : memref<1x32xf32, #tpu.memory_space<vmem>>, vector<1x32xf32>
    %c0_22 = arith.constant 0 : index
    %c0_23 = arith.constant 0 : index
    %39 = vector.load %arg9[%c0_22, %c0_23] : memref<1x32xf32, #tpu.memory_space<vmem>>, vector<1x32xf32>
    %cst_24 = arith.constant dense<0.000000e+00> : vector<16xf32>
    %40 = vector.multi_reduction <add>, %37, %cst_24 [1] : vector<16x32xf32> to vector<16xf32>
    %41 = vector.shape_cast %40 : vector<16xf32> to vector<16x1xf32>
    %cst_25 = arith.constant 3.200000e+01 : f32
    %42 = vector.broadcast %cst_25 : f32 to vector<16x1xf32>
    %43 = arith.divf %41, %42 : vector<16x1xf32>
    %44 = vector.broadcast %43 : vector<16x1xf32> to vector<16x32xf32>
    %45 = arith.subf %37, %44 : vector<16x32xf32>
    %46 = arith.mulf %45, %45 : vector<16x32xf32>
    %cst_26 = arith.constant dense<0.000000e+00> : vector<16xf32>
    %47 = vector.multi_reduction <add>, %46, %cst_26 [1] : vector<16x32xf32> to vector<16xf32>
    %48 = vector.shape_cast %47 : vector<16xf32> to vector<16x1xf32>
    %cst_27 = arith.constant 3.200000e+01 : f32
    %49 = vector.broadcast %cst_27 : f32 to vector<16x1xf32>
    %50 = arith.divf %48, %49 : vector<16x1xf32>
    %51 = vector.broadcast %43 : vector<16x1xf32> to vector<16x32xf32>
    %52 = arith.subf %37, %51 : vector<16x32xf32>
    %cst_28 = arith.constant 9.99999974E-6 : f32
    %53 = vector.broadcast %cst_28 : f32 to vector<16x1xf32>
    %54 = arith.addf %50, %53 : vector<16x1xf32>
    %55 = math.rsqrt %54 : vector<16x1xf32>
    %56 = vector.broadcast %55 : vector<16x1xf32> to vector<16x32xf32>
    %57 = arith.mulf %52, %56 : vector<16x32xf32>
    %58 = vector.broadcast %38 : vector<1x32xf32> to vector<16x32xf32>
    %59 = arith.mulf %57, %58 : vector<16x32xf32>
    %60 = vector.broadcast %39 : vector<1x32xf32> to vector<16x32xf32>
    %61 = arith.addf %59, %60 : vector<16x32xf32>
    %c0_29 = arith.constant 0 : index
    %c0_30 = arith.constant 0 : index
    %62 = vector.load %arg10[%c0_29, %c0_30] : memref<16x32xf32, #tpu.memory_space<vmem>>, vector<16x32xf32>
    tpu.vector_store %arg10[%c0_29, %c0_30], %61 {strides = array<i32>} : memref<16x32xf32, #tpu.memory_space<vmem>>, vector<16x32xf32>,
    return
  }
  func.func @transform_0(%arg0: i32) -> (i32, i32) {
    %c0_i32 = arith.constant 0 : i32
    %c0_i32_0 = arith.constant 0 : i32
    %c0_i32_1 = arith.constant 0 : i32
    return %c0_i32, %c0_i32_0 : i32, i32
  }
  func.func @transform_1(%arg0: i32) -> (i32, i32) {
    %c0_i32 = arith.constant 0 : i32
    %c0_i32_0 = arith.constant 0 : i32
    %c0_i32_1 = arith.constant 0 : i32
    return %c0_i32, %c0_i32_0 : i32, i32
  }
  func.func @transform_2(%arg0: i32) -> (i32, i32) {
    %c0_i32 = arith.constant 0 : i32
    %c0_i32_0 = arith.constant 0 : i32
    %c0_i32_1 = arith.constant 0 : i32
    return %c0_i32, %c0_i32_0 : i32, i32
  }
  func.func @transform_3(%arg0: i32) -> (i32, i32) {
    %c0_i32 = arith.constant 0 : i32
    %c0_i32_0 = arith.constant 0 : i32
    %c0_i32_1 = arith.constant 0 : i32
    return %c0_i32, %c0_i32_0 : i32, i32
  }
  func.func @transform_4(%arg0: i32) -> (i32, i32) {
    %c0_i32 = arith.constant 0 : i32
    %c0_i32_0 = arith.constant 0 : i32
    %c0_i32_1 = arith.constant 0 : i32
    return %c0_i32, %c0_i32_0 : i32, i32
  }
  func.func @transform_5(%arg0: i32) -> (i32, i32) {
    %c0_i32 = arith.constant 0 : i32
    %c0_i32_0 = arith.constant 0 : i32
    %c0_i32_1 = arith.constant 0 : i32
    return %c0_i32, %c0_i32_0 : i32, i32
  }
  func.func @transform_6(%arg0: i32) -> (i32, i32) {
    %c0_i32 = arith.constant 0 : i32
    %c0_i32_0 = arith.constant 0 : i32
    %c0_i32_1 = arith.constant 0 : i32
    return %c0_i32, %c0_i32_0 : i32, i32
  }
  func.func @transform_7(%arg0: i32) -> (i32, i32) {
    %c0_i32 = arith.constant 0 : i32
    %c0_i32_0 = arith.constant 0 : i32
    %c0_i32_1 = arith.constant 0 : i32
    return %c0_i32, %c0_i32_0 : i32, i32
  }
  func.func @transform_8(%arg0: i32) -> (i32, i32) {
    %c0_i32 = arith.constant 0 : i32
    %c0_i32_0 = arith.constant 0 : i32
    %c0_i32_1 = arith.constant 0 : i32
    return %c0_i32, %c0_i32_0 : i32, i32
  }
  func.func @transform_9(%arg0: i32) -> (i32, i32) {
    %c0_i32 = arith.constant 0 : i32
    %c0_i32_0 = arith.constant 0 : i32
    %c0_i32_1 = arith.constant 0 : i32
    return %c0_i32, %c0_i32_0 : i32, i32
  }
}

module attributes {stable_mosaic.version = 11 : i64} {
  func.func @_mha_cross_kernel(%arg0: i32, %arg1: memref<16x32xf32, #tpu.memory_space<vmem>>, %arg2: memref<16x32xf32, #tpu.memory_space<vmem>>, %arg3: memref<32x32xf32, #tpu.memory_space<vmem>>, %arg4: memref<1x32xf32, #tpu.memory_space<vmem>>, %arg5: memref<32x64xf32, #tpu.memory_space<vmem>>, %arg6: memref<1x64xf32, #tpu.memory_space<vmem>>, %arg7: memref<32x32xf32, #tpu.memory_space<vmem>>, %arg8: memref<1x32xf32, #tpu.memory_space<vmem>>, %arg9: memref<1x32xf32, #tpu.memory_space<vmem>>, %arg10: memref<1x32xf32, #tpu.memory_space<vmem>>, %arg11: memref<8x8xf32, #tpu.memory_space<vmem>>, %arg12: memref<2x8xf32, #tpu.memory_space<vmem>>, %arg13: memref<16x32xf32, #tpu.memory_space<vmem>>) attributes {dimension_semantics = [#tpu.dimension_semantics<arbitrary>], iteration_bounds = array<i64: 1>, scalar_prefetch = 0 : i64, scratch_operands = 0 : i64, tpu.core_type = #tpu.core_type<tc>, window_params = [{pipeline_mode = #tpu.pipeline_mode<synchronous>, transform_indices = @transform_0, window_bounds = array<i64: 16, 32>}, {pipeline_mode = #tpu.pipeline_mode<synchronous>, transform_indices = @transform_1, window_bounds = array<i64: 16, 32>}, {pipeline_mode = #tpu.pipeline_mode<synchronous>, transform_indices = @transform_2, window_bounds = array<i64: 32, 32>}, {pipeline_mode = #tpu.pipeline_mode<synchronous>, transform_indices = @transform_3, window_bounds = array<i64: 1, 32>}, {pipeline_mode = #tpu.pipeline_mode<synchronous>, transform_indices = @transform_4, window_bounds = array<i64: 32, 64>}, {pipeline_mode = #tpu.pipeline_mode<synchronous>, transform_indices = @transform_5, window_bounds = array<i64: 1, 64>}, {pipeline_mode = #tpu.pipeline_mode<synchronous>, transform_indices = @transform_6, window_bounds = array<i64: 32, 32>}, {pipeline_mode = #tpu.pipeline_mode<synchronous>, transform_indices = @transform_7, window_bounds = array<i64: 1, 32>}, {pipeline_mode = #tpu.pipeline_mode<synchronous>, transform_indices = @transform_8, window_bounds = array<i64: 1, 32>}, {pipeline_mode = #tpu.pipeline_mode<synchronous>, transform_indices = @transform_9, window_bounds = array<i64: 1, 32>}, {pipeline_mode = #tpu.pipeline_mode<synchronous>, transform_indices = @transform_10, window_bounds = array<i64: 8, 8>}, {pipeline_mode = #tpu.pipeline_mode<synchronous>, transform_indices = @transform_11, window_bounds = array<i64: 2, 8>}, {pipeline_mode = #tpu.pipeline_mode<synchronous>, transform_indices = @transform_12, window_bounds = array<i64: 16, 32>}]} {
    %c0 = arith.constant 0 : index
    %c0_0 = arith.constant 0 : index
    %0 = vector.load %arg1[%c0, %c0_0] : memref<16x32xf32, #tpu.memory_space<vmem>>, vector<16x32xf32>
    %c0_1 = arith.constant 0 : index
    %c0_2 = arith.constant 0 : index
    %1 = vector.load %arg2[%c0_1, %c0_2] : memref<16x32xf32, #tpu.memory_space<vmem>>, vector<16x32xf32>
    %c0_3 = arith.constant 0 : index
    %c0_4 = arith.constant 0 : index
    %2 = vector.load %arg3[%c0_3, %c0_4] : memref<32x32xf32, #tpu.memory_space<vmem>>, vector<32x32xf32>
    %c0_5 = arith.constant 0 : index
    %c0_6 = arith.constant 0 : index
    %3 = vector.load %arg4[%c0_5, %c0_6] : memref<1x32xf32, #tpu.memory_space<vmem>>, vector<1x32xf32>
    %c0_7 = arith.constant 0 : index
    %c0_8 = arith.constant 0 : index
    %4 = vector.load %arg5[%c0_7, %c0_8] : memref<32x64xf32, #tpu.memory_space<vmem>>, vector<32x64xf32>
    %c0_9 = arith.constant 0 : index
    %c0_10 = arith.constant 0 : index
    %5 = vector.load %arg6[%c0_9, %c0_10] : memref<1x64xf32, #tpu.memory_space<vmem>>, vector<1x64xf32>
    %c0_11 = arith.constant 0 : index
    %c0_12 = arith.constant 0 : index
    %6 = vector.load %arg7[%c0_11, %c0_12] : memref<32x32xf32, #tpu.memory_space<vmem>>, vector<32x32xf32>
    %c0_13 = arith.constant 0 : index
    %c0_14 = arith.constant 0 : index
    %7 = vector.load %arg8[%c0_13, %c0_14] : memref<1x32xf32, #tpu.memory_space<vmem>>, vector<1x32xf32>
    %c0_15 = arith.constant 0 : index
    %c0_16 = arith.constant 0 : index
    %8 = vector.load %arg9[%c0_15, %c0_16] : memref<1x32xf32, #tpu.memory_space<vmem>>, vector<1x32xf32>
    %c0_17 = arith.constant 0 : index
    %c0_18 = arith.constant 0 : index
    %9 = vector.load %arg10[%c0_17, %c0_18] : memref<1x32xf32, #tpu.memory_space<vmem>>, vector<1x32xf32>
    %c0_19 = arith.constant 0 : index
    %c0_20 = arith.constant 0 : index
    %10 = vector.load %arg11[%c0_19, %c0_20] : memref<8x8xf32, #tpu.memory_space<vmem>>, vector<8x8xf32>
    %c0_21 = arith.constant 0 : index
    %c0_22 = arith.constant 0 : index
    %11 = vector.load %arg12[%c0_21, %c0_22] : memref<2x8xf32, #tpu.memory_space<vmem>>, vector<2x8xf32>
    %cst = arith.constant dense<0.000000e+00> : vector<16x32xf32>
    %12 = tpu.matmul %0, %2, %cst {dimension_numbers = #tpu.dot_dimension_numbers<[1], [0], [0], [1], [0, 0, 1, 1], [], []>} : vector<16x32xf32>, vector<32x32xf32>, vector<16x32xf32> -> vector<16x32xf32>
    %13 = vector.broadcast %3 : vector<1x32xf32> to vector<16x32xf32>
    %14 = arith.addf %12, %13 : vector<16x32xf32>
    %cst_23 = arith.constant dense<0.000000e+00> : vector<16x64xf32>
    %15 = tpu.matmul %1, %4, %cst_23 {dimension_numbers = #tpu.dot_dimension_numbers<[1], [0], [0], [1], [0, 0, 1, 1], [], []>} : vector<16x32xf32>, vector<32x64xf32>, vector<16x64xf32> -> vector<16x64xf32>
    %16 = vector.broadcast %5 : vector<1x64xf32> to vector<16x64xf32>
    %17 = arith.addf %15, %16 : vector<16x64xf32>
    %18 = vector.extract_strided_slice %17 {offsets = [0, 0], sizes = [16, 32], strides = [1, 1]} : vector<16x64xf32> to vector<16x32xf32>
    %19 = vector.extract_strided_slice %17 {offsets = [0, 32], sizes = [16, 32], strides = [1, 1]} : vector<16x64xf32> to vector<16x32xf32>
    %20 = vector.extract_strided_slice %14 {offsets = [0, 0], sizes = [8, 32], strides = [1, 1]} : vector<16x32xf32> to vector<8x32xf32>
    %21 = vector.extract_strided_slice %18 {offsets = [0, 0], sizes = [8, 32], strides = [1, 1]} : vector<16x32xf32> to vector<8x32xf32>
    %22 = vector.extract_strided_slice %19 {offsets = [0, 0], sizes = [8, 32], strides = [1, 1]} : vector<16x32xf32> to vector<8x32xf32>
    %23 = vector.extract_strided_slice %11 {offsets = [0, 0], sizes = [1, 8], strides = [1, 1]} : vector<2x8xf32> to vector<1x8xf32>
    %24 = vector.broadcast %23 : vector<1x8xf32> to vector<8x8xf32>
    %25 = arith.addf %10, %24 : vector<8x8xf32>
    %26 = vector.extract_strided_slice %20 {offsets = [0, 0], sizes = [8, 8], strides = [1, 1]} : vector<8x32xf32> to vector<8x8xf32>
    %27 = vector.extract_strided_slice %21 {offsets = [0, 0], sizes = [8, 8], strides = [1, 1]} : vector<8x32xf32> to vector<8x8xf32>
    %cst_24 = arith.constant dense<0.000000e+00> : vector<8x8xf32>
    %28 = tpu.matmul %26, %27, %cst_24 {dimension_numbers = #tpu.dot_dimension_numbers<[1], [1], [0], [0], [0, 0, 1, 0], [], []>} : vector<8x8xf32>, vector<8x8xf32>, vector<8x8xf32> -> vector<8x8xf32>
    %29 = arith.addf %28, %25 : vector<8x8xf32>
    %cst_25 = arith.constant dense<0xFF800000> : vector<8xf32>
    %30 = vector.multi_reduction <maximumf>, %29, %cst_25 [1] : vector<8x8xf32> to vector<8xf32>
    %31 = vector.shape_cast %30 : vector<8xf32> to vector<8x1xf32>
    %32 = vector.broadcast %31 : vector<8x1xf32> to vector<8x8xf32>
    %33 = arith.subf %29, %32 : vector<8x8xf32>
    %34 = math.exp %33 : vector<8x8xf32>
    %cst_26 = arith.constant dense<0.000000e+00> : vector<8xf32>
    %35 = vector.multi_reduction <add>, %34, %cst_26 [1] : vector<8x8xf32> to vector<8xf32>
    %36 = vector.shape_cast %35 : vector<8xf32> to vector<8x1xf32>
    %37 = vector.extract_strided_slice %22 {offsets = [0, 0], sizes = [8, 8], strides = [1, 1]} : vector<8x32xf32> to vector<8x8xf32>
    %cst_27 = arith.constant dense<0.000000e+00> : vector<8x8xf32>
    %38 = tpu.matmul %34, %37, %cst_27 {dimension_numbers = #tpu.dot_dimension_numbers<[1], [0], [0], [1], [0, 0, 1, 1], [], []>} : vector<8x8xf32>, vector<8x8xf32>, vector<8x8xf32> -> vector<8x8xf32>
    %39 = vector.broadcast %36 : vector<8x1xf32> to vector<8x8xf32>
    %40 = arith.divf %38, %39 : vector<8x8xf32>
    %41 = vector.extract_strided_slice %6 {offsets = [0, 0], sizes = [8, 32], strides = [1, 1]} : vector<32x32xf32> to vector<8x32xf32>
    %cst_28 = arith.constant dense<0.000000e+00> : vector<8x32xf32>
    %42 = tpu.matmul %40, %41, %cst_28 {dimension_numbers = #tpu.dot_dimension_numbers<[1], [0], [0], [1], [0, 0, 1, 1], [], []>} : vector<8x8xf32>, vector<8x32xf32>, vector<8x32xf32> -> vector<8x32xf32>
    %43 = vector.extract_strided_slice %20 {offsets = [0, 8], sizes = [8, 8], strides = [1, 1]} : vector<8x32xf32> to vector<8x8xf32>
    %44 = vector.extract_strided_slice %21 {offsets = [0, 8], sizes = [8, 8], strides = [1, 1]} : vector<8x32xf32> to vector<8x8xf32>
    %cst_29 = arith.constant dense<0.000000e+00> : vector<8x8xf32>
    %45 = tpu.matmul %43, %44, %cst_29 {dimension_numbers = #tpu.dot_dimension_numbers<[1], [1], [0], [0], [0, 0, 1, 0], [], []>} : vector<8x8xf32>, vector<8x8xf32>, vector<8x8xf32> -> vector<8x8xf32>
    %46 = arith.addf %45, %25 : vector<8x8xf32>
    %cst_30 = arith.constant dense<0xFF800000> : vector<8xf32>
    %47 = vector.multi_reduction <maximumf>, %46, %cst_30 [1] : vector<8x8xf32> to vector<8xf32>
    %48 = vector.shape_cast %47 : vector<8xf32> to vector<8x1xf32>
    %49 = vector.broadcast %48 : vector<8x1xf32> to vector<8x8xf32>
    %50 = arith.subf %46, %49 : vector<8x8xf32>
    %51 = math.exp %50 : vector<8x8xf32>
    %cst_31 = arith.constant dense<0.000000e+00> : vector<8xf32>
    %52 = vector.multi_reduction <add>, %51, %cst_31 [1] : vector<8x8xf32> to vector<8xf32>
    %53 = vector.shape_cast %52 : vector<8xf32> to vector<8x1xf32>
    %54 = vector.extract_strided_slice %22 {offsets = [0, 8], sizes = [8, 8], strides = [1, 1]} : vector<8x32xf32> to vector<8x8xf32>
    %cst_32 = arith.constant dense<0.000000e+00> : vector<8x8xf32>
    %55 = tpu.matmul %51, %54, %cst_32 {dimension_numbers = #tpu.dot_dimension_numbers<[1], [0], [0], [1], [0, 0, 1, 1], [], []>} : vector<8x8xf32>, vector<8x8xf32>, vector<8x8xf32> -> vector<8x8xf32>
    %56 = vector.broadcast %53 : vector<8x1xf32> to vector<8x8xf32>
    %57 = arith.divf %55, %56 : vector<8x8xf32>
    %58 = vector.extract_strided_slice %6 {offsets = [8, 0], sizes = [8, 32], strides = [1, 1]} : vector<32x32xf32> to vector<8x32xf32>
    %cst_33 = arith.constant dense<0.000000e+00> : vector<8x32xf32>
    %59 = tpu.matmul %57, %58, %cst_33 {dimension_numbers = #tpu.dot_dimension_numbers<[1], [0], [0], [1], [0, 0, 1, 1], [], []>} : vector<8x8xf32>, vector<8x32xf32>, vector<8x32xf32> -> vector<8x32xf32>
    %60 = arith.addf %42, %59 : vector<8x32xf32>
    %61 = vector.extract_strided_slice %20 {offsets = [0, 16], sizes = [8, 8], strides = [1, 1]} : vector<8x32xf32> to vector<8x8xf32>
    %62 = vector.extract_strided_slice %21 {offsets = [0, 16], sizes = [8, 8], strides = [1, 1]} : vector<8x32xf32> to vector<8x8xf32>
    %cst_34 = arith.constant dense<0.000000e+00> : vector<8x8xf32>
    %63 = tpu.matmul %61, %62, %cst_34 {dimension_numbers = #tpu.dot_dimension_numbers<[1], [1], [0], [0], [0, 0, 1, 0], [], []>} : vector<8x8xf32>, vector<8x8xf32>, vector<8x8xf32> -> vector<8x8xf32>
    %64 = arith.addf %63, %25 : vector<8x8xf32>
    %cst_35 = arith.constant dense<0xFF800000> : vector<8xf32>
    %65 = vector.multi_reduction <maximumf>, %64, %cst_35 [1] : vector<8x8xf32> to vector<8xf32>
    %66 = vector.shape_cast %65 : vector<8xf32> to vector<8x1xf32>
    %67 = vector.broadcast %66 : vector<8x1xf32> to vector<8x8xf32>
    %68 = arith.subf %64, %67 : vector<8x8xf32>
    %69 = math.exp %68 : vector<8x8xf32>
    %cst_36 = arith.constant dense<0.000000e+00> : vector<8xf32>
    %70 = vector.multi_reduction <add>, %69, %cst_36 [1] : vector<8x8xf32> to vector<8xf32>
    %71 = vector.shape_cast %70 : vector<8xf32> to vector<8x1xf32>
    %72 = vector.extract_strided_slice %22 {offsets = [0, 16], sizes = [8, 8], strides = [1, 1]} : vector<8x32xf32> to vector<8x8xf32>
    %cst_37 = arith.constant dense<0.000000e+00> : vector<8x8xf32>
    %73 = tpu.matmul %69, %72, %cst_37 {dimension_numbers = #tpu.dot_dimension_numbers<[1], [0], [0], [1], [0, 0, 1, 1], [], []>} : vector<8x8xf32>, vector<8x8xf32>, vector<8x8xf32> -> vector<8x8xf32>
    %74 = vector.broadcast %71 : vector<8x1xf32> to vector<8x8xf32>
    %75 = arith.divf %73, %74 : vector<8x8xf32>
    %76 = vector.extract_strided_slice %6 {offsets = [16, 0], sizes = [8, 32], strides = [1, 1]} : vector<32x32xf32> to vector<8x32xf32>
    %cst_38 = arith.constant dense<0.000000e+00> : vector<8x32xf32>
    %77 = tpu.matmul %75, %76, %cst_38 {dimension_numbers = #tpu.dot_dimension_numbers<[1], [0], [0], [1], [0, 0, 1, 1], [], []>} : vector<8x8xf32>, vector<8x32xf32>, vector<8x32xf32> -> vector<8x32xf32>
    %78 = arith.addf %60, %77 : vector<8x32xf32>
    %79 = vector.extract_strided_slice %20 {offsets = [0, 24], sizes = [8, 8], strides = [1, 1]} : vector<8x32xf32> to vector<8x8xf32>
    %80 = vector.extract_strided_slice %21 {offsets = [0, 24], sizes = [8, 8], strides = [1, 1]} : vector<8x32xf32> to vector<8x8xf32>
    %cst_39 = arith.constant dense<0.000000e+00> : vector<8x8xf32>
    %81 = tpu.matmul %79, %80, %cst_39 {dimension_numbers = #tpu.dot_dimension_numbers<[1], [1], [0], [0], [0, 0, 1, 0], [], []>} : vector<8x8xf32>, vector<8x8xf32>, vector<8x8xf32> -> vector<8x8xf32>
    %82 = arith.addf %81, %25 : vector<8x8xf32>
    %cst_40 = arith.constant dense<0xFF800000> : vector<8xf32>
    %83 = vector.multi_reduction <maximumf>, %82, %cst_40 [1] : vector<8x8xf32> to vector<8xf32>
    %84 = vector.shape_cast %83 : vector<8xf32> to vector<8x1xf32>
    %85 = vector.broadcast %84 : vector<8x1xf32> to vector<8x8xf32>
    %86 = arith.subf %82, %85 : vector<8x8xf32>
    %87 = math.exp %86 : vector<8x8xf32>
    %cst_41 = arith.constant dense<0.000000e+00> : vector<8xf32>
    %88 = vector.multi_reduction <add>, %87, %cst_41 [1] : vector<8x8xf32> to vector<8xf32>
    %89 = vector.shape_cast %88 : vector<8xf32> to vector<8x1xf32>
    %90 = vector.extract_strided_slice %22 {offsets = [0, 24], sizes = [8, 8], strides = [1, 1]} : vector<8x32xf32> to vector<8x8xf32>
    %cst_42 = arith.constant dense<0.000000e+00> : vector<8x8xf32>
    %91 = tpu.matmul %87, %90, %cst_42 {dimension_numbers = #tpu.dot_dimension_numbers<[1], [0], [0], [1], [0, 0, 1, 1], [], []>} : vector<8x8xf32>, vector<8x8xf32>, vector<8x8xf32> -> vector<8x8xf32>
    %92 = vector.broadcast %89 : vector<8x1xf32> to vector<8x8xf32>
    %93 = arith.divf %91, %92 : vector<8x8xf32>
    %94 = vector.extract_strided_slice %6 {offsets = [24, 0], sizes = [8, 32], strides = [1, 1]} : vector<32x32xf32> to vector<8x32xf32>
    %cst_43 = arith.constant dense<0.000000e+00> : vector<8x32xf32>
    %95 = tpu.matmul %93, %94, %cst_43 {dimension_numbers = #tpu.dot_dimension_numbers<[1], [0], [0], [1], [0, 0, 1, 1], [], []>} : vector<8x8xf32>, vector<8x32xf32>, vector<8x32xf32> -> vector<8x32xf32>
    %96 = arith.addf %78, %95 : vector<8x32xf32>
    %97 = vector.broadcast %7 : vector<1x32xf32> to vector<8x32xf32>
    %98 = arith.addf %96, %97 : vector<8x32xf32>
    %cst_44 = arith.constant dense<0.000000e+00> : vector<8xf32>
    %99 = vector.multi_reduction <add>, %98, %cst_44 [1] : vector<8x32xf32> to vector<8xf32>
    %100 = vector.shape_cast %99 : vector<8xf32> to vector<8x1xf32>
    %cst_45 = arith.constant 3.200000e+01 : f32
    %101 = vector.broadcast %cst_45 : f32 to vector<8x1xf32>
    %102 = arith.divf %100, %101 : vector<8x1xf32>
    %103 = vector.broadcast %102 : vector<8x1xf32> to vector<8x32xf32>
    %104 = arith.subf %98, %103 : vector<8x32xf32>
    %105 = arith.mulf %104, %104 : vector<8x32xf32>
    %cst_46 = arith.constant dense<0.000000e+00> : vector<8xf32>
    %106 = vector.multi_reduction <add>, %105, %cst_46 [1] : vector<8x32xf32> to vector<8xf32>
    %107 = vector.shape_cast %106 : vector<8xf32> to vector<8x1xf32>
    %cst_47 = arith.constant 3.200000e+01 : f32
    %108 = vector.broadcast %cst_47 : f32 to vector<8x1xf32>
    %109 = arith.divf %107, %108 : vector<8x1xf32>
    %110 = vector.broadcast %102 : vector<8x1xf32> to vector<8x32xf32>
    %111 = arith.subf %98, %110 : vector<8x32xf32>
    %cst_48 = arith.constant 9.99999974E-6 : f32
    %112 = vector.broadcast %cst_48 : f32 to vector<8x1xf32>
    %113 = arith.addf %109, %112 : vector<8x1xf32>
    %114 = math.rsqrt %113 : vector<8x1xf32>
    %115 = vector.broadcast %114 : vector<8x1xf32> to vector<8x32xf32>
    %116 = arith.mulf %111, %115 : vector<8x32xf32>
    %117 = vector.broadcast %8 : vector<1x32xf32> to vector<8x32xf32>
    %118 = arith.mulf %116, %117 : vector<8x32xf32>
    %119 = vector.broadcast %9 : vector<1x32xf32> to vector<8x32xf32>
    %120 = arith.addf %118, %119 : vector<8x32xf32>
    %c0_49 = arith.constant 0 : index
    %c0_50 = arith.constant 0 : index
    %121 = vector.load %arg13[%c0_49, %c0_50] : memref<16x32xf32, #tpu.memory_space<vmem>>, vector<8x32xf32>
    tpu.vector_store %arg13[%c0_49, %c0_50], %120 {strides = array<i32>} : memref<16x32xf32, #tpu.memory_space<vmem>>, vector<8x32xf32>,
    %122 = vector.extract_strided_slice %14 {offsets = [8, 0], sizes = [8, 32], strides = [1, 1]} : vector<16x32xf32> to vector<8x32xf32>
    %123 = vector.extract_strided_slice %18 {offsets = [8, 0], sizes = [8, 32], strides = [1, 1]} : vector<16x32xf32> to vector<8x32xf32>
    %124 = vector.extract_strided_slice %19 {offsets = [8, 0], sizes = [8, 32], strides = [1, 1]} : vector<16x32xf32> to vector<8x32xf32>
    %125 = vector.extract_strided_slice %11 {offsets = [1, 0], sizes = [1, 8], strides = [1, 1]} : vector<2x8xf32> to vector<1x8xf32>
    %126 = vector.broadcast %125 : vector<1x8xf32> to vector<8x8xf32>
    %127 = arith.addf %10, %126 : vector<8x8xf32>
    %128 = vector.extract_strided_slice %122 {offsets = [0, 0], sizes = [8, 8], strides = [1, 1]} : vector<8x32xf32> to vector<8x8xf32>
    %129 = vector.extract_strided_slice %123 {offsets = [0, 0], sizes = [8, 8], strides = [1, 1]} : vector<8x32xf32> to vector<8x8xf32>
    %cst_51 = arith.constant dense<0.000000e+00> : vector<8x8xf32>
    %130 = tpu.matmul %128, %129, %cst_51 {dimension_numbers = #tpu.dot_dimension_numbers<[1], [1], [0], [0], [0, 0, 1, 0], [], []>} : vector<8x8xf32>, vector<8x8xf32>, vector<8x8xf32> -> vector<8x8xf32>
    %131 = arith.addf %130, %127 : vector<8x8xf32>
    %cst_52 = arith.constant dense<0xFF800000> : vector<8xf32>
    %132 = vector.multi_reduction <maximumf>, %131, %cst_52 [1] : vector<8x8xf32> to vector<8xf32>
    %133 = vector.shape_cast %132 : vector<8xf32> to vector<8x1xf32>
    %134 = vector.broadcast %133 : vector<8x1xf32> to vector<8x8xf32>
    %135 = arith.subf %131, %134 : vector<8x8xf32>
    %136 = math.exp %135 : vector<8x8xf32>
    %cst_53 = arith.constant dense<0.000000e+00> : vector<8xf32>
    %137 = vector.multi_reduction <add>, %136, %cst_53 [1] : vector<8x8xf32> to vector<8xf32>
    %138 = vector.shape_cast %137 : vector<8xf32> to vector<8x1xf32>
    %139 = vector.extract_strided_slice %124 {offsets = [0, 0], sizes = [8, 8], strides = [1, 1]} : vector<8x32xf32> to vector<8x8xf32>
    %cst_54 = arith.constant dense<0.000000e+00> : vector<8x8xf32>
    %140 = tpu.matmul %136, %139, %cst_54 {dimension_numbers = #tpu.dot_dimension_numbers<[1], [0], [0], [1], [0, 0, 1, 1], [], []>} : vector<8x8xf32>, vector<8x8xf32>, vector<8x8xf32> -> vector<8x8xf32>
    %141 = vector.broadcast %138 : vector<8x1xf32> to vector<8x8xf32>
    %142 = arith.divf %140, %141 : vector<8x8xf32>
    %143 = vector.extract_strided_slice %6 {offsets = [0, 0], sizes = [8, 32], strides = [1, 1]} : vector<32x32xf32> to vector<8x32xf32>
    %cst_55 = arith.constant dense<0.000000e+00> : vector<8x32xf32>
    %144 = tpu.matmul %142, %143, %cst_55 {dimension_numbers = #tpu.dot_dimension_numbers<[1], [0], [0], [1], [0, 0, 1, 1], [], []>} : vector<8x8xf32>, vector<8x32xf32>, vector<8x32xf32> -> vector<8x32xf32>
    %145 = vector.extract_strided_slice %122 {offsets = [0, 8], sizes = [8, 8], strides = [1, 1]} : vector<8x32xf32> to vector<8x8xf32>
    %146 = vector.extract_strided_slice %123 {offsets = [0, 8], sizes = [8, 8], strides = [1, 1]} : vector<8x32xf32> to vector<8x8xf32>
    %cst_56 = arith.constant dense<0.000000e+00> : vector<8x8xf32>
    %147 = tpu.matmul %145, %146, %cst_56 {dimension_numbers = #tpu.dot_dimension_numbers<[1], [1], [0], [0], [0, 0, 1, 0], [], []>} : vector<8x8xf32>, vector<8x8xf32>, vector<8x8xf32> -> vector<8x8xf32>
    %148 = arith.addf %147, %127 : vector<8x8xf32>
    %cst_57 = arith.constant dense<0xFF800000> : vector<8xf32>
    %149 = vector.multi_reduction <maximumf>, %148, %cst_57 [1] : vector<8x8xf32> to vector<8xf32>
    %150 = vector.shape_cast %149 : vector<8xf32> to vector<8x1xf32>
    %151 = vector.broadcast %150 : vector<8x1xf32> to vector<8x8xf32>
    %152 = arith.subf %148, %151 : vector<8x8xf32>
    %153 = math.exp %152 : vector<8x8xf32>
    %cst_58 = arith.constant dense<0.000000e+00> : vector<8xf32>
    %154 = vector.multi_reduction <add>, %153, %cst_58 [1] : vector<8x8xf32> to vector<8xf32>
    %155 = vector.shape_cast %154 : vector<8xf32> to vector<8x1xf32>
    %156 = vector.extract_strided_slice %124 {offsets = [0, 8], sizes = [8, 8], strides = [1, 1]} : vector<8x32xf32> to vector<8x8xf32>
    %cst_59 = arith.constant dense<0.000000e+00> : vector<8x8xf32>
    %157 = tpu.matmul %153, %156, %cst_59 {dimension_numbers = #tpu.dot_dimension_numbers<[1], [0], [0], [1], [0, 0, 1, 1], [], []>} : vector<8x8xf32>, vector<8x8xf32>, vector<8x8xf32> -> vector<8x8xf32>
    %158 = vector.broadcast %155 : vector<8x1xf32> to vector<8x8xf32>
    %159 = arith.divf %157, %158 : vector<8x8xf32>
    %160 = vector.extract_strided_slice %6 {offsets = [8, 0], sizes = [8, 32], strides = [1, 1]} : vector<32x32xf32> to vector<8x32xf32>
    %cst_60 = arith.constant dense<0.000000e+00> : vector<8x32xf32>
    %161 = tpu.matmul %159, %160, %cst_60 {dimension_numbers = #tpu.dot_dimension_numbers<[1], [0], [0], [1], [0, 0, 1, 1], [], []>} : vector<8x8xf32>, vector<8x32xf32>, vector<8x32xf32> -> vector<8x32xf32>
    %162 = arith.addf %144, %161 : vector<8x32xf32>
    %163 = vector.extract_strided_slice %122 {offsets = [0, 16], sizes = [8, 8], strides = [1, 1]} : vector<8x32xf32> to vector<8x8xf32>
    %164 = vector.extract_strided_slice %123 {offsets = [0, 16], sizes = [8, 8], strides = [1, 1]} : vector<8x32xf32> to vector<8x8xf32>
    %cst_61 = arith.constant dense<0.000000e+00> : vector<8x8xf32>
    %165 = tpu.matmul %163, %164, %cst_61 {dimension_numbers = #tpu.dot_dimension_numbers<[1], [1], [0], [0], [0, 0, 1, 0], [], []>} : vector<8x8xf32>, vector<8x8xf32>, vector<8x8xf32> -> vector<8x8xf32>
    %166 = arith.addf %165, %127 : vector<8x8xf32>
    %cst_62 = arith.constant dense<0xFF800000> : vector<8xf32>
    %167 = vector.multi_reduction <maximumf>, %166, %cst_62 [1] : vector<8x8xf32> to vector<8xf32>
    %168 = vector.shape_cast %167 : vector<8xf32> to vector<8x1xf32>
    %169 = vector.broadcast %168 : vector<8x1xf32> to vector<8x8xf32>
    %170 = arith.subf %166, %169 : vector<8x8xf32>
    %171 = math.exp %170 : vector<8x8xf32>
    %cst_63 = arith.constant dense<0.000000e+00> : vector<8xf32>
    %172 = vector.multi_reduction <add>, %171, %cst_63 [1] : vector<8x8xf32> to vector<8xf32>
    %173 = vector.shape_cast %172 : vector<8xf32> to vector<8x1xf32>
    %174 = vector.extract_strided_slice %124 {offsets = [0, 16], sizes = [8, 8], strides = [1, 1]} : vector<8x32xf32> to vector<8x8xf32>
    %cst_64 = arith.constant dense<0.000000e+00> : vector<8x8xf32>
    %175 = tpu.matmul %171, %174, %cst_64 {dimension_numbers = #tpu.dot_dimension_numbers<[1], [0], [0], [1], [0, 0, 1, 1], [], []>} : vector<8x8xf32>, vector<8x8xf32>, vector<8x8xf32> -> vector<8x8xf32>
    %176 = vector.broadcast %173 : vector<8x1xf32> to vector<8x8xf32>
    %177 = arith.divf %175, %176 : vector<8x8xf32>
    %178 = vector.extract_strided_slice %6 {offsets = [16, 0], sizes = [8, 32], strides = [1, 1]} : vector<32x32xf32> to vector<8x32xf32>
    %cst_65 = arith.constant dense<0.000000e+00> : vector<8x32xf32>
    %179 = tpu.matmul %177, %178, %cst_65 {dimension_numbers = #tpu.dot_dimension_numbers<[1], [0], [0], [1], [0, 0, 1, 1], [], []>} : vector<8x8xf32>, vector<8x32xf32>, vector<8x32xf32> -> vector<8x32xf32>
    %180 = arith.addf %162, %179 : vector<8x32xf32>
    %181 = vector.extract_strided_slice %122 {offsets = [0, 24], sizes = [8, 8], strides = [1, 1]} : vector<8x32xf32> to vector<8x8xf32>
    %182 = vector.extract_strided_slice %123 {offsets = [0, 24], sizes = [8, 8], strides = [1, 1]} : vector<8x32xf32> to vector<8x8xf32>
    %cst_66 = arith.constant dense<0.000000e+00> : vector<8x8xf32>
    %183 = tpu.matmul %181, %182, %cst_66 {dimension_numbers = #tpu.dot_dimension_numbers<[1], [1], [0], [0], [0, 0, 1, 0], [], []>} : vector<8x8xf32>, vector<8x8xf32>, vector<8x8xf32> -> vector<8x8xf32>
    %184 = arith.addf %183, %127 : vector<8x8xf32>
    %cst_67 = arith.constant dense<0xFF800000> : vector<8xf32>
    %185 = vector.multi_reduction <maximumf>, %184, %cst_67 [1] : vector<8x8xf32> to vector<8xf32>
    %186 = vector.shape_cast %185 : vector<8xf32> to vector<8x1xf32>
    %187 = vector.broadcast %186 : vector<8x1xf32> to vector<8x8xf32>
    %188 = arith.subf %184, %187 : vector<8x8xf32>
    %189 = math.exp %188 : vector<8x8xf32>
    %cst_68 = arith.constant dense<0.000000e+00> : vector<8xf32>
    %190 = vector.multi_reduction <add>, %189, %cst_68 [1] : vector<8x8xf32> to vector<8xf32>
    %191 = vector.shape_cast %190 : vector<8xf32> to vector<8x1xf32>
    %192 = vector.extract_strided_slice %124 {offsets = [0, 24], sizes = [8, 8], strides = [1, 1]} : vector<8x32xf32> to vector<8x8xf32>
    %cst_69 = arith.constant dense<0.000000e+00> : vector<8x8xf32>
    %193 = tpu.matmul %189, %192, %cst_69 {dimension_numbers = #tpu.dot_dimension_numbers<[1], [0], [0], [1], [0, 0, 1, 1], [], []>} : vector<8x8xf32>, vector<8x8xf32>, vector<8x8xf32> -> vector<8x8xf32>
    %194 = vector.broadcast %191 : vector<8x1xf32> to vector<8x8xf32>
    %195 = arith.divf %193, %194 : vector<8x8xf32>
    %196 = vector.extract_strided_slice %6 {offsets = [24, 0], sizes = [8, 32], strides = [1, 1]} : vector<32x32xf32> to vector<8x32xf32>
    %cst_70 = arith.constant dense<0.000000e+00> : vector<8x32xf32>
    %197 = tpu.matmul %195, %196, %cst_70 {dimension_numbers = #tpu.dot_dimension_numbers<[1], [0], [0], [1], [0, 0, 1, 1], [], []>} : vector<8x8xf32>, vector<8x32xf32>, vector<8x32xf32> -> vector<8x32xf32>
    %198 = arith.addf %180, %197 : vector<8x32xf32>
    %199 = vector.broadcast %7 : vector<1x32xf32> to vector<8x32xf32>
    %200 = arith.addf %198, %199 : vector<8x32xf32>
    %cst_71 = arith.constant dense<0.000000e+00> : vector<8xf32>
    %201 = vector.multi_reduction <add>, %200, %cst_71 [1] : vector<8x32xf32> to vector<8xf32>
    %202 = vector.shape_cast %201 : vector<8xf32> to vector<8x1xf32>
    %cst_72 = arith.constant 3.200000e+01 : f32
    %203 = vector.broadcast %cst_72 : f32 to vector<8x1xf32>
    %204 = arith.divf %202, %203 : vector<8x1xf32>
    %205 = vector.broadcast %204 : vector<8x1xf32> to vector<8x32xf32>
    %206 = arith.subf %200, %205 : vector<8x32xf32>
    %207 = arith.mulf %206, %206 : vector<8x32xf32>
    %cst_73 = arith.constant dense<0.000000e+00> : vector<8xf32>
    %208 = vector.multi_reduction <add>, %207, %cst_73 [1] : vector<8x32xf32> to vector<8xf32>
    %209 = vector.shape_cast %208 : vector<8xf32> to vector<8x1xf32>
    %cst_74 = arith.constant 3.200000e+01 : f32
    %210 = vector.broadcast %cst_74 : f32 to vector<8x1xf32>
    %211 = arith.divf %209, %210 : vector<8x1xf32>
    %212 = vector.broadcast %204 : vector<8x1xf32> to vector<8x32xf32>
    %213 = arith.subf %200, %212 : vector<8x32xf32>
    %cst_75 = arith.constant 9.99999974E-6 : f32
    %214 = vector.broadcast %cst_75 : f32 to vector<8x1xf32>
    %215 = arith.addf %211, %214 : vector<8x1xf32>
    %216 = math.rsqrt %215 : vector<8x1xf32>
    %217 = vector.broadcast %216 : vector<8x1xf32> to vector<8x32xf32>
    %218 = arith.mulf %213, %217 : vector<8x32xf32>
    %219 = vector.broadcast %8 : vector<1x32xf32> to vector<8x32xf32>
    %220 = arith.mulf %218, %219 : vector<8x32xf32>
    %221 = vector.broadcast %9 : vector<1x32xf32> to vector<8x32xf32>
    %222 = arith.addf %220, %221 : vector<8x32xf32>
    %c8 = arith.constant 8 : index
    %c0_76 = arith.constant 0 : index
    %223 = vector.load %arg13[%c8, %c0_76] : memref<16x32xf32, #tpu.memory_space<vmem>>, vector<8x32xf32>
    tpu.vector_store %arg13[%c8, %c0_76], %222 {strides = array<i32>} : memref<16x32xf32, #tpu.memory_space<vmem>>, vector<8x32xf32>,
    return
  }
  func.func @transform_0(%arg0: i32) -> (i32, i32) {
    %c0_i32 = arith.constant 0 : i32
    %c0_i32_0 = arith.constant 0 : i32
    %c0_i32_1 = arith.constant 0 : i32
    return %c0_i32, %c0_i32_0 : i32, i32
  }
  func.func @transform_1(%arg0: i32) -> (i32, i32) {
    %c0_i32 = arith.constant 0 : i32
    %c0_i32_0 = arith.constant 0 : i32
    %c0_i32_1 = arith.constant 0 : i32
    return %c0_i32, %c0_i32_0 : i32, i32
  }
  func.func @transform_2(%arg0: i32) -> (i32, i32) {
    %c0_i32 = arith.constant 0 : i32
    %c0_i32_0 = arith.constant 0 : i32
    %c0_i32_1 = arith.constant 0 : i32
    return %c0_i32, %c0_i32_0 : i32, i32
  }
  func.func @transform_3(%arg0: i32) -> (i32, i32) {
    %c0_i32 = arith.constant 0 : i32
    %c0_i32_0 = arith.constant 0 : i32
    %c0_i32_1 = arith.constant 0 : i32
    return %c0_i32, %c0_i32_0 : i32, i32
  }
  func.func @transform_4(%arg0: i32) -> (i32, i32) {
    %c0_i32 = arith.constant 0 : i32
    %c0_i32_0 = arith.constant 0 : i32
    %c0_i32_1 = arith.constant 0 : i32
    return %c0_i32, %c0_i32_0 : i32, i32
  }
  func.func @transform_5(%arg0: i32) -> (i32, i32) {
    %c0_i32 = arith.constant 0 : i32
    %c0_i32_0 = arith.constant 0 : i32
    %c0_i32_1 = arith.constant 0 : i32
    return %c0_i32, %c0_i32_0 : i32, i32
  }
  func.func @transform_6(%arg0: i32) -> (i32, i32) {
    %c0_i32 = arith.constant 0 : i32
    %c0_i32_0 = arith.constant 0 : i32
    %c0_i32_1 = arith.constant 0 : i32
    return %c0_i32, %c0_i32_0 : i32, i32
  }
  func.func @transform_7(%arg0: i32) -> (i32, i32) {
    %c0_i32 = arith.constant 0 : i32
    %c0_i32_0 = arith.constant 0 : i32
    %c0_i32_1 = arith.constant 0 : i32
    return %c0_i32, %c0_i32_0 : i32, i32
  }
  func.func @transform_8(%arg0: i32) -> (i32, i32) {
    %c0_i32 = arith.constant 0 : i32
    %c0_i32_0 = arith.constant 0 : i32
    %c0_i32_1 = arith.constant 0 : i32
    return %c0_i32, %c0_i32_0 : i32, i32
  }
  func.func @transform_9(%arg0: i32) -> (i32, i32) {
    %c0_i32 = arith.constant 0 : i32
    %c0_i32_0 = arith.constant 0 : i32
    %c0_i32_1 = arith.constant 0 : i32
    return %c0_i32, %c0_i32_0 : i32, i32
  }
  func.func @transform_10(%arg0: i32) -> (i32, i32) {
    %c0_i32 = arith.constant 0 : i32
    %c0_i32_0 = arith.constant 0 : i32
    %c0_i32_1 = arith.constant 0 : i32
    return %c0_i32, %c0_i32_0 : i32, i32
  }
  func.func @transform_11(%arg0: i32) -> (i32, i32) {
    %c0_i32 = arith.constant 0 : i32
    %c0_i32_0 = arith.constant 0 : i32
    %c0_i32_1 = arith.constant 0 : i32
    return %c0_i32, %c0_i32_0 : i32, i32
  }
  func.func @transform_12(%arg0: i32) -> (i32, i32) {
    %c0_i32 = arith.constant 0 : i32
    %c0_i32_0 = arith.constant 0 : i32
    %c0_i32_1 = arith.constant 0 : i32
    return %c0_i32, %c0_i32_0 : i32, i32
  }
}

</mosaic_0001>

<llo_original>
// kernel: transformer_forward_pallas.11
$region0: #{transformer_forward_pallas.11}
  #allocation0 [shape = 'u32[]', space=smem, size = 0x4, offset = 0x4, fixed_abs, tag = 'smem constant byte address 0x4 - core index']
  #allocation1 [shape = 'u32[144,128]{1,0:T(1,128)}', space=vmem, size = 0x12000, scoped, tag = 'internal scratch']
  %s0 = inlined_call_operand.vmem [shape: f32[16,32], index: 0, kind: input, shape index: {}]
  %s1 = inlined_call_operand.vmem [shape: f32[32,64], index: 1, kind: input, shape index: {}]
  %s2 = inlined_call_operand.vmem [shape: f32[1,64], index: 2, kind: input, shape index: {}]
  %s3 = inlined_call_operand.vmem [shape: f32[64,32], index: 3, kind: input, shape index: {}]
  %s4 = inlined_call_operand.vmem [shape: f32[1,32], index: 4, kind: input, shape index: {}]
  %s5 = inlined_call_operand.vmem [shape: f32[1,32], index: 5, kind: input, shape index: {}]
  %s6 = inlined_call_operand.vmem [shape: f32[1,32], index: 6, kind: input, shape index: {}]
  %s7 = inlined_call_operand.vmem [shape: f32[16,32], index: 7, kind: output, shape index: {}]
  %s8 = sld [smem:[#allocation0]]
  $region38: #{transformer_forward_pallas.11} parent=0
    _
  %s10 = ssub.s32 1, %s8
  %s11 = scalar_select 0, %s10, %s8
  // Predicated region
  $region2: #{transformer_forward_pallas.11} parent=0 // pred_check
    _
  $region3: #{transformer_forward_pallas.11} parent=0 // pred_check_branch
    %13 = sbr.rel (0) target = $region5
  $region4: #{transformer_forward_pallas.11} parent=0 // pred_region
    _
  $region5: #{transformer_forward_pallas.11} parent=0 // pred_fallthru
    _
  // Predicated region
  $region6: #{transformer_forward_pallas.11} parent=0 // pred_check
    _
  $region7: #{transformer_forward_pallas.11} parent=0 // pred_check_branch
    %15 = sbr.rel (0) target = $region9
  $region8: #{transformer_forward_pallas.11} parent=0 // pred_region
    _
  $region9: #{transformer_forward_pallas.11} parent=0 // pred_fallthru
    _
  // Predicated region
  $region10: #{transformer_forward_pallas.11} parent=0 // pred_check
    _
  $region11: #{transformer_forward_pallas.11} parent=0 // pred_check_branch
    %17 = sbr.rel (0) target = $region13
  $region12: #{transformer_forward_pallas.11} parent=0 // pred_region
    _
  $region13: #{transformer_forward_pallas.11} parent=0 // pred_fallthru
    _
  // Predicated region
  $region14: #{transformer_forward_pallas.11} parent=0 // pred_check
    _
  $region15: #{transformer_forward_pallas.11} parent=0 // pred_check_branch
    %19 = sbr.rel (0) target = $region17
  $region16: #{transformer_forward_pallas.11} parent=0 // pred_region
    _
  $region17: #{transformer_forward_pallas.11} parent=0 // pred_fallthru
    _
  // Predicated region
  $region18: #{transformer_forward_pallas.11} parent=0 // pred_check
    _
  $region19: #{transformer_forward_pallas.11} parent=0 // pred_check_branch
    %21 = sbr.rel (0) target = $region21
  $region20: #{transformer_forward_pallas.11} parent=0 // pred_region
    _
  $region21: #{transformer_forward_pallas.11} parent=0 // pred_fallthru
    _
  // Predicated region
  $region22: #{transformer_forward_pallas.11} parent=0 // pred_check
    _
  $region23: #{transformer_forward_pallas.11} parent=0 // pred_check_branch
    %23 = sbr.rel (0) target = $region25
  $region24: #{transformer_forward_pallas.11} parent=0 // pred_region
    _
  $region25: #{transformer_forward_pallas.11} parent=0 // pred_fallthru
    _
  // Predicated region
  $region26: #{transformer_forward_pallas.11} parent=0 // pred_check
    _
  $region27: #{transformer_forward_pallas.11} parent=0 // pred_check_branch
    %25 = sbr.rel (0) target = $region29
  $region28: #{transformer_forward_pallas.11} parent=0 // pred_region
    _
  $region29: #{transformer_forward_pallas.11} parent=0 // pred_fallthru
    _
  %v26 = vld [vmem:[%s0] sm:$0xff]
  %v27 = vld [vmem:[%s0 + $0x8] sm:$0xff]
  %v28 = vld [vmem:[%s1] sm:$0xff]
  %v29 = vld [vmem:[%s1 + $0x8] sm:$0xff]
  %v30 = vld [vmem:[%s1 + $0x10] sm:$0xff]
  %v31 = vld [vmem:[%s1 + $0x18] sm:$0xff]
  %v32 = vld [vmem:[%s2] sm:$0x1]
  %v33 = vld [vmem:[%s3] sm:$0xff]
  %v34 = vld [vmem:[%s3 + $0x8] sm:$0xff]
  %v35 = vld [vmem:[%s3 + $0x10] sm:$0xff]
  %v36 = vld [vmem:[%s3 + $0x18] sm:$0xff]
  %v37 = vld [vmem:[%s3 + $0x20] sm:$0xff]
  %v38 = vld [vmem:[%s3 + $0x28] sm:$0xff]
  %v39 = vld [vmem:[%s3 + $0x30] sm:$0xff]
  %v40 = vld [vmem:[%s3 + $0x38] sm:$0xff]
  %v41 = vld [vmem:[%s4] sm:$0x1]
  %v42 = vld [vmem:[%s5] sm:$0x1]
  %v43 = vld [vmem:[%s6] sm:$0x1]
  %v45 = vlaneseq
  %v46 = vshrl.u32 %v45, 7
  %v47 = vsub.s32 0, %v46
  %v48 = vrot.slane %v32, %v47
  %vm50 = vcmask 261120
  %v52 = vsel %vm50, %v26, 0
  %v55 = vsel %vm50, %v27, 0
  %57 = vmatprep.subr.mxu0 0.0
  %58 = vmatpush1.msra.mxu0 %v28
  %59 = vmatprep.subr.mxu0 0.0
  %60 = vmatpush1.msra.mxu0 %v29
  %61 = vmatprep.subr.mxu0 0.0
  %62 = vmatpush1.msra.mxu0 %v30
  %63 = vmatprep.subr.mxu0 0.0
  %64 = vmatpush1.msra.mxu0 %v31
  %65 = vmatprep.subr.mxu0 0.0
  %66 = vmatpush1.msra.mxu0 0.0
  %67 = vmatprep.subr.mxu0 0.0
  %68 = vmatpush1.msra.mxu0 0.0
  %69 = vmatprep.subr.mxu0 0.0
  %70 = vmatpush1.msra.mxu0 0.0
  %71 = vmatprep.subr.mxu0 0.0
  %72 = vmatpush1.msra.mxu0 0.0
  %73 = vmatprep.subr.mxu0 0.0
  %74 = vmatpush1.msra.mxu0 0.0
  %75 = vmatprep.subr.mxu0 0.0
  %76 = vmatpush1.msra.mxu0 0.0
  %77 = vmatprep.subr.mxu0 0.0
  %78 = vmatpush1.msra.mxu0 0.0
  %79 = vmatprep.subr.mxu0 0.0
  %80 = vmatpush1.msra.mxu0 0.0
  %81 = vmatprep.subr.mxu0 0.0
  %82 = vmatpush1.msra.mxu0 0.0
  %83 = vmatprep.subr.mxu0 0.0
  %84 = vmatpush1.msra.mxu0 0.0
  %85 = vmatprep.subr.mxu0 0.0
  %86 = vmatpush1.msra.mxu0 0.0
  %87 = vmatprep.subr.mxu0 0.0
  %88 = vmatpush1.msra.mxu0 0.0
  %89 = vmatprep.subr.mxu0 0.0
  %90 = vmatpush1.msra.mxu0 0.0
  %91 = vmatprep.subr.mxu0 0.0
  %92 = vmatpush1.msra.mxu0 0.0
  %93 = vmatprep.subr.mxu0 0.0
  %94 = vmatpush1.msra.mxu0 0.0
  %95 = vmatprep.subr.mxu0 0.0
  %96 = vmatpush1.msra.mxu0 0.0
  %97 = vmatprep.subr.mxu0 0.0
  %98 = vmatpush1.msra.mxu0 0.0
  %99 = vmatprep.subr.mxu0 0.0
  %100 = vmatpush1.msra.mxu0 0.0
  %101 = vmatprep.subr.mxu0 0.0
  %102 = vmatpush1.msra.mxu0 0.0
  %103 = vmatprep.subr.mxu0 0.0
  %104 = vmatpush1.msra.mxu0 0.0
  %105 = vmatprep.subr.mxu0 0.0
  %106 = vmatpush1.msra.mxu0 0.0
  %107 = vmatprep.subr.mxu0 0.0
  %108 = vmatpush1.msra.mxu0 0.0
  %109 = vmatprep.subr.mxu0 0.0
  %110 = vmatpush1.msra.mxu0 0.0
  %111 = vmatprep.subr.mxu0 0.0
  %112 = vmatpush1.msra.mxu0 0.0
  %113 = vmatprep.subr.mxu0 0.0
  %114 = vmatpush1.msra.mxu0 0.0
  %115 = vmatprep.subr.mxu0 0.0
  %116 = vmatpush1.msra.mxu0 0.0
  %117 = vmatprep.subr.mxu0 0.0
  %118 = vmatpush1.msra.mxu0 0.0
  %119 = vmatprep.subr.mxu0 0.0
  %120 = vmatpush1.msra.mxu0 0.0
  %121 = vmatprep.mubr.f32.mxu0 0.0
  %122 = vmatmul.mubr.f32.gmra.mrb[0].mxu0 %v52
  %v123 = vpop.f32.mrb[0].mxu0
  %v124 = vadd.f32 %v48, %v123
  %v125 = vpop.f32.mrb[0].mxu0
  %126 = vmatprep.mubr.f32.mxu0 0.0
  %127 = vmatmul.mubr.f32.gmra.mrb[0].mxu0 %v55
  %v128 = vpop.f32.mrb[0].mxu0
  %v129 = vadd.f32 %v48, %v128
  %v130 = vpop.f32.mrb[0].mxu0
  %131 = vdwg.mxu0
  %v132 = vmax.f32 %v124, 0.0
  %v133 = vmax.f32 %v129, 0.0
  %vm134 = vcmask 523264
  %v136 = vsel %vm134, %v132, 0
  %v139 = vsel %vm134, %v133, 0
  %141 = vmatprep.subr.mxu0 0.0
  %142 = vmatpush1.msra.mxu0 %v33
  %143 = vmatprep.subr.mxu0 0.0
  %144 = vmatpush1.msra.mxu0 %v34
  %145 = vmatprep.subr.mxu0 0.0
  %146 = vmatpush1.msra.mxu0 %v35
  %147 = vmatprep.subr.mxu0 0.0
  %148 = vmatpush1.msra.mxu0 %v36
  %149 = vmatprep.subr.mxu0 0.0
  %150 = vmatpush1.msra.mxu0 %v37
  %151 = vmatprep.subr.mxu0 0.0
  %152 = vmatpush1.msra.mxu0 %v38
  %153 = vmatprep.subr.mxu0 0.0
  %154 = vmatpush1.msra.mxu0 %v39
  %155 = vmatprep.subr.mxu0 0.0
  %156 = vmatpush1.msra.mxu0 %v40
  %157 = vmatprep.subr.mxu0 0.0
  %158 = vmatpush1.msra.mxu0 0.0
  %159 = vmatprep.subr.mxu0 0.0
  %160 = vmatpush1.msra.mxu0 0.0
  %161 = vmatprep.subr.mxu0 0.0
  %162 = vmatpush1.msra.mxu0 0.0
  %163 = vmatprep.subr.mxu0 0.0
  %164 = vmatpush1.msra.mxu0 0.0
  %165 = vmatprep.subr.mxu0 0.0
  %166 = vmatpush1.msra.mxu0 0.0
  %167 = vmatprep.subr.mxu0 0.0
  %168 = vmatpush1.msra.mxu0 0.0
  %169 = vmatprep.subr.mxu0 0.0
  %170 = vmatpush1.msra.mxu0 0.0
  %171 = vmatprep.subr.mxu0 0.0
  %172 = vmatpush1.msra.mxu0 0.0
  %173 = vmatprep.subr.mxu0 0.0
  %174 = vmatpush1.msra.mxu0 0.0
  %175 = vmatprep.subr.mxu0 0.0
  %176 = vmatpush1.msra.mxu0 0.0
  %177 = vmatprep.subr.mxu0 0.0
  %178 = vmatpush1.msra.mxu0 0.0
  %179 = vmatprep.subr.mxu0 0.0
  %180 = vmatpush1.msra.mxu0 0.0
  %181 = vmatprep.subr.mxu0 0.0
  %182 = vmatpush1.msra.mxu0 0.0
  %183 = vmatprep.subr.mxu0 0.0
  %184 = vmatpush1.msra.mxu0 0.0
  %185 = vmatprep.subr.mxu0 0.0
  %186 = vmatpush1.msra.mxu0 0.0
  %187 = vmatprep.subr.mxu0 0.0
  %188 = vmatpush1.msra.mxu0 0.0
  %189 = vmatprep.subr.mxu0 0.0
  %190 = vmatpush1.msra.mxu0 0.0
  %191 = vmatprep.subr.mxu0 0.0
  %192 = vmatpush1.msra.mxu0 0.0
  %193 = vmatprep.subr.mxu0 0.0
  %194 = vmatpush1.msra.mxu0 0.0
  %195 = vmatprep.subr.mxu0 0.0
  %196 = vmatpush1.msra.mxu0 0.0
  %197 = vmatprep.subr.mxu0 0.0
  %198 = vmatpush1.msra.mxu0 0.0
  %199 = vmatprep.subr.mxu0 0.0
  %200 = vmatpush1.msra.mxu0 0.0
  %201 = vmatprep.subr.mxu0 0.0
  %202 = vmatpush1.msra.mxu0 0.0
  %203 = vmatprep.subr.mxu0 0.0
  %204 = vmatpush1.msra.mxu0 0.0
  %205 = vmatprep.mubr.f32.mxu0 0.0
  %206 = vmatmul.mubr.f32.gmra.mrb[0].mxu0 %v136
  %v207 = vpop.f32.mrb[0].mxu0
  %v208 = vadd.f32 0.0, %v207
  %v209 = vpop.f32.mrb[0].mxu0
  %210 = vmatprep.mubr.f32.mxu0 0.0
  %211 = vmatmul.mubr.f32.gmra.mrb[0].mxu0 %v139
  %v212 = vpop.f32.mrb[0].mxu0
  %v213 = vadd.f32 0.0, %v212
  %v214 = vpop.f32.mrb[0].mxu0
  %215 = vdwg.mxu0
  %v216 = vadd.f32 %v26, %v208
  %v217 = vadd.f32 %v27, %v213
  %v219 = vlaneseq
  %v220 = vshrl.u32 %v219, 7
  %v221 = vsub.s32 0, %v220
  %v222 = vrot.slane %v41, %v221
  %v224 = vadd.f32 %v216, %v222
  %v225 = vadd.f32 %v217, %v222
  %v226 = vsel %vm50, %v224, 0.0
  %227 = vadd.xlane.f32.xlu0 %v226
  %v228 = vpop.xlane.xlu0 %227
  %v229 = vsel %vm50, %v225, 0.0
  %230 = vadd.xlane.f32.xlu0 %v229
  %v231 = vpop.xlane.xlu0 %230
  %v232 = vrcp.pop 32.0
  %v233 = vmul.f32 %v228, %v232
  %v234 = vmul.f32 %v231, %v232
  %v235 = vsub.f32 %v224, %v233
  %v236 = vsub.f32 %v225, %v234
  %v237 = vmul.f32 %v235, %v235
  %v238 = vmul.f32 %v236, %v236
  %v239 = vsel %vm50, %v237, 0.0
  %240 = vadd.xlane.f32.xlu0 %v239
  %v241 = vpop.xlane.xlu0 %240
  %v242 = vsel %vm50, %v238, 0.0
  %243 = vadd.xlane.f32.xlu0 %v242
  %v244 = vpop.xlane.xlu0 %243
  %v245 = vmul.f32 %v241, %v232
  %v246 = vmul.f32 %v244, %v232
  %v247 = vadd.f32 %v245, 1e-05
  %v248 = vadd.f32 %v246, 1e-05
  %v249 = vrsqrt.pop %v247
  %v250 = vrsqrt.pop %v248
  %v251 = vmul.f32 %v235, %v249
  %v252 = vmul.f32 %v236, %v250
  %v254 = vlaneseq
  %v255 = vshrl.u32 %v254, 7
  %v256 = vsub.s32 0, %v255
  %v257 = vrot.slane %v42, %v256
  %v259 = vmul.f32 %v251, %v257
  %v260 = vmul.f32 %v252, %v257
  %v262 = vlaneseq
  %v263 = vshrl.u32 %v262, 7
  %v264 = vsub.s32 0, %v263
  %v265 = vrot.slane %v43, %v264
  %v267 = vadd.f32 %v259, %v265
  %v268 = vadd.f32 %v260, %v265
  %269 = vst.msk [vmem:[%s7] sm:$0xff] %vm50, %v267
  %270 = vst.msk [vmem:[%s7 + $0x8] sm:$0xff] %vm50, %v268
  // Predicated region
  $region30: #{transformer_forward_pallas.11} parent=0 // pred_check
    _
  $region31: #{transformer_forward_pallas.11} parent=0 // pred_check_branch
    %272 = sbr.rel (0) target = $region33
  $region32: #{transformer_forward_pallas.11} parent=0 // pred_region
    _
  $region33: #{transformer_forward_pallas.11} parent=0 // pred_fallthru
    _
  // Predicated region
  $region34: #{transformer_forward_pallas.11} parent=0 // pred_check
    _
  $region35: #{transformer_forward_pallas.11} parent=0 // pred_check_branch
    %274 = sbr.rel (0) target = $region37
  $region36: #{transformer_forward_pallas.11} parent=0 // pred_region
    _
  $region37: #{transformer_forward_pallas.11} parent=0 // pred_fallthru
    _

// kernel: transformer_forward_pallas.13
$region0: #{transformer_forward_pallas.13}
  #allocation0 [shape = 'u32[]', space=smem, size = 0x4, offset = 0x4, fixed_abs, tag = 'smem constant byte address 0x4 - core index']
  #allocation1 [shape = 'u32[144,128]{1,0:T(1,128)}', space=vmem, size = 0x12000, scoped, tag = 'internal scratch']
  %s0 = inlined_call_operand.vmem [shape: f32[16,32], index: 0, kind: input, shape index: {}]
  %s1 = inlined_call_operand.vmem [shape: f32[32,64], index: 1, kind: input, shape index: {}]
  %s2 = inlined_call_operand.vmem [shape: f32[1,64], index: 2, kind: input, shape index: {}]
  %s3 = inlined_call_operand.vmem [shape: f32[64,32], index: 3, kind: input, shape index: {}]
  %s4 = inlined_call_operand.vmem [shape: f32[1,32], index: 4, kind: input, shape index: {}]
  %s5 = inlined_call_operand.vmem [shape: f32[1,32], index: 5, kind: input, shape index: {}]
  %s6 = inlined_call_operand.vmem [shape: f32[1,32], index: 6, kind: input, shape index: {}]
  %s7 = inlined_call_operand.vmem [shape: f32[1,32], index: 7, kind: input, shape index: {}]
  %s8 = inlined_call_operand.vmem [shape: f32[1,32], index: 8, kind: input, shape index: {}]
  %s9 = inlined_call_operand.vmem [shape: f32[16,32], index: 9, kind: output, shape index: {}]
  %s10 = sld [smem:[#allocation0]]
  $region46: #{transformer_forward_pallas.13} parent=0
    _
  %s12 = ssub.s32 1, %s10
  %s13 = scalar_select 0, %s12, %s10
  // Predicated region
  $region2: #{transformer_forward_pallas.13} parent=0 // pred_check
    _
  $region3: #{transformer_forward_pallas.13} parent=0 // pred_check_branch
    %15 = sbr.rel (0) target = $region5
  $region4: #{transformer_forward_pallas.13} parent=0 // pred_region
    _
  $region5: #{transformer_forward_pallas.13} parent=0 // pred_fallthru
    _
  // Predicated region
  $region6: #{transformer_forward_pallas.13} parent=0 // pred_check
    _
  $region7: #{transformer_forward_pallas.13} parent=0 // pred_check_branch
    %17 = sbr.rel (0) target = $region9
  $region8: #{transformer_forward_pallas.13} parent=0 // pred_region
    _
  $region9: #{transformer_forward_pallas.13} parent=0 // pred_fallthru
    _
  // Predicated region
  $region10: #{transformer_forward_pallas.13} parent=0 // pred_check
    _
  $region11: #{transformer_forward_pallas.13} parent=0 // pred_check_branch
    %19 = sbr.rel (0) target = $region13
  $region12: #{transformer_forward_pallas.13} parent=0 // pred_region
    _
  $region13: #{transformer_forward_pallas.13} parent=0 // pred_fallthru
    _
  // Predicated region
  $region14: #{transformer_forward_pallas.13} parent=0 // pred_check
    _
  $region15: #{transformer_forward_pallas.13} parent=0 // pred_check_branch
    %21 = sbr.rel (0) target = $region17
  $region16: #{transformer_forward_pallas.13} parent=0 // pred_region
    _
  $region17: #{transformer_forward_pallas.13} parent=0 // pred_fallthru
    _
  // Predicated region
  $region18: #{transformer_forward_pallas.13} parent=0 // pred_check
    _
  $region19: #{transformer_forward_pallas.13} parent=0 // pred_check_branch
    %23 = sbr.rel (0) target = $region21
  $region20: #{transformer_forward_pallas.13} parent=0 // pred_region
    _
  $region21: #{transformer_forward_pallas.13} parent=0 // pred_fallthru
    _
  // Predicated region
  $region22: #{transformer_forward_pallas.13} parent=0 // pred_check
    _
  $region23: #{transformer_forward_pallas.13} parent=0 // pred_check_branch
    %25 = sbr.rel (0) target = $region25
  $region24: #{transformer_forward_pallas.13} parent=0 // pred_region
    _
  $region25: #{transformer_forward_pallas.13} parent=0 // pred_fallthru
    _
  // Predicated region
  $region26: #{transformer_forward_pallas.13} parent=0 // pred_check
    _
  $region27: #{transformer_forward_pallas.13} parent=0 // pred_check_branch
    %27 = sbr.rel (0) target = $region29
  $region28: #{transformer_forward_pallas.13} parent=0 // pred_region
    _
  $region29: #{transformer_forward_pallas.13} parent=0 // pred_fallthru
    _
  // Predicated region
  $region30: #{transformer_forward_pallas.13} parent=0 // pred_check
    _
  $region31: #{transformer_forward_pallas.13} parent=0 // pred_check_branch
    %29 = sbr.rel (0) target = $region33
  $region32: #{transformer_forward_pallas.13} parent=0 // pred_region
    _
  $region33: #{transformer_forward_pallas.13} parent=0 // pred_fallthru
    _
  // Predicated region
  $region34: #{transformer_forward_pallas.13} parent=0 // pred_check
    _
  $region35: #{transformer_forward_pallas.13} parent=0 // pred_check_branch
    %31 = sbr.rel (0) target = $region37
  $region36: #{transformer_forward_pallas.13} parent=0 // pred_region
    _
  $region37: #{transformer_forward_pallas.13} parent=0 // pred_fallthru
    _
  %v32 = vld [vmem:[%s0] sm:$0xff]
  %v33 = vld [vmem:[%s0 + $0x8] sm:$0xff]
  %v34 = vld [vmem:[%s1] sm:$0xff]
  %v35 = vld [vmem:[%s1 + $0x8] sm:$0xff]
  %v36 = vld [vmem:[%s1 + $0x10] sm:$0xff]
  %v37 = vld [vmem:[%s1 + $0x18] sm:$0xff]
  %v38 = vld [vmem:[%s2] sm:$0x1]
  %v39 = vld [vmem:[%s3] sm:$0xff]
  %v40 = vld [vmem:[%s3 + $0x8] sm:$0xff]
  %v41 = vld [vmem:[%s3 + $0x10] sm:$0xff]
  %v42 = vld [vmem:[%s3 + $0x18] sm:$0xff]
  %v43 = vld [vmem:[%s3 + $0x20] sm:$0xff]
  %v44 = vld [vmem:[%s3 + $0x28] sm:$0xff]
  %v45 = vld [vmem:[%s3 + $0x30] sm:$0xff]
  %v46 = vld [vmem:[%s3 + $0x38] sm:$0xff]
  %v47 = vld [vmem:[%s4] sm:$0x1]
  %v48 = vld [vmem:[%s5] sm:$0x1]
  %v49 = vld [vmem:[%s6] sm:$0x1]
  %v51 = vlaneseq
  %v52 = vshrl.u32 %v51, 7
  %v53 = vsub.s32 0, %v52
  %v54 = vrot.slane %v38, %v53
  %vm56 = vcmask 261120
  %v58 = vsel %vm56, %v32, 0
  %v61 = vsel %vm56, %v33, 0
  %63 = vmatprep.subr.mxu0 0.0
  %64 = vmatpush1.msra.mxu0 %v34
  %65 = vmatprep.subr.mxu0 0.0
  %66 = vmatpush1.msra.mxu0 %v35
  %67 = vmatprep.subr.mxu0 0.0
  %68 = vmatpush1.msra.mxu0 %v36
  %69 = vmatprep.subr.mxu0 0.0
  %70 = vmatpush1.msra.mxu0 %v37
  %71 = vmatprep.subr.mxu0 0.0
  %72 = vmatpush1.msra.mxu0 0.0
  %73 = vmatprep.subr.mxu0 0.0
  %74 = vmatpush1.msra.mxu0 0.0
  %75 = vmatprep.subr.mxu0 0.0
  %76 = vmatpush1.msra.mxu0 0.0
  %77 = vmatprep.subr.mxu0 0.0
  %78 = vmatpush1.msra.mxu0 0.0
  %79 = vmatprep.subr.mxu0 0.0
  %80 = vmatpush1.msra.mxu0 0.0
  %81 = vmatprep.subr.mxu0 0.0
  %82 = vmatpush1.msra.mxu0 0.0
  %83 = vmatprep.subr.mxu0 0.0
  %84 = vmatpush1.msra.mxu0 0.0
  %85 = vmatprep.subr.mxu0 0.0
  %86 = vmatpush1.msra.mxu0 0.0
  %87 = vmatprep.subr.mxu0 0.0
  %88 = vmatpush1.msra.mxu0 0.0
  %89 = vmatprep.subr.mxu0 0.0
  %90 = vmatpush1.msra.mxu0 0.0
  %91 = vmatprep.subr.mxu0 0.0
  %92 = vmatpush1.msra.mxu0 0.0
  %93 = vmatprep.subr.mxu0 0.0
  %94 = vmatpush1.msra.mxu0 0.0
  %95 = vmatprep.subr.mxu0 0.0
  %96 = vmatpush1.msra.mxu0 0.0
  %97 = vmatprep.subr.mxu0 0.0
  %98 = vmatpush1.msra.mxu0 0.0
  %99 = vmatprep.subr.mxu0 0.0
  %100 = vmatpush1.msra.mxu0 0.0
  %101 = vmatprep.subr.mxu0 0.0
  %102 = vmatpush1.msra.mxu0 0.0
  %103 = vmatprep.subr.mxu0 0.0
  %104 = vmatpush1.msra.mxu0 0.0
  %105 = vmatprep.subr.mxu0 0.0
  %106 = vmatpush1.msra.mxu0 0.0
  %107 = vmatprep.subr.mxu0 0.0
  %108 = vmatpush1.msra.mxu0 0.0
  %109 = vmatprep.subr.mxu0 0.0
  %110 = vmatpush1.msra.mxu0 0.0
  %111 = vmatprep.subr.mxu0 0.0
  %112 = vmatpush1.msra.mxu0 0.0
  %113 = vmatprep.subr.mxu0 0.0
  %114 = vmatpush1.msra.mxu0 0.0
  %115 = vmatprep.subr.mxu0 0.0
  %116 = vmatpush1.msra.mxu0 0.0
  %117 = vmatprep.subr.mxu0 0.0
  %118 = vmatpush1.msra.mxu0 0.0
  %119 = vmatprep.subr.mxu0 0.0
  %120 = vmatpush1.msra.mxu0 0.0
  %121 = vmatprep.subr.mxu0 0.0
  %122 = vmatpush1.msra.mxu0 0.0
  %123 = vmatprep.subr.mxu0 0.0
  %124 = vmatpush1.msra.mxu0 0.0
  %125 = vmatprep.subr.mxu0 0.0
  %126 = vmatpush1.msra.mxu0 0.0
  %127 = vmatprep.mubr.f32.mxu0 0.0
  %128 = vmatmul.mubr.f32.gmra.mrb[0].mxu0 %v58
  %v129 = vpop.f32.mrb[0].mxu0
  %v130 = vadd.f32 %v54, %v129
  %v131 = vpop.f32.mrb[0].mxu0
  %132 = vmatprep.mubr.f32.mxu0 0.0
  %133 = vmatmul.mubr.f32.gmra.mrb[0].mxu0 %v61
  %v134 = vpop.f32.mrb[0].mxu0
  %v135 = vadd.f32 %v54, %v134
  %v136 = vpop.f32.mrb[0].mxu0
  %137 = vdwg.mxu0
  %v138 = vmax.f32 %v130, 0.0
  %v139 = vmax.f32 %v135, 0.0
  %vm140 = vcmask 523264
  %v142 = vsel %vm140, %v138, 0
  %v145 = vsel %vm140, %v139, 0
  %147 = vmatprep.subr.mxu0 0.0
  %148 = vmatpush1.msra.mxu0 %v39
  %149 = vmatprep.subr.mxu0 0.0
  %150 = vmatpush1.msra.mxu0 %v40
  %151 = vmatprep.subr.mxu0 0.0
  %152 = vmatpush1.msra.mxu0 %v41
  %153 = vmatprep.subr.mxu0 0.0
  %154 = vmatpush1.msra.mxu0 %v42
  %155 = vmatprep.subr.mxu0 0.0
  %156 = vmatpush1.msra.mxu0 %v43
  %157 = vmatprep.subr.mxu0 0.0
  %158 = vmatpush1.msra.mxu0 %v44
  %159 = vmatprep.subr.mxu0 0.0
  %160 = vmatpush1.msra.mxu0 %v45
  %161 = vmatprep.subr.mxu0 0.0
  %162 = vmatpush1.msra.mxu0 %v46
  %163 = vmatprep.subr.mxu0 0.0
  %164 = vmatpush1.msra.mxu0 0.0
  %165 = vmatprep.subr.mxu0 0.0
  %166 = vmatpush1.msra.mxu0 0.0
  %167 = vmatprep.subr.mxu0 0.0
  %168 = vmatpush1.msra.mxu0 0.0
  %169 = vmatprep.subr.mxu0 0.0
  %170 = vmatpush1.msra.mxu0 0.0
  %171 = vmatprep.subr.mxu0 0.0
  %172 = vmatpush1.msra.mxu0 0.0
  %173 = vmatprep.subr.mxu0 0.0
  %174 = vmatpush1.msra.mxu0 0.0
  %175 = vmatprep.subr.mxu0 0.0
  %176 = vmatpush1.msra.mxu0 0.0
  %177 = vmatprep.subr.mxu0 0.0
  %178 = vmatpush1.msra.mxu0 0.0
  %179 = vmatprep.subr.mxu0 0.0
  %180 = vmatpush1.msra.mxu0 0.0
  %181 = vmatprep.subr.mxu0 0.0
  %182 = vmatpush1.msra.mxu0 0.0
  %183 = vmatprep.subr.mxu0 0.0
  %184 = vmatpush1.msra.mxu0 0.0
  %185 = vmatprep.subr.mxu0 0.0
  %186 = vmatpush1.msra.mxu0 0.0
  %187 = vmatprep.subr.mxu0 0.0
  %188 = vmatpush1.msra.mxu0 0.0
  %189 = vmatprep.subr.mxu0 0.0
  %190 = vmatpush1.msra.mxu0 0.0
  %191 = vmatprep.subr.mxu0 0.0
  %192 = vmatpush1.msra.mxu0 0.0
  %193 = vmatprep.subr.mxu0 0.0
  %194 = vmatpush1.msra.mxu0 0.0
  %195 = vmatprep.subr.mxu0 0.0
  %196 = vmatpush1.msra.mxu0 0.0
  %197 = vmatprep.subr.mxu0 0.0
  %198 = vmatpush1.msra.mxu0 0.0
  %199 = vmatprep.subr.mxu0 0.0
  %200 = vmatpush1.msra.mxu0 0.0
  %201 = vmatprep.subr.mxu0 0.0
  %202 = vmatpush1.msra.mxu0 0.0
  %203 = vmatprep.subr.mxu0 0.0
  %204 = vmatpush1.msra.mxu0 0.0
  %205 = vmatprep.subr.mxu0 0.0
  %206 = vmatpush1.msra.mxu0 0.0
  %207 = vmatprep.subr.mxu0 0.0
  %208 = vmatpush1.msra.mxu0 0.0
  %209 = vmatprep.subr.mxu0 0.0
  %210 = vmatpush1.msra.mxu0 0.0
  %211 = vmatprep.mubr.f32.mxu0 0.0
  %212 = vmatmul.mubr.f32.gmra.mrb[0].mxu0 %v142
  %v213 = vpop.f32.mrb[0].mxu0
  %v214 = vadd.f32 0.0, %v213
  %v215 = vpop.f32.mrb[0].mxu0
  %216 = vmatprep.mubr.f32.mxu0 0.0
  %217 = vmatmul.mubr.f32.gmra.mrb[0].mxu0 %v145
  %v218 = vpop.f32.mrb[0].mxu0
  %v219 = vadd.f32 0.0, %v218
  %v220 = vpop.f32.mrb[0].mxu0
  %221 = vdwg.mxu0
  %v222 = vadd.f32 %v32, %v214
  %v223 = vadd.f32 %v33, %v219
  %v225 = vlaneseq
  %v226 = vshrl.u32 %v225, 7
  %v227 = vsub.s32 0, %v226
  %v228 = vrot.slane %v47, %v227
  %v230 = vadd.f32 %v222, %v228
  %v231 = vadd.f32 %v223, %v228
  %v232 = vsel %vm56, %v230, 0.0
  %233 = vadd.xlane.f32.xlu0 %v232
  %v234 = vpop.xlane.xlu0 %233
  %v235 = vsel %vm56, %v231, 0.0
  %236 = vadd.xlane.f32.xlu0 %v235
  %v237 = vpop.xlane.xlu0 %236
  %v238 = vrcp.pop 32.0
  %v239 = vmul.f32 %v234, %v238
  %v240 = vmul.f32 %v237, %v238
  %v241 = vsub.f32 %v230, %v239
  %v242 = vsub.f32 %v231, %v240
  %v243 = vmul.f32 %v241, %v241
  %v244 = vmul.f32 %v242, %v242
  %v245 = vsel %vm56, %v243, 0.0
  %246 = vadd.xlane.f32.xlu0 %v245
  %v247 = vpop.xlane.xlu0 %246
  %v248 = vsel %vm56, %v244, 0.0
  %249 = vadd.xlane.f32.xlu0 %v248
  %v250 = vpop.xlane.xlu0 %249
  %v251 = vmul.f32 %v247, %v238
  %v252 = vmul.f32 %v250, %v238
  %v253 = vadd.f32 %v251, 1e-05
  %v254 = vadd.f32 %v252, 1e-05
  %v255 = vrsqrt.pop %v253
  %v256 = vrsqrt.pop %v254
  %v257 = vmul.f32 %v241, %v255
  %v258 = vmul.f32 %v242, %v256
  %v260 = vlaneseq
  %v261 = vshrl.u32 %v260, 7
  %v262 = vsub.s32 0, %v261
  %v263 = vrot.slane %v48, %v262
  %v265 = vmul.f32 %v257, %v263
  %v266 = vmul.f32 %v258, %v263
  %v268 = vlaneseq
  %v269 = vshrl.u32 %v268, 7
  %v270 = vsub.s32 0, %v269
  %v271 = vrot.slane %v49, %v270
  %v273 = vadd.f32 %v265, %v271
  %v274 = vadd.f32 %v266, %v271
  %v275 = vld [vmem:[%s7] sm:$0x1]
  %v276 = vld [vmem:[%s8] sm:$0x1]
  %v277 = vsel %vm56, %v273, 0.0
  %278 = vadd.xlane.f32.xlu0 %v277
  %v279 = vpop.xlane.xlu0 %278
  %v280 = vsel %vm56, %v274, 0.0
  %281 = vadd.xlane.f32.xlu0 %v280
  %v282 = vpop.xlane.xlu0 %281
  %v283 = vmul.f32 %v279, %v238
  %v284 = vmul.f32 %v282, %v238
  %v285 = vsub.f32 %v273, %v283
  %v286 = vsub.f32 %v274, %v284
  %v287 = vmul.f32 %v285, %v285
  %v288 = vmul.f32 %v286, %v286
  %v289 = vsel %vm56, %v287, 0.0
  %290 = vadd.xlane.f32.xlu0 %v289
  %v291 = vpop.xlane.xlu0 %290
  %v292 = vsel %vm56, %v288, 0.0
  %293 = vadd.xlane.f32.xlu0 %v292
  %v294 = vpop.xlane.xlu0 %293
  %v295 = vmul.f32 %v291, %v238
  %v296 = vmul.f32 %v294, %v238
  %v297 = vadd.f32 %v295, 1e-05
  %v298 = vadd.f32 %v296, 1e-05
  %v299 = vrsqrt.pop %v297
  %v300 = vrsqrt.pop %v298
  %v301 = vmul.f32 %v285, %v299
  %v302 = vmul.f32 %v286, %v300
  %v304 = vlaneseq
  %v305 = vshrl.u32 %v304, 7
  %v306 = vsub.s32 0, %v305
  %v307 = vrot.slane %v275, %v306
  %v309 = vmul.f32 %v301, %v307
  %v310 = vmul.f32 %v302, %v307
  %v312 = vlaneseq
  %v313 = vshrl.u32 %v312, 7
  %v314 = vsub.s32 0, %v313
  %v315 = vrot.slane %v276, %v314
  %v317 = vadd.f32 %v309, %v315
  %v318 = vadd.f32 %v310, %v315
  %319 = vst.msk [vmem:[%s9] sm:$0xff] %vm56, %v317
  %320 = vst.msk [vmem:[%s9 + $0x8] sm:$0xff] %vm56, %v318
  // Predicated region
  $region38: #{transformer_forward_pallas.13} parent=0 // pred_check
    _
  $region39: #{transformer_forward_pallas.13} parent=0 // pred_check_branch
    %322 = sbr.rel (0) target = $region41
  $region40: #{transformer_forward_pallas.13} parent=0 // pred_region
    _
  $region41: #{transformer_forward_pallas.13} parent=0 // pred_fallthru
    _
  // Predicated region
  $region42: #{transformer_forward_pallas.13} parent=0 // pred_check
    _
  $region43: #{transformer_forward_pallas.13} parent=0 // pred_check_branch
    %324 = sbr.rel (0) target = $region45
  $region44: #{transformer_forward_pallas.13} parent=0 // pred_region
    _
  $region45: #{transformer_forward_pallas.13} parent=0 // pred_fallthru
    _

// kernel: transformer_forward_pallas.10
$region0: #{transformer_forward_pallas.10}
  #allocation0 [shape = 'u32[]', space=smem, size = 0x4, offset = 0x4, fixed_abs, tag = 'smem constant byte address 0x4 - core index']
  #allocation1 [shape = 'u32[144,128]{1,0:T(1,128)}', space=vmem, size = 0x12000, scoped, tag = 'internal scratch']
  %s0 = inlined_call_operand.vmem [shape: f32[16,32], index: 0, kind: input, shape index: {}]
  %s1 = inlined_call_operand.vmem [shape: f32[32,32], index: 1, kind: input, shape index: {}]
  %s2 = inlined_call_operand.vmem [shape: f32[1,32], index: 2, kind: input, shape index: {}]
  %s3 = inlined_call_operand.vmem [shape: f32[32,64], index: 3, kind: input, shape index: {}]
  %s4 = inlined_call_operand.vmem [shape: f32[1,64], index: 4, kind: input, shape index: {}]
  %s5 = inlined_call_operand.vmem [shape: f32[32,32], index: 5, kind: input, shape index: {}]
  %s6 = inlined_call_operand.vmem [shape: f32[1,32], index: 6, kind: input, shape index: {}]
  %s7 = inlined_call_operand.vmem [shape: f32[1,32], index: 7, kind: input, shape index: {}]
  %s8 = inlined_call_operand.vmem [shape: f32[1,32], index: 8, kind: input, shape index: {}]
  %s9 = inlined_call_operand.vmem [shape: f32[8,8], index: 9, kind: input, shape index: {}]
  %s10 = inlined_call_operand.vmem [shape: f32[2,8], index: 10, kind: input, shape index: {}]
  %s11 = inlined_call_operand.vmem [shape: f32[16,32], index: 11, kind: output, shape index: {}]
  %s12 = sld [smem:[#allocation0]]
  $region54: #{transformer_forward_pallas.10} parent=0
    _
  %s14 = ssub.s32 1, %s12
  %s15 = scalar_select 0, %s14, %s12
  // Predicated region
  $region2: #{transformer_forward_pallas.10} parent=0 // pred_check
    _
  $region3: #{transformer_forward_pallas.10} parent=0 // pred_check_branch
    %17 = sbr.rel (0) target = $region5
  $region4: #{transformer_forward_pallas.10} parent=0 // pred_region
    _
  $region5: #{transformer_forward_pallas.10} parent=0 // pred_fallthru
    _
  // Predicated region
  $region6: #{transformer_forward_pallas.10} parent=0 // pred_check
    _
  $region7: #{transformer_forward_pallas.10} parent=0 // pred_check_branch
    %19 = sbr.rel (0) target = $region9
  $region8: #{transformer_forward_pallas.10} parent=0 // pred_region
    _
  $region9: #{transformer_forward_pallas.10} parent=0 // pred_fallthru
    _
  // Predicated region
  $region10: #{transformer_forward_pallas.10} parent=0 // pred_check
    _
  $region11: #{transformer_forward_pallas.10} parent=0 // pred_check_branch
    %21 = sbr.rel (0) target = $region13
  $region12: #{transformer_forward_pallas.10} parent=0 // pred_region
    _
  $region13: #{transformer_forward_pallas.10} parent=0 // pred_fallthru
    _
  // Predicated region
  $region14: #{transformer_forward_pallas.10} parent=0 // pred_check
    _
  $region15: #{transformer_forward_pallas.10} parent=0 // pred_check_branch
    %23 = sbr.rel (0) target = $region17
  $region16: #{transformer_forward_pallas.10} parent=0 // pred_region
    _
  $region17: #{transformer_forward_pallas.10} parent=0 // pred_fallthru
    _
  // Predicated region
  $region18: #{transformer_forward_pallas.10} parent=0 // pred_check
    _
  $region19: #{transformer_forward_pallas.10} parent=0 // pred_check_branch
    %25 = sbr.rel (0) target = $region21
  $region20: #{transformer_forward_pallas.10} parent=0 // pred_region
    _
  $region21: #{transformer_forward_pallas.10} parent=0 // pred_fallthru
    _
  // Predicated region
  $region22: #{transformer_forward_pallas.10} parent=0 // pred_check
    _
  $region23: #{transformer_forward_pallas.10} parent=0 // pred_check_branch
    %27 = sbr.rel (0) target = $region25
  $region24: #{transformer_forward_pallas.10} parent=0 // pred_region
    _
  $region25: #{transformer_forward_pallas.10} parent=0 // pred_fallthru
    _
  // Predicated region
  $region26: #{transformer_forward_pallas.10} parent=0 // pred_check
    _
  $region27: #{transformer_forward_pallas.10} parent=0 // pred_check_branch
    %29 = sbr.rel (0) target = $region29
  $region28: #{transformer_forward_pallas.10} parent=0 // pred_region
    _
  $region29: #{transformer_forward_pallas.10} parent=0 // pred_fallthru
    _
  // Predicated region
  $region30: #{transformer_forward_pallas.10} parent=0 // pred_check
    _
  $region31: #{transformer_forward_pallas.10} parent=0 // pred_check_branch
    %31 = sbr.rel (0) target = $region33
  $region32: #{transformer_forward_pallas.10} parent=0 // pred_region
    _
  $region33: #{transformer_forward_pallas.10} parent=0 // pred_fallthru
    _
  // Predicated region
  $region34: #{transformer_forward_pallas.10} parent=0 // pred_check
    _
  $region35: #{transformer_forward_pallas.10} parent=0 // pred_check_branch
    %33 = sbr.rel (0) target = $region37
  $region36: #{transformer_forward_pallas.10} parent=0 // pred_region
    _
  $region37: #{transformer_forward_pallas.10} parent=0 // pred_fallthru
    _
  // Predicated region
  $region38: #{transformer_forward_pallas.10} parent=0 // pred_check
    _
  $region39: #{transformer_forward_pallas.10} parent=0 // pred_check_branch
    %35 = sbr.rel (0) target = $region41
  $region40: #{transformer_forward_pallas.10} parent=0 // pred_region
    _
  $region41: #{transformer_forward_pallas.10} parent=0 // pred_fallthru
    _
  // Predicated region
  $region42: #{transformer_forward_pallas.10} parent=0 // pred_check
    _
  $region43: #{transformer_forward_pallas.10} parent=0 // pred_check_branch
    %37 = sbr.rel (0) target = $region45
  $region44: #{transformer_forward_pallas.10} parent=0 // pred_region
    _
  $region45: #{transformer_forward_pallas.10} parent=0 // pred_fallthru
    _
  %v38 = vld [vmem:[%s0] sm:$0xff]
  %v39 = vld [vmem:[%s0 + $0x8] sm:$0xff]
  %v40 = vld [vmem:[%s1] sm:$0xff]
  %v41 = vld [vmem:[%s1 + $0x8] sm:$0xff]
  %v42 = vld [vmem:[%s1 + $0x10] sm:$0xff]
  %v43 = vld [vmem:[%s1 + $0x18] sm:$0xff]
  %v44 = vld [vmem:[%s2] sm:$0x1]
  %v45 = vld [vmem:[%s3] sm:$0xff]
  %v46 = vld [vmem:[%s3 + $0x8] sm:$0xff]
  %v47 = vld [vmem:[%s3 + $0x10] sm:$0xff]
  %v48 = vld [vmem:[%s3 + $0x18] sm:$0xff]
  %v49 = vld [vmem:[%s4] sm:$0x1]
  %v50 = vld [vmem:[%s5] sm:$0xff]
  %v51 = vld [vmem:[%s5 + $0x8] sm:$0xff]
  %v52 = vld [vmem:[%s5 + $0x10] sm:$0xff]
  %v53 = vld [vmem:[%s5 + $0x18] sm:$0xff]
  %v54 = vld [vmem:[%s6] sm:$0x1]
  %v55 = vld [vmem:[%s7] sm:$0x1]
  %v56 = vld [vmem:[%s8] sm:$0x1]
  %v57 = vld [vmem:[%s9] sm:$0xff]
  %v58 = vld [vmem:[%s10] sm:$0x3]
  %v60 = vlaneseq
  %v61 = vshrl.u32 %v60, 7
  %v62 = vsub.s32 0, %v61
  %v63 = vrot.slane %v44, %v62
  %vm65 = vcmask 261120
  %v67 = vsel %vm65, %v38, 0
  %v70 = vsel %vm65, %v39, 0
  %72 = vmatprep.subr.mxu0 0.0
  %73 = vmatpush1.msra.mxu0 %v40
  %74 = vmatprep.subr.mxu0 0.0
  %75 = vmatpush1.msra.mxu0 %v41
  %76 = vmatprep.subr.mxu0 0.0
  %77 = vmatpush1.msra.mxu0 %v42
  %78 = vmatprep.subr.mxu0 0.0
  %79 = vmatpush1.msra.mxu0 %v43
  %80 = vmatprep.subr.mxu0 0.0
  %81 = vmatpush1.msra.mxu0 0.0
  %82 = vmatprep.subr.mxu0 0.0
  %83 = vmatpush1.msra.mxu0 0.0
  %84 = vmatprep.subr.mxu0 0.0
  %85 = vmatpush1.msra.mxu0 0.0
  %86 = vmatprep.subr.mxu0 0.0
  %87 = vmatpush1.msra.mxu0 0.0
  %88 = vmatprep.subr.mxu0 0.0
  %89 = vmatpush1.msra.mxu0 0.0
  %90 = vmatprep.subr.mxu0 0.0
  %91 = vmatpush1.msra.mxu0 0.0
  %92 = vmatprep.subr.mxu0 0.0
  %93 = vmatpush1.msra.mxu0 0.0
  %94 = vmatprep.subr.mxu0 0.0
  %95 = vmatpush1.msra.mxu0 0.0
  %96 = vmatprep.subr.mxu0 0.0
  %97 = vmatpush1.msra.mxu0 0.0
  %98 = vmatprep.subr.mxu0 0.0
  %99 = vmatpush1.msra.mxu0 0.0
  %100 = vmatprep.subr.mxu0 0.0
  %101 = vmatpush1.msra.mxu0 0.0
  %102 = vmatprep.subr.mxu0 0.0
  %103 = vmatpush1.msra.mxu0 0.0
  %104 = vmatprep.subr.mxu0 0.0
  %105 = vmatpush1.msra.mxu0 0.0
  %106 = vmatprep.subr.mxu0 0.0
  %107 = vmatpush1.msra.mxu0 0.0
  %108 = vmatprep.subr.mxu0 0.0
  %109 = vmatpush1.msra.mxu0 0.0
  %110 = vmatprep.subr.mxu0 0.0
  %111 = vmatpush1.msra.mxu0 0.0
  %112 = vmatprep.subr.mxu0 0.0
  %113 = vmatpush1.msra.mxu0 0.0
  %114 = vmatprep.subr.mxu0 0.0
  %115 = vmatpush1.msra.mxu0 0.0
  %116 = vmatprep.subr.mxu0 0.0
  %117 = vmatpush1.msra.mxu0 0.0
  %118 = vmatprep.subr.mxu0 0.0
  %119 = vmatpush1.msra.mxu0 0.0
  %120 = vmatprep.subr.mxu0 0.0
  %121 = vmatpush1.msra.mxu0 0.0
  %122 = vmatprep.subr.mxu0 0.0
  %123 = vmatpush1.msra.mxu0 0.0
  %124 = vmatprep.subr.mxu0 0.0
  %125 = vmatpush1.msra.mxu0 0.0
  %126 = vmatprep.subr.mxu0 0.0
  %127 = vmatpush1.msra.mxu0 0.0
  %128 = vmatprep.subr.mxu0 0.0
  %129 = vmatpush1.msra.mxu0 0.0
  %130 = vmatprep.subr.mxu0 0.0
  %131 = vmatpush1.msra.mxu0 0.0
  %132 = vmatprep.subr.mxu0 0.0
  %133 = vmatpush1.msra.mxu0 0.0
  %134 = vmatprep.subr.mxu0 0.0
  %135 = vmatpush1.msra.mxu0 0.0
  %136 = vmatprep.mubr.f32.mxu0 0.0
  %137 = vmatmul.mubr.f32.gmra.mrb[0].mxu0 %v67
  %v138 = vpop.f32.mrb[0].mxu0
  %v139 = vadd.f32 %v63, %v138
  %v140 = vpop.f32.mrb[0].mxu0
  %141 = vmatprep.mubr.f32.mxu0 0.0
  %142 = vmatmul.mubr.f32.gmra.mrb[0].mxu0 %v70
  %v143 = vpop.f32.mrb[0].mxu0
  %v144 = vadd.f32 %v63, %v143
  %v145 = vpop.f32.mrb[0].mxu0
  %146 = vdwg.mxu0
  %v148 = vlaneseq
  %v149 = vshrl.u32 %v148, 7
  %v150 = vsub.s32 0, %v149
  %v151 = vrot.slane %v49, %v150
  %153 = vmatprep.subr.mxu0 0.0
  %154 = vmatpush1.msra.mxu0 %v45
  %155 = vmatprep.subr.mxu0 0.0
  %156 = vmatpush1.msra.mxu0 %v46
  %157 = vmatprep.subr.mxu0 0.0
  %158 = vmatpush1.msra.mxu0 %v47
  %159 = vmatprep.subr.mxu0 0.0
  %160 = vmatpush1.msra.mxu0 %v48
  %161 = vmatprep.subr.mxu0 0.0
  %162 = vmatpush1.msra.mxu0 0.0
  %163 = vmatprep.subr.mxu0 0.0
  %164 = vmatpush1.msra.mxu0 0.0
  %165 = vmatprep.subr.mxu0 0.0
  %166 = vmatpush1.msra.mxu0 0.0
  %167 = vmatprep.subr.mxu0 0.0
  %168 = vmatpush1.msra.mxu0 0.0
  %169 = vmatprep.subr.mxu0 0.0
  %170 = vmatpush1.msra.mxu0 0.0
  %171 = vmatprep.subr.mxu0 0.0
  %172 = vmatpush1.msra.mxu0 0.0
  %173 = vmatprep.subr.mxu0 0.0
  %174 = vmatpush1.msra.mxu0 0.0
  %175 = vmatprep.subr.mxu0 0.0
  %176 = vmatpush1.msra.mxu0 0.0
  %177 = vmatprep.subr.mxu0 0.0
  %178 = vmatpush1.msra.mxu0 0.0
  %179 = vmatprep.subr.mxu0 0.0
  %180 = vmatpush1.msra.mxu0 0.0
  %181 = vmatprep.subr.mxu0 0.0
  %182 = vmatpush1.msra.mxu0 0.0
  %183 = vmatprep.subr.mxu0 0.0
  %184 = vmatpush1.msra.mxu0 0.0
  %185 = vmatprep.subr.mxu0 0.0
  %186 = vmatpush1.msra.mxu0 0.0
  %187 = vmatprep.subr.mxu0 0.0
  %188 = vmatpush1.msra.mxu0 0.0
  %189 = vmatprep.subr.mxu0 0.0
  %190 = vmatpush1.msra.mxu0 0.0
  %191 = vmatprep.subr.mxu0 0.0
  %192 = vmatpush1.msra.mxu0 0.0
  %193 = vmatprep.subr.mxu0 0.0
  %194 = vmatpush1.msra.mxu0 0.0
  %195 = vmatprep.subr.mxu0 0.0
  %196 = vmatpush1.msra.mxu0 0.0
  %197 = vmatprep.subr.mxu0 0.0
  %198 = vmatpush1.msra.mxu0 0.0
  %199 = vmatprep.subr.mxu0 0.0
  %200 = vmatpush1.msra.mxu0 0.0
  %201 = vmatprep.subr.mxu0 0.0
  %202 = vmatpush1.msra.mxu0 0.0
  %203 = vmatprep.subr.mxu0 0.0
  %204 = vmatpush1.msra.mxu0 0.0
  %205 = vmatprep.subr.mxu0 0.0
  %206 = vmatpush1.msra.mxu0 0.0
  %207 = vmatprep.subr.mxu0 0.0
  %208 = vmatpush1.msra.mxu0 0.0
  %209 = vmatprep.subr.mxu0 0.0
  %210 = vmatpush1.msra.mxu0 0.0
  %211 = vmatprep.subr.mxu0 0.0
  %212 = vmatpush1.msra.mxu0 0.0
  %213 = vmatprep.subr.mxu0 0.0
  %214 = vmatpush1.msra.mxu0 0.0
  %215 = vmatprep.subr.mxu0 0.0
  %216 = vmatpush1.msra.mxu0 0.0
  %217 = vmatprep.mubr.f32.mxu0 0.0
  %218 = vmatmul.mubr.f32.gmra.mrb[0].mxu0 %v67
  %v219 = vpop.f32.mrb[0].mxu0
  %v220 = vadd.f32 %v151, %v219
  %v221 = vpop.f32.mrb[0].mxu0
  %222 = vmatprep.mubr.f32.mxu0 0.0
  %223 = vmatmul.mubr.f32.gmra.mrb[0].mxu0 %v70
  %v224 = vpop.f32.mrb[0].mxu0
  %v225 = vadd.f32 %v151, %v224
  %v226 = vpop.f32.mrb[0].mxu0
  %227 = vdwg.mxu0
  %v228 = vlaneseq
  %v229 = vshrl.u32 %v228, 7
  %v230 = vsub.s32 0, %v229
  %v231 = vrot.slane %v58, %v230
  %v232 = vadd.f32 %v57, %v231
  %vm233 = vcmask 64512
  %v235 = vsel %vm233, %v139, 0
  %v238 = vsel %vm233, %v220, 0
  %240 = vmatprep.subr.mxu0 0.0
  %241 = vmatpush1.xpose.msra.mxu0 %v238
  %242 = vmatprep.subr.mxu0 0.0
  %243 = vmatpush1.xpose.msra.mxu0 0.0
  %244 = vmatprep.subr.mxu0 0.0
  %245 = vmatpush1.xpose.msra.mxu0 0.0
  %246 = vmatprep.subr.mxu0 0.0
  %247 = vmatpush1.xpose.msra.mxu0 0.0
  %248 = vmatprep.subr.mxu0 0.0
  %249 = vmatpush1.xpose.msra.mxu0 0.0
  %250 = vmatprep.subr.mxu0 0.0
  %251 = vmatpush1.xpose.msra.mxu0 0.0
  %252 = vmatprep.subr.mxu0 0.0
  %253 = vmatpush1.xpose.msra.mxu0 0.0
  %254 = vmatprep.subr.mxu0 0.0
  %255 = vmatpush1.xpose.msra.mxu0 0.0
  %256 = vmatprep.subr.mxu0 0.0
  %257 = vmatpush1.xpose.msra.mxu0 0.0
  %258 = vmatprep.subr.mxu0 0.0
  %259 = vmatpush1.xpose.msra.mxu0 0.0
  %260 = vmatprep.subr.mxu0 0.0
  %261 = vmatpush1.xpose.msra.mxu0 0.0
  %262 = vmatprep.subr.mxu0 0.0
  %263 = vmatpush1.xpose.msra.mxu0 0.0
  %264 = vmatprep.subr.mxu0 0.0
  %265 = vmatpush1.xpose.msra.mxu0 0.0
  %266 = vmatprep.subr.mxu0 0.0
  %267 = vmatpush1.xpose.msra.mxu0 0.0
  %268 = vmatprep.subr.mxu0 0.0
  %269 = vmatpush1.xpose.msra.mxu0 0.0
  %270 = vmatprep.subr.mxu0 0.0
  %271 = vmatpush1.xpose.msra.mxu0 0.0
  %272 = vmatprep.subr.mxu0 0.0
  %273 = vmatpush1.xpose.msra.mxu0 0.0
  %274 = vmatprep.subr.mxu0 0.0
  %275 = vmatpush1.xpose.msra.mxu0 0.0
  %276 = vmatprep.subr.mxu0 0.0
  %277 = vmatpush1.xpose.msra.mxu0 0.0
  %278 = vmatprep.subr.mxu0 0.0
  %279 = vmatpush1.xpose.msra.mxu0 0.0
  %280 = vmatprep.subr.mxu0 0.0
  %281 = vmatpush1.xpose.msra.mxu0 0.0
  %282 = vmatprep.subr.mxu0 0.0
  %283 = vmatpush1.xpose.msra.mxu0 0.0
  %284 = vmatprep.subr.mxu0 0.0
  %285 = vmatpush1.xpose.msra.mxu0 0.0
  %286 = vmatprep.subr.mxu0 0.0
  %287 = vmatpush1.xpose.msra.mxu0 0.0
  %288 = vmatprep.subr.mxu0 0.0
  %289 = vmatpush1.xpose.msra.mxu0 0.0
  %290 = vmatprep.subr.mxu0 0.0
  %291 = vmatpush1.xpose.msra.mxu0 0.0
  %292 = vmatprep.subr.mxu0 0.0
  %293 = vmatpush1.xpose.msra.mxu0 0.0
  %294 = vmatprep.subr.mxu0 0.0
  %295 = vmatpush1.xpose.msra.mxu0 0.0
  %296 = vmatprep.subr.mxu0 0.0
  %297 = vmatpush1.xpose.msra.mxu0 0.0
  %298 = vmatprep.subr.mxu0 0.0
  %299 = vmatpush1.xpose.msra.mxu0 0.0
  %300 = vmatprep.subr.mxu0 0.0
  %301 = vmatpush1.xpose.msra.mxu0 0.0
  %302 = vmatprep.subr.mxu0 0.0
  %303 = vmatpush1.xpose.msra.mxu0 0.0
  %304 = vmatprep.mubr.f32.mxu0 0.0
  %305 = vmatmul.mubr.f32.gmra.mrb[0].mxu0 %v235
  %v306 = vpop.f32.mrb[0].mxu0
  %v307 = vadd.f32 %v232, %v306
  %v308 = vpop.f32.mrb[0].mxu0
  %309 = vdwg.mxu0
  %v310 = vsel %vm233, %v307, -inf
  %311 = vmax.xlane.f32.xlu0 %v310
  %v312 = vpop.xlane.xlu0 %311
  %v313 = vsub.f32 %v307, %v312
  %v314 = vmul.f32 %v313, 1.442695
  %v315 = vpow.pop %v314
  %v316 = vsel %vm233, %v315, 0.0
  %317 = vadd.xlane.f32.xlu0 %v316
  %v318 = vpop.xlane.xlu0 %317
  %319 = vrot.lane.b32.xlu0 %v220, 96
  %v320 = vpop.permute.xlu0 %319
  %v323 = vsel %vm233, %v315, 0
  %325 = vmatprep.subr.mxu0 0.0
  %326 = vmatpush1.msra.mxu0 %v320
  %327 = vmatprep.subr.mxu0 0.0
  %328 = vmatpush1.msra.mxu0 0.0
  %329 = vmatprep.subr.mxu0 0.0
  %330 = vmatpush1.msra.mxu0 0.0
  %331 = vmatprep.subr.mxu0 0.0
  %332 = vmatpush1.msra.mxu0 0.0
  %333 = vmatprep.subr.mxu0 0.0
  %334 = vmatpush1.msra.mxu0 0.0
  %335 = vmatprep.subr.mxu0 0.0
  %336 = vmatpush1.msra.mxu0 0.0
  %337 = vmatprep.subr.mxu0 0.0
  %338 = vmatpush1.msra.mxu0 0.0
  %339 = vmatprep.subr.mxu0 0.0
  %340 = vmatpush1.msra.mxu0 0.0
  %341 = vmatprep.subr.mxu0 0.0
  %342 = vmatpush1.msra.mxu0 0.0
  %343 = vmatprep.subr.mxu0 0.0
  %344 = vmatpush1.msra.mxu0 0.0
  %345 = vmatprep.subr.mxu0 0.0
  %346 = vmatpush1.msra.mxu0 0.0
  %347 = vmatprep.subr.mxu0 0.0
  %348 = vmatpush1.msra.mxu0 0.0
  %349 = vmatprep.subr.mxu0 0.0
  %350 = vmatpush1.msra.mxu0 0.0
  %351 = vmatprep.subr.mxu0 0.0
  %352 = vmatpush1.msra.mxu0 0.0
  %353 = vmatprep.subr.mxu0 0.0
  %354 = vmatpush1.msra.mxu0 0.0
  %355 = vmatprep.subr.mxu0 0.0
  %356 = vmatpush1.msra.mxu0 0.0
  %357 = vmatprep.subr.mxu0 0.0
  %358 = vmatpush1.msra.mxu0 0.0
  %359 = vmatprep.subr.mxu0 0.0
  %360 = vmatpush1.msra.mxu0 0.0
  %361 = vmatprep.subr.mxu0 0.0
  %362 = vmatpush1.msra.mxu0 0.0
  %363 = vmatprep.subr.mxu0 0.0
  %364 = vmatpush1.msra.mxu0 0.0
  %365 = vmatprep.subr.mxu0 0.0
  %366 = vmatpush1.msra.mxu0 0.0
  %367 = vmatprep.subr.mxu0 0.0
  %368 = vmatpush1.msra.mxu0 0.0
  %369 = vmatprep.subr.mxu0 0.0
  %370 = vmatpush1.msra.mxu0 0.0
  %371 = vmatprep.subr.mxu0 0.0
  %372 = vmatpush1.msra.mxu0 0.0
  %373 = vmatprep.subr.mxu0 0.0
  %374 = vmatpush1.msra.mxu0 0.0
  %375 = vmatprep.subr.mxu0 0.0
  %376 = vmatpush1.msra.mxu0 0.0
  %377 = vmatprep.subr.mxu0 0.0
  %378 = vmatpush1.msra.mxu0 0.0
  %379 = vmatprep.subr.mxu0 0.0
  %380 = vmatpush1.msra.mxu0 0.0
  %381 = vmatprep.subr.mxu0 0.0
  %382 = vmatpush1.msra.mxu0 0.0
  %383 = vmatprep.subr.mxu0 0.0
  %384 = vmatpush1.msra.mxu0 0.0
  %385 = vmatprep.subr.mxu0 0.0
  %386 = vmatpush1.msra.mxu0 0.0
  %387 = vmatprep.subr.mxu0 0.0
  %388 = vmatpush1.msra.mxu0 0.0
  %389 = vmatprep.mubr.f32.mxu0 0.0
  %390 = vmatmul.mubr.f32.gmra.mrb[0].mxu0 %v323
  %v391 = vpop.f32.mrb[0].mxu0
  %v392 = vadd.f32 0.0, %v391
  %v393 = vpop.f32.mrb[0].mxu0
  %394 = vdwg.mxu0
  %v395 = vrcp.pop %v318
  %v396 = vmul.f32 %v392, %v395
  %397 = vrot.lane.b32.xlu0 %v139, 120
  %v398 = vpop.permute.xlu0 %397
  %399 = vrot.lane.b32.xlu0 %v220, 120
  %v400 = vpop.permute.xlu0 %399
  %v401 = vsel %vm233, %v398, 0
  %v403 = vsel %vm233, %v400, 0
  %405 = vmatprep.subr.mxu0 0.0
  %406 = vmatpush1.xpose.msra.mxu0 %v403
  %407 = vmatprep.subr.mxu0 0.0
  %408 = vmatpush1.xpose.msra.mxu0 0.0
  %409 = vmatprep.subr.mxu0 0.0
  %410 = vmatpush1.xpose.msra.mxu0 0.0
  %411 = vmatprep.subr.mxu0 0.0
  %412 = vmatpush1.xpose.msra.mxu0 0.0
  %413 = vmatprep.subr.mxu0 0.0
  %414 = vmatpush1.xpose.msra.mxu0 0.0
  %415 = vmatprep.subr.mxu0 0.0
  %416 = vmatpush1.xpose.msra.mxu0 0.0
  %417 = vmatprep.subr.mxu0 0.0
  %418 = vmatpush1.xpose.msra.mxu0 0.0
  %419 = vmatprep.subr.mxu0 0.0
  %420 = vmatpush1.xpose.msra.mxu0 0.0
  %421 = vmatprep.subr.mxu0 0.0
  %422 = vmatpush1.xpose.msra.mxu0 0.0
  %423 = vmatprep.subr.mxu0 0.0
  %424 = vmatpush1.xpose.msra.mxu0 0.0
  %425 = vmatprep.subr.mxu0 0.0
  %426 = vmatpush1.xpose.msra.mxu0 0.0
  %427 = vmatprep.subr.mxu0 0.0
  %428 = vmatpush1.xpose.msra.mxu0 0.0
  %429 = vmatprep.subr.mxu0 0.0
  %430 = vmatpush1.xpose.msra.mxu0 0.0
  %431 = vmatprep.subr.mxu0 0.0
  %432 = vmatpush1.xpose.msra.mxu0 0.0
  %433 = vmatprep.subr.mxu0 0.0
  %434 = vmatpush1.xpose.msra.mxu0 0.0
  %435 = vmatprep.subr.mxu0 0.0
  %436 = vmatpush1.xpose.msra.mxu0 0.0
  %437 = vmatprep.subr.mxu0 0.0
  %438 = vmatpush1.xpose.msra.mxu0 0.0
  %439 = vmatprep.subr.mxu0 0.0
  %440 = vmatpush1.xpose.msra.mxu0 0.0
  %441 = vmatprep.subr.mxu0 0.0
  %442 = vmatpush1.xpose.msra.mxu0 0.0
  %443 = vmatprep.subr.mxu0 0.0
  %444 = vmatpush1.xpose.msra.mxu0 0.0
  %445 = vmatprep.subr.mxu0 0.0
  %446 = vmatpush1.xpose.msra.mxu0 0.0
  %447 = vmatprep.subr.mxu0 0.0
  %448 = vmatpush1.xpose.msra.mxu0 0.0
  %449 = vmatprep.subr.mxu0 0.0
  %450 = vmatpush1.xpose.msra.mxu0 0.0
  %451 = vmatprep.subr.mxu0 0.0
  %452 = vmatpush1.xpose.msra.mxu0 0.0
  %453 = vmatprep.subr.mxu0 0.0
  %454 = vmatpush1.xpose.msra.mxu0 0.0
  %455 = vmatprep.subr.mxu0 0.0
  %456 = vmatpush1.xpose.msra.mxu0 0.0
  %457 = vmatprep.subr.mxu0 0.0
  %458 = vmatpush1.xpose.msra.mxu0 0.0
  %459 = vmatprep.subr.mxu0 0.0
  %460 = vmatpush1.xpose.msra.mxu0 0.0
  %461 = vmatprep.subr.mxu0 0.0
  %462 = vmatpush1.xpose.msra.mxu0 0.0
  %463 = vmatprep.subr.mxu0 0.0
  %464 = vmatpush1.xpose.msra.mxu0 0.0
  %465 = vmatprep.subr.mxu0 0.0
  %466 = vmatpush1.xpose.msra.mxu0 0.0
  %467 = vmatprep.subr.mxu0 0.0
  %468 = vmatpush1.xpose.msra.mxu0 0.0
  %469 = vmatprep.mubr.f32.mxu0 0.0
  %470 = vmatmul.mubr.f32.gmra.mrb[0].mxu0 %v401
  %v471 = vpop.f32.mrb[0].mxu0
  %v472 = vadd.f32 %v232, %v471
  %v473 = vpop.f32.mrb[0].mxu0
  %474 = vdwg.mxu0
  %v475 = vsel %vm233, %v472, -inf
  %476 = vmax.xlane.f32.xlu0 %v475
  %v477 = vpop.xlane.xlu0 %476
  %v478 = vsub.f32 %v472, %v477
  %v479 = vmul.f32 %v478, 1.442695
  %v480 = vpow.pop %v479
  %v481 = vsel %vm233, %v480, 0.0
  %482 = vadd.xlane.f32.xlu0 %v481
  %v483 = vpop.xlane.xlu0 %482
  %484 = vrot.lane.b32.xlu0 %v220, 88
  %v485 = vpop.permute.xlu0 %484
  %v488 = vsel %vm233, %v480, 0
  %490 = vmatprep.subr.mxu0 0.0
  %491 = vmatpush1.msra.mxu0 %v485
  %492 = vmatprep.subr.mxu0 0.0
  %493 = vmatpush1.msra.mxu0 0.0
  %494 = vmatprep.subr.mxu0 0.0
  %495 = vmatpush1.msra.mxu0 0.0
  %496 = vmatprep.subr.mxu0 0.0
  %497 = vmatpush1.msra.mxu0 0.0
  %498 = vmatprep.subr.mxu0 0.0
  %499 = vmatpush1.msra.mxu0 0.0
  %500 = vmatprep.subr.mxu0 0.0
  %501 = vmatpush1.msra.mxu0 0.0
  %502 = vmatprep.subr.mxu0 0.0
  %503 = vmatpush1.msra.mxu0 0.0
  %504 = vmatprep.subr.mxu0 0.0
  %505 = vmatpush1.msra.mxu0 0.0
  %506 = vmatprep.subr.mxu0 0.0
  %507 = vmatpush1.msra.mxu0 0.0
  %508 = vmatprep.subr.mxu0 0.0
  %509 = vmatpush1.msra.mxu0 0.0
  %510 = vmatprep.subr.mxu0 0.0
  %511 = vmatpush1.msra.mxu0 0.0
  %512 = vmatprep.subr.mxu0 0.0
  %513 = vmatpush1.msra.mxu0 0.0
  %514 = vmatprep.subr.mxu0 0.0
  %515 = vmatpush1.msra.mxu0 0.0
  %516 = vmatprep.subr.mxu0 0.0
  %517 = vmatpush1.msra.mxu0 0.0
  %518 = vmatprep.subr.mxu0 0.0
  %519 = vmatpush1.msra.mxu0 0.0
  %520 = vmatprep.subr.mxu0 0.0
  %521 = vmatpush1.msra.mxu0 0.0
  %522 = vmatprep.subr.mxu0 0.0
  %523 = vmatpush1.msra.mxu0 0.0
  %524 = vmatprep.subr.mxu0 0.0
  %525 = vmatpush1.msra.mxu0 0.0
  %526 = vmatprep.subr.mxu0 0.0
  %527 = vmatpush1.msra.mxu0 0.0
  %528 = vmatprep.subr.mxu0 0.0
  %529 = vmatpush1.msra.mxu0 0.0
  %530 = vmatprep.subr.mxu0 0.0
  %531 = vmatpush1.msra.mxu0 0.0
  %532 = vmatprep.subr.mxu0 0.0
  %533 = vmatpush1.msra.mxu0 0.0
  %534 = vmatprep.subr.mxu0 0.0
  %535 = vmatpush1.msra.mxu0 0.0
  %536 = vmatprep.subr.mxu0 0.0
  %537 = vmatpush1.msra.mxu0 0.0
  %538 = vmatprep.subr.mxu0 0.0
  %539 = vmatpush1.msra.mxu0 0.0
  %540 = vmatprep.subr.mxu0 0.0
  %541 = vmatpush1.msra.mxu0 0.0
  %542 = vmatprep.subr.mxu0 0.0
  %543 = vmatpush1.msra.mxu0 0.0
  %544 = vmatprep.subr.mxu0 0.0
  %545 = vmatpush1.msra.mxu0 0.0
  %546 = vmatprep.subr.mxu0 0.0
  %547 = vmatpush1.msra.mxu0 0.0
  %548 = vmatprep.subr.mxu0 0.0
  %549 = vmatpush1.msra.mxu0 0.0
  %550 = vmatprep.subr.mxu0 0.0
  %551 = vmatpush1.msra.mxu0 0.0
  %552 = vmatprep.subr.mxu0 0.0
  %553 = vmatpush1.msra.mxu0 0.0
  %554 = vmatprep.mubr.f32.mxu0 0.0
  %555 = vmatmul.mubr.f32.gmra.mrb[0].mxu0 %v488
  %v556 = vpop.f32.mrb[0].mxu0
  %v557 = vadd.f32 0.0, %v556
  %v558 = vpop.f32.mrb[0].mxu0
  %559 = vdwg.mxu0
  %v560 = vrcp.pop %v483
  %v561 = vmul.f32 %v557, %v560
  %v563 = vsel %vm233, %v561, 0
  %565 = vmatprep.subr.mxu0 0.0
  %566 = vmatpush1.msra.mxu0 %v51
  %567 = vmatprep.subr.mxu0 0.0
  %568 = vmatpush1.msra.mxu0 0.0
  %569 = vmatprep.subr.mxu0 0.0
  %570 = vmatpush1.msra.mxu0 0.0
  %571 = vmatprep.subr.mxu0 0.0
  %572 = vmatpush1.msra.mxu0 0.0
  %573 = vmatprep.subr.mxu0 0.0
  %574 = vmatpush1.msra.mxu0 0.0
  %575 = vmatprep.subr.mxu0 0.0
  %576 = vmatpush1.msra.mxu0 0.0
  %577 = vmatprep.subr.mxu0 0.0
  %578 = vmatpush1.msra.mxu0 0.0
  %579 = vmatprep.subr.mxu0 0.0
  %580 = vmatpush1.msra.mxu0 0.0
  %581 = vmatprep.subr.mxu0 0.0
  %582 = vmatpush1.msra.mxu0 0.0
  %583 = vmatprep.subr.mxu0 0.0
  %584 = vmatpush1.msra.mxu0 0.0
  %585 = vmatprep.subr.mxu0 0.0
  %586 = vmatpush1.msra.mxu0 0.0
  %587 = vmatprep.subr.mxu0 0.0
  %588 = vmatpush1.msra.mxu0 0.0
  %589 = vmatprep.subr.mxu0 0.0
  %590 = vmatpush1.msra.mxu0 0.0
  %591 = vmatprep.subr.mxu0 0.0
  %592 = vmatpush1.msra.mxu0 0.0
  %593 = vmatprep.subr.mxu0 0.0
  %594 = vmatpush1.msra.mxu0 0.0
  %595 = vmatprep.subr.mxu0 0.0
  %596 = vmatpush1.msra.mxu0 0.0
  %597 = vmatprep.subr.mxu0 0.0
  %598 = vmatpush1.msra.mxu0 0.0
  %599 = vmatprep.subr.mxu0 0.0
  %600 = vmatpush1.msra.mxu0 0.0
  %601 = vmatprep.subr.mxu0 0.0
  %602 = vmatpush1.msra.mxu0 0.0
  %603 = vmatprep.subr.mxu0 0.0
  %604 = vmatpush1.msra.mxu0 0.0
  %605 = vmatprep.subr.mxu0 0.0
  %606 = vmatpush1.msra.mxu0 0.0
  %607 = vmatprep.subr.mxu0 0.0
  %608 = vmatpush1.msra.mxu0 0.0
  %609 = vmatprep.subr.mxu0 0.0
  %610 = vmatpush1.msra.mxu0 0.0
  %611 = vmatprep.subr.mxu0 0.0
  %612 = vmatpush1.msra.mxu0 0.0
  %613 = vmatprep.subr.mxu0 0.0
  %614 = vmatpush1.msra.mxu0 0.0
  %615 = vmatprep.subr.mxu0 0.0
  %616 = vmatpush1.msra.mxu0 0.0
  %617 = vmatprep.subr.mxu0 0.0
  %618 = vmatpush1.msra.mxu0 0.0
  %619 = vmatprep.subr.mxu0 0.0
  %620 = vmatpush1.msra.mxu0 0.0
  %621 = vmatprep.subr.mxu0 0.0
  %622 = vmatpush1.msra.mxu0 0.0
  %623 = vmatprep.subr.mxu0 0.0
  %624 = vmatpush1.msra.mxu0 0.0
  %625 = vmatprep.subr.mxu0 0.0
  %626 = vmatpush1.msra.mxu0 0.0
  %627 = vmatprep.subr.mxu0 0.0
  %628 = vmatpush1.msra.mxu0 0.0
  %629 = vmatprep.mubr.f32.mxu0 0.0
  %630 = vmatmul.mubr.f32.gmra.mrb[0].mxu0 %v563
  %v631 = vpop.f32.mrb[0].mxu0
  %v632 = vadd.f32 0.0, %v631
  %v633 = vpop.f32.mrb[0].mxu0
  %634 = vdwg.mxu0
  %v636 = vsel %vm233, %v396, 0
  %638 = vmatprep.subr.mxu0 0.0
  %639 = vmatpush1.msra.mxu0 %v50
  %640 = vmatprep.subr.mxu0 0.0
  %641 = vmatpush1.msra.mxu0 0.0
  %642 = vmatprep.subr.mxu0 0.0
  %643 = vmatpush1.msra.mxu0 0.0
  %644 = vmatprep.subr.mxu0 0.0
  %645 = vmatpush1.msra.mxu0 0.0
  %646 = vmatprep.subr.mxu0 0.0
  %647 = vmatpush1.msra.mxu0 0.0
  %648 = vmatprep.subr.mxu0 0.0
  %649 = vmatpush1.msra.mxu0 0.0
  %650 = vmatprep.subr.mxu0 0.0
  %651 = vmatpush1.msra.mxu0 0.0
  %652 = vmatprep.subr.mxu0 0.0
  %653 = vmatpush1.msra.mxu0 0.0
  %654 = vmatprep.subr.mxu0 0.0
  %655 = vmatpush1.msra.mxu0 0.0
  %656 = vmatprep.subr.mxu0 0.0
  %657 = vmatpush1.msra.mxu0 0.0
  %658 = vmatprep.subr.mxu0 0.0
  %659 = vmatpush1.msra.mxu0 0.0
  %660 = vmatprep.subr.mxu0 0.0
  %661 = vmatpush1.msra.mxu0 0.0
  %662 = vmatprep.subr.mxu0 0.0
  %663 = vmatpush1.msra.mxu0 0.0
  %664 = vmatprep.subr.mxu0 0.0
  %665 = vmatpush1.msra.mxu0 0.0
  %666 = vmatprep.subr.mxu0 0.0
  %667 = vmatpush1.msra.mxu0 0.0
  %668 = vmatprep.subr.mxu0 0.0
  %669 = vmatpush1.msra.mxu0 0.0
  %670 = vmatprep.subr.mxu0 0.0
  %671 = vmatpush1.msra.mxu0 0.0
  %672 = vmatprep.subr.mxu0 0.0
  %673 = vmatpush1.msra.mxu0 0.0
  %674 = vmatprep.subr.mxu0 0.0
  %675 = vmatpush1.msra.mxu0 0.0
  %676 = vmatprep.subr.mxu0 0.0
  %677 = vmatpush1.msra.mxu0 0.0
  %678 = vmatprep.subr.mxu0 0.0
  %679 = vmatpush1.msra.mxu0 0.0
  %680 = vmatprep.subr.mxu0 0.0
  %681 = vmatpush1.msra.mxu0 0.0
  %682 = vmatprep.subr.mxu0 0.0
  %683 = vmatpush1.msra.mxu0 0.0
  %684 = vmatprep.subr.mxu0 0.0
  %685 = vmatpush1.msra.mxu0 0.0
  %686 = vmatprep.subr.mxu0 0.0
  %687 = vmatpush1.msra.mxu0 0.0
  %688 = vmatprep.subr.mxu0 0.0
  %689 = vmatpush1.msra.mxu0 0.0
  %690 = vmatprep.subr.mxu0 0.0
  %691 = vmatpush1.msra.mxu0 0.0
  %692 = vmatprep.subr.mxu0 0.0
  %693 = vmatpush1.msra.mxu0 0.0
  %694 = vmatprep.subr.mxu0 0.0
  %695 = vmatpush1.msra.mxu0 0.0
  %696 = vmatprep.subr.mxu0 0.0
  %697 = vmatpush1.msra.mxu0 0.0
  %698 = vmatprep.subr.mxu0 0.0
  %699 = vmatpush1.msra.mxu0 0.0
  %700 = vmatprep.subr.mxu0 0.0
  %701 = vmatpush1.msra.mxu0 0.0
  %702 = vmatprep.mubr.f32.mxu0 0.0
  %703 = vmatmul.mubr.f32.gmra.mrb[0].mxu0 %v636
  %v704 = vpop.f32.mrb[0].mxu0
  %v705 = vadd.f32 %v632, %v704
  %v706 = vpop.f32.mrb[0].mxu0
  %707 = vdwg.mxu0
  %708 = vrot.lane.b32.xlu0 %v139, 112
  %v709 = vpop.permute.xlu0 %708
  %710 = vrot.lane.b32.xlu0 %v220, 112
  %v711 = vpop.permute.xlu0 %710
  %v712 = vsel %vm233, %v709, 0
  %v714 = vsel %vm233, %v711, 0
  %716 = vmatprep.subr.mxu0 0.0
  %717 = vmatpush1.xpose.msra.mxu0 %v714
  %718 = vmatprep.subr.mxu0 0.0
  %719 = vmatpush1.xpose.msra.mxu0 0.0
  %720 = vmatprep.subr.mxu0 0.0
  %721 = vmatpush1.xpose.msra.mxu0 0.0
  %722 = vmatprep.subr.mxu0 0.0
  %723 = vmatpush1.xpose.msra.mxu0 0.0
  %724 = vmatprep.subr.mxu0 0.0
  %725 = vmatpush1.xpose.msra.mxu0 0.0
  %726 = vmatprep.subr.mxu0 0.0
  %727 = vmatpush1.xpose.msra.mxu0 0.0
  %728 = vmatprep.subr.mxu0 0.0
  %729 = vmatpush1.xpose.msra.mxu0 0.0
  %730 = vmatprep.subr.mxu0 0.0
  %731 = vmatpush1.xpose.msra.mxu0 0.0
  %732 = vmatprep.subr.mxu0 0.0
  %733 = vmatpush1.xpose.msra.mxu0 0.0
  %734 = vmatprep.subr.mxu0 0.0
  %735 = vmatpush1.xpose.msra.mxu0 0.0
  %736 = vmatprep.subr.mxu0 0.0
  %737 = vmatpush1.xpose.msra.mxu0 0.0
  %738 = vmatprep.subr.mxu0 0.0
  %739 = vmatpush1.xpose.msra.mxu0 0.0
  %740 = vmatprep.subr.mxu0 0.0
  %741 = vmatpush1.xpose.msra.mxu0 0.0
  %742 = vmatprep.subr.mxu0 0.0
  %743 = vmatpush1.xpose.msra.mxu0 0.0
  %744 = vmatprep.subr.mxu0 0.0
  %745 = vmatpush1.xpose.msra.mxu0 0.0
  %746 = vmatprep.subr.mxu0 0.0
  %747 = vmatpush1.xpose.msra.mxu0 0.0
  %748 = vmatprep.subr.mxu0 0.0
  %749 = vmatpush1.xpose.msra.mxu0 0.0
  %750 = vmatprep.subr.mxu0 0.0
  %751 = vmatpush1.xpose.msra.mxu0 0.0
  %752 = vmatprep.subr.mxu0 0.0
  %753 = vmatpush1.xpose.msra.mxu0 0.0
  %754 = vmatprep.subr.mxu0 0.0
  %755 = vmatpush1.xpose.msra.mxu0 0.0
  %756 = vmatprep.subr.mxu0 0.0
  %757 = vmatpush1.xpose.msra.mxu0 0.0
  %758 = vmatprep.subr.mxu0 0.0
  %759 = vmatpush1.xpose.msra.mxu0 0.0
  %760 = vmatprep.subr.mxu0 0.0
  %761 = vmatpush1.xpose.msra.mxu0 0.0
  %762 = vmatprep.subr.mxu0 0.0
  %763 = vmatpush1.xpose.msra.mxu0 0.0
  %764 = vmatprep.subr.mxu0 0.0
  %765 = vmatpush1.xpose.msra.mxu0 0.0
  %766 = vmatprep.subr.mxu0 0.0
  %767 = vmatpush1.xpose.msra.mxu0 0.0
  %768 = vmatprep.subr.mxu0 0.0
  %769 = vmatpush1.xpose.msra.mxu0 0.0
  %770 = vmatprep.subr.mxu0 0.0
  %771 = vmatpush1.xpose.msra.mxu0 0.0
  %772 = vmatprep.subr.mxu0 0.0
  %773 = vmatpush1.xpose.msra.mxu0 0.0
  %774 = vmatprep.subr.mxu0 0.0
  %775 = vmatpush1.xpose.msra.mxu0 0.0
  %776 = vmatprep.subr.mxu0 0.0
  %777 = vmatpush1.xpose.msra.mxu0 0.0
  %778 = vmatprep.subr.mxu0 0.0
  %779 = vmatpush1.xpose.msra.mxu0 0.0
  %780 = vmatprep.mubr.f32.mxu0 0.0
  %781 = vmatmul.mubr.f32.gmra.mrb[0].mxu0 %v712
  %v782 = vpop.f32.mrb[0].mxu0
  %v783 = vadd.f32 %v232, %v782
  %v784 = vpop.f32.mrb[0].mxu0
  %785 = vdwg.mxu0
  %v786 = vsel %vm233, %v783, -inf
  %787 = vmax.xlane.f32.xlu0 %v786
  %v788 = vpop.xlane.xlu0 %787
  %v789 = vsub.f32 %v783, %v788
  %v790 = vmul.f32 %v789, 1.442695
  %v791 = vpow.pop %v790
  %v792 = vsel %vm233, %v791, 0.0
  %793 = vadd.xlane.f32.xlu0 %v792
  %v794 = vpop.xlane.xlu0 %793
  %795 = vrot.lane.b32.xlu0 %v220, 80
  %v796 = vpop.permute.xlu0 %795
  %v799 = vsel %vm233, %v791, 0
  %801 = vmatprep.subr.mxu0 0.0
  %802 = vmatpush1.msra.mxu0 %v796
  %803 = vmatprep.subr.mxu0 0.0
  %804 = vmatpush1.msra.mxu0 0.0
  %805 = vmatprep.subr.mxu0 0.0
  %806 = vmatpush1.msra.mxu0 0.0
  %807 = vmatprep.subr.mxu0 0.0
  %808 = vmatpush1.msra.mxu0 0.0
  %809 = vmatprep.subr.mxu0 0.0
  %810 = vmatpush1.msra.mxu0 0.0
  %811 = vmatprep.subr.mxu0 0.0
  %812 = vmatpush1.msra.mxu0 0.0
  %813 = vmatprep.subr.mxu0 0.0
  %814 = vmatpush1.msra.mxu0 0.0
  %815 = vmatprep.subr.mxu0 0.0
  %816 = vmatpush1.msra.mxu0 0.0
  %817 = vmatprep.subr.mxu0 0.0
  %818 = vmatpush1.msra.mxu0 0.0
  %819 = vmatprep.subr.mxu0 0.0
  %820 = vmatpush1.msra.mxu0 0.0
  %821 = vmatprep.subr.mxu0 0.0
  %822 = vmatpush1.msra.mxu0 0.0
  %823 = vmatprep.subr.mxu0 0.0
  %824 = vmatpush1.msra.mxu0 0.0
  %825 = vmatprep.subr.mxu0 0.0
  %826 = vmatpush1.msra.mxu0 0.0
  %827 = vmatprep.subr.mxu0 0.0
  %828 = vmatpush1.msra.mxu0 0.0
  %829 = vmatprep.subr.mxu0 0.0
  %830 = vmatpush1.msra.mxu0 0.0
  %831 = vmatprep.subr.mxu0 0.0
  %832 = vmatpush1.msra.mxu0 0.0
  %833 = vmatprep.subr.mxu0 0.0
  %834 = vmatpush1.msra.mxu0 0.0
  %835 = vmatprep.subr.mxu0 0.0
  %836 = vmatpush1.msra.mxu0 0.0
  %837 = vmatprep.subr.mxu0 0.0
  %838 = vmatpush1.msra.mxu0 0.0
  %839 = vmatprep.subr.mxu0 0.0
  %840 = vmatpush1.msra.mxu0 0.0
  %841 = vmatprep.subr.mxu0 0.0
  %842 = vmatpush1.msra.mxu0 0.0
  %843 = vmatprep.subr.mxu0 0.0
  %844 = vmatpush1.msra.mxu0 0.0
  %845 = vmatprep.subr.mxu0 0.0
  %846 = vmatpush1.msra.mxu0 0.0
  %847 = vmatprep.subr.mxu0 0.0
  %848 = vmatpush1.msra.mxu0 0.0
  %849 = vmatprep.subr.mxu0 0.0
  %850 = vmatpush1.msra.mxu0 0.0
  %851 = vmatprep.subr.mxu0 0.0
  %852 = vmatpush1.msra.mxu0 0.0
  %853 = vmatprep.subr.mxu0 0.0
  %854 = vmatpush1.msra.mxu0 0.0
  %855 = vmatprep.subr.mxu0 0.0
  %856 = vmatpush1.msra.mxu0 0.0
  %857 = vmatprep.subr.mxu0 0.0
  %858 = vmatpush1.msra.mxu0 0.0
  %859 = vmatprep.subr.mxu0 0.0
  %860 = vmatpush1.msra.mxu0 0.0
  %861 = vmatprep.subr.mxu0 0.0
  %862 = vmatpush1.msra.mxu0 0.0
  %863 = vmatprep.subr.mxu0 0.0
  %864 = vmatpush1.msra.mxu0 0.0
  %865 = vmatprep.mubr.f32.mxu0 0.0
  %866 = vmatmul.mubr.f32.gmra.mrb[0].mxu0 %v799
  %v867 = vpop.f32.mrb[0].mxu0
  %v868 = vadd.f32 0.0, %v867
  %v869 = vpop.f32.mrb[0].mxu0
  %870 = vdwg.mxu0
  %v871 = vrcp.pop %v794
  %v872 = vmul.f32 %v868, %v871
  %v874 = vsel %vm233, %v872, 0
  %876 = vmatprep.subr.mxu0 0.0
  %877 = vmatpush1.msra.mxu0 %v52
  %878 = vmatprep.subr.mxu0 0.0
  %879 = vmatpush1.msra.mxu0 0.0
  %880 = vmatprep.subr.mxu0 0.0
  %881 = vmatpush1.msra.mxu0 0.0
  %882 = vmatprep.subr.mxu0 0.0
  %883 = vmatpush1.msra.mxu0 0.0
  %884 = vmatprep.subr.mxu0 0.0
  %885 = vmatpush1.msra.mxu0 0.0
  %886 = vmatprep.subr.mxu0 0.0
  %887 = vmatpush1.msra.mxu0 0.0
  %888 = vmatprep.subr.mxu0 0.0
  %889 = vmatpush1.msra.mxu0 0.0
  %890 = vmatprep.subr.mxu0 0.0
  %891 = vmatpush1.msra.mxu0 0.0
  %892 = vmatprep.subr.mxu0 0.0
  %893 = vmatpush1.msra.mxu0 0.0
  %894 = vmatprep.subr.mxu0 0.0
  %895 = vmatpush1.msra.mxu0 0.0
  %896 = vmatprep.subr.mxu0 0.0
  %897 = vmatpush1.msra.mxu0 0.0
  %898 = vmatprep.subr.mxu0 0.0
  %899 = vmatpush1.msra.mxu0 0.0
  %900 = vmatprep.subr.mxu0 0.0
  %901 = vmatpush1.msra.mxu0 0.0
  %902 = vmatprep.subr.mxu0 0.0
  %903 = vmatpush1.msra.mxu0 0.0
  %904 = vmatprep.subr.mxu0 0.0
  %905 = vmatpush1.msra.mxu0 0.0
  %906 = vmatprep.subr.mxu0 0.0
  %907 = vmatpush1.msra.mxu0 0.0
  %908 = vmatprep.subr.mxu0 0.0
  %909 = vmatpush1.msra.mxu0 0.0
  %910 = vmatprep.subr.mxu0 0.0
  %911 = vmatpush1.msra.mxu0 0.0
  %912 = vmatprep.subr.mxu0 0.0
  %913 = vmatpush1.msra.mxu0 0.0
  %914 = vmatprep.subr.mxu0 0.0
  %915 = vmatpush1.msra.mxu0 0.0
  %916 = vmatprep.subr.mxu0 0.0
  %917 = vmatpush1.msra.mxu0 0.0
  %918 = vmatprep.subr.mxu0 0.0
  %919 = vmatpush1.msra.mxu0 0.0
  %920 = vmatprep.subr.mxu0 0.0
  %921 = vmatpush1.msra.mxu0 0.0
  %922 = vmatprep.subr.mxu0 0.0
  %923 = vmatpush1.msra.mxu0 0.0
  %924 = vmatprep.subr.mxu0 0.0
  %925 = vmatpush1.msra.mxu0 0.0
  %926 = vmatprep.subr.mxu0 0.0
  %927 = vmatpush1.msra.mxu0 0.0
  %928 = vmatprep.subr.mxu0 0.0
  %929 = vmatpush1.msra.mxu0 0.0
  %930 = vmatprep.subr.mxu0 0.0
  %931 = vmatpush1.msra.mxu0 0.0
  %932 = vmatprep.subr.mxu0 0.0
  %933 = vmatpush1.msra.mxu0 0.0
  %934 = vmatprep.subr.mxu0 0.0
  %935 = vmatpush1.msra.mxu0 0.0
  %936 = vmatprep.subr.mxu0 0.0
  %937 = vmatpush1.msra.mxu0 0.0
  %938 = vmatprep.subr.mxu0 0.0
  %939 = vmatpush1.msra.mxu0 0.0
  %940 = vmatprep.mubr.f32.mxu0 0.0
  %941 = vmatmul.mubr.f32.gmra.mrb[0].mxu0 %v874
  %v942 = vpop.f32.mrb[0].mxu0
  %v943 = vadd.f32 0.0, %v942
  %v944 = vpop.f32.mrb[0].mxu0
  %945 = vdwg.mxu0
  %v946 = vadd.f32 %v705, %v943
  %947 = vrot.lane.b32.xlu0 %v139, 104
  %v948 = vpop.permute.xlu0 %947
  %949 = vrot.lane.b32.xlu0 %v220, 104
  %v950 = vpop.permute.xlu0 %949
  %v951 = vsel %vm233, %v948, 0
  %v953 = vsel %vm233, %v950, 0
  %955 = vmatprep.subr.mxu0 0.0
  %956 = vmatpush1.xpose.msra.mxu0 %v953
  %957 = vmatprep.subr.mxu0 0.0
  %958 = vmatpush1.xpose.msra.mxu0 0.0
  %959 = vmatprep.subr.mxu0 0.0
  %960 = vmatpush1.xpose.msra.mxu0 0.0
  %961 = vmatprep.subr.mxu0 0.0
  %962 = vmatpush1.xpose.msra.mxu0 0.0
  %963 = vmatprep.subr.mxu0 0.0
  %964 = vmatpush1.xpose.msra.mxu0 0.0
  %965 = vmatprep.subr.mxu0 0.0
  %966 = vmatpush1.xpose.msra.mxu0 0.0
  %967 = vmatprep.subr.mxu0 0.0
  %968 = vmatpush1.xpose.msra.mxu0 0.0
  %969 = vmatprep.subr.mxu0 0.0
  %970 = vmatpush1.xpose.msra.mxu0 0.0
  %971 = vmatprep.subr.mxu0 0.0
  %972 = vmatpush1.xpose.msra.mxu0 0.0
  %973 = vmatprep.subr.mxu0 0.0
  %974 = vmatpush1.xpose.msra.mxu0 0.0
  %975 = vmatprep.subr.mxu0 0.0
  %976 = vmatpush1.xpose.msra.mxu0 0.0
  %977 = vmatprep.subr.mxu0 0.0
  %978 = vmatpush1.xpose.msra.mxu0 0.0
  %979 = vmatprep.subr.mxu0 0.0
  %980 = vmatpush1.xpose.msra.mxu0 0.0
  %981 = vmatprep.subr.mxu0 0.0
  %982 = vmatpush1.xpose.msra.mxu0 0.0
  %983 = vmatprep.subr.mxu0 0.0
  %984 = vmatpush1.xpose.msra.mxu0 0.0
  %985 = vmatprep.subr.mxu0 0.0
  %986 = vmatpush1.xpose.msra.mxu0 0.0
  %987 = vmatprep.subr.mxu0 0.0
  %988 = vmatpush1.xpose.msra.mxu0 0.0
  %989 = vmatprep.subr.mxu0 0.0
  %990 = vmatpush1.xpose.msra.mxu0 0.0
  %991 = vmatprep.subr.mxu0 0.0
  %992 = vmatpush1.xpose.msra.mxu0 0.0
  %993 = vmatprep.subr.mxu0 0.0
  %994 = vmatpush1.xpose.msra.mxu0 0.0
  %995 = vmatprep.subr.mxu0 0.0
  %996 = vmatpush1.xpose.msra.mxu0 0.0
  %997 = vmatprep.subr.mxu0 0.0
  %998 = vmatpush1.xpose.msra.mxu0 0.0
  %999 = vmatprep.subr.mxu0 0.0
  %1000 = vmatpush1.xpose.msra.mxu0 0.0
  %1001 = vmatprep.subr.mxu0 0.0
  %1002 = vmatpush1.xpose.msra.mxu0 0.0
  %1003 = vmatprep.subr.mxu0 0.0
  %1004 = vmatpush1.xpose.msra.mxu0 0.0
  %1005 = vmatprep.subr.mxu0 0.0
  %1006 = vmatpush1.xpose.msra.mxu0 0.0
  %1007 = vmatprep.subr.mxu0 0.0
  %1008 = vmatpush1.xpose.msra.mxu0 0.0
  %1009 = vmatprep.subr.mxu0 0.0
  %1010 = vmatpush1.xpose.msra.mxu0 0.0
  %1011 = vmatprep.subr.mxu0 0.0
  %1012 = vmatpush1.xpose.msra.mxu0 0.0
  %1013 = vmatprep.subr.mxu0 0.0
  %1014 = vmatpush1.xpose.msra.mxu0 0.0
  %1015 = vmatprep.subr.mxu0 0.0
  %1016 = vmatpush1.xpose.msra.mxu0 0.0
  %1017 = vmatprep.subr.mxu0 0.0
  %1018 = vmatpush1.xpose.msra.mxu0 0.0
  %1019 = vmatprep.mubr.f32.mxu0 0.0
  %1020 = vmatmul.mubr.f32.gmra.mrb[0].mxu0 %v951
  %v1021 = vpop.f32.mrb[0].mxu0
  %v1022 = vadd.f32 %v232, %v1021
  %v1023 = vpop.f32.mrb[0].mxu0
  %1024 = vdwg.mxu0
  %v1025 = vsel %vm233, %v1022, -inf
  %1026 = vmax.xlane.f32.xlu0 %v1025
  %v1027 = vpop.xlane.xlu0 %1026
  %v1028 = vsub.f32 %v1022, %v1027
  %v1029 = vmul.f32 %v1028, 1.442695
  %v1030 = vpow.pop %v1029
  %v1031 = vsel %vm233, %v1030, 0.0
  %1032 = vadd.xlane.f32.xlu0 %v1031
  %v1033 = vpop.xlane.xlu0 %1032
  %1034 = vrot.lane.b32.xlu0 %v220, 72
  %v1035 = vpop.permute.xlu0 %1034
  %v1038 = vsel %vm233, %v1030, 0
  %1040 = vmatprep.subr.mxu0 0.0
  %1041 = vmatpush1.msra.mxu0 %v1035
  %1042 = vmatprep.subr.mxu0 0.0
  %1043 = vmatpush1.msra.mxu0 0.0
  %1044 = vmatprep.subr.mxu0 0.0
  %1045 = vmatpush1.msra.mxu0 0.0
  %1046 = vmatprep.subr.mxu0 0.0
  %1047 = vmatpush1.msra.mxu0 0.0
  %1048 = vmatprep.subr.mxu0 0.0
  %1049 = vmatpush1.msra.mxu0 0.0
  %1050 = vmatprep.subr.mxu0 0.0
  %1051 = vmatpush1.msra.mxu0 0.0
  %1052 = vmatprep.subr.mxu0 0.0
  %1053 = vmatpush1.msra.mxu0 0.0
  %1054 = vmatprep.subr.mxu0 0.0
  %1055 = vmatpush1.msra.mxu0 0.0
  %1056 = vmatprep.subr.mxu0 0.0
  %1057 = vmatpush1.msra.mxu0 0.0
  %1058 = vmatprep.subr.mxu0 0.0
  %1059 = vmatpush1.msra.mxu0 0.0
  %1060 = vmatprep.subr.mxu0 0.0
  %1061 = vmatpush1.msra.mxu0 0.0
  %1062 = vmatprep.subr.mxu0 0.0
  %1063 = vmatpush1.msra.mxu0 0.0
  %1064 = vmatprep.subr.mxu0 0.0
  %1065 = vmatpush1.msra.mxu0 0.0
  %1066 = vmatprep.subr.mxu0 0.0
  %1067 = vmatpush1.msra.mxu0 0.0
  %1068 = vmatprep.subr.mxu0 0.0
  %1069 = vmatpush1.msra.mxu0 0.0
  %1070 = vmatprep.subr.mxu0 0.0
  %1071 = vmatpush1.msra.mxu0 0.0
  %1072 = vmatprep.subr.mxu0 0.0
  %1073 = vmatpush1.msra.mxu0 0.0
  %1074 = vmatprep.subr.mxu0 0.0
  %1075 = vmatpush1.msra.mxu0 0.0
  %1076 = vmatprep.subr.mxu0 0.0
  %1077 = vmatpush1.msra.mxu0 0.0
  %1078 = vmatprep.subr.mxu0 0.0
  %1079 = vmatpush1.msra.mxu0 0.0
  %1080 = vmatprep.subr.mxu0 0.0
  %1081 = vmatpush1.msra.mxu0 0.0
  %1082 = vmatprep.subr.mxu0 0.0
  %1083 = vmatpush1.msra.mxu0 0.0
  %1084 = vmatprep.subr.mxu0 0.0
  %1085 = vmatpush1.msra.mxu0 0.0
  %1086 = vmatprep.subr.mxu0 0.0
  %1087 = vmatpush1.msra.mxu0 0.0
  %1088 = vmatprep.subr.mxu0 0.0
  %1089 = vmatpush1.msra.mxu0 0.0
  %1090 = vmatprep.subr.mxu0 0.0
  %1091 = vmatpush1.msra.mxu0 0.0
  %1092 = vmatprep.subr.mxu0 0.0
  %1093 = vmatpush1.msra.mxu0 0.0
  %1094 = vmatprep.subr.mxu0 0.0
  %1095 = vmatpush1.msra.mxu0 0.0
  %1096 = vmatprep.subr.mxu0 0.0
  %1097 = vmatpush1.msra.mxu0 0.0
  %1098 = vmatprep.subr.mxu0 0.0
  %1099 = vmatpush1.msra.mxu0 0.0
  %1100 = vmatprep.subr.mxu0 0.0
  %1101 = vmatpush1.msra.mxu0 0.0
  %1102 = vmatprep.subr.mxu0 0.0
  %1103 = vmatpush1.msra.mxu0 0.0
  %1104 = vmatprep.mubr.f32.mxu0 0.0
  %1105 = vmatmul.mubr.f32.gmra.mrb[0].mxu0 %v1038
  %v1106 = vpop.f32.mrb[0].mxu0
  %v1107 = vadd.f32 0.0, %v1106
  %v1108 = vpop.f32.mrb[0].mxu0
  %1109 = vdwg.mxu0
  %v1110 = vrcp.pop %v1033
  %v1111 = vmul.f32 %v1107, %v1110
  %v1113 = vsel %vm233, %v1111, 0
  %1115 = vmatprep.subr.mxu0 0.0
  %1116 = vmatpush1.msra.mxu0 %v53
  %1117 = vmatprep.subr.mxu0 0.0
  %1118 = vmatpush1.msra.mxu0 0.0
  %1119 = vmatprep.subr.mxu0 0.0
  %1120 = vmatpush1.msra.mxu0 0.0
  %1121 = vmatprep.subr.mxu0 0.0
  %1122 = vmatpush1.msra.mxu0 0.0
  %1123 = vmatprep.subr.mxu0 0.0
  %1124 = vmatpush1.msra.mxu0 0.0
  %1125 = vmatprep.subr.mxu0 0.0
  %1126 = vmatpush1.msra.mxu0 0.0
  %1127 = vmatprep.subr.mxu0 0.0
  %1128 = vmatpush1.msra.mxu0 0.0
  %1129 = vmatprep.subr.mxu0 0.0
  %1130 = vmatpush1.msra.mxu0 0.0
  %1131 = vmatprep.subr.mxu0 0.0
  %1132 = vmatpush1.msra.mxu0 0.0
  %1133 = vmatprep.subr.mxu0 0.0
  %1134 = vmatpush1.msra.mxu0 0.0
  %1135 = vmatprep.subr.mxu0 0.0
  %1136 = vmatpush1.msra.mxu0 0.0
  %1137 = vmatprep.subr.mxu0 0.0
  %1138 = vmatpush1.msra.mxu0 0.0
  %1139 = vmatprep.subr.mxu0 0.0
  %1140 = vmatpush1.msra.mxu0 0.0
  %1141 = vmatprep.subr.mxu0 0.0
  %1142 = vmatpush1.msra.mxu0 0.0
  %1143 = vmatprep.subr.mxu0 0.0
  %1144 = vmatpush1.msra.mxu0 0.0
  %1145 = vmatprep.subr.mxu0 0.0
  %1146 = vmatpush1.msra.mxu0 0.0
  %1147 = vmatprep.subr.mxu0 0.0
  %1148 = vmatpush1.msra.mxu0 0.0
  %1149 = vmatprep.subr.mxu0 0.0
  %1150 = vmatpush1.msra.mxu0 0.0
  %1151 = vmatprep.subr.mxu0 0.0
  %1152 = vmatpush1.msra.mxu0 0.0
  %1153 = vmatprep.subr.mxu0 0.0
  %1154 = vmatpush1.msra.mxu0 0.0
  %1155 = vmatprep.subr.mxu0 0.0
  %1156 = vmatpush1.msra.mxu0 0.0
  %1157 = vmatprep.subr.mxu0 0.0
  %1158 = vmatpush1.msra.mxu0 0.0
  %1159 = vmatprep.subr.mxu0 0.0
  %1160 = vmatpush1.msra.mxu0 0.0
  %1161 = vmatprep.subr.mxu0 0.0
  %1162 = vmatpush1.msra.mxu0 0.0
  %1163 = vmatprep.subr.mxu0 0.0
  %1164 = vmatpush1.msra.mxu0 0.0
  %1165 = vmatprep.subr.mxu0 0.0
  %1166 = vmatpush1.msra.mxu0 0.0
  %1167 = vmatprep.subr.mxu0 0.0
  %1168 = vmatpush1.msra.mxu0 0.0
  %1169 = vmatprep.subr.mxu0 0.0
  %1170 = vmatpush1.msra.mxu0 0.0
  %1171 = vmatprep.subr.mxu0 0.0
  %1172 = vmatpush1.msra.mxu0 0.0
  %1173 = vmatprep.subr.mxu0 0.0
  %1174 = vmatpush1.msra.mxu0 0.0
  %1175 = vmatprep.subr.mxu0 0.0
  %1176 = vmatpush1.msra.mxu0 0.0
  %1177 = vmatprep.subr.mxu0 0.0
  %1178 = vmatpush1.msra.mxu0 0.0
  %1179 = vmatprep.mubr.f32.mxu0 0.0
  %1180 = vmatmul.mubr.f32.gmra.mrb[0].mxu0 %v1113
  %v1181 = vpop.f32.mrb[0].mxu0
  %v1182 = vadd.f32 0.0, %v1181
  %v1183 = vpop.f32.mrb[0].mxu0
  %1184 = vdwg.mxu0
  %v1185 = vadd.f32 %v946, %v1182
  %v1187 = vlaneseq
  %v1188 = vshrl.u32 %v1187, 7
  %v1189 = vsub.s32 0, %v1188
  %v1190 = vrot.slane %v54, %v1189
  %v1192 = vadd.f32 %v1185, %v1190
  %v1193 = vadd.f32 %v38, %v1192
  %v1194 = vsel %vm65, %v1193, 0.0
  %1195 = vadd.xlane.f32.xlu0 %v1194
  %v1196 = vpop.xlane.xlu0 %1195
  %v1197 = vrcp.pop 32.0
  %v1198 = vmul.f32 %v1196, %v1197
  %v1199 = vsub.f32 %v1193, %v1198
  %v1200 = vmul.f32 %v1199, %v1199
  %v1201 = vsel %vm65, %v1200, 0.0
  %1202 = vadd.xlane.f32.xlu0 %v1201
  %v1203 = vpop.xlane.xlu0 %1202
  %v1204 = vmul.f32 %v1203, %v1197
  %v1205 = vadd.f32 %v1204, 1e-05
  %v1206 = vrsqrt.pop %v1205
  %v1207 = vmul.f32 %v1199, %v1206
  %v1209 = vlaneseq
  %v1210 = vshrl.u32 %v1209, 7
  %v1211 = vsub.s32 0, %v1210
  %v1212 = vrot.slane %v55, %v1211
  %v1214 = vmul.f32 %v1207, %v1212
  %v1216 = vlaneseq
  %v1217 = vshrl.u32 %v1216, 7
  %v1218 = vsub.s32 0, %v1217
  %v1219 = vrot.slane %v56, %v1218
  %v1221 = vadd.f32 %v1214, %v1219
  %1222 = vst.msk [vmem:[%s11] sm:$0xff] %vm65, %v1221
  %v1223 = vlaneseq
  %v1224 = vshrl.u32 %v1223, 7
  %v1225 = vsub.s32 1, %v1224
  %v1226 = vrot.slane %v58, %v1225
  %v1227 = vadd.f32 %v57, %v1226
  %v1229 = vsel %vm233, %v144, 0
  %v1232 = vsel %vm233, %v225, 0
  %1234 = vmatprep.subr.mxu0 0.0
  %1235 = vmatpush1.xpose.msra.mxu0 %v1232
  %1236 = vmatprep.subr.mxu0 0.0
  %1237 = vmatpush1.xpose.msra.mxu0 0.0
  %1238 = vmatprep.subr.mxu0 0.0
  %1239 = vmatpush1.xpose.msra.mxu0 0.0
  %1240 = vmatprep.subr.mxu0 0.0
  %1241 = vmatpush1.xpose.msra.mxu0 0.0
  %1242 = vmatprep.subr.mxu0 0.0
  %1243 = vmatpush1.xpose.msra.mxu0 0.0
  %1244 = vmatprep.subr.mxu0 0.0
  %1245 = vmatpush1.xpose.msra.mxu0 0.0
  %1246 = vmatprep.subr.mxu0 0.0
  %1247 = vmatpush1.xpose.msra.mxu0 0.0
  %1248 = vmatprep.subr.mxu0 0.0
  %1249 = vmatpush1.xpose.msra.mxu0 0.0
  %1250 = vmatprep.subr.mxu0 0.0
  %1251 = vmatpush1.xpose.msra.mxu0 0.0
  %1252 = vmatprep.subr.mxu0 0.0
  %1253 = vmatpush1.xpose.msra.mxu0 0.0
  %1254 = vmatprep.subr.mxu0 0.0
  %1255 = vmatpush1.xpose.msra.mxu0 0.0
  %1256 = vmatprep.subr.mxu0 0.0
  %1257 = vmatpush1.xpose.msra.mxu0 0.0
  %1258 = vmatprep.subr.mxu0 0.0
  %1259 = vmatpush1.xpose.msra.mxu0 0.0
  %1260 = vmatprep.subr.mxu0 0.0
  %1261 = vmatpush1.xpose.msra.mxu0 0.0
  %1262 = vmatprep.subr.mxu0 0.0
  %1263 = vmatpush1.xpose.msra.mxu0 0.0
  %1264 = vmatprep.subr.mxu0 0.0
  %1265 = vmatpush1.xpose.msra.mxu0 0.0
  %1266 = vmatprep.subr.mxu0 0.0
  %1267 = vmatpush1.xpose.msra.mxu0 0.0
  %1268 = vmatprep.subr.mxu0 0.0
  %1269 = vmatpush1.xpose.msra.mxu0 0.0
  %1270 = vmatprep.subr.mxu0 0.0
  %1271 = vmatpush1.xpose.msra.mxu0 0.0
  %1272 = vmatprep.subr.mxu0 0.0
  %1273 = vmatpush1.xpose.msra.mxu0 0.0
  %1274 = vmatprep.subr.mxu0 0.0
  %1275 = vmatpush1.xpose.msra.mxu0 0.0
  %1276 = vmatprep.subr.mxu0 0.0
  %1277 = vmatpush1.xpose.msra.mxu0 0.0
  %1278 = vmatprep.subr.mxu0 0.0
  %1279 = vmatpush1.xpose.msra.mxu0 0.0
  %1280 = vmatprep.subr.mxu0 0.0
  %1281 = vmatpush1.xpose.msra.mxu0 0.0
  %1282 = vmatprep.subr.mxu0 0.0
  %1283 = vmatpush1.xpose.msra.mxu0 0.0
  %1284 = vmatprep.subr.mxu0 0.0
  %1285 = vmatpush1.xpose.msra.mxu0 0.0
  %1286 = vmatprep.subr.mxu0 0.0
  %1287 = vmatpush1.xpose.msra.mxu0 0.0
  %1288 = vmatprep.subr.mxu0 0.0
  %1289 = vmatpush1.xpose.msra.mxu0 0.0
  %1290 = vmatprep.subr.mxu0 0.0
  %1291 = vmatpush1.xpose.msra.mxu0 0.0
  %1292 = vmatprep.subr.mxu0 0.0
  %1293 = vmatpush1.xpose.msra.mxu0 0.0
  %1294 = vmatprep.subr.mxu0 0.0
  %1295 = vmatpush1.xpose.msra.mxu0 0.0
  %1296 = vmatprep.subr.mxu0 0.0
  %1297 = vmatpush1.xpose.msra.mxu0 0.0
  %1298 = vmatprep.mubr.f32.mxu0 0.0
  %1299 = vmatmul.mubr.f32.gmra.mrb[0].mxu0 %v1229
  %v1300 = vpop.f32.mrb[0].mxu0
  %v1301 = vadd.f32 %v1227, %v1300
  %v1302 = vpop.f32.mrb[0].mxu0
  %1303 = vdwg.mxu0
  %v1304 = vsel %vm233, %v1301, -inf
  %1305 = vmax.xlane.f32.xlu0 %v1304
  %v1306 = vpop.xlane.xlu0 %1305
  %v1307 = vsub.f32 %v1301, %v1306
  %v1308 = vmul.f32 %v1307, 1.442695
  %v1309 = vpow.pop %v1308
  %v1310 = vsel %vm233, %v1309, 0.0
  %1311 = vadd.xlane.f32.xlu0 %v1310
  %v1312 = vpop.xlane.xlu0 %1311
  %1313 = vrot.lane.b32.xlu0 %v225, 96
  %v1314 = vpop.permute.xlu0 %1313
  %v1317 = vsel %vm233, %v1309, 0
  %1319 = vmatprep.subr.mxu0 0.0
  %1320 = vmatpush1.msra.mxu0 %v1314
  %1321 = vmatprep.subr.mxu0 0.0
  %1322 = vmatpush1.msra.mxu0 0.0
  %1323 = vmatprep.subr.mxu0 0.0
  %1324 = vmatpush1.msra.mxu0 0.0
  %1325 = vmatprep.subr.mxu0 0.0
  %1326 = vmatpush1.msra.mxu0 0.0
  %1327 = vmatprep.subr.mxu0 0.0
  %1328 = vmatpush1.msra.mxu0 0.0
  %1329 = vmatprep.subr.mxu0 0.0
  %1330 = vmatpush1.msra.mxu0 0.0
  %1331 = vmatprep.subr.mxu0 0.0
  %1332 = vmatpush1.msra.mxu0 0.0
  %1333 = vmatprep.subr.mxu0 0.0
  %1334 = vmatpush1.msra.mxu0 0.0
  %1335 = vmatprep.subr.mxu0 0.0
  %1336 = vmatpush1.msra.mxu0 0.0
  %1337 = vmatprep.subr.mxu0 0.0
  %1338 = vmatpush1.msra.mxu0 0.0
  %1339 = vmatprep.subr.mxu0 0.0
  %1340 = vmatpush1.msra.mxu0 0.0
  %1341 = vmatprep.subr.mxu0 0.0
  %1342 = vmatpush1.msra.mxu0 0.0
  %1343 = vmatprep.subr.mxu0 0.0
  %1344 = vmatpush1.msra.mxu0 0.0
  %1345 = vmatprep.subr.mxu0 0.0
  %1346 = vmatpush1.msra.mxu0 0.0
  %1347 = vmatprep.subr.mxu0 0.0
  %1348 = vmatpush1.msra.mxu0 0.0
  %1349 = vmatprep.subr.mxu0 0.0
  %1350 = vmatpush1.msra.mxu0 0.0
  %1351 = vmatprep.subr.mxu0 0.0
  %1352 = vmatpush1.msra.mxu0 0.0
  %1353 = vmatprep.subr.mxu0 0.0
  %1354 = vmatpush1.msra.mxu0 0.0
  %1355 = vmatprep.subr.mxu0 0.0
  %1356 = vmatpush1.msra.mxu0 0.0
  %1357 = vmatprep.subr.mxu0 0.0
  %1358 = vmatpush1.msra.mxu0 0.0
  %1359 = vmatprep.subr.mxu0 0.0
  %1360 = vmatpush1.msra.mxu0 0.0
  %1361 = vmatprep.subr.mxu0 0.0
  %1362 = vmatpush1.msra.mxu0 0.0
  %1363 = vmatprep.subr.mxu0 0.0
  %1364 = vmatpush1.msra.mxu0 0.0
  %1365 = vmatprep.subr.mxu0 0.0
  %1366 = vmatpush1.msra.mxu0 0.0
  %1367 = vmatprep.subr.mxu0 0.0
  %1368 = vmatpush1.msra.mxu0 0.0
  %1369 = vmatprep.subr.mxu0 0.0
  %1370 = vmatpush1.msra.mxu0 0.0
  %1371 = vmatprep.subr.mxu0 0.0
  %1372 = vmatpush1.msra.mxu0 0.0
  %1373 = vmatprep.subr.mxu0 0.0
  %1374 = vmatpush1.msra.mxu0 0.0
  %1375 = vmatprep.subr.mxu0 0.0
  %1376 = vmatpush1.msra.mxu0 0.0
  %1377 = vmatprep.subr.mxu0 0.0
  %1378 = vmatpush1.msra.mxu0 0.0
  %1379 = vmatprep.subr.mxu0 0.0
  %1380 = vmatpush1.msra.mxu0 0.0
  %1381 = vmatprep.subr.mxu0 0.0
  %1382 = vmatpush1.msra.mxu0 0.0
  %1383 = vmatprep.mubr.f32.mxu0 0.0
  %1384 = vmatmul.mubr.f32.gmra.mrb[0].mxu0 %v1317
  %v1385 = vpop.f32.mrb[0].mxu0
  %v1386 = vadd.f32 0.0, %v1385
  %v1387 = vpop.f32.mrb[0].mxu0
  %1388 = vdwg.mxu0
  %v1389 = vrcp.pop %v1312
  %v1390 = vmul.f32 %v1386, %v1389
  %1391 = vrot.lane.b32.xlu0 %v144, 120
  %v1392 = vpop.permute.xlu0 %1391
  %1393 = vrot.lane.b32.xlu0 %v225, 120
  %v1394 = vpop.permute.xlu0 %1393
  %v1395 = vsel %vm233, %v1392, 0
  %v1397 = vsel %vm233, %v1394, 0
  %1399 = vmatprep.subr.mxu0 0.0
  %1400 = vmatpush1.xpose.msra.mxu0 %v1397
  %1401 = vmatprep.subr.mxu0 0.0
  %1402 = vmatpush1.xpose.msra.mxu0 0.0
  %1403 = vmatprep.subr.mxu0 0.0
  %1404 = vmatpush1.xpose.msra.mxu0 0.0
  %1405 = vmatprep.subr.mxu0 0.0
  %1406 = vmatpush1.xpose.msra.mxu0 0.0
  %1407 = vmatprep.subr.mxu0 0.0
  %1408 = vmatpush1.xpose.msra.mxu0 0.0
  %1409 = vmatprep.subr.mxu0 0.0
  %1410 = vmatpush1.xpose.msra.mxu0 0.0
  %1411 = vmatprep.subr.mxu0 0.0
  %1412 = vmatpush1.xpose.msra.mxu0 0.0
  %1413 = vmatprep.subr.mxu0 0.0
  %1414 = vmatpush1.xpose.msra.mxu0 0.0
  %1415 = vmatprep.subr.mxu0 0.0
  %1416 = vmatpush1.xpose.msra.mxu0 0.0
  %1417 = vmatprep.subr.mxu0 0.0
  %1418 = vmatpush1.xpose.msra.mxu0 0.0
  %1419 = vmatprep.subr.mxu0 0.0
  %1420 = vmatpush1.xpose.msra.mxu0 0.0
  %1421 = vmatprep.subr.mxu0 0.0
  %1422 = vmatpush1.xpose.msra.mxu0 0.0
  %1423 = vmatprep.subr.mxu0 0.0
  %1424 = vmatpush1.xpose.msra.mxu0 0.0
  %1425 = vmatprep.subr.mxu0 0.0
  %1426 = vmatpush1.xpose.msra.mxu0 0.0
  %1427 = vmatprep.subr.mxu0 0.0
  %1428 = vmatpush1.xpose.msra.mxu0 0.0
  %1429 = vmatprep.subr.mxu0 0.0
  %1430 = vmatpush1.xpose.msra.mxu0 0.0
  %1431 = vmatprep.subr.mxu0 0.0
  %1432 = vmatpush1.xpose.msra.mxu0 0.0
  %1433 = vmatprep.subr.mxu0 0.0
  %1434 = vmatpush1.xpose.msra.mxu0 0.0
  %1435 = vmatprep.subr.mxu0 0.0
  %1436 = vmatpush1.xpose.msra.mxu0 0.0
  %1437 = vmatprep.subr.mxu0 0.0
  %1438 = vmatpush1.xpose.msra.mxu0 0.0
  %1439 = vmatprep.subr.mxu0 0.0
  %1440 = vmatpush1.xpose.msra.mxu0 0.0
  %1441 = vmatprep.subr.mxu0 0.0
  %1442 = vmatpush1.xpose.msra.mxu0 0.0
  %1443 = vmatprep.subr.mxu0 0.0
  %1444 = vmatpush1.xpose.msra.mxu0 0.0
  %1445 = vmatprep.subr.mxu0 0.0
  %1446 = vmatpush1.xpose.msra.mxu0 0.0
  %1447 = vmatprep.subr.mxu0 0.0
  %1448 = vmatpush1.xpose.msra.mxu0 0.0
  %1449 = vmatprep.subr.mxu0 0.0
  %1450 = vmatpush1.xpose.msra.mxu0 0.0
  %1451 = vmatprep.subr.mxu0 0.0
  %1452 = vmatpush1.xpose.msra.mxu0 0.0
  %1453 = vmatprep.subr.mxu0 0.0
  %1454 = vmatpush1.xpose.msra.mxu0 0.0
  %1455 = vmatprep.subr.mxu0 0.0
  %1456 = vmatpush1.xpose.msra.mxu0 0.0
  %1457 = vmatprep.subr.mxu0 0.0
  %1458 = vmatpush1.xpose.msra.mxu0 0.0
  %1459 = vmatprep.subr.mxu0 0.0
  %1460 = vmatpush1.xpose.msra.mxu0 0.0
  %1461 = vmatprep.subr.mxu0 0.0
  %1462 = vmatpush1.xpose.msra.mxu0 0.0
  %1463 = vmatprep.mubr.f32.mxu0 0.0
  %1464 = vmatmul.mubr.f32.gmra.mrb[0].mxu0 %v1395
  %v1465 = vpop.f32.mrb[0].mxu0
  %v1466 = vadd.f32 %v1227, %v1465
  %v1467 = vpop.f32.mrb[0].mxu0
  %1468 = vdwg.mxu0
  %v1469 = vsel %vm233, %v1466, -inf
  %1470 = vmax.xlane.f32.xlu0 %v1469
  %v1471 = vpop.xlane.xlu0 %1470
  %v1472 = vsub.f32 %v1466, %v1471
  %v1473 = vmul.f32 %v1472, 1.442695
  %v1474 = vpow.pop %v1473
  %v1475 = vsel %vm233, %v1474, 0.0
  %1476 = vadd.xlane.f32.xlu0 %v1475
  %v1477 = vpop.xlane.xlu0 %1476
  %1478 = vrot.lane.b32.xlu0 %v225, 88
  %v1479 = vpop.permute.xlu0 %1478
  %v1482 = vsel %vm233, %v1474, 0
  %1484 = vmatprep.subr.mxu0 0.0
  %1485 = vmatpush1.msra.mxu0 %v1479
  %1486 = vmatprep.subr.mxu0 0.0
  %1487 = vmatpush1.msra.mxu0 0.0
  %1488 = vmatprep.subr.mxu0 0.0
  %1489 = vmatpush1.msra.mxu0 0.0
  %1490 = vmatprep.subr.mxu0 0.0
  %1491 = vmatpush1.msra.mxu0 0.0
  %1492 = vmatprep.subr.mxu0 0.0
  %1493 = vmatpush1.msra.mxu0 0.0
  %1494 = vmatprep.subr.mxu0 0.0
  %1495 = vmatpush1.msra.mxu0 0.0
  %1496 = vmatprep.subr.mxu0 0.0
  %1497 = vmatpush1.msra.mxu0 0.0
  %1498 = vmatprep.subr.mxu0 0.0
  %1499 = vmatpush1.msra.mxu0 0.0
  %1500 = vmatprep.subr.mxu0 0.0
  %1501 = vmatpush1.msra.mxu0 0.0
  %1502 = vmatprep.subr.mxu0 0.0
  %1503 = vmatpush1.msra.mxu0 0.0
  %1504 = vmatprep.subr.mxu0 0.0
  %1505 = vmatpush1.msra.mxu0 0.0
  %1506 = vmatprep.subr.mxu0 0.0
  %1507 = vmatpush1.msra.mxu0 0.0
  %1508 = vmatprep.subr.mxu0 0.0
  %1509 = vmatpush1.msra.mxu0 0.0
  %1510 = vmatprep.subr.mxu0 0.0
  %1511 = vmatpush1.msra.mxu0 0.0
  %1512 = vmatprep.subr.mxu0 0.0
  %1513 = vmatpush1.msra.mxu0 0.0
  %1514 = vmatprep.subr.mxu0 0.0
  %1515 = vmatpush1.msra.mxu0 0.0
  %1516 = vmatprep.subr.mxu0 0.0
  %1517 = vmatpush1.msra.mxu0 0.0
  %1518 = vmatprep.subr.mxu0 0.0
  %1519 = vmatpush1.msra.mxu0 0.0
  %1520 = vmatprep.subr.mxu0 0.0
  %1521 = vmatpush1.msra.mxu0 0.0
  %1522 = vmatprep.subr.mxu0 0.0
  %1523 = vmatpush1.msra.mxu0 0.0
  %1524 = vmatprep.subr.mxu0 0.0
  %1525 = vmatpush1.msra.mxu0 0.0
  %1526 = vmatprep.subr.mxu0 0.0
  %1527 = vmatpush1.msra.mxu0 0.0
  %1528 = vmatprep.subr.mxu0 0.0
  %1529 = vmatpush1.msra.mxu0 0.0
  %1530 = vmatprep.subr.mxu0 0.0
  %1531 = vmatpush1.msra.mxu0 0.0
  %1532 = vmatprep.subr.mxu0 0.0
  %1533 = vmatpush1.msra.mxu0 0.0
  %1534 = vmatprep.subr.mxu0 0.0
  %1535 = vmatpush1.msra.mxu0 0.0
  %1536 = vmatprep.subr.mxu0 0.0
  %1537 = vmatpush1.msra.mxu0 0.0
  %1538 = vmatprep.subr.mxu0 0.0
  %1539 = vmatpush1.msra.mxu0 0.0
  %1540 = vmatprep.subr.mxu0 0.0
  %1541 = vmatpush1.msra.mxu0 0.0
  %1542 = vmatprep.subr.mxu0 0.0
  %1543 = vmatpush1.msra.mxu0 0.0
  %1544 = vmatprep.subr.mxu0 0.0
  %1545 = vmatpush1.msra.mxu0 0.0
  %1546 = vmatprep.subr.mxu0 0.0
  %1547 = vmatpush1.msra.mxu0 0.0
  %1548 = vmatprep.mubr.f32.mxu0 0.0
  %1549 = vmatmul.mubr.f32.gmra.mrb[0].mxu0 %v1482
  %v1550 = vpop.f32.mrb[0].mxu0
  %v1551 = vadd.f32 0.0, %v1550
  %v1552 = vpop.f32.mrb[0].mxu0
  %1553 = vdwg.mxu0
  %v1554 = vrcp.pop %v1477
  %v1555 = vmul.f32 %v1551, %v1554
  %v1557 = vsel %vm233, %v1555, 0
  %1559 = vmatprep.subr.mxu0 0.0
  %1560 = vmatpush1.msra.mxu0 %v51
  %1561 = vmatprep.subr.mxu0 0.0
  %1562 = vmatpush1.msra.mxu0 0.0
  %1563 = vmatprep.subr.mxu0 0.0
  %1564 = vmatpush1.msra.mxu0 0.0
  %1565 = vmatprep.subr.mxu0 0.0
  %1566 = vmatpush1.msra.mxu0 0.0
  %1567 = vmatprep.subr.mxu0 0.0
  %1568 = vmatpush1.msra.mxu0 0.0
  %1569 = vmatprep.subr.mxu0 0.0
  %1570 = vmatpush1.msra.mxu0 0.0
  %1571 = vmatprep.subr.mxu0 0.0
  %1572 = vmatpush1.msra.mxu0 0.0
  %1573 = vmatprep.subr.mxu0 0.0
  %1574 = vmatpush1.msra.mxu0 0.0
  %1575 = vmatprep.subr.mxu0 0.0
  %1576 = vmatpush1.msra.mxu0 0.0
  %1577 = vmatprep.subr.mxu0 0.0
  %1578 = vmatpush1.msra.mxu0 0.0
  %1579 = vmatprep.subr.mxu0 0.0
  %1580 = vmatpush1.msra.mxu0 0.0
  %1581 = vmatprep.subr.mxu0 0.0
  %1582 = vmatpush1.msra.mxu0 0.0
  %1583 = vmatprep.subr.mxu0 0.0
  %1584 = vmatpush1.msra.mxu0 0.0
  %1585 = vmatprep.subr.mxu0 0.0
  %1586 = vmatpush1.msra.mxu0 0.0
  %1587 = vmatprep.subr.mxu0 0.0
  %1588 = vmatpush1.msra.mxu0 0.0
  %1589 = vmatprep.subr.mxu0 0.0
  %1590 = vmatpush1.msra.mxu0 0.0
  %1591 = vmatprep.subr.mxu0 0.0
  %1592 = vmatpush1.msra.mxu0 0.0
  %1593 = vmatprep.subr.mxu0 0.0
  %1594 = vmatpush1.msra.mxu0 0.0
  %1595 = vmatprep.subr.mxu0 0.0
  %1596 = vmatpush1.msra.mxu0 0.0
  %1597 = vmatprep.subr.mxu0 0.0
  %1598 = vmatpush1.msra.mxu0 0.0
  %1599 = vmatprep.subr.mxu0 0.0
  %1600 = vmatpush1.msra.mxu0 0.0
  %1601 = vmatprep.subr.mxu0 0.0
  %1602 = vmatpush1.msra.mxu0 0.0
  %1603 = vmatprep.subr.mxu0 0.0
  %1604 = vmatpush1.msra.mxu0 0.0
  %1605 = vmatprep.subr.mxu0 0.0
  %1606 = vmatpush1.msra.mxu0 0.0
  %1607 = vmatprep.subr.mxu0 0.0
  %1608 = vmatpush1.msra.mxu0 0.0
  %1609 = vmatprep.subr.mxu0 0.0
  %1610 = vmatpush1.msra.mxu0 0.0
  %1611 = vmatprep.subr.mxu0 0.0
  %1612 = vmatpush1.msra.mxu0 0.0
  %1613 = vmatprep.subr.mxu0 0.0
  %1614 = vmatpush1.msra.mxu0 0.0
  %1615 = vmatprep.subr.mxu0 0.0
  %1616 = vmatpush1.msra.mxu0 0.0
  %1617 = vmatprep.subr.mxu0 0.0
  %1618 = vmatpush1.msra.mxu0 0.0
  %1619 = vmatprep.subr.mxu0 0.0
  %1620 = vmatpush1.msra.mxu0 0.0
  %1621 = vmatprep.subr.mxu0 0.0
  %1622 = vmatpush1.msra.mxu0 0.0
  %1623 = vmatprep.mubr.f32.mxu0 0.0
  %1624 = vmatmul.mubr.f32.gmra.mrb[0].mxu0 %v1557
  %v1625 = vpop.f32.mrb[0].mxu0
  %v1626 = vadd.f32 0.0, %v1625
  %v1627 = vpop.f32.mrb[0].mxu0
  %1628 = vdwg.mxu0
  %v1630 = vsel %vm233, %v1390, 0
  %1632 = vmatprep.subr.mxu0 0.0
  %1633 = vmatpush1.msra.mxu0 %v50
  %1634 = vmatprep.subr.mxu0 0.0
  %1635 = vmatpush1.msra.mxu0 0.0
  %1636 = vmatprep.subr.mxu0 0.0
  %1637 = vmatpush1.msra.mxu0 0.0
  %1638 = vmatprep.subr.mxu0 0.0
  %1639 = vmatpush1.msra.mxu0 0.0
  %1640 = vmatprep.subr.mxu0 0.0
  %1641 = vmatpush1.msra.mxu0 0.0
  %1642 = vmatprep.subr.mxu0 0.0
  %1643 = vmatpush1.msra.mxu0 0.0
  %1644 = vmatprep.subr.mxu0 0.0
  %1645 = vmatpush1.msra.mxu0 0.0
  %1646 = vmatprep.subr.mxu0 0.0
  %1647 = vmatpush1.msra.mxu0 0.0
  %1648 = vmatprep.subr.mxu0 0.0
  %1649 = vmatpush1.msra.mxu0 0.0
  %1650 = vmatprep.subr.mxu0 0.0
  %1651 = vmatpush1.msra.mxu0 0.0
  %1652 = vmatprep.subr.mxu0 0.0
  %1653 = vmatpush1.msra.mxu0 0.0
  %1654 = vmatprep.subr.mxu0 0.0
  %1655 = vmatpush1.msra.mxu0 0.0
  %1656 = vmatprep.subr.mxu0 0.0
  %1657 = vmatpush1.msra.mxu0 0.0
  %1658 = vmatprep.subr.mxu0 0.0
  %1659 = vmatpush1.msra.mxu0 0.0
  %1660 = vmatprep.subr.mxu0 0.0
  %1661 = vmatpush1.msra.mxu0 0.0
  %1662 = vmatprep.subr.mxu0 0.0
  %1663 = vmatpush1.msra.mxu0 0.0
  %1664 = vmatprep.subr.mxu0 0.0
  %1665 = vmatpush1.msra.mxu0 0.0
  %1666 = vmatprep.subr.mxu0 0.0
  %1667 = vmatpush1.msra.mxu0 0.0
  %1668 = vmatprep.subr.mxu0 0.0
  %1669 = vmatpush1.msra.mxu0 0.0
  %1670 = vmatprep.subr.mxu0 0.0
  %1671 = vmatpush1.msra.mxu0 0.0
  %1672 = vmatprep.subr.mxu0 0.0
  %1673 = vmatpush1.msra.mxu0 0.0
  %1674 = vmatprep.subr.mxu0 0.0
  %1675 = vmatpush1.msra.mxu0 0.0
  %1676 = vmatprep.subr.mxu0 0.0
  %1677 = vmatpush1.msra.mxu0 0.0
  %1678 = vmatprep.subr.mxu0 0.0
  %1679 = vmatpush1.msra.mxu0 0.0
  %1680 = vmatprep.subr.mxu0 0.0
  %1681 = vmatpush1.msra.mxu0 0.0
  %1682 = vmatprep.subr.mxu0 0.0
  %1683 = vmatpush1.msra.mxu0 0.0
  %1684 = vmatprep.subr.mxu0 0.0
  %1685 = vmatpush1.msra.mxu0 0.0
  %1686 = vmatprep.subr.mxu0 0.0
  %1687 = vmatpush1.msra.mxu0 0.0
  %1688 = vmatprep.subr.mxu0 0.0
  %1689 = vmatpush1.msra.mxu0 0.0
  %1690 = vmatprep.subr.mxu0 0.0
  %1691 = vmatpush1.msra.mxu0 0.0
  %1692 = vmatprep.subr.mxu0 0.0
  %1693 = vmatpush1.msra.mxu0 0.0
  %1694 = vmatprep.subr.mxu0 0.0
  %1695 = vmatpush1.msra.mxu0 0.0
  %1696 = vmatprep.mubr.f32.mxu0 0.0
  %1697 = vmatmul.mubr.f32.gmra.mrb[0].mxu0 %v1630
  %v1698 = vpop.f32.mrb[0].mxu0
  %v1699 = vadd.f32 %v1626, %v1698
  %v1700 = vpop.f32.mrb[0].mxu0
  %1701 = vdwg.mxu0
  %1702 = vrot.lane.b32.xlu0 %v144, 112
  %v1703 = vpop.permute.xlu0 %1702
  %1704 = vrot.lane.b32.xlu0 %v225, 112
  %v1705 = vpop.permute.xlu0 %1704
  %v1706 = vsel %vm233, %v1703, 0
  %v1708 = vsel %vm233, %v1705, 0
  %1710 = vmatprep.subr.mxu0 0.0
  %1711 = vmatpush1.xpose.msra.mxu0 %v1708
  %1712 = vmatprep.subr.mxu0 0.0
  %1713 = vmatpush1.xpose.msra.mxu0 0.0
  %1714 = vmatprep.subr.mxu0 0.0
  %1715 = vmatpush1.xpose.msra.mxu0 0.0
  %1716 = vmatprep.subr.mxu0 0.0
  %1717 = vmatpush1.xpose.msra.mxu0 0.0
  %1718 = vmatprep.subr.mxu0 0.0
  %1719 = vmatpush1.xpose.msra.mxu0 0.0
  %1720 = vmatprep.subr.mxu0 0.0
  %1721 = vmatpush1.xpose.msra.mxu0 0.0
  %1722 = vmatprep.subr.mxu0 0.0
  %1723 = vmatpush1.xpose.msra.mxu0 0.0
  %1724 = vmatprep.subr.mxu0 0.0
  %1725 = vmatpush1.xpose.msra.mxu0 0.0
  %1726 = vmatprep.subr.mxu0 0.0
  %1727 = vmatpush1.xpose.msra.mxu0 0.0
  %1728 = vmatprep.subr.mxu0 0.0
  %1729 = vmatpush1.xpose.msra.mxu0 0.0
  %1730 = vmatprep.subr.mxu0 0.0
  %1731 = vmatpush1.xpose.msra.mxu0 0.0
  %1732 = vmatprep.subr.mxu0 0.0
  %1733 = vmatpush1.xpose.msra.mxu0 0.0
  %1734 = vmatprep.subr.mxu0 0.0
  %1735 = vmatpush1.xpose.msra.mxu0 0.0
  %1736 = vmatprep.subr.mxu0 0.0
  %1737 = vmatpush1.xpose.msra.mxu0 0.0
  %1738 = vmatprep.subr.mxu0 0.0
  %1739 = vmatpush1.xpose.msra.mxu0 0.0
  %1740 = vmatprep.subr.mxu0 0.0
  %1741 = vmatpush1.xpose.msra.mxu0 0.0
  %1742 = vmatprep.subr.mxu0 0.0
  %1743 = vmatpush1.xpose.msra.mxu0 0.0
  %1744 = vmatprep.subr.mxu0 0.0
  %1745 = vmatpush1.xpose.msra.mxu0 0.0
  %1746 = vmatprep.subr.mxu0 0.0
  %1747 = vmatpush1.xpose.msra.mxu0 0.0
  %1748 = vmatprep.subr.mxu0 0.0
  %1749 = vmatpush1.xpose.msra.mxu0 0.0
  %1750 = vmatprep.subr.mxu0 0.0
  %1751 = vmatpush1.xpose.msra.mxu0 0.0
  %1752 = vmatprep.subr.mxu0 0.0
  %1753 = vmatpush1.xpose.msra.mxu0 0.0
  %1754 = vmatprep.subr.mxu0 0.0
  %1755 = vmatpush1.xpose.msra.mxu0 0.0
  %1756 = vmatprep.subr.mxu0 0.0
  %1757 = vmatpush1.xpose.msra.mxu0 0.0
  %1758 = vmatprep.subr.mxu0 0.0
  %1759 = vmatpush1.xpose.msra.mxu0 0.0
  %1760 = vmatprep.subr.mxu0 0.0
  %1761 = vmatpush1.xpose.msra.mxu0 0.0
  %1762 = vmatprep.subr.mxu0 0.0
  %1763 = vmatpush1.xpose.msra.mxu0 0.0
  %1764 = vmatprep.subr.mxu0 0.0
  %1765 = vmatpush1.xpose.msra.mxu0 0.0
  %1766 = vmatprep.subr.mxu0 0.0
  %1767 = vmatpush1.xpose.msra.mxu0 0.0
  %1768 = vmatprep.subr.mxu0 0.0
  %1769 = vmatpush1.xpose.msra.mxu0 0.0
  %1770 = vmatprep.subr.mxu0 0.0
  %1771 = vmatpush1.xpose.msra.mxu0 0.0
  %1772 = vmatprep.subr.mxu0 0.0
  %1773 = vmatpush1.xpose.msra.mxu0 0.0
  %1774 = vmatprep.mubr.f32.mxu0 0.0
  %1775 = vmatmul.mubr.f32.gmra.mrb[0].mxu0 %v1706
  %v1776 = vpop.f32.mrb[0].mxu0
  %v1777 = vadd.f32 %v1227, %v1776
  %v1778 = vpop.f32.mrb[0].mxu0
  %1779 = vdwg.mxu0
  %v1780 = vsel %vm233, %v1777, -inf
  %1781 = vmax.xlane.f32.xlu0 %v1780
  %v1782 = vpop.xlane.xlu0 %1781
  %v1783 = vsub.f32 %v1777, %v1782
  %v1784 = vmul.f32 %v1783, 1.442695
  %v1785 = vpow.pop %v1784
  %v1786 = vsel %vm233, %v1785, 0.0
  %1787 = vadd.xlane.f32.xlu0 %v1786
  %v1788 = vpop.xlane.xlu0 %1787
  %1789 = vrot.lane.b32.xlu0 %v225, 80
  %v1790 = vpop.permute.xlu0 %1789
  %v1793 = vsel %vm233, %v1785, 0
  %1795 = vmatprep.subr.mxu0 0.0
  %1796 = vmatpush1.msra.mxu0 %v1790
  %1797 = vmatprep.subr.mxu0 0.0
  %1798 = vmatpush1.msra.mxu0 0.0
  %1799 = vmatprep.subr.mxu0 0.0
  %1800 = vmatpush1.msra.mxu0 0.0
  %1801 = vmatprep.subr.mxu0 0.0
  %1802 = vmatpush1.msra.mxu0 0.0
  %1803 = vmatprep.subr.mxu0 0.0
  %1804 = vmatpush1.msra.mxu0 0.0
  %1805 = vmatprep.subr.mxu0 0.0
  %1806 = vmatpush1.msra.mxu0 0.0
  %1807 = vmatprep.subr.mxu0 0.0
  %1808 = vmatpush1.msra.mxu0 0.0
  %1809 = vmatprep.subr.mxu0 0.0
  %1810 = vmatpush1.msra.mxu0 0.0
  %1811 = vmatprep.subr.mxu0 0.0
  %1812 = vmatpush1.msra.mxu0 0.0
  %1813 = vmatprep.subr.mxu0 0.0
  %1814 = vmatpush1.msra.mxu0 0.0
  %1815 = vmatprep.subr.mxu0 0.0
  %1816 = vmatpush1.msra.mxu0 0.0
  %1817 = vmatprep.subr.mxu0 0.0
  %1818 = vmatpush1.msra.mxu0 0.0
  %1819 = vmatprep.subr.mxu0 0.0
  %1820 = vmatpush1.msra.mxu0 0.0
  %1821 = vmatprep.subr.mxu0 0.0
  %1822 = vmatpush1.msra.mxu0 0.0
  %1823 = vmatprep.subr.mxu0 0.0
  %1824 = vmatpush1.msra.mxu0 0.0
  %1825 = vmatprep.subr.mxu0 0.0
  %1826 = vmatpush1.msra.mxu0 0.0
  %1827 = vmatprep.subr.mxu0 0.0
  %1828 = vmatpush1.msra.mxu0 0.0
  %1829 = vmatprep.subr.mxu0 0.0
  %1830 = vmatpush1.msra.mxu0 0.0
  %1831 = vmatprep.subr.mxu0 0.0
  %1832 = vmatpush1.msra.mxu0 0.0
  %1833 = vmatprep.subr.mxu0 0.0
  %1834 = vmatpush1.msra.mxu0 0.0
  %1835 = vmatprep.subr.mxu0 0.0
  %1836 = vmatpush1.msra.mxu0 0.0
  %1837 = vmatprep.subr.mxu0 0.0
  %1838 = vmatpush1.msra.mxu0 0.0
  %1839 = vmatprep.subr.mxu0 0.0
  %1840 = vmatpush1.msra.mxu0 0.0
  %1841 = vmatprep.subr.mxu0 0.0
  %1842 = vmatpush1.msra.mxu0 0.0
  %1843 = vmatprep.subr.mxu0 0.0
  %1844 = vmatpush1.msra.mxu0 0.0
  %1845 = vmatprep.subr.mxu0 0.0
  %1846 = vmatpush1.msra.mxu0 0.0
  %1847 = vmatprep.subr.mxu0 0.0
  %1848 = vmatpush1.msra.mxu0 0.0
  %1849 = vmatprep.subr.mxu0 0.0
  %1850 = vmatpush1.msra.mxu0 0.0
  %1851 = vmatprep.subr.mxu0 0.0
  %1852 = vmatpush1.msra.mxu0 0.0
  %1853 = vmatprep.subr.mxu0 0.0
  %1854 = vmatpush1.msra.mxu0 0.0
  %1855 = vmatprep.subr.mxu0 0.0
  %1856 = vmatpush1.msra.mxu0 0.0
  %1857 = vmatprep.subr.mxu0 0.0
  %1858 = vmatpush1.msra.mxu0 0.0
  %1859 = vmatprep.mubr.f32.mxu0 0.0
  %1860 = vmatmul.mubr.f32.gmra.mrb[0].mxu0 %v1793
  %v1861 = vpop.f32.mrb[0].mxu0
  %v1862 = vadd.f32 0.0, %v1861
  %v1863 = vpop.f32.mrb[0].mxu0
  %1864 = vdwg.mxu0
  %v1865 = vrcp.pop %v1788
  %v1866 = vmul.f32 %v1862, %v1865
  %v1868 = vsel %vm233, %v1866, 0
  %1870 = vmatprep.subr.mxu0 0.0
  %1871 = vmatpush1.msra.mxu0 %v52
  %1872 = vmatprep.subr.mxu0 0.0
  %1873 = vmatpush1.msra.mxu0 0.0
  %1874 = vmatprep.subr.mxu0 0.0
  %1875 = vmatpush1.msra.mxu0 0.0
  %1876 = vmatprep.subr.mxu0 0.0
  %1877 = vmatpush1.msra.mxu0 0.0
  %1878 = vmatprep.subr.mxu0 0.0
  %1879 = vmatpush1.msra.mxu0 0.0
  %1880 = vmatprep.subr.mxu0 0.0
  %1881 = vmatpush1.msra.mxu0 0.0
  %1882 = vmatprep.subr.mxu0 0.0
  %1883 = vmatpush1.msra.mxu0 0.0
  %1884 = vmatprep.subr.mxu0 0.0
  %1885 = vmatpush1.msra.mxu0 0.0
  %1886 = vmatprep.subr.mxu0 0.0
  %1887 = vmatpush1.msra.mxu0 0.0
  %1888 = vmatprep.subr.mxu0 0.0
  %1889 = vmatpush1.msra.mxu0 0.0
  %1890 = vmatprep.subr.mxu0 0.0
  %1891 = vmatpush1.msra.mxu0 0.0
  %1892 = vmatprep.subr.mxu0 0.0
  %1893 = vmatpush1.msra.mxu0 0.0
  %1894 = vmatprep.subr.mxu0 0.0
  %1895 = vmatpush1.msra.mxu0 0.0
  %1896 = vmatprep.subr.mxu0 0.0
  %1897 = vmatpush1.msra.mxu0 0.0
  %1898 = vmatprep.subr.mxu0 0.0
  %1899 = vmatpush1.msra.mxu0 0.0
  %1900 = vmatprep.subr.mxu0 0.0
  %1901 = vmatpush1.msra.mxu0 0.0
  %1902 = vmatprep.subr.mxu0 0.0
  %1903 = vmatpush1.msra.mxu0 0.0
  %1904 = vmatprep.subr.mxu0 0.0
  %1905 = vmatpush1.msra.mxu0 0.0
  %1906 = vmatprep.subr.mxu0 0.0
  %1907 = vmatpush1.msra.mxu0 0.0
  %1908 = vmatprep.subr.mxu0 0.0
  %1909 = vmatpush1.msra.mxu0 0.0
  %1910 = vmatprep.subr.mxu0 0.0
  %1911 = vmatpush1.msra.mxu0 0.0
  %1912 = vmatprep.subr.mxu0 0.0
  %1913 = vmatpush1.msra.mxu0 0.0
  %1914 = vmatprep.subr.mxu0 0.0
  %1915 = vmatpush1.msra.mxu0 0.0
  %1916 = vmatprep.subr.mxu0 0.0
  %1917 = vmatpush1.msra.mxu0 0.0
  %1918 = vmatprep.subr.mxu0 0.0
  %1919 = vmatpush1.msra.mxu0 0.0
  %1920 = vmatprep.subr.mxu0 0.0
  %1921 = vmatpush1.msra.mxu0 0.0
  %1922 = vmatprep.subr.mxu0 0.0
  %1923 = vmatpush1.msra.mxu0 0.0
  %1924 = vmatprep.subr.mxu0 0.0
  %1925 = vmatpush1.msra.mxu0 0.0
  %1926 = vmatprep.subr.mxu0 0.0
  %1927 = vmatpush1.msra.mxu0 0.0
  %1928 = vmatprep.subr.mxu0 0.0
  %1929 = vmatpush1.msra.mxu0 0.0
  %1930 = vmatprep.subr.mxu0 0.0
  %1931 = vmatpush1.msra.mxu0 0.0
  %1932 = vmatprep.subr.mxu0 0.0
  %1933 = vmatpush1.msra.mxu0 0.0
  %1934 = vmatprep.mubr.f32.mxu0 0.0
  %1935 = vmatmul.mubr.f32.gmra.mrb[0].mxu0 %v1868
  %v1936 = vpop.f32.mrb[0].mxu0
  %v1937 = vadd.f32 0.0, %v1936
  %v1938 = vpop.f32.mrb[0].mxu0
  %1939 = vdwg.mxu0
  %v1940 = vadd.f32 %v1699, %v1937
  %1941 = vrot.lane.b32.xlu0 %v144, 104
  %v1942 = vpop.permute.xlu0 %1941
  %1943 = vrot.lane.b32.xlu0 %v225, 104
  %v1944 = vpop.permute.xlu0 %1943
  %v1945 = vsel %vm233, %v1942, 0
  %v1947 = vsel %vm233, %v1944, 0
  %1949 = vmatprep.subr.mxu0 0.0
  %1950 = vmatpush1.xpose.msra.mxu0 %v1947
  %1951 = vmatprep.subr.mxu0 0.0
  %1952 = vmatpush1.xpose.msra.mxu0 0.0
  %1953 = vmatprep.subr.mxu0 0.0
  %1954 = vmatpush1.xpose.msra.mxu0 0.0
  %1955 = vmatprep.subr.mxu0 0.0
  %1956 = vmatpush1.xpose.msra.mxu0 0.0
  %1957 = vmatprep.subr.mxu0 0.0
  %1958 = vmatpush1.xpose.msra.mxu0 0.0
  %1959 = vmatprep.subr.mxu0 0.0
  %1960 = vmatpush1.xpose.msra.mxu0 0.0
  %1961 = vmatprep.subr.mxu0 0.0
  %1962 = vmatpush1.xpose.msra.mxu0 0.0
  %1963 = vmatprep.subr.mxu0 0.0
  %1964 = vmatpush1.xpose.msra.mxu0 0.0
  %1965 = vmatprep.subr.mxu0 0.0
  %1966 = vmatpush1.xpose.msra.mxu0 0.0
  %1967 = vmatprep.subr.mxu0 0.0
  %1968 = vmatpush1.xpose.msra.mxu0 0.0
  %1969 = vmatprep.subr.mxu0 0.0
  %1970 = vmatpush1.xpose.msra.mxu0 0.0
  %1971 = vmatprep.subr.mxu0 0.0
  %1972 = vmatpush1.xpose.msra.mxu0 0.0
  %1973 = vmatprep.subr.mxu0 0.0
  %1974 = vmatpush1.xpose.msra.mxu0 0.0
  %1975 = vmatprep.subr.mxu0 0.0
  %1976 = vmatpush1.xpose.msra.mxu0 0.0
  %1977 = vmatprep.subr.mxu0 0.0
  %1978 = vmatpush1.xpose.msra.mxu0 0.0
  %1979 = vmatprep.subr.mxu0 0.0
  %1980 = vmatpush1.xpose.msra.mxu0 0.0
  %1981 = vmatprep.subr.mxu0 0.0
  %1982 = vmatpush1.xpose.msra.mxu0 0.0
  %1983 = vmatprep.subr.mxu0 0.0
  %1984 = vmatpush1.xpose.msra.mxu0 0.0
  %1985 = vmatprep.subr.mxu0 0.0
  %1986 = vmatpush1.xpose.msra.mxu0 0.0
  %1987 = vmatprep.subr.mxu0 0.0
  %1988 = vmatpush1.xpose.msra.mxu0 0.0
  %1989 = vmatprep.subr.mxu0 0.0
  %1990 = vmatpush1.xpose.msra.mxu0 0.0
  %1991 = vmatprep.subr.mxu0 0.0
  %1992 = vmatpush1.xpose.msra.mxu0 0.0
  %1993 = vmatprep.subr.mxu0 0.0
  %1994 = vmatpush1.xpose.msra.mxu0 0.0
  %1995 = vmatprep.subr.mxu0 0.0
  %1996 = vmatpush1.xpose.msra.mxu0 0.0
  %1997 = vmatprep.subr.mxu0 0.0
  %1998 = vmatpush1.xpose.msra.mxu0 0.0
  %1999 = vmatprep.subr.mxu0 0.0
  %2000 = vmatpush1.xpose.msra.mxu0 0.0
  %2001 = vmatprep.subr.mxu0 0.0
  %2002 = vmatpush1.xpose.msra.mxu0 0.0
  %2003 = vmatprep.subr.mxu0 0.0
  %2004 = vmatpush1.xpose.msra.mxu0 0.0
  %2005 = vmatprep.subr.mxu0 0.0
  %2006 = vmatpush1.xpose.msra.mxu0 0.0
  %2007 = vmatprep.subr.mxu0 0.0
  %2008 = vmatpush1.xpose.msra.mxu0 0.0
  %2009 = vmatprep.subr.mxu0 0.0
  %2010 = vmatpush1.xpose.msra.mxu0 0.0
  %2011 = vmatprep.subr.mxu0 0.0
  %2012 = vmatpush1.xpose.msra.mxu0 0.0
  %2013 = vmatprep.mubr.f32.mxu0 0.0
  %2014 = vmatmul.mubr.f32.gmra.mrb[0].mxu0 %v1945
  %v2015 = vpop.f32.mrb[0].mxu0
  %v2016 = vadd.f32 %v1227, %v2015
  %v2017 = vpop.f32.mrb[0].mxu0
  %2018 = vdwg.mxu0
  %v2019 = vsel %vm233, %v2016, -inf
  %2020 = vmax.xlane.f32.xlu0 %v2019
  %v2021 = vpop.xlane.xlu0 %2020
  %v2022 = vsub.f32 %v2016, %v2021
  %v2023 = vmul.f32 %v2022, 1.442695
  %v2024 = vpow.pop %v2023
  %v2025 = vsel %vm233, %v2024, 0.0
  %2026 = vadd.xlane.f32.xlu0 %v2025
  %v2027 = vpop.xlane.xlu0 %2026
  %2028 = vrot.lane.b32.xlu0 %v225, 72
  %v2029 = vpop.permute.xlu0 %2028
  %v2032 = vsel %vm233, %v2024, 0
  %2034 = vmatprep.subr.mxu0 0.0
  %2035 = vmatpush1.msra.mxu0 %v2029
  %2036 = vmatprep.subr.mxu0 0.0
  %2037 = vmatpush1.msra.mxu0 0.0
  %2038 = vmatprep.subr.mxu0 0.0
  %2039 = vmatpush1.msra.mxu0 0.0
  %2040 = vmatprep.subr.mxu0 0.0
  %2041 = vmatpush1.msra.mxu0 0.0
  %2042 = vmatprep.subr.mxu0 0.0
  %2043 = vmatpush1.msra.mxu0 0.0
  %2044 = vmatprep.subr.mxu0 0.0
  %2045 = vmatpush1.msra.mxu0 0.0
  %2046 = vmatprep.subr.mxu0 0.0
  %2047 = vmatpush1.msra.mxu0 0.0
  %2048 = vmatprep.subr.mxu0 0.0
  %2049 = vmatpush1.msra.mxu0 0.0
  %2050 = vmatprep.subr.mxu0 0.0
  %2051 = vmatpush1.msra.mxu0 0.0
  %2052 = vmatprep.subr.mxu0 0.0
  %2053 = vmatpush1.msra.mxu0 0.0
  %2054 = vmatprep.subr.mxu0 0.0
  %2055 = vmatpush1.msra.mxu0 0.0
  %2056 = vmatprep.subr.mxu0 0.0
  %2057 = vmatpush1.msra.mxu0 0.0
  %2058 = vmatprep.subr.mxu0 0.0
  %2059 = vmatpush1.msra.mxu0 0.0
  %2060 = vmatprep.subr.mxu0 0.0
  %2061 = vmatpush1.msra.mxu0 0.0
  %2062 = vmatprep.subr.mxu0 0.0
  %2063 = vmatpush1.msra.mxu0 0.0
  %2064 = vmatprep.subr.mxu0 0.0
  %2065 = vmatpush1.msra.mxu0 0.0
  %2066 = vmatprep.subr.mxu0 0.0
  %2067 = vmatpush1.msra.mxu0 0.0
  %2068 = vmatprep.subr.mxu0 0.0
  %2069 = vmatpush1.msra.mxu0 0.0
  %2070 = vmatprep.subr.mxu0 0.0
  %2071 = vmatpush1.msra.mxu0 0.0
  %2072 = vmatprep.subr.mxu0 0.0
  %2073 = vmatpush1.msra.mxu0 0.0
  %2074 = vmatprep.subr.mxu0 0.0
  %2075 = vmatpush1.msra.mxu0 0.0
  %2076 = vmatprep.subr.mxu0 0.0
  %2077 = vmatpush1.msra.mxu0 0.0
  %2078 = vmatprep.subr.mxu0 0.0
  %2079 = vmatpush1.msra.mxu0 0.0
  %2080 = vmatprep.subr.mxu0 0.0
  %2081 = vmatpush1.msra.mxu0 0.0
  %2082 = vmatprep.subr.mxu0 0.0
  %2083 = vmatpush1.msra.mxu0 0.0
  %2084 = vmatprep.subr.mxu0 0.0
  %2085 = vmatpush1.msra.mxu0 0.0
  %2086 = vmatprep.subr.mxu0 0.0
  %2087 = vmatpush1.msra.mxu0 0.0
  %2088 = vmatprep.subr.mxu0 0.0
  %2089 = vmatpush1.msra.mxu0 0.0
  %2090 = vmatprep.subr.mxu0 0.0
  %2091 = vmatpush1.msra.mxu0 0.0
  %2092 = vmatprep.subr.mxu0 0.0
  %2093 = vmatpush1.msra.mxu0 0.0
  %2094 = vmatprep.subr.mxu0 0.0
  %2095 = vmatpush1.msra.mxu0 0.0
  %2096 = vmatprep.subr.mxu0 0.0
  %2097 = vmatpush1.msra.mxu0 0.0
  %2098 = vmatprep.mubr.f32.mxu0 0.0
  %2099 = vmatmul.mubr.f32.gmra.mrb[0].mxu0 %v2032
  %v2100 = vpop.f32.mrb[0].mxu0
  %v2101 = vadd.f32 0.0, %v2100
  %v2102 = vpop.f32.mrb[0].mxu0
  %2103 = vdwg.mxu0
  %v2104 = vrcp.pop %v2027
  %v2105 = vmul.f32 %v2101, %v2104
  %v2107 = vsel %vm233, %v2105, 0
  %2109 = vmatprep.subr.mxu0 0.0
  %2110 = vmatpush1.msra.mxu0 %v53
  %2111 = vmatprep.subr.mxu0 0.0
  %2112 = vmatpush1.msra.mxu0 0.0
  %2113 = vmatprep.subr.mxu0 0.0
  %2114 = vmatpush1.msra.mxu0 0.0
  %2115 = vmatprep.subr.mxu0 0.0
  %2116 = vmatpush1.msra.mxu0 0.0
  %2117 = vmatprep.subr.mxu0 0.0
  %2118 = vmatpush1.msra.mxu0 0.0
  %2119 = vmatprep.subr.mxu0 0.0
  %2120 = vmatpush1.msra.mxu0 0.0
  %2121 = vmatprep.subr.mxu0 0.0
  %2122 = vmatpush1.msra.mxu0 0.0
  %2123 = vmatprep.subr.mxu0 0.0
  %2124 = vmatpush1.msra.mxu0 0.0
  %2125 = vmatprep.subr.mxu0 0.0
  %2126 = vmatpush1.msra.mxu0 0.0
  %2127 = vmatprep.subr.mxu0 0.0
  %2128 = vmatpush1.msra.mxu0 0.0
  %2129 = vmatprep.subr.mxu0 0.0
  %2130 = vmatpush1.msra.mxu0 0.0
  %2131 = vmatprep.subr.mxu0 0.0
  %2132 = vmatpush1.msra.mxu0 0.0
  %2133 = vmatprep.subr.mxu0 0.0
  %2134 = vmatpush1.msra.mxu0 0.0
  %2135 = vmatprep.subr.mxu0 0.0
  %2136 = vmatpush1.msra.mxu0 0.0
  %2137 = vmatprep.subr.mxu0 0.0
  %2138 = vmatpush1.msra.mxu0 0.0
  %2139 = vmatprep.subr.mxu0 0.0
  %2140 = vmatpush1.msra.mxu0 0.0
  %2141 = vmatprep.subr.mxu0 0.0
  %2142 = vmatpush1.msra.mxu0 0.0
  %2143 = vmatprep.subr.mxu0 0.0
  %2144 = vmatpush1.msra.mxu0 0.0
  %2145 = vmatprep.subr.mxu0 0.0
  %2146 = vmatpush1.msra.mxu0 0.0
  %2147 = vmatprep.subr.mxu0 0.0
  %2148 = vmatpush1.msra.mxu0 0.0
  %2149 = vmatprep.subr.mxu0 0.0
  %2150 = vmatpush1.msra.mxu0 0.0
  %2151 = vmatprep.subr.mxu0 0.0
  %2152 = vmatpush1.msra.mxu0 0.0
  %2153 = vmatprep.subr.mxu0 0.0
  %2154 = vmatpush1.msra.mxu0 0.0
  %2155 = vmatprep.subr.mxu0 0.0
  %2156 = vmatpush1.msra.mxu0 0.0
  %2157 = vmatprep.subr.mxu0 0.0
  %2158 = vmatpush1.msra.mxu0 0.0
  %2159 = vmatprep.subr.mxu0 0.0
  %2160 = vmatpush1.msra.mxu0 0.0
  %2161 = vmatprep.subr.mxu0 0.0
  %2162 = vmatpush1.msra.mxu0 0.0
  %2163 = vmatprep.subr.mxu0 0.0
  %2164 = vmatpush1.msra.mxu0 0.0
  %2165 = vmatprep.subr.mxu0 0.0
  %2166 = vmatpush1.msra.mxu0 0.0
  %2167 = vmatprep.subr.mxu0 0.0
  %2168 = vmatpush1.msra.mxu0 0.0
  %2169 = vmatprep.subr.mxu0 0.0
  %2170 = vmatpush1.msra.mxu0 0.0
  %2171 = vmatprep.subr.mxu0 0.0
  %2172 = vmatpush1.msra.mxu0 0.0
  %2173 = vmatprep.mubr.f32.mxu0 0.0
  %2174 = vmatmul.mubr.f32.gmra.mrb[0].mxu0 %v2107
  %v2175 = vpop.f32.mrb[0].mxu0
  %v2176 = vadd.f32 0.0, %v2175
  %v2177 = vpop.f32.mrb[0].mxu0
  %2178 = vdwg.mxu0
  %v2179 = vadd.f32 %v1940, %v2176
  %v2180 = vadd.f32 %v2179, %v1190
  %v2181 = vadd.f32 %v39, %v2180
  %v2182 = vsel %vm65, %v2181, 0.0
  %2183 = vadd.xlane.f32.xlu0 %v2182
  %v2184 = vpop.xlane.xlu0 %2183
  %v2185 = vmul.f32 %v2184, %v1197
  %v2186 = vsub.f32 %v2181, %v2185
  %v2187 = vmul.f32 %v2186, %v2186
  %v2188 = vsel %vm65, %v2187, 0.0
  %2189 = vadd.xlane.f32.xlu0 %v2188
  %v2190 = vpop.xlane.xlu0 %2189
  %v2191 = vmul.f32 %v2190, %v1197
  %v2192 = vadd.f32 %v2191, 1e-05
  %v2193 = vrsqrt.pop %v2192
  %v2194 = vmul.f32 %v2186, %v2193
  %v2195 = vmul.f32 %v2194, %v1212
  %v2196 = vadd.f32 %v2195, %v1219
  %2197 = vst.msk [vmem:[%s11 + $0x8] sm:$0xff] %vm65, %v2196
  // Predicated region
  $region46: #{transformer_forward_pallas.10} parent=0 // pred_check
    _
  $region47: #{transformer_forward_pallas.10} parent=0 // pred_check_branch
    %2199 = sbr.rel (0) target = $region49
  $region48: #{transformer_forward_pallas.10} parent=0 // pred_region
    _
  $region49: #{transformer_forward_pallas.10} parent=0 // pred_fallthru
    _
  // Predicated region
  $region50: #{transformer_forward_pallas.10} parent=0 // pred_check
    _
  $region51: #{transformer_forward_pallas.10} parent=0 // pred_check_branch
    %2201 = sbr.rel (0) target = $region53
  $region52: #{transformer_forward_pallas.10} parent=0 // pred_region
    _
  $region53: #{transformer_forward_pallas.10} parent=0 // pred_fallthru
    _

// kernel: transformer_forward_pallas.15
$region0: #{transformer_forward_pallas.15}
  #allocation0 [shape = 'u32[]', space=smem, size = 0x4, offset = 0x4, fixed_abs, tag = 'smem constant byte address 0x4 - core index']
  #allocation1 [shape = 'u32[144,128]{1,0:T(1,128)}', space=vmem, size = 0x12000, scoped, tag = 'internal scratch']
  %s0 = inlined_call_operand.vmem [shape: f32[16,32], index: 0, kind: input, shape index: {}]
  %s1 = inlined_call_operand.vmem [shape: f32[16,32], index: 1, kind: input, shape index: {}]
  %s2 = inlined_call_operand.vmem [shape: f32[32,32], index: 2, kind: input, shape index: {}]
  %s3 = inlined_call_operand.vmem [shape: f32[1,32], index: 3, kind: input, shape index: {}]
  %s4 = inlined_call_operand.vmem [shape: f32[32,64], index: 4, kind: input, shape index: {}]
  %s5 = inlined_call_operand.vmem [shape: f32[1,64], index: 5, kind: input, shape index: {}]
  %s6 = inlined_call_operand.vmem [shape: f32[32,32], index: 6, kind: input, shape index: {}]
  %s7 = inlined_call_operand.vmem [shape: f32[1,32], index: 7, kind: input, shape index: {}]
  %s8 = inlined_call_operand.vmem [shape: f32[1,32], index: 8, kind: input, shape index: {}]
  %s9 = inlined_call_operand.vmem [shape: f32[1,32], index: 9, kind: input, shape index: {}]
  %s10 = inlined_call_operand.vmem [shape: f32[8,8], index: 10, kind: input, shape index: {}]
  %s11 = inlined_call_operand.vmem [shape: f32[2,8], index: 11, kind: input, shape index: {}]
  %s12 = inlined_call_operand.vmem [shape: f32[16,32], index: 12, kind: output, shape index: {}]
  %s13 = sld [smem:[#allocation0]]
  $region58: #{transformer_forward_pallas.15} parent=0
    _
  %s15 = ssub.s32 1, %s13
  %s16 = scalar_select 0, %s15, %s13
  // Predicated region
  $region2: #{transformer_forward_pallas.15} parent=0 // pred_check
    _
  $region3: #{transformer_forward_pallas.15} parent=0 // pred_check_branch
    %18 = sbr.rel (0) target = $region5
  $region4: #{transformer_forward_pallas.15} parent=0 // pred_region
    _
  $region5: #{transformer_forward_pallas.15} parent=0 // pred_fallthru
    _
  // Predicated region
  $region6: #{transformer_forward_pallas.15} parent=0 // pred_check
    _
  $region7: #{transformer_forward_pallas.15} parent=0 // pred_check_branch
    %20 = sbr.rel (0) target = $region9
  $region8: #{transformer_forward_pallas.15} parent=0 // pred_region
    _
  $region9: #{transformer_forward_pallas.15} parent=0 // pred_fallthru
    _
  // Predicated region
  $region10: #{transformer_forward_pallas.15} parent=0 // pred_check
    _
  $region11: #{transformer_forward_pallas.15} parent=0 // pred_check_branch
    %22 = sbr.rel (0) target = $region13
  $region12: #{transformer_forward_pallas.15} parent=0 // pred_region
    _
  $region13: #{transformer_forward_pallas.15} parent=0 // pred_fallthru
    _
  // Predicated region
  $region14: #{transformer_forward_pallas.15} parent=0 // pred_check
    _
  $region15: #{transformer_forward_pallas.15} parent=0 // pred_check_branch
    %24 = sbr.rel (0) target = $region17
  $region16: #{transformer_forward_pallas.15} parent=0 // pred_region
    _
  $region17: #{transformer_forward_pallas.15} parent=0 // pred_fallthru
    _
  // Predicated region
  $region18: #{transformer_forward_pallas.15} parent=0 // pred_check
    _
  $region19: #{transformer_forward_pallas.15} parent=0 // pred_check_branch
    %26 = sbr.rel (0) target = $region21
  $region20: #{transformer_forward_pallas.15} parent=0 // pred_region
    _
  $region21: #{transformer_forward_pallas.15} parent=0 // pred_fallthru
    _
  // Predicated region
  $region22: #{transformer_forward_pallas.15} parent=0 // pred_check
    _
  $region23: #{transformer_forward_pallas.15} parent=0 // pred_check_branch
    %28 = sbr.rel (0) target = $region25
  $region24: #{transformer_forward_pallas.15} parent=0 // pred_region
    _
  $region25: #{transformer_forward_pallas.15} parent=0 // pred_fallthru
    _
  // Predicated region
  $region26: #{transformer_forward_pallas.15} parent=0 // pred_check
    _
  $region27: #{transformer_forward_pallas.15} parent=0 // pred_check_branch
    %30 = sbr.rel (0) target = $region29
  $region28: #{transformer_forward_pallas.15} parent=0 // pred_region
    _
  $region29: #{transformer_forward_pallas.15} parent=0 // pred_fallthru
    _
  // Predicated region
  $region30: #{transformer_forward_pallas.15} parent=0 // pred_check
    _
  $region31: #{transformer_forward_pallas.15} parent=0 // pred_check_branch
    %32 = sbr.rel (0) target = $region33
  $region32: #{transformer_forward_pallas.15} parent=0 // pred_region
    _
  $region33: #{transformer_forward_pallas.15} parent=0 // pred_fallthru
    _
  // Predicated region
  $region34: #{transformer_forward_pallas.15} parent=0 // pred_check
    _
  $region35: #{transformer_forward_pallas.15} parent=0 // pred_check_branch
    %34 = sbr.rel (0) target = $region37
  $region36: #{transformer_forward_pallas.15} parent=0 // pred_region
    _
  $region37: #{transformer_forward_pallas.15} parent=0 // pred_fallthru
    _
  // Predicated region
  $region38: #{transformer_forward_pallas.15} parent=0 // pred_check
    _
  $region39: #{transformer_forward_pallas.15} parent=0 // pred_check_branch
    %36 = sbr.rel (0) target = $region41
  $region40: #{transformer_forward_pallas.15} parent=0 // pred_region
    _
  $region41: #{transformer_forward_pallas.15} parent=0 // pred_fallthru
    _
  // Predicated region
  $region42: #{transformer_forward_pallas.15} parent=0 // pred_check
    _
  $region43: #{transformer_forward_pallas.15} parent=0 // pred_check_branch
    %38 = sbr.rel (0) target = $region45
  $region44: #{transformer_forward_pallas.15} parent=0 // pred_region
    _
  $region45: #{transformer_forward_pallas.15} parent=0 // pred_fallthru
    _
  // Predicated region
  $region46: #{transformer_forward_pallas.15} parent=0 // pred_check
    _
  $region47: #{transformer_forward_pallas.15} parent=0 // pred_check_branch
    %40 = sbr.rel (0) target = $region49
  $region48: #{transformer_forward_pallas.15} parent=0 // pred_region
    _
  $region49: #{transformer_forward_pallas.15} parent=0 // pred_fallthru
    _
  %v41 = vld [vmem:[%s0] sm:$0xff]
  %v42 = vld [vmem:[%s0 + $0x8] sm:$0xff]
  %v43 = vld [vmem:[%s1] sm:$0xff]
  %v44 = vld [vmem:[%s1 + $0x8] sm:$0xff]
  %v45 = vld [vmem:[%s2] sm:$0xff]
  %v46 = vld [vmem:[%s2 + $0x8] sm:$0xff]
  %v47 = vld [vmem:[%s2 + $0x10] sm:$0xff]
  %v48 = vld [vmem:[%s2 + $0x18] sm:$0xff]
  %v49 = vld [vmem:[%s3] sm:$0x1]
  %v50 = vld [vmem:[%s4] sm:$0xff]
  %v51 = vld [vmem:[%s4 + $0x8] sm:$0xff]
  %v52 = vld [vmem:[%s4 + $0x10] sm:$0xff]
  %v53 = vld [vmem:[%s4 + $0x18] sm:$0xff]
  %v54 = vld [vmem:[%s5] sm:$0x1]
  %v55 = vld [vmem:[%s6] sm:$0xff]
  %v56 = vld [vmem:[%s6 + $0x8] sm:$0xff]
  %v57 = vld [vmem:[%s6 + $0x10] sm:$0xff]
  %v58 = vld [vmem:[%s6 + $0x18] sm:$0xff]
  %v59 = vld [vmem:[%s7] sm:$0x1]
  %v60 = vld [vmem:[%s8] sm:$0x1]
  %v61 = vld [vmem:[%s9] sm:$0x1]
  %v62 = vld [vmem:[%s10] sm:$0xff]
  %v63 = vld [vmem:[%s11] sm:$0x3]
  %v65 = vlaneseq
  %v66 = vshrl.u32 %v65, 7
  %v67 = vsub.s32 0, %v66
  %v68 = vrot.slane %v49, %v67
  %vm70 = vcmask 261120
  %v72 = vsel %vm70, %v41, 0
  %v75 = vsel %vm70, %v42, 0
  %77 = vmatprep.subr.mxu0 0.0
  %78 = vmatpush1.msra.mxu0 %v45
  %79 = vmatprep.subr.mxu0 0.0
  %80 = vmatpush1.msra.mxu0 %v46
  %81 = vmatprep.subr.mxu0 0.0
  %82 = vmatpush1.msra.mxu0 %v47
  %83 = vmatprep.subr.mxu0 0.0
  %84 = vmatpush1.msra.mxu0 %v48
  %85 = vmatprep.subr.mxu0 0.0
  %86 = vmatpush1.msra.mxu0 0.0
  %87 = vmatprep.subr.mxu0 0.0
  %88 = vmatpush1.msra.mxu0 0.0
  %89 = vmatprep.subr.mxu0 0.0
  %90 = vmatpush1.msra.mxu0 0.0
  %91 = vmatprep.subr.mxu0 0.0
  %92 = vmatpush1.msra.mxu0 0.0
  %93 = vmatprep.subr.mxu0 0.0
  %94 = vmatpush1.msra.mxu0 0.0
  %95 = vmatprep.subr.mxu0 0.0
  %96 = vmatpush1.msra.mxu0 0.0
  %97 = vmatprep.subr.mxu0 0.0
  %98 = vmatpush1.msra.mxu0 0.0
  %99 = vmatprep.subr.mxu0 0.0
  %100 = vmatpush1.msra.mxu0 0.0
  %101 = vmatprep.subr.mxu0 0.0
  %102 = vmatpush1.msra.mxu0 0.0
  %103 = vmatprep.subr.mxu0 0.0
  %104 = vmatpush1.msra.mxu0 0.0
  %105 = vmatprep.subr.mxu0 0.0
  %106 = vmatpush1.msra.mxu0 0.0
  %107 = vmatprep.subr.mxu0 0.0
  %108 = vmatpush1.msra.mxu0 0.0
  %109 = vmatprep.subr.mxu0 0.0
  %110 = vmatpush1.msra.mxu0 0.0
  %111 = vmatprep.subr.mxu0 0.0
  %112 = vmatpush1.msra.mxu0 0.0
  %113 = vmatprep.subr.mxu0 0.0
  %114 = vmatpush1.msra.mxu0 0.0
  %115 = vmatprep.subr.mxu0 0.0
  %116 = vmatpush1.msra.mxu0 0.0
  %117 = vmatprep.subr.mxu0 0.0
  %118 = vmatpush1.msra.mxu0 0.0
  %119 = vmatprep.subr.mxu0 0.0
  %120 = vmatpush1.msra.mxu0 0.0
  %121 = vmatprep.subr.mxu0 0.0
  %122 = vmatpush1.msra.mxu0 0.0
  %123 = vmatprep.subr.mxu0 0.0
  %124 = vmatpush1.msra.mxu0 0.0
  %125 = vmatprep.subr.mxu0 0.0
  %126 = vmatpush1.msra.mxu0 0.0
  %127 = vmatprep.subr.mxu0 0.0
  %128 = vmatpush1.msra.mxu0 0.0
  %129 = vmatprep.subr.mxu0 0.0
  %130 = vmatpush1.msra.mxu0 0.0
  %131 = vmatprep.subr.mxu0 0.0
  %132 = vmatpush1.msra.mxu0 0.0
  %133 = vmatprep.subr.mxu0 0.0
  %134 = vmatpush1.msra.mxu0 0.0
  %135 = vmatprep.subr.mxu0 0.0
  %136 = vmatpush1.msra.mxu0 0.0
  %137 = vmatprep.subr.mxu0 0.0
  %138 = vmatpush1.msra.mxu0 0.0
  %139 = vmatprep.subr.mxu0 0.0
  %140 = vmatpush1.msra.mxu0 0.0
  %141 = vmatprep.mubr.f32.mxu0 0.0
  %142 = vmatmul.mubr.f32.gmra.mrb[0].mxu0 %v72
  %v143 = vpop.f32.mrb[0].mxu0
  %v144 = vadd.f32 %v68, %v143
  %v145 = vpop.f32.mrb[0].mxu0
  %146 = vmatprep.mubr.f32.mxu0 0.0
  %147 = vmatmul.mubr.f32.gmra.mrb[0].mxu0 %v75
  %v148 = vpop.f32.mrb[0].mxu0
  %v149 = vadd.f32 %v68, %v148
  %v150 = vpop.f32.mrb[0].mxu0
  %151 = vdwg.mxu0
  %v153 = vlaneseq
  %v154 = vshrl.u32 %v153, 7
  %v155 = vsub.s32 0, %v154
  %v156 = vrot.slane %v54, %v155
  %v159 = vsel %vm70, %v43, 0
  %v162 = vsel %vm70, %v44, 0
  %164 = vmatprep.subr.mxu0 0.0
  %165 = vmatpush1.msra.mxu0 %v50
  %166 = vmatprep.subr.mxu0 0.0
  %167 = vmatpush1.msra.mxu0 %v51
  %168 = vmatprep.subr.mxu0 0.0
  %169 = vmatpush1.msra.mxu0 %v52
  %170 = vmatprep.subr.mxu0 0.0
  %171 = vmatpush1.msra.mxu0 %v53
  %172 = vmatprep.subr.mxu0 0.0
  %173 = vmatpush1.msra.mxu0 0.0
  %174 = vmatprep.subr.mxu0 0.0
  %175 = vmatpush1.msra.mxu0 0.0
  %176 = vmatprep.subr.mxu0 0.0
  %177 = vmatpush1.msra.mxu0 0.0
  %178 = vmatprep.subr.mxu0 0.0
  %179 = vmatpush1.msra.mxu0 0.0
  %180 = vmatprep.subr.mxu0 0.0
  %181 = vmatpush1.msra.mxu0 0.0
  %182 = vmatprep.subr.mxu0 0.0
  %183 = vmatpush1.msra.mxu0 0.0
  %184 = vmatprep.subr.mxu0 0.0
  %185 = vmatpush1.msra.mxu0 0.0
  %186 = vmatprep.subr.mxu0 0.0
  %187 = vmatpush1.msra.mxu0 0.0
  %188 = vmatprep.subr.mxu0 0.0
  %189 = vmatpush1.msra.mxu0 0.0
  %190 = vmatprep.subr.mxu0 0.0
  %191 = vmatpush1.msra.mxu0 0.0
  %192 = vmatprep.subr.mxu0 0.0
  %193 = vmatpush1.msra.mxu0 0.0
  %194 = vmatprep.subr.mxu0 0.0
  %195 = vmatpush1.msra.mxu0 0.0
  %196 = vmatprep.subr.mxu0 0.0
  %197 = vmatpush1.msra.mxu0 0.0
  %198 = vmatprep.subr.mxu0 0.0
  %199 = vmatpush1.msra.mxu0 0.0
  %200 = vmatprep.subr.mxu0 0.0
  %201 = vmatpush1.msra.mxu0 0.0
  %202 = vmatprep.subr.mxu0 0.0
  %203 = vmatpush1.msra.mxu0 0.0
  %204 = vmatprep.subr.mxu0 0.0
  %205 = vmatpush1.msra.mxu0 0.0
  %206 = vmatprep.subr.mxu0 0.0
  %207 = vmatpush1.msra.mxu0 0.0
  %208 = vmatprep.subr.mxu0 0.0
  %209 = vmatpush1.msra.mxu0 0.0
  %210 = vmatprep.subr.mxu0 0.0
  %211 = vmatpush1.msra.mxu0 0.0
  %212 = vmatprep.subr.mxu0 0.0
  %213 = vmatpush1.msra.mxu0 0.0
  %214 = vmatprep.subr.mxu0 0.0
  %215 = vmatpush1.msra.mxu0 0.0
  %216 = vmatprep.subr.mxu0 0.0
  %217 = vmatpush1.msra.mxu0 0.0
  %218 = vmatprep.subr.mxu0 0.0
  %219 = vmatpush1.msra.mxu0 0.0
  %220 = vmatprep.subr.mxu0 0.0
  %221 = vmatpush1.msra.mxu0 0.0
  %222 = vmatprep.subr.mxu0 0.0
  %223 = vmatpush1.msra.mxu0 0.0
  %224 = vmatprep.subr.mxu0 0.0
  %225 = vmatpush1.msra.mxu0 0.0
  %226 = vmatprep.subr.mxu0 0.0
  %227 = vmatpush1.msra.mxu0 0.0
  %228 = vmatprep.mubr.f32.mxu0 0.0
  %229 = vmatmul.mubr.f32.gmra.mrb[0].mxu0 %v159
  %v230 = vpop.f32.mrb[0].mxu0
  %v231 = vadd.f32 %v156, %v230
  %v232 = vpop.f32.mrb[0].mxu0
  %233 = vmatprep.mubr.f32.mxu0 0.0
  %234 = vmatmul.mubr.f32.gmra.mrb[0].mxu0 %v162
  %v235 = vpop.f32.mrb[0].mxu0
  %v236 = vadd.f32 %v156, %v235
  %v237 = vpop.f32.mrb[0].mxu0
  %238 = vdwg.mxu0
  %v239 = vlaneseq
  %v240 = vshrl.u32 %v239, 7
  %v241 = vsub.s32 0, %v240
  %v242 = vrot.slane %v63, %v241
  %v243 = vadd.f32 %v62, %v242
  %vm244 = vcmask 64512
  %v246 = vsel %vm244, %v144, 0
  %v249 = vsel %vm244, %v231, 0
  %251 = vmatprep.subr.mxu0 0.0
  %252 = vmatpush1.xpose.msra.mxu0 %v249
  %253 = vmatprep.subr.mxu0 0.0
  %254 = vmatpush1.xpose.msra.mxu0 0.0
  %255 = vmatprep.subr.mxu0 0.0
  %256 = vmatpush1.xpose.msra.mxu0 0.0
  %257 = vmatprep.subr.mxu0 0.0
  %258 = vmatpush1.xpose.msra.mxu0 0.0
  %259 = vmatprep.subr.mxu0 0.0
  %260 = vmatpush1.xpose.msra.mxu0 0.0
  %261 = vmatprep.subr.mxu0 0.0
  %262 = vmatpush1.xpose.msra.mxu0 0.0
  %263 = vmatprep.subr.mxu0 0.0
  %264 = vmatpush1.xpose.msra.mxu0 0.0
  %265 = vmatprep.subr.mxu0 0.0
  %266 = vmatpush1.xpose.msra.mxu0 0.0
  %267 = vmatprep.subr.mxu0 0.0
  %268 = vmatpush1.xpose.msra.mxu0 0.0
  %269 = vmatprep.subr.mxu0 0.0
  %270 = vmatpush1.xpose.msra.mxu0 0.0
  %271 = vmatprep.subr.mxu0 0.0
  %272 = vmatpush1.xpose.msra.mxu0 0.0
  %273 = vmatprep.subr.mxu0 0.0
  %274 = vmatpush1.xpose.msra.mxu0 0.0
  %275 = vmatprep.subr.mxu0 0.0
  %276 = vmatpush1.xpose.msra.mxu0 0.0
  %277 = vmatprep.subr.mxu0 0.0
  %278 = vmatpush1.xpose.msra.mxu0 0.0
  %279 = vmatprep.subr.mxu0 0.0
  %280 = vmatpush1.xpose.msra.mxu0 0.0
  %281 = vmatprep.subr.mxu0 0.0
  %282 = vmatpush1.xpose.msra.mxu0 0.0
  %283 = vmatprep.subr.mxu0 0.0
  %284 = vmatpush1.xpose.msra.mxu0 0.0
  %285 = vmatprep.subr.mxu0 0.0
  %286 = vmatpush1.xpose.msra.mxu0 0.0
  %287 = vmatprep.subr.mxu0 0.0
  %288 = vmatpush1.xpose.msra.mxu0 0.0
  %289 = vmatprep.subr.mxu0 0.0
  %290 = vmatpush1.xpose.msra.mxu0 0.0
  %291 = vmatprep.subr.mxu0 0.0
  %292 = vmatpush1.xpose.msra.mxu0 0.0
  %293 = vmatprep.subr.mxu0 0.0
  %294 = vmatpush1.xpose.msra.mxu0 0.0
  %295 = vmatprep.subr.mxu0 0.0
  %296 = vmatpush1.xpose.msra.mxu0 0.0
  %297 = vmatprep.subr.mxu0 0.0
  %298 = vmatpush1.xpose.msra.mxu0 0.0
  %299 = vmatprep.subr.mxu0 0.0
  %300 = vmatpush1.xpose.msra.mxu0 0.0
  %301 = vmatprep.subr.mxu0 0.0
  %302 = vmatpush1.xpose.msra.mxu0 0.0
  %303 = vmatprep.subr.mxu0 0.0
  %304 = vmatpush1.xpose.msra.mxu0 0.0
  %305 = vmatprep.subr.mxu0 0.0
  %306 = vmatpush1.xpose.msra.mxu0 0.0
  %307 = vmatprep.subr.mxu0 0.0
  %308 = vmatpush1.xpose.msra.mxu0 0.0
  %309 = vmatprep.subr.mxu0 0.0
  %310 = vmatpush1.xpose.msra.mxu0 0.0
  %311 = vmatprep.subr.mxu0 0.0
  %312 = vmatpush1.xpose.msra.mxu0 0.0
  %313 = vmatprep.subr.mxu0 0.0
  %314 = vmatpush1.xpose.msra.mxu0 0.0
  %315 = vmatprep.mubr.f32.mxu0 0.0
  %316 = vmatmul.mubr.f32.gmra.mrb[0].mxu0 %v246
  %v317 = vpop.f32.mrb[0].mxu0
  %v318 = vadd.f32 %v243, %v317
  %v319 = vpop.f32.mrb[0].mxu0
  %320 = vdwg.mxu0
  %v321 = vsel %vm244, %v318, -inf
  %322 = vmax.xlane.f32.xlu0 %v321
  %v323 = vpop.xlane.xlu0 %322
  %v324 = vsub.f32 %v318, %v323
  %v325 = vmul.f32 %v324, 1.442695
  %v326 = vpow.pop %v325
  %v327 = vsel %vm244, %v326, 0.0
  %328 = vadd.xlane.f32.xlu0 %v327
  %v329 = vpop.xlane.xlu0 %328
  %330 = vrot.lane.b32.xlu0 %v231, 96
  %v331 = vpop.permute.xlu0 %330
  %v334 = vsel %vm244, %v326, 0
  %336 = vmatprep.subr.mxu0 0.0
  %337 = vmatpush1.msra.mxu0 %v331
  %338 = vmatprep.subr.mxu0 0.0
  %339 = vmatpush1.msra.mxu0 0.0
  %340 = vmatprep.subr.mxu0 0.0
  %341 = vmatpush1.msra.mxu0 0.0
  %342 = vmatprep.subr.mxu0 0.0
  %343 = vmatpush1.msra.mxu0 0.0
  %344 = vmatprep.subr.mxu0 0.0
  %345 = vmatpush1.msra.mxu0 0.0
  %346 = vmatprep.subr.mxu0 0.0
  %347 = vmatpush1.msra.mxu0 0.0
  %348 = vmatprep.subr.mxu0 0.0
  %349 = vmatpush1.msra.mxu0 0.0
  %350 = vmatprep.subr.mxu0 0.0
  %351 = vmatpush1.msra.mxu0 0.0
  %352 = vmatprep.subr.mxu0 0.0
  %353 = vmatpush1.msra.mxu0 0.0
  %354 = vmatprep.subr.mxu0 0.0
  %355 = vmatpush1.msra.mxu0 0.0
  %356 = vmatprep.subr.mxu0 0.0
  %357 = vmatpush1.msra.mxu0 0.0
  %358 = vmatprep.subr.mxu0 0.0
  %359 = vmatpush1.msra.mxu0 0.0
  %360 = vmatprep.subr.mxu0 0.0
  %361 = vmatpush1.msra.mxu0 0.0
  %362 = vmatprep.subr.mxu0 0.0
  %363 = vmatpush1.msra.mxu0 0.0
  %364 = vmatprep.subr.mxu0 0.0
  %365 = vmatpush1.msra.mxu0 0.0
  %366 = vmatprep.subr.mxu0 0.0
  %367 = vmatpush1.msra.mxu0 0.0
  %368 = vmatprep.subr.mxu0 0.0
  %369 = vmatpush1.msra.mxu0 0.0
  %370 = vmatprep.subr.mxu0 0.0
  %371 = vmatpush1.msra.mxu0 0.0
  %372 = vmatprep.subr.mxu0 0.0
  %373 = vmatpush1.msra.mxu0 0.0
  %374 = vmatprep.subr.mxu0 0.0
  %375 = vmatpush1.msra.mxu0 0.0
  %376 = vmatprep.subr.mxu0 0.0
  %377 = vmatpush1.msra.mxu0 0.0
  %378 = vmatprep.subr.mxu0 0.0
  %379 = vmatpush1.msra.mxu0 0.0
  %380 = vmatprep.subr.mxu0 0.0
  %381 = vmatpush1.msra.mxu0 0.0
  %382 = vmatprep.subr.mxu0 0.0
  %383 = vmatpush1.msra.mxu0 0.0
  %384 = vmatprep.subr.mxu0 0.0
  %385 = vmatpush1.msra.mxu0 0.0
  %386 = vmatprep.subr.mxu0 0.0
  %387 = vmatpush1.msra.mxu0 0.0
  %388 = vmatprep.subr.mxu0 0.0
  %389 = vmatpush1.msra.mxu0 0.0
  %390 = vmatprep.subr.mxu0 0.0
  %391 = vmatpush1.msra.mxu0 0.0
  %392 = vmatprep.subr.mxu0 0.0
  %393 = vmatpush1.msra.mxu0 0.0
  %394 = vmatprep.subr.mxu0 0.0
  %395 = vmatpush1.msra.mxu0 0.0
  %396 = vmatprep.subr.mxu0 0.0
  %397 = vmatpush1.msra.mxu0 0.0
  %398 = vmatprep.subr.mxu0 0.0
  %399 = vmatpush1.msra.mxu0 0.0
  %400 = vmatprep.mubr.f32.mxu0 0.0
  %401 = vmatmul.mubr.f32.gmra.mrb[0].mxu0 %v334
  %v402 = vpop.f32.mrb[0].mxu0
  %v403 = vadd.f32 0.0, %v402
  %v404 = vpop.f32.mrb[0].mxu0
  %405 = vdwg.mxu0
  %v406 = vrcp.pop %v329
  %v407 = vmul.f32 %v403, %v406
  %408 = vrot.lane.b32.xlu0 %v144, 120
  %v409 = vpop.permute.xlu0 %408
  %410 = vrot.lane.b32.xlu0 %v231, 120
  %v411 = vpop.permute.xlu0 %410
  %v412 = vsel %vm244, %v409, 0
  %v414 = vsel %vm244, %v411, 0
  %416 = vmatprep.subr.mxu0 0.0
  %417 = vmatpush1.xpose.msra.mxu0 %v414
  %418 = vmatprep.subr.mxu0 0.0
  %419 = vmatpush1.xpose.msra.mxu0 0.0
  %420 = vmatprep.subr.mxu0 0.0
  %421 = vmatpush1.xpose.msra.mxu0 0.0
  %422 = vmatprep.subr.mxu0 0.0
  %423 = vmatpush1.xpose.msra.mxu0 0.0
  %424 = vmatprep.subr.mxu0 0.0
  %425 = vmatpush1.xpose.msra.mxu0 0.0
  %426 = vmatprep.subr.mxu0 0.0
  %427 = vmatpush1.xpose.msra.mxu0 0.0
  %428 = vmatprep.subr.mxu0 0.0
  %429 = vmatpush1.xpose.msra.mxu0 0.0
  %430 = vmatprep.subr.mxu0 0.0
  %431 = vmatpush1.xpose.msra.mxu0 0.0
  %432 = vmatprep.subr.mxu0 0.0
  %433 = vmatpush1.xpose.msra.mxu0 0.0
  %434 = vmatprep.subr.mxu0 0.0
  %435 = vmatpush1.xpose.msra.mxu0 0.0
  %436 = vmatprep.subr.mxu0 0.0
  %437 = vmatpush1.xpose.msra.mxu0 0.0
  %438 = vmatprep.subr.mxu0 0.0
  %439 = vmatpush1.xpose.msra.mxu0 0.0
  %440 = vmatprep.subr.mxu0 0.0
  %441 = vmatpush1.xpose.msra.mxu0 0.0
  %442 = vmatprep.subr.mxu0 0.0
  %443 = vmatpush1.xpose.msra.mxu0 0.0
  %444 = vmatprep.subr.mxu0 0.0
  %445 = vmatpush1.xpose.msra.mxu0 0.0
  %446 = vmatprep.subr.mxu0 0.0
  %447 = vmatpush1.xpose.msra.mxu0 0.0
  %448 = vmatprep.subr.mxu0 0.0
  %449 = vmatpush1.xpose.msra.mxu0 0.0
  %450 = vmatprep.subr.mxu0 0.0
  %451 = vmatpush1.xpose.msra.mxu0 0.0
  %452 = vmatprep.subr.mxu0 0.0
  %453 = vmatpush1.xpose.msra.mxu0 0.0
  %454 = vmatprep.subr.mxu0 0.0
  %455 = vmatpush1.xpose.msra.mxu0 0.0
  %456 = vmatprep.subr.mxu0 0.0
  %457 = vmatpush1.xpose.msra.mxu0 0.0
  %458 = vmatprep.subr.mxu0 0.0
  %459 = vmatpush1.xpose.msra.mxu0 0.0
  %460 = vmatprep.subr.mxu0 0.0
  %461 = vmatpush1.xpose.msra.mxu0 0.0
  %462 = vmatprep.subr.mxu0 0.0
  %463 = vmatpush1.xpose.msra.mxu0 0.0
  %464 = vmatprep.subr.mxu0 0.0
  %465 = vmatpush1.xpose.msra.mxu0 0.0
  %466 = vmatprep.subr.mxu0 0.0
  %467 = vmatpush1.xpose.msra.mxu0 0.0
  %468 = vmatprep.subr.mxu0 0.0
  %469 = vmatpush1.xpose.msra.mxu0 0.0
  %470 = vmatprep.subr.mxu0 0.0
  %471 = vmatpush1.xpose.msra.mxu0 0.0
  %472 = vmatprep.subr.mxu0 0.0
  %473 = vmatpush1.xpose.msra.mxu0 0.0
  %474 = vmatprep.subr.mxu0 0.0
  %475 = vmatpush1.xpose.msra.mxu0 0.0
  %476 = vmatprep.subr.mxu0 0.0
  %477 = vmatpush1.xpose.msra.mxu0 0.0
  %478 = vmatprep.subr.mxu0 0.0
  %479 = vmatpush1.xpose.msra.mxu0 0.0
  %480 = vmatprep.mubr.f32.mxu0 0.0
  %481 = vmatmul.mubr.f32.gmra.mrb[0].mxu0 %v412
  %v482 = vpop.f32.mrb[0].mxu0
  %v483 = vadd.f32 %v243, %v482
  %v484 = vpop.f32.mrb[0].mxu0
  %485 = vdwg.mxu0
  %v486 = vsel %vm244, %v483, -inf
  %487 = vmax.xlane.f32.xlu0 %v486
  %v488 = vpop.xlane.xlu0 %487
  %v489 = vsub.f32 %v483, %v488
  %v490 = vmul.f32 %v489, 1.442695
  %v491 = vpow.pop %v490
  %v492 = vsel %vm244, %v491, 0.0
  %493 = vadd.xlane.f32.xlu0 %v492
  %v494 = vpop.xlane.xlu0 %493
  %495 = vrot.lane.b32.xlu0 %v231, 88
  %v496 = vpop.permute.xlu0 %495
  %v499 = vsel %vm244, %v491, 0
  %501 = vmatprep.subr.mxu0 0.0
  %502 = vmatpush1.msra.mxu0 %v496
  %503 = vmatprep.subr.mxu0 0.0
  %504 = vmatpush1.msra.mxu0 0.0
  %505 = vmatprep.subr.mxu0 0.0
  %506 = vmatpush1.msra.mxu0 0.0
  %507 = vmatprep.subr.mxu0 0.0
  %508 = vmatpush1.msra.mxu0 0.0
  %509 = vmatprep.subr.mxu0 0.0
  %510 = vmatpush1.msra.mxu0 0.0
  %511 = vmatprep.subr.mxu0 0.0
  %512 = vmatpush1.msra.mxu0 0.0
  %513 = vmatprep.subr.mxu0 0.0
  %514 = vmatpush1.msra.mxu0 0.0
  %515 = vmatprep.subr.mxu0 0.0
  %516 = vmatpush1.msra.mxu0 0.0
  %517 = vmatprep.subr.mxu0 0.0
  %518 = vmatpush1.msra.mxu0 0.0
  %519 = vmatprep.subr.mxu0 0.0
  %520 = vmatpush1.msra.mxu0 0.0
  %521 = vmatprep.subr.mxu0 0.0
  %522 = vmatpush1.msra.mxu0 0.0
  %523 = vmatprep.subr.mxu0 0.0
  %524 = vmatpush1.msra.mxu0 0.0
  %525 = vmatprep.subr.mxu0 0.0
  %526 = vmatpush1.msra.mxu0 0.0
  %527 = vmatprep.subr.mxu0 0.0
  %528 = vmatpush1.msra.mxu0 0.0
  %529 = vmatprep.subr.mxu0 0.0
  %530 = vmatpush1.msra.mxu0 0.0
  %531 = vmatprep.subr.mxu0 0.0
  %532 = vmatpush1.msra.mxu0 0.0
  %533 = vmatprep.subr.mxu0 0.0
  %534 = vmatpush1.msra.mxu0 0.0
  %535 = vmatprep.subr.mxu0 0.0
  %536 = vmatpush1.msra.mxu0 0.0
  %537 = vmatprep.subr.mxu0 0.0
  %538 = vmatpush1.msra.mxu0 0.0
  %539 = vmatprep.subr.mxu0 0.0
  %540 = vmatpush1.msra.mxu0 0.0
  %541 = vmatprep.subr.mxu0 0.0
  %542 = vmatpush1.msra.mxu0 0.0
  %543 = vmatprep.subr.mxu0 0.0
  %544 = vmatpush1.msra.mxu0 0.0
  %545 = vmatprep.subr.mxu0 0.0
  %546 = vmatpush1.msra.mxu0 0.0
  %547 = vmatprep.subr.mxu0 0.0
  %548 = vmatpush1.msra.mxu0 0.0
  %549 = vmatprep.subr.mxu0 0.0
  %550 = vmatpush1.msra.mxu0 0.0
  %551 = vmatprep.subr.mxu0 0.0
  %552 = vmatpush1.msra.mxu0 0.0
  %553 = vmatprep.subr.mxu0 0.0
  %554 = vmatpush1.msra.mxu0 0.0
  %555 = vmatprep.subr.mxu0 0.0
  %556 = vmatpush1.msra.mxu0 0.0
  %557 = vmatprep.subr.mxu0 0.0
  %558 = vmatpush1.msra.mxu0 0.0
  %559 = vmatprep.subr.mxu0 0.0
  %560 = vmatpush1.msra.mxu0 0.0
  %561 = vmatprep.subr.mxu0 0.0
  %562 = vmatpush1.msra.mxu0 0.0
  %563 = vmatprep.subr.mxu0 0.0
  %564 = vmatpush1.msra.mxu0 0.0
  %565 = vmatprep.mubr.f32.mxu0 0.0
  %566 = vmatmul.mubr.f32.gmra.mrb[0].mxu0 %v499
  %v567 = vpop.f32.mrb[0].mxu0
  %v568 = vadd.f32 0.0, %v567
  %v569 = vpop.f32.mrb[0].mxu0
  %570 = vdwg.mxu0
  %v571 = vrcp.pop %v494
  %v572 = vmul.f32 %v568, %v571
  %v574 = vsel %vm244, %v572, 0
  %576 = vmatprep.subr.mxu0 0.0
  %577 = vmatpush1.msra.mxu0 %v56
  %578 = vmatprep.subr.mxu0 0.0
  %579 = vmatpush1.msra.mxu0 0.0
  %580 = vmatprep.subr.mxu0 0.0
  %581 = vmatpush1.msra.mxu0 0.0
  %582 = vmatprep.subr.mxu0 0.0
  %583 = vmatpush1.msra.mxu0 0.0
  %584 = vmatprep.subr.mxu0 0.0
  %585 = vmatpush1.msra.mxu0 0.0
  %586 = vmatprep.subr.mxu0 0.0
  %587 = vmatpush1.msra.mxu0 0.0
  %588 = vmatprep.subr.mxu0 0.0
  %589 = vmatpush1.msra.mxu0 0.0
  %590 = vmatprep.subr.mxu0 0.0
  %591 = vmatpush1.msra.mxu0 0.0
  %592 = vmatprep.subr.mxu0 0.0
  %593 = vmatpush1.msra.mxu0 0.0
  %594 = vmatprep.subr.mxu0 0.0
  %595 = vmatpush1.msra.mxu0 0.0
  %596 = vmatprep.subr.mxu0 0.0
  %597 = vmatpush1.msra.mxu0 0.0
  %598 = vmatprep.subr.mxu0 0.0
  %599 = vmatpush1.msra.mxu0 0.0
  %600 = vmatprep.subr.mxu0 0.0
  %601 = vmatpush1.msra.mxu0 0.0
  %602 = vmatprep.subr.mxu0 0.0
  %603 = vmatpush1.msra.mxu0 0.0
  %604 = vmatprep.subr.mxu0 0.0
  %605 = vmatpush1.msra.mxu0 0.0
  %606 = vmatprep.subr.mxu0 0.0
  %607 = vmatpush1.msra.mxu0 0.0
  %608 = vmatprep.subr.mxu0 0.0
  %609 = vmatpush1.msra.mxu0 0.0
  %610 = vmatprep.subr.mxu0 0.0
  %611 = vmatpush1.msra.mxu0 0.0
  %612 = vmatprep.subr.mxu0 0.0
  %613 = vmatpush1.msra.mxu0 0.0
  %614 = vmatprep.subr.mxu0 0.0
  %615 = vmatpush1.msra.mxu0 0.0
  %616 = vmatprep.subr.mxu0 0.0
  %617 = vmatpush1.msra.mxu0 0.0
  %618 = vmatprep.subr.mxu0 0.0
  %619 = vmatpush1.msra.mxu0 0.0
  %620 = vmatprep.subr.mxu0 0.0
  %621 = vmatpush1.msra.mxu0 0.0
  %622 = vmatprep.subr.mxu0 0.0
  %623 = vmatpush1.msra.mxu0 0.0
  %624 = vmatprep.subr.mxu0 0.0
  %625 = vmatpush1.msra.mxu0 0.0
  %626 = vmatprep.subr.mxu0 0.0
  %627 = vmatpush1.msra.mxu0 0.0
  %628 = vmatprep.subr.mxu0 0.0
  %629 = vmatpush1.msra.mxu0 0.0
  %630 = vmatprep.subr.mxu0 0.0
  %631 = vmatpush1.msra.mxu0 0.0
  %632 = vmatprep.subr.mxu0 0.0
  %633 = vmatpush1.msra.mxu0 0.0
  %634 = vmatprep.subr.mxu0 0.0
  %635 = vmatpush1.msra.mxu0 0.0
  %636 = vmatprep.subr.mxu0 0.0
  %637 = vmatpush1.msra.mxu0 0.0
  %638 = vmatprep.subr.mxu0 0.0
  %639 = vmatpush1.msra.mxu0 0.0
  %640 = vmatprep.mubr.f32.mxu0 0.0
  %641 = vmatmul.mubr.f32.gmra.mrb[0].mxu0 %v574
  %v642 = vpop.f32.mrb[0].mxu0
  %v643 = vadd.f32 0.0, %v642
  %v644 = vpop.f32.mrb[0].mxu0
  %645 = vdwg.mxu0
  %v647 = vsel %vm244, %v407, 0
  %649 = vmatprep.subr.mxu0 0.0
  %650 = vmatpush1.msra.mxu0 %v55
  %651 = vmatprep.subr.mxu0 0.0
  %652 = vmatpush1.msra.mxu0 0.0
  %653 = vmatprep.subr.mxu0 0.0
  %654 = vmatpush1.msra.mxu0 0.0
  %655 = vmatprep.subr.mxu0 0.0
  %656 = vmatpush1.msra.mxu0 0.0
  %657 = vmatprep.subr.mxu0 0.0
  %658 = vmatpush1.msra.mxu0 0.0
  %659 = vmatprep.subr.mxu0 0.0
  %660 = vmatpush1.msra.mxu0 0.0
  %661 = vmatprep.subr.mxu0 0.0
  %662 = vmatpush1.msra.mxu0 0.0
  %663 = vmatprep.subr.mxu0 0.0
  %664 = vmatpush1.msra.mxu0 0.0
  %665 = vmatprep.subr.mxu0 0.0
  %666 = vmatpush1.msra.mxu0 0.0
  %667 = vmatprep.subr.mxu0 0.0
  %668 = vmatpush1.msra.mxu0 0.0
  %669 = vmatprep.subr.mxu0 0.0
  %670 = vmatpush1.msra.mxu0 0.0
  %671 = vmatprep.subr.mxu0 0.0
  %672 = vmatpush1.msra.mxu0 0.0
  %673 = vmatprep.subr.mxu0 0.0
  %674 = vmatpush1.msra.mxu0 0.0
  %675 = vmatprep.subr.mxu0 0.0
  %676 = vmatpush1.msra.mxu0 0.0
  %677 = vmatprep.subr.mxu0 0.0
  %678 = vmatpush1.msra.mxu0 0.0
  %679 = vmatprep.subr.mxu0 0.0
  %680 = vmatpush1.msra.mxu0 0.0
  %681 = vmatprep.subr.mxu0 0.0
  %682 = vmatpush1.msra.mxu0 0.0
  %683 = vmatprep.subr.mxu0 0.0
  %684 = vmatpush1.msra.mxu0 0.0
  %685 = vmatprep.subr.mxu0 0.0
  %686 = vmatpush1.msra.mxu0 0.0
  %687 = vmatprep.subr.mxu0 0.0
  %688 = vmatpush1.msra.mxu0 0.0
  %689 = vmatprep.subr.mxu0 0.0
  %690 = vmatpush1.msra.mxu0 0.0
  %691 = vmatprep.subr.mxu0 0.0
  %692 = vmatpush1.msra.mxu0 0.0
  %693 = vmatprep.subr.mxu0 0.0
  %694 = vmatpush1.msra.mxu0 0.0
  %695 = vmatprep.subr.mxu0 0.0
  %696 = vmatpush1.msra.mxu0 0.0
  %697 = vmatprep.subr.mxu0 0.0
  %698 = vmatpush1.msra.mxu0 0.0
  %699 = vmatprep.subr.mxu0 0.0
  %700 = vmatpush1.msra.mxu0 0.0
  %701 = vmatprep.subr.mxu0 0.0
  %702 = vmatpush1.msra.mxu0 0.0
  %703 = vmatprep.subr.mxu0 0.0
  %704 = vmatpush1.msra.mxu0 0.0
  %705 = vmatprep.subr.mxu0 0.0
  %706 = vmatpush1.msra.mxu0 0.0
  %707 = vmatprep.subr.mxu0 0.0
  %708 = vmatpush1.msra.mxu0 0.0
  %709 = vmatprep.subr.mxu0 0.0
  %710 = vmatpush1.msra.mxu0 0.0
  %711 = vmatprep.subr.mxu0 0.0
  %712 = vmatpush1.msra.mxu0 0.0
  %713 = vmatprep.mubr.f32.mxu0 0.0
  %714 = vmatmul.mubr.f32.gmra.mrb[0].mxu0 %v647
  %v715 = vpop.f32.mrb[0].mxu0
  %v716 = vadd.f32 %v643, %v715
  %v717 = vpop.f32.mrb[0].mxu0
  %718 = vdwg.mxu0
  %719 = vrot.lane.b32.xlu0 %v144, 112
  %v720 = vpop.permute.xlu0 %719
  %721 = vrot.lane.b32.xlu0 %v231, 112
  %v722 = vpop.permute.xlu0 %721
  %v723 = vsel %vm244, %v720, 0
  %v725 = vsel %vm244, %v722, 0
  %727 = vmatprep.subr.mxu0 0.0
  %728 = vmatpush1.xpose.msra.mxu0 %v725
  %729 = vmatprep.subr.mxu0 0.0
  %730 = vmatpush1.xpose.msra.mxu0 0.0
  %731 = vmatprep.subr.mxu0 0.0
  %732 = vmatpush1.xpose.msra.mxu0 0.0
  %733 = vmatprep.subr.mxu0 0.0
  %734 = vmatpush1.xpose.msra.mxu0 0.0
  %735 = vmatprep.subr.mxu0 0.0
  %736 = vmatpush1.xpose.msra.mxu0 0.0
  %737 = vmatprep.subr.mxu0 0.0
  %738 = vmatpush1.xpose.msra.mxu0 0.0
  %739 = vmatprep.subr.mxu0 0.0
  %740 = vmatpush1.xpose.msra.mxu0 0.0
  %741 = vmatprep.subr.mxu0 0.0
  %742 = vmatpush1.xpose.msra.mxu0 0.0
  %743 = vmatprep.subr.mxu0 0.0
  %744 = vmatpush1.xpose.msra.mxu0 0.0
  %745 = vmatprep.subr.mxu0 0.0
  %746 = vmatpush1.xpose.msra.mxu0 0.0
  %747 = vmatprep.subr.mxu0 0.0
  %748 = vmatpush1.xpose.msra.mxu0 0.0
  %749 = vmatprep.subr.mxu0 0.0
  %750 = vmatpush1.xpose.msra.mxu0 0.0
  %751 = vmatprep.subr.mxu0 0.0
  %752 = vmatpush1.xpose.msra.mxu0 0.0
  %753 = vmatprep.subr.mxu0 0.0
  %754 = vmatpush1.xpose.msra.mxu0 0.0
  %755 = vmatprep.subr.mxu0 0.0
  %756 = vmatpush1.xpose.msra.mxu0 0.0
  %757 = vmatprep.subr.mxu0 0.0
  %758 = vmatpush1.xpose.msra.mxu0 0.0
  %759 = vmatprep.subr.mxu0 0.0
  %760 = vmatpush1.xpose.msra.mxu0 0.0
  %761 = vmatprep.subr.mxu0 0.0
  %762 = vmatpush1.xpose.msra.mxu0 0.0
  %763 = vmatprep.subr.mxu0 0.0
  %764 = vmatpush1.xpose.msra.mxu0 0.0
  %765 = vmatprep.subr.mxu0 0.0
  %766 = vmatpush1.xpose.msra.mxu0 0.0
  %767 = vmatprep.subr.mxu0 0.0
  %768 = vmatpush1.xpose.msra.mxu0 0.0
  %769 = vmatprep.subr.mxu0 0.0
  %770 = vmatpush1.xpose.msra.mxu0 0.0
  %771 = vmatprep.subr.mxu0 0.0
  %772 = vmatpush1.xpose.msra.mxu0 0.0
  %773 = vmatprep.subr.mxu0 0.0
  %774 = vmatpush1.xpose.msra.mxu0 0.0
  %775 = vmatprep.subr.mxu0 0.0
  %776 = vmatpush1.xpose.msra.mxu0 0.0
  %777 = vmatprep.subr.mxu0 0.0
  %778 = vmatpush1.xpose.msra.mxu0 0.0
  %779 = vmatprep.subr.mxu0 0.0
  %780 = vmatpush1.xpose.msra.mxu0 0.0
  %781 = vmatprep.subr.mxu0 0.0
  %782 = vmatpush1.xpose.msra.mxu0 0.0
  %783 = vmatprep.subr.mxu0 0.0
  %784 = vmatpush1.xpose.msra.mxu0 0.0
  %785 = vmatprep.subr.mxu0 0.0
  %786 = vmatpush1.xpose.msra.mxu0 0.0
  %787 = vmatprep.subr.mxu0 0.0
  %788 = vmatpush1.xpose.msra.mxu0 0.0
  %789 = vmatprep.subr.mxu0 0.0
  %790 = vmatpush1.xpose.msra.mxu0 0.0
  %791 = vmatprep.mubr.f32.mxu0 0.0
  %792 = vmatmul.mubr.f32.gmra.mrb[0].mxu0 %v723
  %v793 = vpop.f32.mrb[0].mxu0
  %v794 = vadd.f32 %v243, %v793
  %v795 = vpop.f32.mrb[0].mxu0
  %796 = vdwg.mxu0
  %v797 = vsel %vm244, %v794, -inf
  %798 = vmax.xlane.f32.xlu0 %v797
  %v799 = vpop.xlane.xlu0 %798
  %v800 = vsub.f32 %v794, %v799
  %v801 = vmul.f32 %v800, 1.442695
  %v802 = vpow.pop %v801
  %v803 = vsel %vm244, %v802, 0.0
  %804 = vadd.xlane.f32.xlu0 %v803
  %v805 = vpop.xlane.xlu0 %804
  %806 = vrot.lane.b32.xlu0 %v231, 80
  %v807 = vpop.permute.xlu0 %806
  %v810 = vsel %vm244, %v802, 0
  %812 = vmatprep.subr.mxu0 0.0
  %813 = vmatpush1.msra.mxu0 %v807
  %814 = vmatprep.subr.mxu0 0.0
  %815 = vmatpush1.msra.mxu0 0.0
  %816 = vmatprep.subr.mxu0 0.0
  %817 = vmatpush1.msra.mxu0 0.0
  %818 = vmatprep.subr.mxu0 0.0
  %819 = vmatpush1.msra.mxu0 0.0
  %820 = vmatprep.subr.mxu0 0.0
  %821 = vmatpush1.msra.mxu0 0.0
  %822 = vmatprep.subr.mxu0 0.0
  %823 = vmatpush1.msra.mxu0 0.0
  %824 = vmatprep.subr.mxu0 0.0
  %825 = vmatpush1.msra.mxu0 0.0
  %826 = vmatprep.subr.mxu0 0.0
  %827 = vmatpush1.msra.mxu0 0.0
  %828 = vmatprep.subr.mxu0 0.0
  %829 = vmatpush1.msra.mxu0 0.0
  %830 = vmatprep.subr.mxu0 0.0
  %831 = vmatpush1.msra.mxu0 0.0
  %832 = vmatprep.subr.mxu0 0.0
  %833 = vmatpush1.msra.mxu0 0.0
  %834 = vmatprep.subr.mxu0 0.0
  %835 = vmatpush1.msra.mxu0 0.0
  %836 = vmatprep.subr.mxu0 0.0
  %837 = vmatpush1.msra.mxu0 0.0
  %838 = vmatprep.subr.mxu0 0.0
  %839 = vmatpush1.msra.mxu0 0.0
  %840 = vmatprep.subr.mxu0 0.0
  %841 = vmatpush1.msra.mxu0 0.0
  %842 = vmatprep.subr.mxu0 0.0
  %843 = vmatpush1.msra.mxu0 0.0
  %844 = vmatprep.subr.mxu0 0.0
  %845 = vmatpush1.msra.mxu0 0.0
  %846 = vmatprep.subr.mxu0 0.0
  %847 = vmatpush1.msra.mxu0 0.0
  %848 = vmatprep.subr.mxu0 0.0
  %849 = vmatpush1.msra.mxu0 0.0
  %850 = vmatprep.subr.mxu0 0.0
  %851 = vmatpush1.msra.mxu0 0.0
  %852 = vmatprep.subr.mxu0 0.0
  %853 = vmatpush1.msra.mxu0 0.0
  %854 = vmatprep.subr.mxu0 0.0
  %855 = vmatpush1.msra.mxu0 0.0
  %856 = vmatprep.subr.mxu0 0.0
  %857 = vmatpush1.msra.mxu0 0.0
  %858 = vmatprep.subr.mxu0 0.0
  %859 = vmatpush1.msra.mxu0 0.0
  %860 = vmatprep.subr.mxu0 0.0
  %861 = vmatpush1.msra.mxu0 0.0
  %862 = vmatprep.subr.mxu0 0.0
  %863 = vmatpush1.msra.mxu0 0.0
  %864 = vmatprep.subr.mxu0 0.0
  %865 = vmatpush1.msra.mxu0 0.0
  %866 = vmatprep.subr.mxu0 0.0
  %867 = vmatpush1.msra.mxu0 0.0
  %868 = vmatprep.subr.mxu0 0.0
  %869 = vmatpush1.msra.mxu0 0.0
  %870 = vmatprep.subr.mxu0 0.0
  %871 = vmatpush1.msra.mxu0 0.0
  %872 = vmatprep.subr.mxu0 0.0
  %873 = vmatpush1.msra.mxu0 0.0
  %874 = vmatprep.subr.mxu0 0.0
  %875 = vmatpush1.msra.mxu0 0.0
  %876 = vmatprep.mubr.f32.mxu0 0.0
  %877 = vmatmul.mubr.f32.gmra.mrb[0].mxu0 %v810
  %v878 = vpop.f32.mrb[0].mxu0
  %v879 = vadd.f32 0.0, %v878
  %v880 = vpop.f32.mrb[0].mxu0
  %881 = vdwg.mxu0
  %v882 = vrcp.pop %v805
  %v883 = vmul.f32 %v879, %v882
  %v885 = vsel %vm244, %v883, 0
  %887 = vmatprep.subr.mxu0 0.0
  %888 = vmatpush1.msra.mxu0 %v57
  %889 = vmatprep.subr.mxu0 0.0
  %890 = vmatpush1.msra.mxu0 0.0
  %891 = vmatprep.subr.mxu0 0.0
  %892 = vmatpush1.msra.mxu0 0.0
  %893 = vmatprep.subr.mxu0 0.0
  %894 = vmatpush1.msra.mxu0 0.0
  %895 = vmatprep.subr.mxu0 0.0
  %896 = vmatpush1.msra.mxu0 0.0
  %897 = vmatprep.subr.mxu0 0.0
  %898 = vmatpush1.msra.mxu0 0.0
  %899 = vmatprep.subr.mxu0 0.0
  %900 = vmatpush1.msra.mxu0 0.0
  %901 = vmatprep.subr.mxu0 0.0
  %902 = vmatpush1.msra.mxu0 0.0
  %903 = vmatprep.subr.mxu0 0.0
  %904 = vmatpush1.msra.mxu0 0.0
  %905 = vmatprep.subr.mxu0 0.0
  %906 = vmatpush1.msra.mxu0 0.0
  %907 = vmatprep.subr.mxu0 0.0
  %908 = vmatpush1.msra.mxu0 0.0
  %909 = vmatprep.subr.mxu0 0.0
  %910 = vmatpush1.msra.mxu0 0.0
  %911 = vmatprep.subr.mxu0 0.0
  %912 = vmatpush1.msra.mxu0 0.0
  %913 = vmatprep.subr.mxu0 0.0
  %914 = vmatpush1.msra.mxu0 0.0
  %915 = vmatprep.subr.mxu0 0.0
  %916 = vmatpush1.msra.mxu0 0.0
  %917 = vmatprep.subr.mxu0 0.0
  %918 = vmatpush1.msra.mxu0 0.0
  %919 = vmatprep.subr.mxu0 0.0
  %920 = vmatpush1.msra.mxu0 0.0
  %921 = vmatprep.subr.mxu0 0.0
  %922 = vmatpush1.msra.mxu0 0.0
  %923 = vmatprep.subr.mxu0 0.0
  %924 = vmatpush1.msra.mxu0 0.0
  %925 = vmatprep.subr.mxu0 0.0
  %926 = vmatpush1.msra.mxu0 0.0
  %927 = vmatprep.subr.mxu0 0.0
  %928 = vmatpush1.msra.mxu0 0.0
  %929 = vmatprep.subr.mxu0 0.0
  %930 = vmatpush1.msra.mxu0 0.0
  %931 = vmatprep.subr.mxu0 0.0
  %932 = vmatpush1.msra.mxu0 0.0
  %933 = vmatprep.subr.mxu0 0.0
  %934 = vmatpush1.msra.mxu0 0.0
  %935 = vmatprep.subr.mxu0 0.0
  %936 = vmatpush1.msra.mxu0 0.0
  %937 = vmatprep.subr.mxu0 0.0
  %938 = vmatpush1.msra.mxu0 0.0
  %939 = vmatprep.subr.mxu0 0.0
  %940 = vmatpush1.msra.mxu0 0.0
  %941 = vmatprep.subr.mxu0 0.0
  %942 = vmatpush1.msra.mxu0 0.0
  %943 = vmatprep.subr.mxu0 0.0
  %944 = vmatpush1.msra.mxu0 0.0
  %945 = vmatprep.subr.mxu0 0.0
  %946 = vmatpush1.msra.mxu0 0.0
  %947 = vmatprep.subr.mxu0 0.0
  %948 = vmatpush1.msra.mxu0 0.0
  %949 = vmatprep.subr.mxu0 0.0
  %950 = vmatpush1.msra.mxu0 0.0
  %951 = vmatprep.mubr.f32.mxu0 0.0
  %952 = vmatmul.mubr.f32.gmra.mrb[0].mxu0 %v885
  %v953 = vpop.f32.mrb[0].mxu0
  %v954 = vadd.f32 0.0, %v953
  %v955 = vpop.f32.mrb[0].mxu0
  %956 = vdwg.mxu0
  %v957 = vadd.f32 %v716, %v954
  %958 = vrot.lane.b32.xlu0 %v144, 104
  %v959 = vpop.permute.xlu0 %958
  %960 = vrot.lane.b32.xlu0 %v231, 104
  %v961 = vpop.permute.xlu0 %960
  %v962 = vsel %vm244, %v959, 0
  %v964 = vsel %vm244, %v961, 0
  %966 = vmatprep.subr.mxu0 0.0
  %967 = vmatpush1.xpose.msra.mxu0 %v964
  %968 = vmatprep.subr.mxu0 0.0
  %969 = vmatpush1.xpose.msra.mxu0 0.0
  %970 = vmatprep.subr.mxu0 0.0
  %971 = vmatpush1.xpose.msra.mxu0 0.0
  %972 = vmatprep.subr.mxu0 0.0
  %973 = vmatpush1.xpose.msra.mxu0 0.0
  %974 = vmatprep.subr.mxu0 0.0
  %975 = vmatpush1.xpose.msra.mxu0 0.0
  %976 = vmatprep.subr.mxu0 0.0
  %977 = vmatpush1.xpose.msra.mxu0 0.0
  %978 = vmatprep.subr.mxu0 0.0
  %979 = vmatpush1.xpose.msra.mxu0 0.0
  %980 = vmatprep.subr.mxu0 0.0
  %981 = vmatpush1.xpose.msra.mxu0 0.0
  %982 = vmatprep.subr.mxu0 0.0
  %983 = vmatpush1.xpose.msra.mxu0 0.0
  %984 = vmatprep.subr.mxu0 0.0
  %985 = vmatpush1.xpose.msra.mxu0 0.0
  %986 = vmatprep.subr.mxu0 0.0
  %987 = vmatpush1.xpose.msra.mxu0 0.0
  %988 = vmatprep.subr.mxu0 0.0
  %989 = vmatpush1.xpose.msra.mxu0 0.0
  %990 = vmatprep.subr.mxu0 0.0
  %991 = vmatpush1.xpose.msra.mxu0 0.0
  %992 = vmatprep.subr.mxu0 0.0
  %993 = vmatpush1.xpose.msra.mxu0 0.0
  %994 = vmatprep.subr.mxu0 0.0
  %995 = vmatpush1.xpose.msra.mxu0 0.0
  %996 = vmatprep.subr.mxu0 0.0
  %997 = vmatpush1.xpose.msra.mxu0 0.0
  %998 = vmatprep.subr.mxu0 0.0
  %999 = vmatpush1.xpose.msra.mxu0 0.0
  %1000 = vmatprep.subr.mxu0 0.0
  %1001 = vmatpush1.xpose.msra.mxu0 0.0
  %1002 = vmatprep.subr.mxu0 0.0
  %1003 = vmatpush1.xpose.msra.mxu0 0.0
  %1004 = vmatprep.subr.mxu0 0.0
  %1005 = vmatpush1.xpose.msra.mxu0 0.0
  %1006 = vmatprep.subr.mxu0 0.0
  %1007 = vmatpush1.xpose.msra.mxu0 0.0
  %1008 = vmatprep.subr.mxu0 0.0
  %1009 = vmatpush1.xpose.msra.mxu0 0.0
  %1010 = vmatprep.subr.mxu0 0.0
  %1011 = vmatpush1.xpose.msra.mxu0 0.0
  %1012 = vmatprep.subr.mxu0 0.0
  %1013 = vmatpush1.xpose.msra.mxu0 0.0
  %1014 = vmatprep.subr.mxu0 0.0
  %1015 = vmatpush1.xpose.msra.mxu0 0.0
  %1016 = vmatprep.subr.mxu0 0.0
  %1017 = vmatpush1.xpose.msra.mxu0 0.0
  %1018 = vmatprep.subr.mxu0 0.0
  %1019 = vmatpush1.xpose.msra.mxu0 0.0
  %1020 = vmatprep.subr.mxu0 0.0
  %1021 = vmatpush1.xpose.msra.mxu0 0.0
  %1022 = vmatprep.subr.mxu0 0.0
  %1023 = vmatpush1.xpose.msra.mxu0 0.0
  %1024 = vmatprep.subr.mxu0 0.0
  %1025 = vmatpush1.xpose.msra.mxu0 0.0
  %1026 = vmatprep.subr.mxu0 0.0
  %1027 = vmatpush1.xpose.msra.mxu0 0.0
  %1028 = vmatprep.subr.mxu0 0.0
  %1029 = vmatpush1.xpose.msra.mxu0 0.0
  %1030 = vmatprep.mubr.f32.mxu0 0.0
  %1031 = vmatmul.mubr.f32.gmra.mrb[0].mxu0 %v962
  %v1032 = vpop.f32.mrb[0].mxu0
  %v1033 = vadd.f32 %v243, %v1032
  %v1034 = vpop.f32.mrb[0].mxu0
  %1035 = vdwg.mxu0
  %v1036 = vsel %vm244, %v1033, -inf
  %1037 = vmax.xlane.f32.xlu0 %v1036
  %v1038 = vpop.xlane.xlu0 %1037
  %v1039 = vsub.f32 %v1033, %v1038
  %v1040 = vmul.f32 %v1039, 1.442695
  %v1041 = vpow.pop %v1040
  %v1042 = vsel %vm244, %v1041, 0.0
  %1043 = vadd.xlane.f32.xlu0 %v1042
  %v1044 = vpop.xlane.xlu0 %1043
  %1045 = vrot.lane.b32.xlu0 %v231, 72
  %v1046 = vpop.permute.xlu0 %1045
  %v1049 = vsel %vm244, %v1041, 0
  %1051 = vmatprep.subr.mxu0 0.0
  %1052 = vmatpush1.msra.mxu0 %v1046
  %1053 = vmatprep.subr.mxu0 0.0
  %1054 = vmatpush1.msra.mxu0 0.0
  %1055 = vmatprep.subr.mxu0 0.0
  %1056 = vmatpush1.msra.mxu0 0.0
  %1057 = vmatprep.subr.mxu0 0.0
  %1058 = vmatpush1.msra.mxu0 0.0
  %1059 = vmatprep.subr.mxu0 0.0
  %1060 = vmatpush1.msra.mxu0 0.0
  %1061 = vmatprep.subr.mxu0 0.0
  %1062 = vmatpush1.msra.mxu0 0.0
  %1063 = vmatprep.subr.mxu0 0.0
  %1064 = vmatpush1.msra.mxu0 0.0
  %1065 = vmatprep.subr.mxu0 0.0
  %1066 = vmatpush1.msra.mxu0 0.0
  %1067 = vmatprep.subr.mxu0 0.0
  %1068 = vmatpush1.msra.mxu0 0.0
  %1069 = vmatprep.subr.mxu0 0.0
  %1070 = vmatpush1.msra.mxu0 0.0
  %1071 = vmatprep.subr.mxu0 0.0
  %1072 = vmatpush1.msra.mxu0 0.0
  %1073 = vmatprep.subr.mxu0 0.0
  %1074 = vmatpush1.msra.mxu0 0.0
  %1075 = vmatprep.subr.mxu0 0.0
  %1076 = vmatpush1.msra.mxu0 0.0
  %1077 = vmatprep.subr.mxu0 0.0
  %1078 = vmatpush1.msra.mxu0 0.0
  %1079 = vmatprep.subr.mxu0 0.0
  %1080 = vmatpush1.msra.mxu0 0.0
  %1081 = vmatprep.subr.mxu0 0.0
  %1082 = vmatpush1.msra.mxu0 0.0
  %1083 = vmatprep.subr.mxu0 0.0
  %1084 = vmatpush1.msra.mxu0 0.0
  %1085 = vmatprep.subr.mxu0 0.0
  %1086 = vmatpush1.msra.mxu0 0.0
  %1087 = vmatprep.subr.mxu0 0.0
  %1088 = vmatpush1.msra.mxu0 0.0
  %1089 = vmatprep.subr.mxu0 0.0
  %1090 = vmatpush1.msra.mxu0 0.0
  %1091 = vmatprep.subr.mxu0 0.0
  %1092 = vmatpush1.msra.mxu0 0.0
  %1093 = vmatprep.subr.mxu0 0.0
  %1094 = vmatpush1.msra.mxu0 0.0
  %1095 = vmatprep.subr.mxu0 0.0
  %1096 = vmatpush1.msra.mxu0 0.0
  %1097 = vmatprep.subr.mxu0 0.0
  %1098 = vmatpush1.msra.mxu0 0.0
  %1099 = vmatprep.subr.mxu0 0.0
  %1100 = vmatpush1.msra.mxu0 0.0
  %1101 = vmatprep.subr.mxu0 0.0
  %1102 = vmatpush1.msra.mxu0 0.0
  %1103 = vmatprep.subr.mxu0 0.0
  %1104 = vmatpush1.msra.mxu0 0.0
  %1105 = vmatprep.subr.mxu0 0.0
  %1106 = vmatpush1.msra.mxu0 0.0
  %1107 = vmatprep.subr.mxu0 0.0
  %1108 = vmatpush1.msra.mxu0 0.0
  %1109 = vmatprep.subr.mxu0 0.0
  %1110 = vmatpush1.msra.mxu0 0.0
  %1111 = vmatprep.subr.mxu0 0.0
  %1112 = vmatpush1.msra.mxu0 0.0
  %1113 = vmatprep.subr.mxu0 0.0
  %1114 = vmatpush1.msra.mxu0 0.0
  %1115 = vmatprep.mubr.f32.mxu0 0.0
  %1116 = vmatmul.mubr.f32.gmra.mrb[0].mxu0 %v1049
  %v1117 = vpop.f32.mrb[0].mxu0
  %v1118 = vadd.f32 0.0, %v1117
  %v1119 = vpop.f32.mrb[0].mxu0
  %1120 = vdwg.mxu0
  %v1121 = vrcp.pop %v1044
  %v1122 = vmul.f32 %v1118, %v1121
  %v1124 = vsel %vm244, %v1122, 0
  %1126 = vmatprep.subr.mxu0 0.0
  %1127 = vmatpush1.msra.mxu0 %v58
  %1128 = vmatprep.subr.mxu0 0.0
  %1129 = vmatpush1.msra.mxu0 0.0
  %1130 = vmatprep.subr.mxu0 0.0
  %1131 = vmatpush1.msra.mxu0 0.0
  %1132 = vmatprep.subr.mxu0 0.0
  %1133 = vmatpush1.msra.mxu0 0.0
  %1134 = vmatprep.subr.mxu0 0.0
  %1135 = vmatpush1.msra.mxu0 0.0
  %1136 = vmatprep.subr.mxu0 0.0
  %1137 = vmatpush1.msra.mxu0 0.0
  %1138 = vmatprep.subr.mxu0 0.0
  %1139 = vmatpush1.msra.mxu0 0.0
  %1140 = vmatprep.subr.mxu0 0.0
  %1141 = vmatpush1.msra.mxu0 0.0
  %1142 = vmatprep.subr.mxu0 0.0
  %1143 = vmatpush1.msra.mxu0 0.0
  %1144 = vmatprep.subr.mxu0 0.0
  %1145 = vmatpush1.msra.mxu0 0.0
  %1146 = vmatprep.subr.mxu0 0.0
  %1147 = vmatpush1.msra.mxu0 0.0
  %1148 = vmatprep.subr.mxu0 0.0
  %1149 = vmatpush1.msra.mxu0 0.0
  %1150 = vmatprep.subr.mxu0 0.0
  %1151 = vmatpush1.msra.mxu0 0.0
  %1152 = vmatprep.subr.mxu0 0.0
  %1153 = vmatpush1.msra.mxu0 0.0
  %1154 = vmatprep.subr.mxu0 0.0
  %1155 = vmatpush1.msra.mxu0 0.0
  %1156 = vmatprep.subr.mxu0 0.0
  %1157 = vmatpush1.msra.mxu0 0.0
  %1158 = vmatprep.subr.mxu0 0.0
  %1159 = vmatpush1.msra.mxu0 0.0
  %1160 = vmatprep.subr.mxu0 0.0
  %1161 = vmatpush1.msra.mxu0 0.0
  %1162 = vmatprep.subr.mxu0 0.0
  %1163 = vmatpush1.msra.mxu0 0.0
  %1164 = vmatprep.subr.mxu0 0.0
  %1165 = vmatpush1.msra.mxu0 0.0
  %1166 = vmatprep.subr.mxu0 0.0
  %1167 = vmatpush1.msra.mxu0 0.0
  %1168 = vmatprep.subr.mxu0 0.0
  %1169 = vmatpush1.msra.mxu0 0.0
  %1170 = vmatprep.subr.mxu0 0.0
  %1171 = vmatpush1.msra.mxu0 0.0
  %1172 = vmatprep.subr.mxu0 0.0
  %1173 = vmatpush1.msra.mxu0 0.0
  %1174 = vmatprep.subr.mxu0 0.0
  %1175 = vmatpush1.msra.mxu0 0.0
  %1176 = vmatprep.subr.mxu0 0.0
  %1177 = vmatpush1.msra.mxu0 0.0
  %1178 = vmatprep.subr.mxu0 0.0
  %1179 = vmatpush1.msra.mxu0 0.0
  %1180 = vmatprep.subr.mxu0 0.0
  %1181 = vmatpush1.msra.mxu0 0.0
  %1182 = vmatprep.subr.mxu0 0.0
  %1183 = vmatpush1.msra.mxu0 0.0
  %1184 = vmatprep.subr.mxu0 0.0
  %1185 = vmatpush1.msra.mxu0 0.0
  %1186 = vmatprep.subr.mxu0 0.0
  %1187 = vmatpush1.msra.mxu0 0.0
  %1188 = vmatprep.subr.mxu0 0.0
  %1189 = vmatpush1.msra.mxu0 0.0
  %1190 = vmatprep.mubr.f32.mxu0 0.0
  %1191 = vmatmul.mubr.f32.gmra.mrb[0].mxu0 %v1124
  %v1192 = vpop.f32.mrb[0].mxu0
  %v1193 = vadd.f32 0.0, %v1192
  %v1194 = vpop.f32.mrb[0].mxu0
  %1195 = vdwg.mxu0
  %v1196 = vadd.f32 %v957, %v1193
  %v1198 = vlaneseq
  %v1199 = vshrl.u32 %v1198, 7
  %v1200 = vsub.s32 0, %v1199
  %v1201 = vrot.slane %v59, %v1200
  %v1203 = vadd.f32 %v1196, %v1201
  %v1204 = vsel %vm70, %v1203, 0.0
  %1205 = vadd.xlane.f32.xlu0 %v1204
  %v1206 = vpop.xlane.xlu0 %1205
  %v1207 = vrcp.pop 32.0
  %v1208 = vmul.f32 %v1206, %v1207
  %v1209 = vsub.f32 %v1203, %v1208
  %v1210 = vmul.f32 %v1209, %v1209
  %v1211 = vsel %vm70, %v1210, 0.0
  %1212 = vadd.xlane.f32.xlu0 %v1211
  %v1213 = vpop.xlane.xlu0 %1212
  %v1214 = vmul.f32 %v1213, %v1207
  %v1215 = vadd.f32 %v1214, 1e-05
  %v1216 = vrsqrt.pop %v1215
  %v1217 = vmul.f32 %v1209, %v1216
  %v1219 = vlaneseq
  %v1220 = vshrl.u32 %v1219, 7
  %v1221 = vsub.s32 0, %v1220
  %v1222 = vrot.slane %v60, %v1221
  %v1224 = vmul.f32 %v1217, %v1222
  %v1226 = vlaneseq
  %v1227 = vshrl.u32 %v1226, 7
  %v1228 = vsub.s32 0, %v1227
  %v1229 = vrot.slane %v61, %v1228
  %v1231 = vadd.f32 %v1224, %v1229
  %1232 = vst.msk [vmem:[%s12] sm:$0xff] %vm70, %v1231
  %v1233 = vlaneseq
  %v1234 = vshrl.u32 %v1233, 7
  %v1235 = vsub.s32 1, %v1234
  %v1236 = vrot.slane %v63, %v1235
  %v1237 = vadd.f32 %v62, %v1236
  %v1239 = vsel %vm244, %v149, 0
  %v1242 = vsel %vm244, %v236, 0
  %1244 = vmatprep.subr.mxu0 0.0
  %1245 = vmatpush1.xpose.msra.mxu0 %v1242
  %1246 = vmatprep.subr.mxu0 0.0
  %1247 = vmatpush1.xpose.msra.mxu0 0.0
  %1248 = vmatprep.subr.mxu0 0.0
  %1249 = vmatpush1.xpose.msra.mxu0 0.0
  %1250 = vmatprep.subr.mxu0 0.0
  %1251 = vmatpush1.xpose.msra.mxu0 0.0
  %1252 = vmatprep.subr.mxu0 0.0
  %1253 = vmatpush1.xpose.msra.mxu0 0.0
  %1254 = vmatprep.subr.mxu0 0.0
  %1255 = vmatpush1.xpose.msra.mxu0 0.0
  %1256 = vmatprep.subr.mxu0 0.0
  %1257 = vmatpush1.xpose.msra.mxu0 0.0
  %1258 = vmatprep.subr.mxu0 0.0
  %1259 = vmatpush1.xpose.msra.mxu0 0.0
  %1260 = vmatprep.subr.mxu0 0.0
  %1261 = vmatpush1.xpose.msra.mxu0 0.0
  %1262 = vmatprep.subr.mxu0 0.0
  %1263 = vmatpush1.xpose.msra.mxu0 0.0
  %1264 = vmatprep.subr.mxu0 0.0
  %1265 = vmatpush1.xpose.msra.mxu0 0.0
  %1266 = vmatprep.subr.mxu0 0.0
  %1267 = vmatpush1.xpose.msra.mxu0 0.0
  %1268 = vmatprep.subr.mxu0 0.0
  %1269 = vmatpush1.xpose.msra.mxu0 0.0
  %1270 = vmatprep.subr.mxu0 0.0
  %1271 = vmatpush1.xpose.msra.mxu0 0.0
  %1272 = vmatprep.subr.mxu0 0.0
  %1273 = vmatpush1.xpose.msra.mxu0 0.0
  %1274 = vmatprep.subr.mxu0 0.0
  %1275 = vmatpush1.xpose.msra.mxu0 0.0
  %1276 = vmatprep.subr.mxu0 0.0
  %1277 = vmatpush1.xpose.msra.mxu0 0.0
  %1278 = vmatprep.subr.mxu0 0.0
  %1279 = vmatpush1.xpose.msra.mxu0 0.0
  %1280 = vmatprep.subr.mxu0 0.0
  %1281 = vmatpush1.xpose.msra.mxu0 0.0
  %1282 = vmatprep.subr.mxu0 0.0
  %1283 = vmatpush1.xpose.msra.mxu0 0.0
  %1284 = vmatprep.subr.mxu0 0.0
  %1285 = vmatpush1.xpose.msra.mxu0 0.0
  %1286 = vmatprep.subr.mxu0 0.0
  %1287 = vmatpush1.xpose.msra.mxu0 0.0
  %1288 = vmatprep.subr.mxu0 0.0
  %1289 = vmatpush1.xpose.msra.mxu0 0.0
  %1290 = vmatprep.subr.mxu0 0.0
  %1291 = vmatpush1.xpose.msra.mxu0 0.0
  %1292 = vmatprep.subr.mxu0 0.0
  %1293 = vmatpush1.xpose.msra.mxu0 0.0
  %1294 = vmatprep.subr.mxu0 0.0
  %1295 = vmatpush1.xpose.msra.mxu0 0.0
  %1296 = vmatprep.subr.mxu0 0.0
  %1297 = vmatpush1.xpose.msra.mxu0 0.0
  %1298 = vmatprep.subr.mxu0 0.0
  %1299 = vmatpush1.xpose.msra.mxu0 0.0
  %1300 = vmatprep.subr.mxu0 0.0
  %1301 = vmatpush1.xpose.msra.mxu0 0.0
  %1302 = vmatprep.subr.mxu0 0.0
  %1303 = vmatpush1.xpose.msra.mxu0 0.0
  %1304 = vmatprep.subr.mxu0 0.0
  %1305 = vmatpush1.xpose.msra.mxu0 0.0
  %1306 = vmatprep.subr.mxu0 0.0
  %1307 = vmatpush1.xpose.msra.mxu0 0.0
  %1308 = vmatprep.mubr.f32.mxu0 0.0
  %1309 = vmatmul.mubr.f32.gmra.mrb[0].mxu0 %v1239
  %v1310 = vpop.f32.mrb[0].mxu0
  %v1311 = vadd.f32 %v1237, %v1310
  %v1312 = vpop.f32.mrb[0].mxu0
  %1313 = vdwg.mxu0
  %v1314 = vsel %vm244, %v1311, -inf
  %1315 = vmax.xlane.f32.xlu0 %v1314
  %v1316 = vpop.xlane.xlu0 %1315
  %v1317 = vsub.f32 %v1311, %v1316
  %v1318 = vmul.f32 %v1317, 1.442695
  %v1319 = vpow.pop %v1318
  %v1320 = vsel %vm244, %v1319, 0.0
  %1321 = vadd.xlane.f32.xlu0 %v1320
  %v1322 = vpop.xlane.xlu0 %1321
  %1323 = vrot.lane.b32.xlu0 %v236, 96
  %v1324 = vpop.permute.xlu0 %1323
  %v1327 = vsel %vm244, %v1319, 0
  %1329 = vmatprep.subr.mxu0 0.0
  %1330 = vmatpush1.msra.mxu0 %v1324
  %1331 = vmatprep.subr.mxu0 0.0
  %1332 = vmatpush1.msra.mxu0 0.0
  %1333 = vmatprep.subr.mxu0 0.0
  %1334 = vmatpush1.msra.mxu0 0.0
  %1335 = vmatprep.subr.mxu0 0.0
  %1336 = vmatpush1.msra.mxu0 0.0
  %1337 = vmatprep.subr.mxu0 0.0
  %1338 = vmatpush1.msra.mxu0 0.0
  %1339 = vmatprep.subr.mxu0 0.0
  %1340 = vmatpush1.msra.mxu0 0.0
  %1341 = vmatprep.subr.mxu0 0.0
  %1342 = vmatpush1.msra.mxu0 0.0
  %1343 = vmatprep.subr.mxu0 0.0
  %1344 = vmatpush1.msra.mxu0 0.0
  %1345 = vmatprep.subr.mxu0 0.0
  %1346 = vmatpush1.msra.mxu0 0.0
  %1347 = vmatprep.subr.mxu0 0.0
  %1348 = vmatpush1.msra.mxu0 0.0
  %1349 = vmatprep.subr.mxu0 0.0
  %1350 = vmatpush1.msra.mxu0 0.0
  %1351 = vmatprep.subr.mxu0 0.0
  %1352 = vmatpush1.msra.mxu0 0.0
  %1353 = vmatprep.subr.mxu0 0.0
  %1354 = vmatpush1.msra.mxu0 0.0
  %1355 = vmatprep.subr.mxu0 0.0
  %1356 = vmatpush1.msra.mxu0 0.0
  %1357 = vmatprep.subr.mxu0 0.0
  %1358 = vmatpush1.msra.mxu0 0.0
  %1359 = vmatprep.subr.mxu0 0.0
  %1360 = vmatpush1.msra.mxu0 0.0
  %1361 = vmatprep.subr.mxu0 0.0
  %1362 = vmatpush1.msra.mxu0 0.0
  %1363 = vmatprep.subr.mxu0 0.0
  %1364 = vmatpush1.msra.mxu0 0.0
  %1365 = vmatprep.subr.mxu0 0.0
  %1366 = vmatpush1.msra.mxu0 0.0
  %1367 = vmatprep.subr.mxu0 0.0
  %1368 = vmatpush1.msra.mxu0 0.0
  %1369 = vmatprep.subr.mxu0 0.0
  %1370 = vmatpush1.msra.mxu0 0.0
  %1371 = vmatprep.subr.mxu0 0.0
  %1372 = vmatpush1.msra.mxu0 0.0
  %1373 = vmatprep.subr.mxu0 0.0
  %1374 = vmatpush1.msra.mxu0 0.0
  %1375 = vmatprep.subr.mxu0 0.0
  %1376 = vmatpush1.msra.mxu0 0.0
  %1377 = vmatprep.subr.mxu0 0.0
  %1378 = vmatpush1.msra.mxu0 0.0
  %1379 = vmatprep.subr.mxu0 0.0
  %1380 = vmatpush1.msra.mxu0 0.0
  %1381 = vmatprep.subr.mxu0 0.0
  %1382 = vmatpush1.msra.mxu0 0.0
  %1383 = vmatprep.subr.mxu0 0.0
  %1384 = vmatpush1.msra.mxu0 0.0
  %1385 = vmatprep.subr.mxu0 0.0
  %1386 = vmatpush1.msra.mxu0 0.0
  %1387 = vmatprep.subr.mxu0 0.0
  %1388 = vmatpush1.msra.mxu0 0.0
  %1389 = vmatprep.subr.mxu0 0.0
  %1390 = vmatpush1.msra.mxu0 0.0
  %1391 = vmatprep.subr.mxu0 0.0
  %1392 = vmatpush1.msra.mxu0 0.0
  %1393 = vmatprep.mubr.f32.mxu0 0.0
  %1394 = vmatmul.mubr.f32.gmra.mrb[0].mxu0 %v1327
  %v1395 = vpop.f32.mrb[0].mxu0
  %v1396 = vadd.f32 0.0, %v1395
  %v1397 = vpop.f32.mrb[0].mxu0
  %1398 = vdwg.mxu0
  %v1399 = vrcp.pop %v1322
  %v1400 = vmul.f32 %v1396, %v1399
  %1401 = vrot.lane.b32.xlu0 %v149, 120
  %v1402 = vpop.permute.xlu0 %1401
  %1403 = vrot.lane.b32.xlu0 %v236, 120
  %v1404 = vpop.permute.xlu0 %1403
  %v1405 = vsel %vm244, %v1402, 0
  %v1407 = vsel %vm244, %v1404, 0
  %1409 = vmatprep.subr.mxu0 0.0
  %1410 = vmatpush1.xpose.msra.mxu0 %v1407
  %1411 = vmatprep.subr.mxu0 0.0
  %1412 = vmatpush1.xpose.msra.mxu0 0.0
  %1413 = vmatprep.subr.mxu0 0.0
  %1414 = vmatpush1.xpose.msra.mxu0 0.0
  %1415 = vmatprep.subr.mxu0 0.0
  %1416 = vmatpush1.xpose.msra.mxu0 0.0
  %1417 = vmatprep.subr.mxu0 0.0
  %1418 = vmatpush1.xpose.msra.mxu0 0.0
  %1419 = vmatprep.subr.mxu0 0.0
  %1420 = vmatpush1.xpose.msra.mxu0 0.0
  %1421 = vmatprep.subr.mxu0 0.0
  %1422 = vmatpush1.xpose.msra.mxu0 0.0
  %1423 = vmatprep.subr.mxu0 0.0
  %1424 = vmatpush1.xpose.msra.mxu0 0.0
  %1425 = vmatprep.subr.mxu0 0.0
  %1426 = vmatpush1.xpose.msra.mxu0 0.0
  %1427 = vmatprep.subr.mxu0 0.0
  %1428 = vmatpush1.xpose.msra.mxu0 0.0
  %1429 = vmatprep.subr.mxu0 0.0
  %1430 = vmatpush1.xpose.msra.mxu0 0.0
  %1431 = vmatprep.subr.mxu0 0.0
  %1432 = vmatpush1.xpose.msra.mxu0 0.0
  %1433 = vmatprep.subr.mxu0 0.0
  %1434 = vmatpush1.xpose.msra.mxu0 0.0
  %1435 = vmatprep.subr.mxu0 0.0
  %1436 = vmatpush1.xpose.msra.mxu0 0.0
  %1437 = vmatprep.subr.mxu0 0.0
  %1438 = vmatpush1.xpose.msra.mxu0 0.0
  %1439 = vmatprep.subr.mxu0 0.0
  %1440 = vmatpush1.xpose.msra.mxu0 0.0
  %1441 = vmatprep.subr.mxu0 0.0
  %1442 = vmatpush1.xpose.msra.mxu0 0.0
  %1443 = vmatprep.subr.mxu0 0.0
  %1444 = vmatpush1.xpose.msra.mxu0 0.0
  %1445 = vmatprep.subr.mxu0 0.0
  %1446 = vmatpush1.xpose.msra.mxu0 0.0
  %1447 = vmatprep.subr.mxu0 0.0
  %1448 = vmatpush1.xpose.msra.mxu0 0.0
  %1449 = vmatprep.subr.mxu0 0.0
  %1450 = vmatpush1.xpose.msra.mxu0 0.0
  %1451 = vmatprep.subr.mxu0 0.0
  %1452 = vmatpush1.xpose.msra.mxu0 0.0
  %1453 = vmatprep.subr.mxu0 0.0
  %1454 = vmatpush1.xpose.msra.mxu0 0.0
  %1455 = vmatprep.subr.mxu0 0.0
  %1456 = vmatpush1.xpose.msra.mxu0 0.0
  %1457 = vmatprep.subr.mxu0 0.0
  %1458 = vmatpush1.xpose.msra.mxu0 0.0
  %1459 = vmatprep.subr.mxu0 0.0
  %1460 = vmatpush1.xpose.msra.mxu0 0.0
  %1461 = vmatprep.subr.mxu0 0.0
  %1462 = vmatpush1.xpose.msra.mxu0 0.0
  %1463 = vmatprep.subr.mxu0 0.0
  %1464 = vmatpush1.xpose.msra.mxu0 0.0
  %1465 = vmatprep.subr.mxu0 0.0
  %1466 = vmatpush1.xpose.msra.mxu0 0.0
  %1467 = vmatprep.subr.mxu0 0.0
  %1468 = vmatpush1.xpose.msra.mxu0 0.0
  %1469 = vmatprep.subr.mxu0 0.0
  %1470 = vmatpush1.xpose.msra.mxu0 0.0
  %1471 = vmatprep.subr.mxu0 0.0
  %1472 = vmatpush1.xpose.msra.mxu0 0.0
  %1473 = vmatprep.mubr.f32.mxu0 0.0
  %1474 = vmatmul.mubr.f32.gmra.mrb[0].mxu0 %v1405
  %v1475 = vpop.f32.mrb[0].mxu0
  %v1476 = vadd.f32 %v1237, %v1475
  %v1477 = vpop.f32.mrb[0].mxu0
  %1478 = vdwg.mxu0
  %v1479 = vsel %vm244, %v1476, -inf
  %1480 = vmax.xlane.f32.xlu0 %v1479
  %v1481 = vpop.xlane.xlu0 %1480
  %v1482 = vsub.f32 %v1476, %v1481
  %v1483 = vmul.f32 %v1482, 1.442695
  %v1484 = vpow.pop %v1483
  %v1485 = vsel %vm244, %v1484, 0.0
  %1486 = vadd.xlane.f32.xlu0 %v1485
  %v1487 = vpop.xlane.xlu0 %1486
  %1488 = vrot.lane.b32.xlu0 %v236, 88
  %v1489 = vpop.permute.xlu0 %1488
  %v1492 = vsel %vm244, %v1484, 0
  %1494 = vmatprep.subr.mxu0 0.0
  %1495 = vmatpush1.msra.mxu0 %v1489
  %1496 = vmatprep.subr.mxu0 0.0
  %1497 = vmatpush1.msra.mxu0 0.0
  %1498 = vmatprep.subr.mxu0 0.0
  %1499 = vmatpush1.msra.mxu0 0.0
  %1500 = vmatprep.subr.mxu0 0.0
  %1501 = vmatpush1.msra.mxu0 0.0
  %1502 = vmatprep.subr.mxu0 0.0
  %1503 = vmatpush1.msra.mxu0 0.0
  %1504 = vmatprep.subr.mxu0 0.0
  %1505 = vmatpush1.msra.mxu0 0.0
  %1506 = vmatprep.subr.mxu0 0.0
  %1507 = vmatpush1.msra.mxu0 0.0
  %1508 = vmatprep.subr.mxu0 0.0
  %1509 = vmatpush1.msra.mxu0 0.0
  %1510 = vmatprep.subr.mxu0 0.0
  %1511 = vmatpush1.msra.mxu0 0.0
  %1512 = vmatprep.subr.mxu0 0.0
  %1513 = vmatpush1.msra.mxu0 0.0
  %1514 = vmatprep.subr.mxu0 0.0
  %1515 = vmatpush1.msra.mxu0 0.0
  %1516 = vmatprep.subr.mxu0 0.0
  %1517 = vmatpush1.msra.mxu0 0.0
  %1518 = vmatprep.subr.mxu0 0.0
  %1519 = vmatpush1.msra.mxu0 0.0
  %1520 = vmatprep.subr.mxu0 0.0
  %1521 = vmatpush1.msra.mxu0 0.0
  %1522 = vmatprep.subr.mxu0 0.0
  %1523 = vmatpush1.msra.mxu0 0.0
  %1524 = vmatprep.subr.mxu0 0.0
  %1525 = vmatpush1.msra.mxu0 0.0
  %1526 = vmatprep.subr.mxu0 0.0
  %1527 = vmatpush1.msra.mxu0 0.0
  %1528 = vmatprep.subr.mxu0 0.0
  %1529 = vmatpush1.msra.mxu0 0.0
  %1530 = vmatprep.subr.mxu0 0.0
  %1531 = vmatpush1.msra.mxu0 0.0
  %1532 = vmatprep.subr.mxu0 0.0
  %1533 = vmatpush1.msra.mxu0 0.0
  %1534 = vmatprep.subr.mxu0 0.0
  %1535 = vmatpush1.msra.mxu0 0.0
  %1536 = vmatprep.subr.mxu0 0.0
  %1537 = vmatpush1.msra.mxu0 0.0
  %1538 = vmatprep.subr.mxu0 0.0
  %1539 = vmatpush1.msra.mxu0 0.0
  %1540 = vmatprep.subr.mxu0 0.0
  %1541 = vmatpush1.msra.mxu0 0.0
  %1542 = vmatprep.subr.mxu0 0.0
  %1543 = vmatpush1.msra.mxu0 0.0
  %1544 = vmatprep.subr.mxu0 0.0
  %1545 = vmatpush1.msra.mxu0 0.0
  %1546 = vmatprep.subr.mxu0 0.0
  %1547 = vmatpush1.msra.mxu0 0.0
  %1548 = vmatprep.subr.mxu0 0.0
  %1549 = vmatpush1.msra.mxu0 0.0
  %1550 = vmatprep.subr.mxu0 0.0
  %1551 = vmatpush1.msra.mxu0 0.0
  %1552 = vmatprep.subr.mxu0 0.0
  %1553 = vmatpush1.msra.mxu0 0.0
  %1554 = vmatprep.subr.mxu0 0.0
  %1555 = vmatpush1.msra.mxu0 0.0
  %1556 = vmatprep.subr.mxu0 0.0
  %1557 = vmatpush1.msra.mxu0 0.0
  %1558 = vmatprep.mubr.f32.mxu0 0.0
  %1559 = vmatmul.mubr.f32.gmra.mrb[0].mxu0 %v1492
  %v1560 = vpop.f32.mrb[0].mxu0
  %v1561 = vadd.f32 0.0, %v1560
  %v1562 = vpop.f32.mrb[0].mxu0
  %1563 = vdwg.mxu0
  %v1564 = vrcp.pop %v1487
  %v1565 = vmul.f32 %v1561, %v1564
  %v1567 = vsel %vm244, %v1565, 0
  %1569 = vmatprep.subr.mxu0 0.0
  %1570 = vmatpush1.msra.mxu0 %v56
  %1571 = vmatprep.subr.mxu0 0.0
  %1572 = vmatpush1.msra.mxu0 0.0
  %1573 = vmatprep.subr.mxu0 0.0
  %1574 = vmatpush1.msra.mxu0 0.0
  %1575 = vmatprep.subr.mxu0 0.0
  %1576 = vmatpush1.msra.mxu0 0.0
  %1577 = vmatprep.subr.mxu0 0.0
  %1578 = vmatpush1.msra.mxu0 0.0
  %1579 = vmatprep.subr.mxu0 0.0
  %1580 = vmatpush1.msra.mxu0 0.0
  %1581 = vmatprep.subr.mxu0 0.0
  %1582 = vmatpush1.msra.mxu0 0.0
  %1583 = vmatprep.subr.mxu0 0.0
  %1584 = vmatpush1.msra.mxu0 0.0
  %1585 = vmatprep.subr.mxu0 0.0
  %1586 = vmatpush1.msra.mxu0 0.0
  %1587 = vmatprep.subr.mxu0 0.0
  %1588 = vmatpush1.msra.mxu0 0.0
  %1589 = vmatprep.subr.mxu0 0.0
  %1590 = vmatpush1.msra.mxu0 0.0
  %1591 = vmatprep.subr.mxu0 0.0
  %1592 = vmatpush1.msra.mxu0 0.0
  %1593 = vmatprep.subr.mxu0 0.0
  %1594 = vmatpush1.msra.mxu0 0.0
  %1595 = vmatprep.subr.mxu0 0.0
  %1596 = vmatpush1.msra.mxu0 0.0
  %1597 = vmatprep.subr.mxu0 0.0
  %1598 = vmatpush1.msra.mxu0 0.0
  %1599 = vmatprep.subr.mxu0 0.0
  %1600 = vmatpush1.msra.mxu0 0.0
  %1601 = vmatprep.subr.mxu0 0.0
  %1602 = vmatpush1.msra.mxu0 0.0
  %1603 = vmatprep.subr.mxu0 0.0
  %1604 = vmatpush1.msra.mxu0 0.0
  %1605 = vmatprep.subr.mxu0 0.0
  %1606 = vmatpush1.msra.mxu0 0.0
  %1607 = vmatprep.subr.mxu0 0.0
  %1608 = vmatpush1.msra.mxu0 0.0
  %1609 = vmatprep.subr.mxu0 0.0
  %1610 = vmatpush1.msra.mxu0 0.0
  %1611 = vmatprep.subr.mxu0 0.0
  %1612 = vmatpush1.msra.mxu0 0.0
  %1613 = vmatprep.subr.mxu0 0.0
  %1614 = vmatpush1.msra.mxu0 0.0
  %1615 = vmatprep.subr.mxu0 0.0
  %1616 = vmatpush1.msra.mxu0 0.0
  %1617 = vmatprep.subr.mxu0 0.0
  %1618 = vmatpush1.msra.mxu0 0.0
  %1619 = vmatprep.subr.mxu0 0.0
  %1620 = vmatpush1.msra.mxu0 0.0
  %1621 = vmatprep.subr.mxu0 0.0
  %1622 = vmatpush1.msra.mxu0 0.0
  %1623 = vmatprep.subr.mxu0 0.0
  %1624 = vmatpush1.msra.mxu0 0.0
  %1625 = vmatprep.subr.mxu0 0.0
  %1626 = vmatpush1.msra.mxu0 0.0
  %1627 = vmatprep.subr.mxu0 0.0
  %1628 = vmatpush1.msra.mxu0 0.0
  %1629 = vmatprep.subr.mxu0 0.0
  %1630 = vmatpush1.msra.mxu0 0.0
  %1631 = vmatprep.subr.mxu0 0.0
  %1632 = vmatpush1.msra.mxu0 0.0
  %1633 = vmatprep.mubr.f32.mxu0 0.0
  %1634 = vmatmul.mubr.f32.gmra.mrb[0].mxu0 %v1567
  %v1635 = vpop.f32.mrb[0].mxu0
  %v1636 = vadd.f32 0.0, %v1635
  %v1637 = vpop.f32.mrb[0].mxu0
  %1638 = vdwg.mxu0
  %v1640 = vsel %vm244, %v1400, 0
  %1642 = vmatprep.subr.mxu0 0.0
  %1643 = vmatpush1.msra.mxu0 %v55
  %1644 = vmatprep.subr.mxu0 0.0
  %1645 = vmatpush1.msra.mxu0 0.0
  %1646 = vmatprep.subr.mxu0 0.0
  %1647 = vmatpush1.msra.mxu0 0.0
  %1648 = vmatprep.subr.mxu0 0.0
  %1649 = vmatpush1.msra.mxu0 0.0
  %1650 = vmatprep.subr.mxu0 0.0
  %1651 = vmatpush1.msra.mxu0 0.0
  %1652 = vmatprep.subr.mxu0 0.0
  %1653 = vmatpush1.msra.mxu0 0.0
  %1654 = vmatprep.subr.mxu0 0.0
  %1655 = vmatpush1.msra.mxu0 0.0
  %1656 = vmatprep.subr.mxu0 0.0
  %1657 = vmatpush1.msra.mxu0 0.0
  %1658 = vmatprep.subr.mxu0 0.0
  %1659 = vmatpush1.msra.mxu0 0.0
  %1660 = vmatprep.subr.mxu0 0.0
  %1661 = vmatpush1.msra.mxu0 0.0
  %1662 = vmatprep.subr.mxu0 0.0
  %1663 = vmatpush1.msra.mxu0 0.0
  %1664 = vmatprep.subr.mxu0 0.0
  %1665 = vmatpush1.msra.mxu0 0.0
  %1666 = vmatprep.subr.mxu0 0.0
  %1667 = vmatpush1.msra.mxu0 0.0
  %1668 = vmatprep.subr.mxu0 0.0
  %1669 = vmatpush1.msra.mxu0 0.0
  %1670 = vmatprep.subr.mxu0 0.0
  %1671 = vmatpush1.msra.mxu0 0.0
  %1672 = vmatprep.subr.mxu0 0.0
  %1673 = vmatpush1.msra.mxu0 0.0
  %1674 = vmatprep.subr.mxu0 0.0
  %1675 = vmatpush1.msra.mxu0 0.0
  %1676 = vmatprep.subr.mxu0 0.0
  %1677 = vmatpush1.msra.mxu0 0.0
  %1678 = vmatprep.subr.mxu0 0.0
  %1679 = vmatpush1.msra.mxu0 0.0
  %1680 = vmatprep.subr.mxu0 0.0
  %1681 = vmatpush1.msra.mxu0 0.0
  %1682 = vmatprep.subr.mxu0 0.0
  %1683 = vmatpush1.msra.mxu0 0.0
  %1684 = vmatprep.subr.mxu0 0.0
  %1685 = vmatpush1.msra.mxu0 0.0
  %1686 = vmatprep.subr.mxu0 0.0
  %1687 = vmatpush1.msra.mxu0 0.0
  %1688 = vmatprep.subr.mxu0 0.0
  %1689 = vmatpush1.msra.mxu0 0.0
  %1690 = vmatprep.subr.mxu0 0.0
  %1691 = vmatpush1.msra.mxu0 0.0
  %1692 = vmatprep.subr.mxu0 0.0
  %1693 = vmatpush1.msra.mxu0 0.0
  %1694 = vmatprep.subr.mxu0 0.0
  %1695 = vmatpush1.msra.mxu0 0.0
  %1696 = vmatprep.subr.mxu0 0.0
  %1697 = vmatpush1.msra.mxu0 0.0
  %1698 = vmatprep.subr.mxu0 0.0
  %1699 = vmatpush1.msra.mxu0 0.0
  %1700 = vmatprep.subr.mxu0 0.0
  %1701 = vmatpush1.msra.mxu0 0.0
  %1702 = vmatprep.subr.mxu0 0.0
  %1703 = vmatpush1.msra.mxu0 0.0
  %1704 = vmatprep.subr.mxu0 0.0
  %1705 = vmatpush1.msra.mxu0 0.0
  %1706 = vmatprep.mubr.f32.mxu0 0.0
  %1707 = vmatmul.mubr.f32.gmra.mrb[0].mxu0 %v1640
  %v1708 = vpop.f32.mrb[0].mxu0
  %v1709 = vadd.f32 %v1636, %v1708
  %v1710 = vpop.f32.mrb[0].mxu0
  %1711 = vdwg.mxu0
  %1712 = vrot.lane.b32.xlu0 %v149, 112
  %v1713 = vpop.permute.xlu0 %1712
  %1714 = vrot.lane.b32.xlu0 %v236, 112
  %v1715 = vpop.permute.xlu0 %1714
  %v1716 = vsel %vm244, %v1713, 0
  %v1718 = vsel %vm244, %v1715, 0
  %1720 = vmatprep.subr.mxu0 0.0
  %1721 = vmatpush1.xpose.msra.mxu0 %v1718
  %1722 = vmatprep.subr.mxu0 0.0
  %1723 = vmatpush1.xpose.msra.mxu0 0.0
  %1724 = vmatprep.subr.mxu0 0.0
  %1725 = vmatpush1.xpose.msra.mxu0 0.0
  %1726 = vmatprep.subr.mxu0 0.0
  %1727 = vmatpush1.xpose.msra.mxu0 0.0
  %1728 = vmatprep.subr.mxu0 0.0
  %1729 = vmatpush1.xpose.msra.mxu0 0.0
  %1730 = vmatprep.subr.mxu0 0.0
  %1731 = vmatpush1.xpose.msra.mxu0 0.0
  %1732 = vmatprep.subr.mxu0 0.0
  %1733 = vmatpush1.xpose.msra.mxu0 0.0
  %1734 = vmatprep.subr.mxu0 0.0
  %1735 = vmatpush1.xpose.msra.mxu0 0.0
  %1736 = vmatprep.subr.mxu0 0.0
  %1737 = vmatpush1.xpose.msra.mxu0 0.0
  %1738 = vmatprep.subr.mxu0 0.0
  %1739 = vmatpush1.xpose.msra.mxu0 0.0
  %1740 = vmatprep.subr.mxu0 0.0
  %1741 = vmatpush1.xpose.msra.mxu0 0.0
  %1742 = vmatprep.subr.mxu0 0.0
  %1743 = vmatpush1.xpose.msra.mxu0 0.0
  %1744 = vmatprep.subr.mxu0 0.0
  %1745 = vmatpush1.xpose.msra.mxu0 0.0
  %1746 = vmatprep.subr.mxu0 0.0
  %1747 = vmatpush1.xpose.msra.mxu0 0.0
  %1748 = vmatprep.subr.mxu0 0.0
  %1749 = vmatpush1.xpose.msra.mxu0 0.0
  %1750 = vmatprep.subr.mxu0 0.0
  %1751 = vmatpush1.xpose.msra.mxu0 0.0
  %1752 = vmatprep.subr.mxu0 0.0
  %1753 = vmatpush1.xpose.msra.mxu0 0.0
  %1754 = vmatprep.subr.mxu0 0.0
  %1755 = vmatpush1.xpose.msra.mxu0 0.0
  %1756 = vmatprep.subr.mxu0 0.0
  %1757 = vmatpush1.xpose.msra.mxu0 0.0
  %1758 = vmatprep.subr.mxu0 0.0
  %1759 = vmatpush1.xpose.msra.mxu0 0.0
  %1760 = vmatprep.subr.mxu0 0.0
  %1761 = vmatpush1.xpose.msra.mxu0 0.0
  %1762 = vmatprep.subr.mxu0 0.0
  %1763 = vmatpush1.xpose.msra.mxu0 0.0
  %1764 = vmatprep.subr.mxu0 0.0
  %1765 = vmatpush1.xpose.msra.mxu0 0.0
  %1766 = vmatprep.subr.mxu0 0.0
  %1767 = vmatpush1.xpose.msra.mxu0 0.0
  %1768 = vmatprep.subr.mxu0 0.0
  %1769 = vmatpush1.xpose.msra.mxu0 0.0
  %1770 = vmatprep.subr.mxu0 0.0
  %1771 = vmatpush1.xpose.msra.mxu0 0.0
  %1772 = vmatprep.subr.mxu0 0.0
  %1773 = vmatpush1.xpose.msra.mxu0 0.0
  %1774 = vmatprep.subr.mxu0 0.0
  %1775 = vmatpush1.xpose.msra.mxu0 0.0
  %1776 = vmatprep.subr.mxu0 0.0
  %1777 = vmatpush1.xpose.msra.mxu0 0.0
  %1778 = vmatprep.subr.mxu0 0.0
  %1779 = vmatpush1.xpose.msra.mxu0 0.0
  %1780 = vmatprep.subr.mxu0 0.0
  %1781 = vmatpush1.xpose.msra.mxu0 0.0
  %1782 = vmatprep.subr.mxu0 0.0
  %1783 = vmatpush1.xpose.msra.mxu0 0.0
  %1784 = vmatprep.mubr.f32.mxu0 0.0
  %1785 = vmatmul.mubr.f32.gmra.mrb[0].mxu0 %v1716
  %v1786 = vpop.f32.mrb[0].mxu0
  %v1787 = vadd.f32 %v1237, %v1786
  %v1788 = vpop.f32.mrb[0].mxu0
  %1789 = vdwg.mxu0
  %v1790 = vsel %vm244, %v1787, -inf
  %1791 = vmax.xlane.f32.xlu0 %v1790
  %v1792 = vpop.xlane.xlu0 %1791
  %v1793 = vsub.f32 %v1787, %v1792
  %v1794 = vmul.f32 %v1793, 1.442695
  %v1795 = vpow.pop %v1794
  %v1796 = vsel %vm244, %v1795, 0.0
  %1797 = vadd.xlane.f32.xlu0 %v1796
  %v1798 = vpop.xlane.xlu0 %1797
  %1799 = vrot.lane.b32.xlu0 %v236, 80
  %v1800 = vpop.permute.xlu0 %1799
  %v1803 = vsel %vm244, %v1795, 0
  %1805 = vmatprep.subr.mxu0 0.0
  %1806 = vmatpush1.msra.mxu0 %v1800
  %1807 = vmatprep.subr.mxu0 0.0
  %1808 = vmatpush1.msra.mxu0 0.0
  %1809 = vmatprep.subr.mxu0 0.0
  %1810 = vmatpush1.msra.mxu0 0.0
  %1811 = vmatprep.subr.mxu0 0.0
  %1812 = vmatpush1.msra.mxu0 0.0
  %1813 = vmatprep.subr.mxu0 0.0
  %1814 = vmatpush1.msra.mxu0 0.0
  %1815 = vmatprep.subr.mxu0 0.0
  %1816 = vmatpush1.msra.mxu0 0.0
  %1817 = vmatprep.subr.mxu0 0.0
  %1818 = vmatpush1.msra.mxu0 0.0
  %1819 = vmatprep.subr.mxu0 0.0
  %1820 = vmatpush1.msra.mxu0 0.0
  %1821 = vmatprep.subr.mxu0 0.0
  %1822 = vmatpush1.msra.mxu0 0.0
  %1823 = vmatprep.subr.mxu0 0.0
  %1824 = vmatpush1.msra.mxu0 0.0
  %1825 = vmatprep.subr.mxu0 0.0
  %1826 = vmatpush1.msra.mxu0 0.0
  %1827 = vmatprep.subr.mxu0 0.0
  %1828 = vmatpush1.msra.mxu0 0.0
  %1829 = vmatprep.subr.mxu0 0.0
  %1830 = vmatpush1.msra.mxu0 0.0
  %1831 = vmatprep.subr.mxu0 0.0
  %1832 = vmatpush1.msra.mxu0 0.0
  %1833 = vmatprep.subr.mxu0 0.0
  %1834 = vmatpush1.msra.mxu0 0.0
  %1835 = vmatprep.subr.mxu0 0.0
  %1836 = vmatpush1.msra.mxu0 0.0
  %1837 = vmatprep.subr.mxu0 0.0
  %1838 = vmatpush1.msra.mxu0 0.0
  %1839 = vmatprep.subr.mxu0 0.0
  %1840 = vmatpush1.msra.mxu0 0.0
  %1841 = vmatprep.subr.mxu0 0.0
  %1842 = vmatpush1.msra.mxu0 0.0
  %1843 = vmatprep.subr.mxu0 0.0
  %1844 = vmatpush1.msra.mxu0 0.0
  %1845 = vmatprep.subr.mxu0 0.0
  %1846 = vmatpush1.msra.mxu0 0.0
  %1847 = vmatprep.subr.mxu0 0.0
  %1848 = vmatpush1.msra.mxu0 0.0
  %1849 = vmatprep.subr.mxu0 0.0
  %1850 = vmatpush1.msra.mxu0 0.0
  %1851 = vmatprep.subr.mxu0 0.0
  %1852 = vmatpush1.msra.mxu0 0.0
  %1853 = vmatprep.subr.mxu0 0.0
  %1854 = vmatpush1.msra.mxu0 0.0
  %1855 = vmatprep.subr.mxu0 0.0
  %1856 = vmatpush1.msra.mxu0 0.0
  %1857 = vmatprep.subr.mxu0 0.0
  %1858 = vmatpush1.msra.mxu0 0.0
  %1859 = vmatprep.subr.mxu0 0.0
  %1860 = vmatpush1.msra.mxu0 0.0
  %1861 = vmatprep.subr.mxu0 0.0
  %1862 = vmatpush1.msra.mxu0 0.0
  %1863 = vmatprep.subr.mxu0 0.0
  %1864 = vmatpush1.msra.mxu0 0.0
  %1865 = vmatprep.subr.mxu0 0.0
  %1866 = vmatpush1.msra.mxu0 0.0
  %1867 = vmatprep.subr.mxu0 0.0
  %1868 = vmatpush1.msra.mxu0 0.0
  %1869 = vmatprep.mubr.f32.mxu0 0.0
  %1870 = vmatmul.mubr.f32.gmra.mrb[0].mxu0 %v1803
  %v1871 = vpop.f32.mrb[0].mxu0
  %v1872 = vadd.f32 0.0, %v1871
  %v1873 = vpop.f32.mrb[0].mxu0
  %1874 = vdwg.mxu0
  %v1875 = vrcp.pop %v1798
  %v1876 = vmul.f32 %v1872, %v1875
  %v1878 = vsel %vm244, %v1876, 0
  %1880 = vmatprep.subr.mxu0 0.0
  %1881 = vmatpush1.msra.mxu0 %v57
  %1882 = vmatprep.subr.mxu0 0.0
  %1883 = vmatpush1.msra.mxu0 0.0
  %1884 = vmatprep.subr.mxu0 0.0
  %1885 = vmatpush1.msra.mxu0 0.0
  %1886 = vmatprep.subr.mxu0 0.0
  %1887 = vmatpush1.msra.mxu0 0.0
  %1888 = vmatprep.subr.mxu0 0.0
  %1889 = vmatpush1.msra.mxu0 0.0
  %1890 = vmatprep.subr.mxu0 0.0
  %1891 = vmatpush1.msra.mxu0 0.0
  %1892 = vmatprep.subr.mxu0 0.0
  %1893 = vmatpush1.msra.mxu0 0.0
  %1894 = vmatprep.subr.mxu0 0.0
  %1895 = vmatpush1.msra.mxu0 0.0
  %1896 = vmatprep.subr.mxu0 0.0
  %1897 = vmatpush1.msra.mxu0 0.0
  %1898 = vmatprep.subr.mxu0 0.0
  %1899 = vmatpush1.msra.mxu0 0.0
  %1900 = vmatprep.subr.mxu0 0.0
  %1901 = vmatpush1.msra.mxu0 0.0
  %1902 = vmatprep.subr.mxu0 0.0
  %1903 = vmatpush1.msra.mxu0 0.0
  %1904 = vmatprep.subr.mxu0 0.0
  %1905 = vmatpush1.msra.mxu0 0.0
  %1906 = vmatprep.subr.mxu0 0.0
  %1907 = vmatpush1.msra.mxu0 0.0
  %1908 = vmatprep.subr.mxu0 0.0
  %1909 = vmatpush1.msra.mxu0 0.0
  %1910 = vmatprep.subr.mxu0 0.0
  %1911 = vmatpush1.msra.mxu0 0.0
  %1912 = vmatprep.subr.mxu0 0.0
  %1913 = vmatpush1.msra.mxu0 0.0
  %1914 = vmatprep.subr.mxu0 0.0
  %1915 = vmatpush1.msra.mxu0 0.0
  %1916 = vmatprep.subr.mxu0 0.0
  %1917 = vmatpush1.msra.mxu0 0.0
  %1918 = vmatprep.subr.mxu0 0.0
  %1919 = vmatpush1.msra.mxu0 0.0
  %1920 = vmatprep.subr.mxu0 0.0
  %1921 = vmatpush1.msra.mxu0 0.0
  %1922 = vmatprep.subr.mxu0 0.0
  %1923 = vmatpush1.msra.mxu0 0.0
  %1924 = vmatprep.subr.mxu0 0.0
  %1925 = vmatpush1.msra.mxu0 0.0
  %1926 = vmatprep.subr.mxu0 0.0
  %1927 = vmatpush1.msra.mxu0 0.0
  %1928 = vmatprep.subr.mxu0 0.0
  %1929 = vmatpush1.msra.mxu0 0.0
  %1930 = vmatprep.subr.mxu0 0.0
  %1931 = vmatpush1.msra.mxu0 0.0
  %1932 = vmatprep.subr.mxu0 0.0
  %1933 = vmatpush1.msra.mxu0 0.0
  %1934 = vmatprep.subr.mxu0 0.0
  %1935 = vmatpush1.msra.mxu0 0.0
  %1936 = vmatprep.subr.mxu0 0.0
  %1937 = vmatpush1.msra.mxu0 0.0
  %1938 = vmatprep.subr.mxu0 0.0
  %1939 = vmatpush1.msra.mxu0 0.0
  %1940 = vmatprep.subr.mxu0 0.0
  %1941 = vmatpush1.msra.mxu0 0.0
  %1942 = vmatprep.subr.mxu0 0.0
  %1943 = vmatpush1.msra.mxu0 0.0
  %1944 = vmatprep.mubr.f32.mxu0 0.0
  %1945 = vmatmul.mubr.f32.gmra.mrb[0].mxu0 %v1878
  %v1946 = vpop.f32.mrb[0].mxu0
  %v1947 = vadd.f32 0.0, %v1946
  %v1948 = vpop.f32.mrb[0].mxu0
  %1949 = vdwg.mxu0
  %v1950 = vadd.f32 %v1709, %v1947
  %1951 = vrot.lane.b32.xlu0 %v149, 104
  %v1952 = vpop.permute.xlu0 %1951
  %1953 = vrot.lane.b32.xlu0 %v236, 104
  %v1954 = vpop.permute.xlu0 %1953
  %v1955 = vsel %vm244, %v1952, 0
  %v1957 = vsel %vm244, %v1954, 0
  %1959 = vmatprep.subr.mxu0 0.0
  %1960 = vmatpush1.xpose.msra.mxu0 %v1957
  %1961 = vmatprep.subr.mxu0 0.0
  %1962 = vmatpush1.xpose.msra.mxu0 0.0
  %1963 = vmatprep.subr.mxu0 0.0
  %1964 = vmatpush1.xpose.msra.mxu0 0.0
  %1965 = vmatprep.subr.mxu0 0.0
  %1966 = vmatpush1.xpose.msra.mxu0 0.0
  %1967 = vmatprep.subr.mxu0 0.0
  %1968 = vmatpush1.xpose.msra.mxu0 0.0
  %1969 = vmatprep.subr.mxu0 0.0
  %1970 = vmatpush1.xpose.msra.mxu0 0.0
  %1971 = vmatprep.subr.mxu0 0.0
  %1972 = vmatpush1.xpose.msra.mxu0 0.0
  %1973 = vmatprep.subr.mxu0 0.0
  %1974 = vmatpush1.xpose.msra.mxu0 0.0
  %1975 = vmatprep.subr.mxu0 0.0
  %1976 = vmatpush1.xpose.msra.mxu0 0.0
  %1977 = vmatprep.subr.mxu0 0.0
  %1978 = vmatpush1.xpose.msra.mxu0 0.0
  %1979 = vmatprep.subr.mxu0 0.0
  %1980 = vmatpush1.xpose.msra.mxu0 0.0
  %1981 = vmatprep.subr.mxu0 0.0
  %1982 = vmatpush1.xpose.msra.mxu0 0.0
  %1983 = vmatprep.subr.mxu0 0.0
  %1984 = vmatpush1.xpose.msra.mxu0 0.0
  %1985 = vmatprep.subr.mxu0 0.0
  %1986 = vmatpush1.xpose.msra.mxu0 0.0
  %1987 = vmatprep.subr.mxu0 0.0
  %1988 = vmatpush1.xpose.msra.mxu0 0.0
  %1989 = vmatprep.subr.mxu0 0.0
  %1990 = vmatpush1.xpose.msra.mxu0 0.0
  %1991 = vmatprep.subr.mxu0 0.0
  %1992 = vmatpush1.xpose.msra.mxu0 0.0
  %1993 = vmatprep.subr.mxu0 0.0
  %1994 = vmatpush1.xpose.msra.mxu0 0.0
  %1995 = vmatprep.subr.mxu0 0.0
  %1996 = vmatpush1.xpose.msra.mxu0 0.0
  %1997 = vmatprep.subr.mxu0 0.0
  %1998 = vmatpush1.xpose.msra.mxu0 0.0
  %1999 = vmatprep.subr.mxu0 0.0
  %2000 = vmatpush1.xpose.msra.mxu0 0.0
  %2001 = vmatprep.subr.mxu0 0.0
  %2002 = vmatpush1.xpose.msra.mxu0 0.0
  %2003 = vmatprep.subr.mxu0 0.0
  %2004 = vmatpush1.xpose.msra.mxu0 0.0
  %2005 = vmatprep.subr.mxu0 0.0
  %2006 = vmatpush1.xpose.msra.mxu0 0.0
  %2007 = vmatprep.subr.mxu0 0.0
  %2008 = vmatpush1.xpose.msra.mxu0 0.0
  %2009 = vmatprep.subr.mxu0 0.0
  %2010 = vmatpush1.xpose.msra.mxu0 0.0
  %2011 = vmatprep.subr.mxu0 0.0
  %2012 = vmatpush1.xpose.msra.mxu0 0.0
  %2013 = vmatprep.subr.mxu0 0.0
  %2014 = vmatpush1.xpose.msra.mxu0 0.0
  %2015 = vmatprep.subr.mxu0 0.0
  %2016 = vmatpush1.xpose.msra.mxu0 0.0
  %2017 = vmatprep.subr.mxu0 0.0
  %2018 = vmatpush1.xpose.msra.mxu0 0.0
  %2019 = vmatprep.subr.mxu0 0.0
  %2020 = vmatpush1.xpose.msra.mxu0 0.0
  %2021 = vmatprep.subr.mxu0 0.0
  %2022 = vmatpush1.xpose.msra.mxu0 0.0
  %2023 = vmatprep.mubr.f32.mxu0 0.0
  %2024 = vmatmul.mubr.f32.gmra.mrb[0].mxu0 %v1955
  %v2025 = vpop.f32.mrb[0].mxu0
  %v2026 = vadd.f32 %v1237, %v2025
  %v2027 = vpop.f32.mrb[0].mxu0
  %2028 = vdwg.mxu0
  %v2029 = vsel %vm244, %v2026, -inf
  %2030 = vmax.xlane.f32.xlu0 %v2029
  %v2031 = vpop.xlane.xlu0 %2030
  %v2032 = vsub.f32 %v2026, %v2031
  %v2033 = vmul.f32 %v2032, 1.442695
  %v2034 = vpow.pop %v2033
  %v2035 = vsel %vm244, %v2034, 0.0
  %2036 = vadd.xlane.f32.xlu0 %v2035
  %v2037 = vpop.xlane.xlu0 %2036
  %2038 = vrot.lane.b32.xlu0 %v236, 72
  %v2039 = vpop.permute.xlu0 %2038
  %v2042 = vsel %vm244, %v2034, 0
  %2044 = vmatprep.subr.mxu0 0.0
  %2045 = vmatpush1.msra.mxu0 %v2039
  %2046 = vmatprep.subr.mxu0 0.0
  %2047 = vmatpush1.msra.mxu0 0.0
  %2048 = vmatprep.subr.mxu0 0.0
  %2049 = vmatpush1.msra.mxu0 0.0
  %2050 = vmatprep.subr.mxu0 0.0
  %2051 = vmatpush1.msra.mxu0 0.0
  %2052 = vmatprep.subr.mxu0 0.0
  %2053 = vmatpush1.msra.mxu0 0.0
  %2054 = vmatprep.subr.mxu0 0.0
  %2055 = vmatpush1.msra.mxu0 0.0
  %2056 = vmatprep.subr.mxu0 0.0
  %2057 = vmatpush1.msra.mxu0 0.0
  %2058 = vmatprep.subr.mxu0 0.0
  %2059 = vmatpush1.msra.mxu0 0.0
  %2060 = vmatprep.subr.mxu0 0.0
  %2061 = vmatpush1.msra.mxu0 0.0
  %2062 = vmatprep.subr.mxu0 0.0
  %2063 = vmatpush1.msra.mxu0 0.0
  %2064 = vmatprep.subr.mxu0 0.0
  %2065 = vmatpush1.msra.mxu0 0.0
  %2066 = vmatprep.subr.mxu0 0.0
  %2067 = vmatpush1.msra.mxu0 0.0
  %2068 = vmatprep.subr.mxu0 0.0
  %2069 = vmatpush1.msra.mxu0 0.0
  %2070 = vmatprep.subr.mxu0 0.0
  %2071 = vmatpush1.msra.mxu0 0.0
  %2072 = vmatprep.subr.mxu0 0.0
  %2073 = vmatpush1.msra.mxu0 0.0
  %2074 = vmatprep.subr.mxu0 0.0
  %2075 = vmatpush1.msra.mxu0 0.0
  %2076 = vmatprep.subr.mxu0 0.0
  %2077 = vmatpush1.msra.mxu0 0.0
  %2078 = vmatprep.subr.mxu0 0.0
  %2079 = vmatpush1.msra.mxu0 0.0
  %2080 = vmatprep.subr.mxu0 0.0
  %2081 = vmatpush1.msra.mxu0 0.0
  %2082 = vmatprep.subr.mxu0 0.0
  %2083 = vmatpush1.msra.mxu0 0.0
  %2084 = vmatprep.subr.mxu0 0.0
  %2085 = vmatpush1.msra.mxu0 0.0
  %2086 = vmatprep.subr.mxu0 0.0
  %2087 = vmatpush1.msra.mxu0 0.0
  %2088 = vmatprep.subr.mxu0 0.0
  %2089 = vmatpush1.msra.mxu0 0.0
  %2090 = vmatprep.subr.mxu0 0.0
  %2091 = vmatpush1.msra.mxu0 0.0
  %2092 = vmatprep.subr.mxu0 0.0
  %2093 = vmatpush1.msra.mxu0 0.0
  %2094 = vmatprep.subr.mxu0 0.0
  %2095 = vmatpush1.msra.mxu0 0.0
  %2096 = vmatprep.subr.mxu0 0.0
  %2097 = vmatpush1.msra.mxu0 0.0
  %2098 = vmatprep.subr.mxu0 0.0
  %2099 = vmatpush1.msra.mxu0 0.0
  %2100 = vmatprep.subr.mxu0 0.0
  %2101 = vmatpush1.msra.mxu0 0.0
  %2102 = vmatprep.subr.mxu0 0.0
  %2103 = vmatpush1.msra.mxu0 0.0
  %2104 = vmatprep.subr.mxu0 0.0
  %2105 = vmatpush1.msra.mxu0 0.0
  %2106 = vmatprep.subr.mxu0 0.0
  %2107 = vmatpush1.msra.mxu0 0.0
  %2108 = vmatprep.mubr.f32.mxu0 0.0
  %2109 = vmatmul.mubr.f32.gmra.mrb[0].mxu0 %v2042
  %v2110 = vpop.f32.mrb[0].mxu0
  %v2111 = vadd.f32 0.0, %v2110
  %v2112 = vpop.f32.mrb[0].mxu0
  %2113 = vdwg.mxu0
  %v2114 = vrcp.pop %v2037
  %v2115 = vmul.f32 %v2111, %v2114
  %v2117 = vsel %vm244, %v2115, 0
  %2119 = vmatprep.subr.mxu0 0.0
  %2120 = vmatpush1.msra.mxu0 %v58
  %2121 = vmatprep.subr.mxu0 0.0
  %2122 = vmatpush1.msra.mxu0 0.0
  %2123 = vmatprep.subr.mxu0 0.0
  %2124 = vmatpush1.msra.mxu0 0.0
  %2125 = vmatprep.subr.mxu0 0.0
  %2126 = vmatpush1.msra.mxu0 0.0
  %2127 = vmatprep.subr.mxu0 0.0
  %2128 = vmatpush1.msra.mxu0 0.0
  %2129 = vmatprep.subr.mxu0 0.0
  %2130 = vmatpush1.msra.mxu0 0.0
  %2131 = vmatprep.subr.mxu0 0.0
  %2132 = vmatpush1.msra.mxu0 0.0
  %2133 = vmatprep.subr.mxu0 0.0
  %2134 = vmatpush1.msra.mxu0 0.0
  %2135 = vmatprep.subr.mxu0 0.0
  %2136 = vmatpush1.msra.mxu0 0.0
  %2137 = vmatprep.subr.mxu0 0.0
  %2138 = vmatpush1.msra.mxu0 0.0
  %2139 = vmatprep.subr.mxu0 0.0
  %2140 = vmatpush1.msra.mxu0 0.0
  %2141 = vmatprep.subr.mxu0 0.0
  %2142 = vmatpush1.msra.mxu0 0.0
  %2143 = vmatprep.subr.mxu0 0.0
  %2144 = vmatpush1.msra.mxu0 0.0
  %2145 = vmatprep.subr.mxu0 0.0
  %2146 = vmatpush1.msra.mxu0 0.0
  %2147 = vmatprep.subr.mxu0 0.0
  %2148 = vmatpush1.msra.mxu0 0.0
  %2149 = vmatprep.subr.mxu0 0.0
  %2150 = vmatpush1.msra.mxu0 0.0
  %2151 = vmatprep.subr.mxu0 0.0
  %2152 = vmatpush1.msra.mxu0 0.0
  %2153 = vmatprep.subr.mxu0 0.0
  %2154 = vmatpush1.msra.mxu0 0.0
  %2155 = vmatprep.subr.mxu0 0.0
  %2156 = vmatpush1.msra.mxu0 0.0
  %2157 = vmatprep.subr.mxu0 0.0
  %2158 = vmatpush1.msra.mxu0 0.0
  %2159 = vmatprep.subr.mxu0 0.0
  %2160 = vmatpush1.msra.mxu0 0.0
  %2161 = vmatprep.subr.mxu0 0.0
  %2162 = vmatpush1.msra.mxu0 0.0
  %2163 = vmatprep.subr.mxu0 0.0
  %2164 = vmatpush1.msra.mxu0 0.0
  %2165 = vmatprep.subr.mxu0 0.0
  %2166 = vmatpush1.msra.mxu0 0.0
  %2167 = vmatprep.subr.mxu0 0.0
  %2168 = vmatpush1.msra.mxu0 0.0
  %2169 = vmatprep.subr.mxu0 0.0
  %2170 = vmatpush1.msra.mxu0 0.0
  %2171 = vmatprep.subr.mxu0 0.0
  %2172 = vmatpush1.msra.mxu0 0.0
  %2173 = vmatprep.subr.mxu0 0.0
  %2174 = vmatpush1.msra.mxu0 0.0
  %2175 = vmatprep.subr.mxu0 0.0
  %2176 = vmatpush1.msra.mxu0 0.0
  %2177 = vmatprep.subr.mxu0 0.0
  %2178 = vmatpush1.msra.mxu0 0.0
  %2179 = vmatprep.subr.mxu0 0.0
  %2180 = vmatpush1.msra.mxu0 0.0
  %2181 = vmatprep.subr.mxu0 0.0
  %2182 = vmatpush1.msra.mxu0 0.0
  %2183 = vmatprep.mubr.f32.mxu0 0.0
  %2184 = vmatmul.mubr.f32.gmra.mrb[0].mxu0 %v2117
  %v2185 = vpop.f32.mrb[0].mxu0
  %v2186 = vadd.f32 0.0, %v2185
  %v2187 = vpop.f32.mrb[0].mxu0
  %2188 = vdwg.mxu0
  %v2189 = vadd.f32 %v1950, %v2186
  %v2190 = vadd.f32 %v2189, %v1201
  %v2191 = vsel %vm70, %v2190, 0.0
  %2192 = vadd.xlane.f32.xlu0 %v2191
  %v2193 = vpop.xlane.xlu0 %2192
  %v2194 = vmul.f32 %v2193, %v1207
  %v2195 = vsub.f32 %v2190, %v2194
  %v2196 = vmul.f32 %v2195, %v2195
  %v2197 = vsel %vm70, %v2196, 0.0
  %2198 = vadd.xlane.f32.xlu0 %v2197
  %v2199 = vpop.xlane.xlu0 %2198
  %v2200 = vmul.f32 %v2199, %v1207
  %v2201 = vadd.f32 %v2200, 1e-05
  %v2202 = vrsqrt.pop %v2201
  %v2203 = vmul.f32 %v2195, %v2202
  %v2204 = vmul.f32 %v2203, %v1222
  %v2205 = vadd.f32 %v2204, %v1229
  %2206 = vst.msk [vmem:[%s12 + $0x8] sm:$0xff] %vm70, %v2205
  // Predicated region
  $region50: #{transformer_forward_pallas.15} parent=0 // pred_check
    _
  $region51: #{transformer_forward_pallas.15} parent=0 // pred_check_branch
    %2208 = sbr.rel (0) target = $region53
  $region52: #{transformer_forward_pallas.15} parent=0 // pred_region
    _
  $region53: #{transformer_forward_pallas.15} parent=0 // pred_fallthru
    _
  // Predicated region
  $region54: #{transformer_forward_pallas.15} parent=0 // pred_check
    _
  $region55: #{transformer_forward_pallas.15} parent=0 // pred_check_branch
    %2210 = sbr.rel (0) target = $region57
  $region56: #{transformer_forward_pallas.15} parent=0 // pred_region
    _
  $region57: #{transformer_forward_pallas.15} parent=0 // pred_fallthru
    _

</llo_original>
